<compile_context>
chip_gen: v5e
topology: v5e:2x2
jax: 0.10.0
libtpu: 0.0.40
codegen_flags: <defaults>
</compile_context>

<pallas_src>
import numpy as np

import jax
import jax.numpy as jnp
from jax.experimental import pallas as pl
from jax.experimental.pallas import tpu as pltpu

ACTIONS = 2
_N2 = 128                         # fc2 output padded to one full lane width
_VMEM_LIMIT = 32 * 1024 * 1024    # safe on v5e/v6e/v7x; far above actual need


# ----------------------------------------------------------------------------
# Fused forward kernel (one grid step = one image)
# ----------------------------------------------------------------------------
def _dqn_fused_kernel(p1_ref, w1_ref, b1_ref, s2_ref, w2_ref, b2_ref,
                      s3_ref, w3_ref, b3_ref, wf1_ref, bf1_ref,
                      wf2_ref, bf2_ref, o_ref, flat_sc):
    f32 = jnp.float32
    bf16 = jnp.bfloat16

    # conv1: im2col patches [361,256] @ [256,32] + bias + ReLU (f32 epilogue).
    c1 = jnp.dot(p1_ref[0], w1_ref[...], preferred_element_type=f32)
    c1 = jnp.maximum(c1 + b1_ref[...], 0.0).astype(bf16)                     # [361,32]

    # conv2 (k4 s2): gather the 16 shifted 8x8 windows with one selection
    # matmul (one-hot rows), then accumulate the per-tap matmuls.
    p2 = jnp.dot(s2_ref[...], c1, preferred_element_type=f32).astype(bf16)   # [1024,32]
    acc2 = jnp.zeros((64, 64), f32)
    for k in range(16):
        acc2 = acc2 + jnp.dot(p2[k * 64:(k + 1) * 64, :], w2_ref[k],
                              preferred_element_type=f32)
    c2 = jnp.maximum(acc2 + b2_ref[...], 0.0).astype(bf16)                   # [64,64]

    # conv3 (k3 s1): same structure; selection blocks are padded to 40 rows so
    # every value slice below starts on an 8-sublane boundary.
    p3 = jnp.dot(s3_ref[...], c2, preferred_element_type=f32).astype(bf16)   # [360,64]
    acc3 = jnp.zeros((40, 64), f32)
    for k in range(9):
        acc3 = acc3 + jnp.dot(p3[k * 40:(k + 1) * 40, :], w3_ref[k],
                              preferred_element_type=f32)
    c3 = jnp.maximum(acc3[0:36, :] + b3_ref[...], 0.0)                       # [36,64] f32

    # Flatten (H,W,C) -> [1,2304] through a tiny VMEM scratch (36 row stores,
    # guaranteed-lowerable masked lane stores; avoids a transpose-like reshape).
    for r in range(36):
        flat_sc[:, r * 64:(r + 1) * 64] = c3[r:r + 1, :]
    flat = flat_sc[...].astype(bf16)                                         # [1,2304]

    # fc1 + ReLU, fc2: the 512-wide hidden never leaves the core.
    h = jnp.dot(flat, wf1_ref[...], preferred_element_type=f32)
    h = jnp.maximum(h + bf1_ref[...], 0.0).astype(bf16)                      # [1,512]
    o = jnp.dot(h, wf2_ref[...], preferred_element_type=f32) + bf2_ref[...]
    o_ref[0] = o.astype(o_ref.dtype)                                         # [1,128]


# ----------------------------------------------------------------------------
# Forward wrapper: thin conv1 im2col glue + the single fused pallas_call
# ----------------------------------------------------------------------------
def dqn_forward(pp, x):
    """x: [B, 4, 80, 80] f32 (NCHW, as in PyTorch) -> [B, ACTIONS] f32."""
    B = x.shape[0]
    # conv1 im2col on the tiny raw input, channel-first (no lane-4 NHWC array).
    cols = [x[:, :, kh:kh + 76:4, kw:kw + 76:4]
            for kh in range(8) for kw in range(8)]             # 64 x [B,4,19,19]
    p1 = jnp.concatenate(cols, axis=1)                         # [B,256,19,19], (kh,kw,ci)
    p1 = p1.transpose(0, 2, 3, 1).reshape(B, 361, 256).astype(jnp.bfloat16)

    out = pl.pallas_call(
        _dqn_fused_kernel,
        out_shape=jax.ShapeDtypeStruct((B, 1, _N2), jnp.float32),
        grid=(B,),
        in_specs=[
            pl.BlockSpec((1, 361, 256), lambda b: (b, 0, 0)),   # per-image conv1 patches
            pl.BlockSpec((256, 32), lambda b: (0, 0)),          # conv1 weight (resident)
            pl.BlockSpec((1, 32), lambda b: (0, 0)),
            pl.BlockSpec((1024, 361), lambda b: (0, 0)),        # conv2 selection matrix
            pl.BlockSpec((16, 32, 64), lambda b: (0, 0, 0)),    # conv2 per-tap weights
            pl.BlockSpec((1, 64), lambda b: (0, 0)),
            pl.BlockSpec((360, 64), lambda b: (0, 0)),          # conv3 selection matrix
            pl.BlockSpec((9, 64, 64), lambda b: (0, 0, 0)),     # conv3 per-tap weights
            pl.BlockSpec((1, 64), lambda b: (0, 0)),
            pl.BlockSpec((2304, 512), lambda b: (0, 0)),        # fc1 weight
            pl.BlockSpec((1, 512), lambda b: (0, 0)),
            pl.BlockSpec((512, _N2), lambda b: (0, 0)),         # fc2 weight (N padded)
            pl.BlockSpec((1, _N2), lambda b: (0, 0)),
        ],
        out_specs=pl.BlockSpec((1, 1, _N2), lambda b: (b, 0, 0)),
        scratch_shapes=[pltpu.VMEM((1, 2304), jnp.float32)],
        compiler_params=pltpu.CompilerParams(
            dimension_semantics=("parallel",),   # B=2 -> one image per TC on v7x
            vmem_limit_bytes=_VMEM_LIMIT,
        ),
    )(p1, pp["w1"], pp["b1"], pp["s2"], pp["w2"], pp["b2"],
      pp["s3"], pp["w3"], pp["b3"], pp["wf1"], pp["bf1"], pp["wf2"], pp["bf2"])
    return out.reshape(B, _N2)[:, :ACTIONS]


# ----------------------------------------------------------------------------
# Parameters: PyTorch-style init, then one-time kernel-friendly re-layout
# ----------------------------------------------------------------------------
def init_dqn_params(key):
    ks = jax.random.split(key, 10)

    def u(k, shape, fan_in):
        bound = 1.0 / jnp.sqrt(fan_in)
        return jax.random.uniform(k, shape, jnp.float32, -bound, bound)

    return {
        "conv1_w": u(ks[0], (32, 4, 8, 8), 4 * 8 * 8),
        "conv1_b": u(ks[1], (32,), 4 * 8 * 8),
        "conv2_w": u(ks[2], (64, 32, 4, 4), 32 * 4 * 4),
        "conv2_b": u(ks[3], (64,), 32 * 4 * 4),
        "conv3_w": u(ks[4], (64, 64, 3, 3), 64 * 3 * 3),
        "conv3_b": u(ks[5], (64,), 64 * 3 * 3),
        "fc1_w": u(ks[6], (512, 2304), 2304),
        "fc1_b": u(ks[7], (512,), 2304),
        "fc2_w": u(ks[8], (ACTIONS, 512), 512),
        "fc2_b": u(ks[9], (ACTIONS,), 512),
    }


def prepare_params(p):
    """One-time weight re-layout (outside the jitted forward)."""
    def conv_mat(w):   # [Cout,Cin,KH,KW] -> [KH*KW*Cin, Cout], rows in (kh,kw,ci)
        co, ci, kh, kw = w.shape
        return w.transpose(2, 3, 1, 0).reshape(kh * kw * ci, co).astype(jnp.bfloat16)

    def conv_taps(w):  # [Cout,Cin,KH,KW] -> [KH*KW, Cin, Cout]
        co, ci, kh, kw = w.shape
        return w.transpose(2, 3, 1, 0).reshape(kh * kw, ci, co).astype(jnp.bfloat16)

    def row(b):
        return jnp.asarray(b).reshape(1, -1).astype(jnp.float32)

    # One-hot selection ("gather") matrices for the in-kernel conv2/conv3 windows.
    s2 = np.zeros((16, 64, 361), np.float32)           # conv2: k4 s2, 19x19 -> 8x8
    for kh in range(4):
        for kw in range(4):
            for oh in range(8):
                for ow in range(8):
                    s2[kh * 4 + kw, oh * 8 + ow,
                       (2 * oh + kh) * 19 + (2 * ow + kw)] = 1.0
    s3 = np.zeros((9, 40, 64), np.float32)             # conv3: k3 s1, 8x8 -> 6x6 (padded to 40 rows)
    for kh in range(3):
        for kw in range(3):
            for oh in range(6):
                for ow in range(6):
                    s3[kh * 3 + kw, oh * 6 + ow, (oh + kh) * 8 + (ow + kw)] = 1.0

    # fc1: PyTorch flattens conv3 output as (C,H,W); our in-kernel flatten is
    # (H,W,C), so permute the weight rows once here for identical semantics.
    wf1 = p["fc1_w"].reshape(512, 64, 6, 6).transpose(2, 3, 1, 0).reshape(2304, 512)
    wf2 = jnp.pad(p["fc2_w"].T, ((0, 0), (0, _N2 - ACTIONS)))
    bf2 = jnp.pad(p["fc2_b"], (0, _N2 - ACTIONS))

    return {
        "w1": conv_mat(p["conv1_w"]), "b1": row(p["conv1_b"]),
        "s2": jnp.asarray(s2.reshape(16 * 64, 361), jnp.bfloat16),
        "w2": conv_taps(p["conv2_w"]), "b2": row(p["conv2_b"]),
        "s3": jnp.asarray(s3.reshape(9 * 40, 64), jnp.bfloat16),
        "w3": conv_taps(p["conv3_w"]), "b3": row(p["conv3_b"]),
        "wf1": wf1.astype(jnp.bfloat16), "bf1": row(p["fc1_b"]),
        "wf2": wf2.astype(jnp.bfloat16), "bf2": row(bf2),
    }


# ----------------------------------------------------------------------------
# Pure-JAX f32 reference (PyTorch semantics) for a tolerance check
# ----------------------------------------------------------------------------
def _reference_forward(params, x):
    def conv(y, w, b, stride):
        y = jax.lax.conv_general_dilated(
            y, w, (stride, stride), "VALID",
            dimension_numbers=("NCHW", "OIHW", "NCHW"))
        return jax.nn.relu(y + b.reshape(1, -1, 1, 1))

    y = conv(x, params["conv1_w"], params["conv1_b"], 4)
    y = conv(y, params["conv2_w"], params["conv2_b"], 2)
    y = conv(y, params["conv3_w"], params["conv3_b"], 1)
    y = y.reshape(y.shape[0], -1)                              # (C,H,W) flatten
    y = jax.nn.relu(y @ params["fc1_w"].T + params["fc1_b"])
    return y @ params["fc2_w"].T + params["fc2_b"]


if __name__ == "__main__":
    key = jax.random.PRNGKey(0)
    kp_, kx = jax.random.split(key)
    params = init_dqn_params(kp_)
    pp = prepare_params(params)

    B = 2
    x = jax.random.uniform(kx, (B, 4, 80, 80), jnp.float32)

    out = jax.block_until_ready(jax.jit(dqn_forward)(pp, x))
    assert out.shape == (B, ACTIONS), out.shape
    assert out.dtype == jnp.float32

    ref = jax.block_until_ready(jax.jit(_reference_forward)(params, x))
    max_err = float(jnp.max(jnp.abs(out - ref)))
    assert max_err < 0.1, f"max abs err vs f32 reference: {max_err}"

    print("KERNEL_OK")
</pallas_src>

<mosaic_0001>
module attributes {stable_mosaic.version = 11 : i64} {
  func.func @_dqn_fused_kernel(%arg0: i32, %arg1: memref<1x361x256xbf16, #tpu.memory_space<vmem>>, %arg2: memref<256x32xbf16, #tpu.memory_space<vmem>>, %arg3: memref<1x32xf32, #tpu.memory_space<vmem>>, %arg4: memref<1024x361xbf16, #tpu.memory_space<vmem>>, %arg5: memref<16x32x64xbf16, #tpu.memory_space<vmem>>, %arg6: memref<1x64xf32, #tpu.memory_space<vmem>>, %arg7: memref<360x64xbf16, #tpu.memory_space<vmem>>, %arg8: memref<9x64x64xbf16, #tpu.memory_space<vmem>>, %arg9: memref<1x64xf32, #tpu.memory_space<vmem>>, %arg10: memref<2304x512xbf16, #tpu.memory_space<vmem>>, %arg11: memref<1x512xf32, #tpu.memory_space<vmem>>, %arg12: memref<512x128xbf16, #tpu.memory_space<vmem>>, %arg13: memref<1x128xf32, #tpu.memory_space<vmem>>, %arg14: memref<1x1x128xf32, #tpu.memory_space<vmem>>, %arg15: memref<1x2304xf32, #tpu.memory_space<vmem>>) attributes {dimension_semantics = [#tpu.dimension_semantics<parallel>], iteration_bounds = array<i64: 2>, scalar_prefetch = 0 : i64, scratch_operands = 1 : i64, tpu.core_type = #tpu.core_type<tc>, window_params = [{transform_indices = @transform_0, window_bounds = array<i64: 1, 361, 256>}, {pipeline_mode = #tpu.pipeline_mode<synchronous>, transform_indices = @transform_1, window_bounds = array<i64: 256, 32>}, {pipeline_mode = #tpu.pipeline_mode<synchronous>, transform_indices = @transform_2, window_bounds = array<i64: 1, 32>}, {pipeline_mode = #tpu.pipeline_mode<synchronous>, transform_indices = @transform_3, window_bounds = array<i64: 1024, 361>}, {pipeline_mode = #tpu.pipeline_mode<synchronous>, transform_indices = @transform_4, window_bounds = array<i64: 16, 32, 64>}, {pipeline_mode = #tpu.pipeline_mode<synchronous>, transform_indices = @transform_5, window_bounds = array<i64: 1, 64>}, {pipeline_mode = #tpu.pipeline_mode<synchronous>, transform_indices = @transform_6, window_bounds = array<i64: 360, 64>}, {pipeline_mode = #tpu.pipeline_mode<synchronous>, transform_indices = @transform_7, window_bounds = array<i64: 9, 64, 64>}, {pipeline_mode = #tpu.pipeline_mode<synchronous>, transform_indices = @transform_8, window_bounds = array<i64: 1, 64>}, {pipeline_mode = #tpu.pipeline_mode<synchronous>, transform_indices = @transform_9, window_bounds = array<i64: 2304, 512>}, {pipeline_mode = #tpu.pipeline_mode<synchronous>, transform_indices = @transform_10, window_bounds = array<i64: 1, 512>}, {pipeline_mode = #tpu.pipeline_mode<synchronous>, transform_indices = @transform_11, window_bounds = array<i64: 512, 128>}, {pipeline_mode = #tpu.pipeline_mode<synchronous>, transform_indices = @transform_12, window_bounds = array<i64: 1, 128>}, {transform_indices = @transform_13, window_bounds = array<i64: 1, 1, 128>}]} {
    %c0 = arith.constant 0 : index
    %c0_0 = arith.constant 0 : index
    %c0_1 = arith.constant 0 : index
    %0 = vector.load %arg1[%c0, %c0_0, %c0_1] : memref<1x361x256xbf16, #tpu.memory_space<vmem>>, vector<1x361x256xbf16>
    %1 = vector.shape_cast %0 : vector<1x361x256xbf16> to vector<361x256xbf16>
    %c0_2 = arith.constant 0 : index
    %c0_3 = arith.constant 0 : index
    %2 = vector.load %arg2[%c0_2, %c0_3] : memref<256x32xbf16, #tpu.memory_space<vmem>>, vector<256x32xbf16>
    %cst = arith.constant dense<0.000000e+00> : vector<361x32xf32>
    %3 = tpu.matmul %1, %2, %cst {dimension_numbers = #tpu.dot_dimension_numbers<[1], [0], [0], [1], [0, 0, 1, 1], [], []>} : vector<361x256xbf16>, vector<256x32xbf16>, vector<361x32xf32> -> vector<361x32xf32>
    %c0_4 = arith.constant 0 : index
    %c0_5 = arith.constant 0 : index
    %4 = vector.load %arg3[%c0_4, %c0_5] : memref<1x32xf32, #tpu.memory_space<vmem>>, vector<1x32xf32>
    %5 = vector.broadcast %4 : vector<1x32xf32> to vector<361x32xf32>
    %6 = arith.addf %3, %5 : vector<361x32xf32>
    %cst_6 = arith.constant 0.000000e+00 : f32
    %7 = vector.broadcast %cst_6 : f32 to vector<361x32xf32>
    %8 = arith.maximumf %6, %7 : vector<361x32xf32>
    %9 = arith.truncf %8 : vector<361x32xf32> to vector<361x32xbf16>
    %c0_7 = arith.constant 0 : index
    %c0_8 = arith.constant 0 : index
    %10 = vector.load %arg4[%c0_7, %c0_8] : memref<1024x361xbf16, #tpu.memory_space<vmem>>, vector<1024x361xbf16>
    %cst_9 = arith.constant dense<0.000000e+00> : vector<1024x32xf32>
    %11 = tpu.matmul %10, %9, %cst_9 {dimension_numbers = #tpu.dot_dimension_numbers<[1], [0], [0], [1], [0, 0, 1, 1], [], []>} : vector<1024x361xbf16>, vector<361x32xbf16>, vector<1024x32xf32> -> vector<1024x32xf32>
    %12 = arith.truncf %11 : vector<1024x32xf32> to vector<1024x32xbf16>
    %cst_10 = arith.constant 0.000000e+00 : f32
    %13 = vector.broadcast %cst_10 : f32 to vector<64x64xf32>
    %14 = vector.extract_strided_slice %12 {offsets = [0, 0], sizes = [64, 32], strides = [1, 1]} : vector<1024x32xbf16> to vector<64x32xbf16>
    %c0_11 = arith.constant 0 : index
    %c0_12 = arith.constant 0 : index
    %c0_13 = arith.constant 0 : index
    %15 = vector.load %arg5[%c0_11, %c0_12, %c0_13] : memref<16x32x64xbf16, #tpu.memory_space<vmem>>, vector<1x32x64xbf16>
    %16 = vector.shape_cast %15 : vector<1x32x64xbf16> to vector<32x64xbf16>
    %cst_14 = arith.constant dense<0.000000e+00> : vector<64x64xf32>
    %17 = tpu.matmul %14, %16, %cst_14 {dimension_numbers = #tpu.dot_dimension_numbers<[1], [0], [0], [1], [0, 0, 1, 1], [], []>} : vector<64x32xbf16>, vector<32x64xbf16>, vector<64x64xf32> -> vector<64x64xf32>
    %18 = arith.addf %13, %17 : vector<64x64xf32>
    %19 = vector.extract_strided_slice %12 {offsets = [64, 0], sizes = [64, 32], strides = [1, 1]} : vector<1024x32xbf16> to vector<64x32xbf16>
    %c1 = arith.constant 1 : index
    %c0_15 = arith.constant 0 : index
    %c0_16 = arith.constant 0 : index
    %20 = vector.load %arg5[%c1, %c0_15, %c0_16] : memref<16x32x64xbf16, #tpu.memory_space<vmem>>, vector<1x32x64xbf16>
    %21 = vector.shape_cast %20 : vector<1x32x64xbf16> to vector<32x64xbf16>
    %cst_17 = arith.constant dense<0.000000e+00> : vector<64x64xf32>
    %22 = tpu.matmul %19, %21, %cst_17 {dimension_numbers = #tpu.dot_dimension_numbers<[1], [0], [0], [1], [0, 0, 1, 1], [], []>} : vector<64x32xbf16>, vector<32x64xbf16>, vector<64x64xf32> -> vector<64x64xf32>
    %23 = arith.addf %18, %22 : vector<64x64xf32>
    %24 = vector.extract_strided_slice %12 {offsets = [128, 0], sizes = [64, 32], strides = [1, 1]} : vector<1024x32xbf16> to vector<64x32xbf16>
    %c2 = arith.constant 2 : index
    %c0_18 = arith.constant 0 : index
    %c0_19 = arith.constant 0 : index
    %25 = vector.load %arg5[%c2, %c0_18, %c0_19] : memref<16x32x64xbf16, #tpu.memory_space<vmem>>, vector<1x32x64xbf16>
    %26 = vector.shape_cast %25 : vector<1x32x64xbf16> to vector<32x64xbf16>
    %cst_20 = arith.constant dense<0.000000e+00> : vector<64x64xf32>
    %27 = tpu.matmul %24, %26, %cst_20 {dimension_numbers = #tpu.dot_dimension_numbers<[1], [0], [0], [1], [0, 0, 1, 1], [], []>} : vector<64x32xbf16>, vector<32x64xbf16>, vector<64x64xf32> -> vector<64x64xf32>
    %28 = arith.addf %23, %27 : vector<64x64xf32>
    %29 = vector.extract_strided_slice %12 {offsets = [192, 0], sizes = [64, 32], strides = [1, 1]} : vector<1024x32xbf16> to vector<64x32xbf16>
    %c3 = arith.constant 3 : index
    %c0_21 = arith.constant 0 : index
    %c0_22 = arith.constant 0 : index
    %30 = vector.load %arg5[%c3, %c0_21, %c0_22] : memref<16x32x64xbf16, #tpu.memory_space<vmem>>, vector<1x32x64xbf16>
    %31 = vector.shape_cast %30 : vector<1x32x64xbf16> to vector<32x64xbf16>
    %cst_23 = arith.constant dense<0.000000e+00> : vector<64x64xf32>
    %32 = tpu.matmul %29, %31, %cst_23 {dimension_numbers = #tpu.dot_dimension_numbers<[1], [0], [0], [1], [0, 0, 1, 1], [], []>} : vector<64x32xbf16>, vector<32x64xbf16>, vector<64x64xf32> -> vector<64x64xf32>
    %33 = arith.addf %28, %32 : vector<64x64xf32>
    %34 = vector.extract_strided_slice %12 {offsets = [256, 0], sizes = [64, 32], strides = [1, 1]} : vector<1024x32xbf16> to vector<64x32xbf16>
    %c4 = arith.constant 4 : index
    %c0_24 = arith.constant 0 : index
    %c0_25 = arith.constant 0 : index
    %35 = vector.load %arg5[%c4, %c0_24, %c0_25] : memref<16x32x64xbf16, #tpu.memory_space<vmem>>, vector<1x32x64xbf16>
    %36 = vector.shape_cast %35 : vector<1x32x64xbf16> to vector<32x64xbf16>
    %cst_26 = arith.constant dense<0.000000e+00> : vector<64x64xf32>
    %37 = tpu.matmul %34, %36, %cst_26 {dimension_numbers = #tpu.dot_dimension_numbers<[1], [0], [0], [1], [0, 0, 1, 1], [], []>} : vector<64x32xbf16>, vector<32x64xbf16>, vector<64x64xf32> -> vector<64x64xf32>
    %38 = arith.addf %33, %37 : vector<64x64xf32>
    %39 = vector.extract_strided_slice %12 {offsets = [320, 0], sizes = [64, 32], strides = [1, 1]} : vector<1024x32xbf16> to vector<64x32xbf16>
    %c5 = arith.constant 5 : index
    %c0_27 = arith.constant 0 : index
    %c0_28 = arith.constant 0 : index
    %40 = vector.load %arg5[%c5, %c0_27, %c0_28] : memref<16x32x64xbf16, #tpu.memory_space<vmem>>, vector<1x32x64xbf16>
    %41 = vector.shape_cast %40 : vector<1x32x64xbf16> to vector<32x64xbf16>
    %cst_29 = arith.constant dense<0.000000e+00> : vector<64x64xf32>
    %42 = tpu.matmul %39, %41, %cst_29 {dimension_numbers = #tpu.dot_dimension_numbers<[1], [0], [0], [1], [0, 0, 1, 1], [], []>} : vector<64x32xbf16>, vector<32x64xbf16>, vector<64x64xf32> -> vector<64x64xf32>
    %43 = arith.addf %38, %42 : vector<64x64xf32>
    %44 = vector.extract_strided_slice %12 {offsets = [384, 0], sizes = [64, 32], strides = [1, 1]} : vector<1024x32xbf16> to vector<64x32xbf16>
    %c6 = arith.constant 6 : index
    %c0_30 = arith.constant 0 : index
    %c0_31 = arith.constant 0 : index
    %45 = vector.load %arg5[%c6, %c0_30, %c0_31] : memref<16x32x64xbf16, #tpu.memory_space<vmem>>, vector<1x32x64xbf16>
    %46 = vector.shape_cast %45 : vector<1x32x64xbf16> to vector<32x64xbf16>
    %cst_32 = arith.constant dense<0.000000e+00> : vector<64x64xf32>
    %47 = tpu.matmul %44, %46, %cst_32 {dimension_numbers = #tpu.dot_dimension_numbers<[1], [0], [0], [1], [0, 0, 1, 1], [], []>} : vector<64x32xbf16>, vector<32x64xbf16>, vector<64x64xf32> -> vector<64x64xf32>
    %48 = arith.addf %43, %47 : vector<64x64xf32>
    %49 = vector.extract_strided_slice %12 {offsets = [448, 0], sizes = [64, 32], strides = [1, 1]} : vector<1024x32xbf16> to vector<64x32xbf16>
    %c7 = arith.constant 7 : index
    %c0_33 = arith.constant 0 : index
    %c0_34 = arith.constant 0 : index
    %50 = vector.load %arg5[%c7, %c0_33, %c0_34] : memref<16x32x64xbf16, #tpu.memory_space<vmem>>, vector<1x32x64xbf16>
    %51 = vector.shape_cast %50 : vector<1x32x64xbf16> to vector<32x64xbf16>
    %cst_35 = arith.constant dense<0.000000e+00> : vector<64x64xf32>
    %52 = tpu.matmul %49, %51, %cst_35 {dimension_numbers = #tpu.dot_dimension_numbers<[1], [0], [0], [1], [0, 0, 1, 1], [], []>} : vector<64x32xbf16>, vector<32x64xbf16>, vector<64x64xf32> -> vector<64x64xf32>
    %53 = arith.addf %48, %52 : vector<64x64xf32>
    %54 = vector.extract_strided_slice %12 {offsets = [512, 0], sizes = [64, 32], strides = [1, 1]} : vector<1024x32xbf16> to vector<64x32xbf16>
    %c8 = arith.constant 8 : index
    %c0_36 = arith.constant 0 : index
    %c0_37 = arith.constant 0 : index
    %55 = vector.load %arg5[%c8, %c0_36, %c0_37] : memref<16x32x64xbf16, #tpu.memory_space<vmem>>, vector<1x32x64xbf16>
    %56 = vector.shape_cast %55 : vector<1x32x64xbf16> to vector<32x64xbf16>
    %cst_38 = arith.constant dense<0.000000e+00> : vector<64x64xf32>
    %57 = tpu.matmul %54, %56, %cst_38 {dimension_numbers = #tpu.dot_dimension_numbers<[1], [0], [0], [1], [0, 0, 1, 1], [], []>} : vector<64x32xbf16>, vector<32x64xbf16>, vector<64x64xf32> -> vector<64x64xf32>
    %58 = arith.addf %53, %57 : vector<64x64xf32>
    %59 = vector.extract_strided_slice %12 {offsets = [576, 0], sizes = [64, 32], strides = [1, 1]} : vector<1024x32xbf16> to vector<64x32xbf16>
    %c9 = arith.constant 9 : index
    %c0_39 = arith.constant 0 : index
    %c0_40 = arith.constant 0 : index
    %60 = vector.load %arg5[%c9, %c0_39, %c0_40] : memref<16x32x64xbf16, #tpu.memory_space<vmem>>, vector<1x32x64xbf16>
    %61 = vector.shape_cast %60 : vector<1x32x64xbf16> to vector<32x64xbf16>
    %cst_41 = arith.constant dense<0.000000e+00> : vector<64x64xf32>
    %62 = tpu.matmul %59, %61, %cst_41 {dimension_numbers = #tpu.dot_dimension_numbers<[1], [0], [0], [1], [0, 0, 1, 1], [], []>} : vector<64x32xbf16>, vector<32x64xbf16>, vector<64x64xf32> -> vector<64x64xf32>
    %63 = arith.addf %58, %62 : vector<64x64xf32>
    %64 = vector.extract_strided_slice %12 {offsets = [640, 0], sizes = [64, 32], strides = [1, 1]} : vector<1024x32xbf16> to vector<64x32xbf16>
    %c10 = arith.constant 10 : index
    %c0_42 = arith.constant 0 : index
    %c0_43 = arith.constant 0 : index
    %65 = vector.load %arg5[%c10, %c0_42, %c0_43] : memref<16x32x64xbf16, #tpu.memory_space<vmem>>, vector<1x32x64xbf16>
    %66 = vector.shape_cast %65 : vector<1x32x64xbf16> to vector<32x64xbf16>
    %cst_44 = arith.constant dense<0.000000e+00> : vector<64x64xf32>
    %67 = tpu.matmul %64, %66, %cst_44 {dimension_numbers = #tpu.dot_dimension_numbers<[1], [0], [0], [1], [0, 0, 1, 1], [], []>} : vector<64x32xbf16>, vector<32x64xbf16>, vector<64x64xf32> -> vector<64x64xf32>
    %68 = arith.addf %63, %67 : vector<64x64xf32>
    %69 = vector.extract_strided_slice %12 {offsets = [704, 0], sizes = [64, 32], strides = [1, 1]} : vector<1024x32xbf16> to vector<64x32xbf16>
    %c11 = arith.constant 11 : index
    %c0_45 = arith.constant 0 : index
    %c0_46 = arith.constant 0 : index
    %70 = vector.load %arg5[%c11, %c0_45, %c0_46] : memref<16x32x64xbf16, #tpu.memory_space<vmem>>, vector<1x32x64xbf16>
    %71 = vector.shape_cast %70 : vector<1x32x64xbf16> to vector<32x64xbf16>
    %cst_47 = arith.constant dense<0.000000e+00> : vector<64x64xf32>
    %72 = tpu.matmul %69, %71, %cst_47 {dimension_numbers = #tpu.dot_dimension_numbers<[1], [0], [0], [1], [0, 0, 1, 1], [], []>} : vector<64x32xbf16>, vector<32x64xbf16>, vector<64x64xf32> -> vector<64x64xf32>
    %73 = arith.addf %68, %72 : vector<64x64xf32>
    %74 = vector.extract_strided_slice %12 {offsets = [768, 0], sizes = [64, 32], strides = [1, 1]} : vector<1024x32xbf16> to vector<64x32xbf16>
    %c12 = arith.constant 12 : index
    %c0_48 = arith.constant 0 : index
    %c0_49 = arith.constant 0 : index
    %75 = vector.load %arg5[%c12, %c0_48, %c0_49] : memref<16x32x64xbf16, #tpu.memory_space<vmem>>, vector<1x32x64xbf16>
    %76 = vector.shape_cast %75 : vector<1x32x64xbf16> to vector<32x64xbf16>
    %cst_50 = arith.constant dense<0.000000e+00> : vector<64x64xf32>
    %77 = tpu.matmul %74, %76, %cst_50 {dimension_numbers = #tpu.dot_dimension_numbers<[1], [0], [0], [1], [0, 0, 1, 1], [], []>} : vector<64x32xbf16>, vector<32x64xbf16>, vector<64x64xf32> -> vector<64x64xf32>
    %78 = arith.addf %73, %77 : vector<64x64xf32>
    %79 = vector.extract_strided_slice %12 {offsets = [832, 0], sizes = [64, 32], strides = [1, 1]} : vector<1024x32xbf16> to vector<64x32xbf16>
    %c13 = arith.constant 13 : index
    %c0_51 = arith.constant 0 : index
    %c0_52 = arith.constant 0 : index
    %80 = vector.load %arg5[%c13, %c0_51, %c0_52] : memref<16x32x64xbf16, #tpu.memory_space<vmem>>, vector<1x32x64xbf16>
    %81 = vector.shape_cast %80 : vector<1x32x64xbf16> to vector<32x64xbf16>
    %cst_53 = arith.constant dense<0.000000e+00> : vector<64x64xf32>
    %82 = tpu.matmul %79, %81, %cst_53 {dimension_numbers = #tpu.dot_dimension_numbers<[1], [0], [0], [1], [0, 0, 1, 1], [], []>} : vector<64x32xbf16>, vector<32x64xbf16>, vector<64x64xf32> -> vector<64x64xf32>
    %83 = arith.addf %78, %82 : vector<64x64xf32>
    %84 = vector.extract_strided_slice %12 {offsets = [896, 0], sizes = [64, 32], strides = [1, 1]} : vector<1024x32xbf16> to vector<64x32xbf16>
    %c14 = arith.constant 14 : index
    %c0_54 = arith.constant 0 : index
    %c0_55 = arith.constant 0 : index
    %85 = vector.load %arg5[%c14, %c0_54, %c0_55] : memref<16x32x64xbf16, #tpu.memory_space<vmem>>, vector<1x32x64xbf16>
    %86 = vector.shape_cast %85 : vector<1x32x64xbf16> to vector<32x64xbf16>
    %cst_56 = arith.constant dense<0.000000e+00> : vector<64x64xf32>
    %87 = tpu.matmul %84, %86, %cst_56 {dimension_numbers = #tpu.dot_dimension_numbers<[1], [0], [0], [1], [0, 0, 1, 1], [], []>} : vector<64x32xbf16>, vector<32x64xbf16>, vector<64x64xf32> -> vector<64x64xf32>
    %88 = arith.addf %83, %87 : vector<64x64xf32>
    %89 = vector.extract_strided_slice %12 {offsets = [960, 0], sizes = [64, 32], strides = [1, 1]} : vector<1024x32xbf16> to vector<64x32xbf16>
    %c15 = arith.constant 15 : index
    %c0_57 = arith.constant 0 : index
    %c0_58 = arith.constant 0 : index
    %90 = vector.load %arg5[%c15, %c0_57, %c0_58] : memref<16x32x64xbf16, #tpu.memory_space<vmem>>, vector<1x32x64xbf16>
    %91 = vector.shape_cast %90 : vector<1x32x64xbf16> to vector<32x64xbf16>
    %cst_59 = arith.constant dense<0.000000e+00> : vector<64x64xf32>
    %92 = tpu.matmul %89, %91, %cst_59 {dimension_numbers = #tpu.dot_dimension_numbers<[1], [0], [0], [1], [0, 0, 1, 1], [], []>} : vector<64x32xbf16>, vector<32x64xbf16>, vector<64x64xf32> -> vector<64x64xf32>
    %93 = arith.addf %88, %92 : vector<64x64xf32>
    %c0_60 = arith.constant 0 : index
    %c0_61 = arith.constant 0 : index
    %94 = vector.load %arg6[%c0_60, %c0_61] : memref<1x64xf32, #tpu.memory_space<vmem>>, vector<1x64xf32>
    %95 = vector.broadcast %94 : vector<1x64xf32> to vector<64x64xf32>
    %96 = arith.addf %93, %95 : vector<64x64xf32>
    %cst_62 = arith.constant 0.000000e+00 : f32
    %97 = vector.broadcast %cst_62 : f32 to vector<64x64xf32>
    %98 = arith.maximumf %96, %97 : vector<64x64xf32>
    %99 = arith.truncf %98 : vector<64x64xf32> to vector<64x64xbf16>
    %c0_63 = arith.constant 0 : index
    %c0_64 = arith.constant 0 : index
    %100 = vector.load %arg7[%c0_63, %c0_64] : memref<360x64xbf16, #tpu.memory_space<vmem>>, vector<360x64xbf16>
    %cst_65 = arith.constant dense<0.000000e+00> : vector<360x64xf32>
    %101 = tpu.matmul %100, %99, %cst_65 {dimension_numbers = #tpu.dot_dimension_numbers<[1], [0], [0], [1], [0, 0, 1, 1], [], []>} : vector<360x64xbf16>, vector<64x64xbf16>, vector<360x64xf32> -> vector<360x64xf32>
    %102 = arith.truncf %101 : vector<360x64xf32> to vector<360x64xbf16>
    %cst_66 = arith.constant 0.000000e+00 : f32
    %103 = vector.broadcast %cst_66 : f32 to vector<40x64xf32>
    %104 = vector.extract_strided_slice %102 {offsets = [0, 0], sizes = [40, 64], strides = [1, 1]} : vector<360x64xbf16> to vector<40x64xbf16>
    %c0_67 = arith.constant 0 : index
    %c0_68 = arith.constant 0 : index
    %c0_69 = arith.constant 0 : index
    %105 = vector.load %arg8[%c0_67, %c0_68, %c0_69] : memref<9x64x64xbf16, #tpu.memory_space<vmem>>, vector<1x64x64xbf16>
    %106 = vector.shape_cast %105 : vector<1x64x64xbf16> to vector<64x64xbf16>
    %cst_70 = arith.constant dense<0.000000e+00> : vector<40x64xf32>
    %107 = tpu.matmul %104, %106, %cst_70 {dimension_numbers = #tpu.dot_dimension_numbers<[1], [0], [0], [1], [0, 0, 1, 1], [], []>} : vector<40x64xbf16>, vector<64x64xbf16>, vector<40x64xf32> -> vector<40x64xf32>
    %108 = arith.addf %103, %107 : vector<40x64xf32>
    %109 = vector.extract_strided_slice %102 {offsets = [40, 0], sizes = [40, 64], strides = [1, 1]} : vector<360x64xbf16> to vector<40x64xbf16>
    %c1_71 = arith.constant 1 : index
    %c0_72 = arith.constant 0 : index
    %c0_73 = arith.constant 0 : index
    %110 = vector.load %arg8[%c1_71, %c0_72, %c0_73] : memref<9x64x64xbf16, #tpu.memory_space<vmem>>, vector<1x64x64xbf16>
    %111 = vector.shape_cast %110 : vector<1x64x64xbf16> to vector<64x64xbf16>
    %cst_74 = arith.constant dense<0.000000e+00> : vector<40x64xf32>
    %112 = tpu.matmul %109, %111, %cst_74 {dimension_numbers = #tpu.dot_dimension_numbers<[1], [0], [0], [1], [0, 0, 1, 1], [], []>} : vector<40x64xbf16>, vector<64x64xbf16>, vector<40x64xf32> -> vector<40x64xf32>
    %113 = arith.addf %108, %112 : vector<40x64xf32>
    %114 = vector.extract_strided_slice %102 {offsets = [80, 0], sizes = [40, 64], strides = [1, 1]} : vector<360x64xbf16> to vector<40x64xbf16>
    %c2_75 = arith.constant 2 : index
    %c0_76 = arith.constant 0 : index
    %c0_77 = arith.constant 0 : index
    %115 = vector.load %arg8[%c2_75, %c0_76, %c0_77] : memref<9x64x64xbf16, #tpu.memory_space<vmem>>, vector<1x64x64xbf16>
    %116 = vector.shape_cast %115 : vector<1x64x64xbf16> to vector<64x64xbf16>
    %cst_78 = arith.constant dense<0.000000e+00> : vector<40x64xf32>
    %117 = tpu.matmul %114, %116, %cst_78 {dimension_numbers = #tpu.dot_dimension_numbers<[1], [0], [0], [1], [0, 0, 1, 1], [], []>} : vector<40x64xbf16>, vector<64x64xbf16>, vector<40x64xf32> -> vector<40x64xf32>
    %118 = arith.addf %113, %117 : vector<40x64xf32>
    %119 = vector.extract_strided_slice %102 {offsets = [120, 0], sizes = [40, 64], strides = [1, 1]} : vector<360x64xbf16> to vector<40x64xbf16>
    %c3_79 = arith.constant 3 : index
    %c0_80 = arith.constant 0 : index
    %c0_81 = arith.constant 0 : index
    %120 = vector.load %arg8[%c3_79, %c0_80, %c0_81] : memref<9x64x64xbf16, #tpu.memory_space<vmem>>, vector<1x64x64xbf16>
    %121 = vector.shape_cast %120 : vector<1x64x64xbf16> to vector<64x64xbf16>
    %cst_82 = arith.constant dense<0.000000e+00> : vector<40x64xf32>
    %122 = tpu.matmul %119, %121, %cst_82 {dimension_numbers = #tpu.dot_dimension_numbers<[1], [0], [0], [1], [0, 0, 1, 1], [], []>} : vector<40x64xbf16>, vector<64x64xbf16>, vector<40x64xf32> -> vector<40x64xf32>
    %123 = arith.addf %118, %122 : vector<40x64xf32>
    %124 = vector.extract_strided_slice %102 {offsets = [160, 0], sizes = [40, 64], strides = [1, 1]} : vector<360x64xbf16> to vector<40x64xbf16>
    %c4_83 = arith.constant 4 : index
    %c0_84 = arith.constant 0 : index
    %c0_85 = arith.constant 0 : index
    %125 = vector.load %arg8[%c4_83, %c0_84, %c0_85] : memref<9x64x64xbf16, #tpu.memory_space<vmem>>, vector<1x64x64xbf16>
    %126 = vector.shape_cast %125 : vector<1x64x64xbf16> to vector<64x64xbf16>
    %cst_86 = arith.constant dense<0.000000e+00> : vector<40x64xf32>
    %127 = tpu.matmul %124, %126, %cst_86 {dimension_numbers = #tpu.dot_dimension_numbers<[1], [0], [0], [1], [0, 0, 1, 1], [], []>} : vector<40x64xbf16>, vector<64x64xbf16>, vector<40x64xf32> -> vector<40x64xf32>
    %128 = arith.addf %123, %127 : vector<40x64xf32>
    %129 = vector.extract_strided_slice %102 {offsets = [200, 0], sizes = [40, 64], strides = [1, 1]} : vector<360x64xbf16> to vector<40x64xbf16>
    %c5_87 = arith.constant 5 : index
    %c0_88 = arith.constant 0 : index
    %c0_89 = arith.constant 0 : index
    %130 = vector.load %arg8[%c5_87, %c0_88, %c0_89] : memref<9x64x64xbf16, #tpu.memory_space<vmem>>, vector<1x64x64xbf16>
    %131 = vector.shape_cast %130 : vector<1x64x64xbf16> to vector<64x64xbf16>
    %cst_90 = arith.constant dense<0.000000e+00> : vector<40x64xf32>
    %132 = tpu.matmul %129, %131, %cst_90 {dimension_numbers = #tpu.dot_dimension_numbers<[1], [0], [0], [1], [0, 0, 1, 1], [], []>} : vector<40x64xbf16>, vector<64x64xbf16>, vector<40x64xf32> -> vector<40x64xf32>
    %133 = arith.addf %128, %132 : vector<40x64xf32>
    %134 = vector.extract_strided_slice %102 {offsets = [240, 0], sizes = [40, 64], strides = [1, 1]} : vector<360x64xbf16> to vector<40x64xbf16>
    %c6_91 = arith.constant 6 : index
    %c0_92 = arith.constant 0 : index
    %c0_93 = arith.constant 0 : index
    %135 = vector.load %arg8[%c6_91, %c0_92, %c0_93] : memref<9x64x64xbf16, #tpu.memory_space<vmem>>, vector<1x64x64xbf16>
    %136 = vector.shape_cast %135 : vector<1x64x64xbf16> to vector<64x64xbf16>
    %cst_94 = arith.constant dense<0.000000e+00> : vector<40x64xf32>
    %137 = tpu.matmul %134, %136, %cst_94 {dimension_numbers = #tpu.dot_dimension_numbers<[1], [0], [0], [1], [0, 0, 1, 1], [], []>} : vector<40x64xbf16>, vector<64x64xbf16>, vector<40x64xf32> -> vector<40x64xf32>
    %138 = arith.addf %133, %137 : vector<40x64xf32>
    %139 = vector.extract_strided_slice %102 {offsets = [280, 0], sizes = [40, 64], strides = [1, 1]} : vector<360x64xbf16> to vector<40x64xbf16>
    %c7_95 = arith.constant 7 : index
    %c0_96 = arith.constant 0 : index
    %c0_97 = arith.constant 0 : index
    %140 = vector.load %arg8[%c7_95, %c0_96, %c0_97] : memref<9x64x64xbf16, #tpu.memory_space<vmem>>, vector<1x64x64xbf16>
    %141 = vector.shape_cast %140 : vector<1x64x64xbf16> to vector<64x64xbf16>
    %cst_98 = arith.constant dense<0.000000e+00> : vector<40x64xf32>
    %142 = tpu.matmul %139, %141, %cst_98 {dimension_numbers = #tpu.dot_dimension_numbers<[1], [0], [0], [1], [0, 0, 1, 1], [], []>} : vector<40x64xbf16>, vector<64x64xbf16>, vector<40x64xf32> -> vector<40x64xf32>
    %143 = arith.addf %138, %142 : vector<40x64xf32>
    %144 = vector.extract_strided_slice %102 {offsets = [320, 0], sizes = [40, 64], strides = [1, 1]} : vector<360x64xbf16> to vector<40x64xbf16>
    %c8_99 = arith.constant 8 : index
    %c0_100 = arith.constant 0 : index
    %c0_101 = arith.constant 0 : index
    %145 = vector.load %arg8[%c8_99, %c0_100, %c0_101] : memref<9x64x64xbf16, #tpu.memory_space<vmem>>, vector<1x64x64xbf16>
    %146 = vector.shape_cast %145 : vector<1x64x64xbf16> to vector<64x64xbf16>
    %cst_102 = arith.constant dense<0.000000e+00> : vector<40x64xf32>
    %147 = tpu.matmul %144, %146, %cst_102 {dimension_numbers = #tpu.dot_dimension_numbers<[1], [0], [0], [1], [0, 0, 1, 1], [], []>} : vector<40x64xbf16>, vector<64x64xbf16>, vector<40x64xf32> -> vector<40x64xf32>
    %148 = arith.addf %143, %147 : vector<40x64xf32>
    %149 = vector.extract_strided_slice %148 {offsets = [0, 0], sizes = [36, 64], strides = [1, 1]} : vector<40x64xf32> to vector<36x64xf32>
    %c0_103 = arith.constant 0 : index
    %c0_104 = arith.constant 0 : index
    %150 = vector.load %arg9[%c0_103, %c0_104] : memref<1x64xf32, #tpu.memory_space<vmem>>, vector<1x64xf32>
    %151 = vector.broadcast %150 : vector<1x64xf32> to vector<36x64xf32>
    %152 = arith.addf %149, %151 : vector<36x64xf32>
    %cst_105 = arith.constant 0.000000e+00 : f32
    %153 = vector.broadcast %cst_105 : f32 to vector<36x64xf32>
    %154 = arith.maximumf %152, %153 : vector<36x64xf32>
    %155 = vector.extract_strided_slice %154 {offsets = [0, 0], sizes = [1, 64], strides = [1, 1]} : vector<36x64xf32> to vector<1x64xf32>
    %c0_106 = arith.constant 0 : index
    %c0_107 = arith.constant 0 : index
    %156 = vector.load %arg15[%c0_106, %c0_107] : memref<1x2304xf32, #tpu.memory_space<vmem>>, vector<1x64xf32>
    tpu.vector_store %arg15[%c0_106, %c0_107], %155 {strides = array<i32>} : memref<1x2304xf32, #tpu.memory_space<vmem>>, vector<1x64xf32>,
    %157 = vector.extract_strided_slice %154 {offsets = [1, 0], sizes = [1, 64], strides = [1, 1]} : vector<36x64xf32> to vector<1x64xf32>
    %c0_108 = arith.constant 0 : index
    %c64 = arith.constant 64 : index
    %158 = vector.load %arg15[%c0_108, %c64] : memref<1x2304xf32, #tpu.memory_space<vmem>>, vector<1x64xf32>
    tpu.vector_store %arg15[%c0_108, %c64], %157 {strides = array<i32>} : memref<1x2304xf32, #tpu.memory_space<vmem>>, vector<1x64xf32>,
    %159 = vector.extract_strided_slice %154 {offsets = [2, 0], sizes = [1, 64], strides = [1, 1]} : vector<36x64xf32> to vector<1x64xf32>
    %c0_109 = arith.constant 0 : index
    %c128 = arith.constant 128 : index
    %160 = vector.load %arg15[%c0_109, %c128] : memref<1x2304xf32, #tpu.memory_space<vmem>>, vector<1x64xf32>
    tpu.vector_store %arg15[%c0_109, %c128], %159 {strides = array<i32>} : memref<1x2304xf32, #tpu.memory_space<vmem>>, vector<1x64xf32>,
    %161 = vector.extract_strided_slice %154 {offsets = [3, 0], sizes = [1, 64], strides = [1, 1]} : vector<36x64xf32> to vector<1x64xf32>
    %c0_110 = arith.constant 0 : index
    %c192 = arith.constant 192 : index
    %162 = vector.load %arg15[%c0_110, %c192] : memref<1x2304xf32, #tpu.memory_space<vmem>>, vector<1x64xf32>
    tpu.vector_store %arg15[%c0_110, %c192], %161 {strides = array<i32>} : memref<1x2304xf32, #tpu.memory_space<vmem>>, vector<1x64xf32>,
    %163 = vector.extract_strided_slice %154 {offsets = [4, 0], sizes = [1, 64], strides = [1, 1]} : vector<36x64xf32> to vector<1x64xf32>
    %c0_111 = arith.constant 0 : index
    %c256 = arith.constant 256 : index
    %164 = vector.load %arg15[%c0_111, %c256] : memref<1x2304xf32, #tpu.memory_space<vmem>>, vector<1x64xf32>
    tpu.vector_store %arg15[%c0_111, %c256], %163 {strides = array<i32>} : memref<1x2304xf32, #tpu.memory_space<vmem>>, vector<1x64xf32>,
    %165 = vector.extract_strided_slice %154 {offsets = [5, 0], sizes = [1, 64], strides = [1, 1]} : vector<36x64xf32> to vector<1x64xf32>
    %c0_112 = arith.constant 0 : index
    %c320 = arith.constant 320 : index
    %166 = vector.load %arg15[%c0_112, %c320] : memref<1x2304xf32, #tpu.memory_space<vmem>>, vector<1x64xf32>
    tpu.vector_store %arg15[%c0_112, %c320], %165 {strides = array<i32>} : memref<1x2304xf32, #tpu.memory_space<vmem>>, vector<1x64xf32>,
    %167 = vector.extract_strided_slice %154 {offsets = [6, 0], sizes = [1, 64], strides = [1, 1]} : vector<36x64xf32> to vector<1x64xf32>
    %c0_113 = arith.constant 0 : index
    %c384 = arith.constant 384 : index
    %168 = vector.load %arg15[%c0_113, %c384] : memref<1x2304xf32, #tpu.memory_space<vmem>>, vector<1x64xf32>
    tpu.vector_store %arg15[%c0_113, %c384], %167 {strides = array<i32>} : memref<1x2304xf32, #tpu.memory_space<vmem>>, vector<1x64xf32>,
    %169 = vector.extract_strided_slice %154 {offsets = [7, 0], sizes = [1, 64], strides = [1, 1]} : vector<36x64xf32> to vector<1x64xf32>
    %c0_114 = arith.constant 0 : index
    %c448 = arith.constant 448 : index
    %170 = vector.load %arg15[%c0_114, %c448] : memref<1x2304xf32, #tpu.memory_space<vmem>>, vector<1x64xf32>
    tpu.vector_store %arg15[%c0_114, %c448], %169 {strides = array<i32>} : memref<1x2304xf32, #tpu.memory_space<vmem>>, vector<1x64xf32>,
    %171 = vector.extract_strided_slice %154 {offsets = [8, 0], sizes = [1, 64], strides = [1, 1]} : vector<36x64xf32> to vector<1x64xf32>
    %c0_115 = arith.constant 0 : index
    %c512 = arith.constant 512 : index
    %172 = vector.load %arg15[%c0_115, %c512] : memref<1x2304xf32, #tpu.memory_space<vmem>>, vector<1x64xf32>
    tpu.vector_store %arg15[%c0_115, %c512], %171 {strides = array<i32>} : memref<1x2304xf32, #tpu.memory_space<vmem>>, vector<1x64xf32>,
    %173 = vector.extract_strided_slice %154 {offsets = [9, 0], sizes = [1, 64], strides = [1, 1]} : vector<36x64xf32> to vector<1x64xf32>
    %c0_116 = arith.constant 0 : index
    %c576 = arith.constant 576 : index
    %174 = vector.load %arg15[%c0_116, %c576] : memref<1x2304xf32, #tpu.memory_space<vmem>>, vector<1x64xf32>
    tpu.vector_store %arg15[%c0_116, %c576], %173 {strides = array<i32>} : memref<1x2304xf32, #tpu.memory_space<vmem>>, vector<1x64xf32>,
    %175 = vector.extract_strided_slice %154 {offsets = [10, 0], sizes = [1, 64], strides = [1, 1]} : vector<36x64xf32> to vector<1x64xf32>
    %c0_117 = arith.constant 0 : index
    %c640 = arith.constant 640 : index
    %176 = vector.load %arg15[%c0_117, %c640] : memref<1x2304xf32, #tpu.memory_space<vmem>>, vector<1x64xf32>
    tpu.vector_store %arg15[%c0_117, %c640], %175 {strides = array<i32>} : memref<1x2304xf32, #tpu.memory_space<vmem>>, vector<1x64xf32>,
    %177 = vector.extract_strided_slice %154 {offsets = [11, 0], sizes = [1, 64], strides = [1, 1]} : vector<36x64xf32> to vector<1x64xf32>
    %c0_118 = arith.constant 0 : index
    %c704 = arith.constant 704 : index
    %178 = vector.load %arg15[%c0_118, %c704] : memref<1x2304xf32, #tpu.memory_space<vmem>>, vector<1x64xf32>
    tpu.vector_store %arg15[%c0_118, %c704], %177 {strides = array<i32>} : memref<1x2304xf32, #tpu.memory_space<vmem>>, vector<1x64xf32>,
    %179 = vector.extract_strided_slice %154 {offsets = [12, 0], sizes = [1, 64], strides = [1, 1]} : vector<36x64xf32> to vector<1x64xf32>
    %c0_119 = arith.constant 0 : index
    %c768 = arith.constant 768 : index
    %180 = vector.load %arg15[%c0_119, %c768] : memref<1x2304xf32, #tpu.memory_space<vmem>>, vector<1x64xf32>
    tpu.vector_store %arg15[%c0_119, %c768], %179 {strides = array<i32>} : memref<1x2304xf32, #tpu.memory_space<vmem>>, vector<1x64xf32>,
    %181 = vector.extract_strided_slice %154 {offsets = [13, 0], sizes = [1, 64], strides = [1, 1]} : vector<36x64xf32> to vector<1x64xf32>
    %c0_120 = arith.constant 0 : index
    %c832 = arith.constant 832 : index
    %182 = vector.load %arg15[%c0_120, %c832] : memref<1x2304xf32, #tpu.memory_space<vmem>>, vector<1x64xf32>
    tpu.vector_store %arg15[%c0_120, %c832], %181 {strides = array<i32>} : memref<1x2304xf32, #tpu.memory_space<vmem>>, vector<1x64xf32>,
    %183 = vector.extract_strided_slice %154 {offsets = [14, 0], sizes = [1, 64], strides = [1, 1]} : vector<36x64xf32> to vector<1x64xf32>
    %c0_121 = arith.constant 0 : index
    %c896 = arith.constant 896 : index
    %184 = vector.load %arg15[%c0_121, %c896] : memref<1x2304xf32, #tpu.memory_space<vmem>>, vector<1x64xf32>
    tpu.vector_store %arg15[%c0_121, %c896], %183 {strides = array<i32>} : memref<1x2304xf32, #tpu.memory_space<vmem>>, vector<1x64xf32>,
    %185 = vector.extract_strided_slice %154 {offsets = [15, 0], sizes = [1, 64], strides = [1, 1]} : vector<36x64xf32> to vector<1x64xf32>
    %c0_122 = arith.constant 0 : index
    %c960 = arith.constant 960 : index
    %186 = vector.load %arg15[%c0_122, %c960] : memref<1x2304xf32, #tpu.memory_space<vmem>>, vector<1x64xf32>
    tpu.vector_store %arg15[%c0_122, %c960], %185 {strides = array<i32>} : memref<1x2304xf32, #tpu.memory_space<vmem>>, vector<1x64xf32>,
    %187 = vector.extract_strided_slice %154 {offsets = [16, 0], sizes = [1, 64], strides = [1, 1]} : vector<36x64xf32> to vector<1x64xf32>
    %c0_123 = arith.constant 0 : index
    %c1024 = arith.constant 1024 : index
    %188 = vector.load %arg15[%c0_123, %c1024] : memref<1x2304xf32, #tpu.memory_space<vmem>>, vector<1x64xf32>
    tpu.vector_store %arg15[%c0_123, %c1024], %187 {strides = array<i32>} : memref<1x2304xf32, #tpu.memory_space<vmem>>, vector<1x64xf32>,
    %189 = vector.extract_strided_slice %154 {offsets = [17, 0], sizes = [1, 64], strides = [1, 1]} : vector<36x64xf32> to vector<1x64xf32>
    %c0_124 = arith.constant 0 : index
    %c1088 = arith.constant 1088 : index
    %190 = vector.load %arg15[%c0_124, %c1088] : memref<1x2304xf32, #tpu.memory_space<vmem>>, vector<1x64xf32>
    tpu.vector_store %arg15[%c0_124, %c1088], %189 {strides = array<i32>} : memref<1x2304xf32, #tpu.memory_space<vmem>>, vector<1x64xf32>,
    %191 = vector.extract_strided_slice %154 {offsets = [18, 0], sizes = [1, 64], strides = [1, 1]} : vector<36x64xf32> to vector<1x64xf32>
    %c0_125 = arith.constant 0 : index
    %c1152 = arith.constant 1152 : index
    %192 = vector.load %arg15[%c0_125, %c1152] : memref<1x2304xf32, #tpu.memory_space<vmem>>, vector<1x64xf32>
    tpu.vector_store %arg15[%c0_125, %c1152], %191 {strides = array<i32>} : memref<1x2304xf32, #tpu.memory_space<vmem>>, vector<1x64xf32>,
    %193 = vector.extract_strided_slice %154 {offsets = [19, 0], sizes = [1, 64], strides = [1, 1]} : vector<36x64xf32> to vector<1x64xf32>
    %c0_126 = arith.constant 0 : index
    %c1216 = arith.constant 1216 : index
    %194 = vector.load %arg15[%c0_126, %c1216] : memref<1x2304xf32, #tpu.memory_space<vmem>>, vector<1x64xf32>
    tpu.vector_store %arg15[%c0_126, %c1216], %193 {strides = array<i32>} : memref<1x2304xf32, #tpu.memory_space<vmem>>, vector<1x64xf32>,
    %195 = vector.extract_strided_slice %154 {offsets = [20, 0], sizes = [1, 64], strides = [1, 1]} : vector<36x64xf32> to vector<1x64xf32>
    %c0_127 = arith.constant 0 : index
    %c1280 = arith.constant 1280 : index
    %196 = vector.load %arg15[%c0_127, %c1280] : memref<1x2304xf32, #tpu.memory_space<vmem>>, vector<1x64xf32>
    tpu.vector_store %arg15[%c0_127, %c1280], %195 {strides = array<i32>} : memref<1x2304xf32, #tpu.memory_space<vmem>>, vector<1x64xf32>,
    %197 = vector.extract_strided_slice %154 {offsets = [21, 0], sizes = [1, 64], strides = [1, 1]} : vector<36x64xf32> to vector<1x64xf32>
    %c0_128 = arith.constant 0 : index
    %c1344 = arith.constant 1344 : index
    %198 = vector.load %arg15[%c0_128, %c1344] : memref<1x2304xf32, #tpu.memory_space<vmem>>, vector<1x64xf32>
    tpu.vector_store %arg15[%c0_128, %c1344], %197 {strides = array<i32>} : memref<1x2304xf32, #tpu.memory_space<vmem>>, vector<1x64xf32>,
    %199 = vector.extract_strided_slice %154 {offsets = [22, 0], sizes = [1, 64], strides = [1, 1]} : vector<36x64xf32> to vector<1x64xf32>
    %c0_129 = arith.constant 0 : index
    %c1408 = arith.constant 1408 : index
    %200 = vector.load %arg15[%c0_129, %c1408] : memref<1x2304xf32, #tpu.memory_space<vmem>>, vector<1x64xf32>
    tpu.vector_store %arg15[%c0_129, %c1408], %199 {strides = array<i32>} : memref<1x2304xf32, #tpu.memory_space<vmem>>, vector<1x64xf32>,
    %201 = vector.extract_strided_slice %154 {offsets = [23, 0], sizes = [1, 64], strides = [1, 1]} : vector<36x64xf32> to vector<1x64xf32>
    %c0_130 = arith.constant 0 : index
    %c1472 = arith.constant 1472 : index
    %202 = vector.load %arg15[%c0_130, %c1472] : memref<1x2304xf32, #tpu.memory_space<vmem>>, vector<1x64xf32>
    tpu.vector_store %arg15[%c0_130, %c1472], %201 {strides = array<i32>} : memref<1x2304xf32, #tpu.memory_space<vmem>>, vector<1x64xf32>,
    %203 = vector.extract_strided_slice %154 {offsets = [24, 0], sizes = [1, 64], strides = [1, 1]} : vector<36x64xf32> to vector<1x64xf32>
    %c0_131 = arith.constant 0 : index
    %c1536 = arith.constant 1536 : index
    %204 = vector.load %arg15[%c0_131, %c1536] : memref<1x2304xf32, #tpu.memory_space<vmem>>, vector<1x64xf32>
    tpu.vector_store %arg15[%c0_131, %c1536], %203 {strides = array<i32>} : memref<1x2304xf32, #tpu.memory_space<vmem>>, vector<1x64xf32>,
    %205 = vector.extract_strided_slice %154 {offsets = [25, 0], sizes = [1, 64], strides = [1, 1]} : vector<36x64xf32> to vector<1x64xf32>
    %c0_132 = arith.constant 0 : index
    %c1600 = arith.constant 1600 : index
    %206 = vector.load %arg15[%c0_132, %c1600] : memref<1x2304xf32, #tpu.memory_space<vmem>>, vector<1x64xf32>
    tpu.vector_store %arg15[%c0_132, %c1600], %205 {strides = array<i32>} : memref<1x2304xf32, #tpu.memory_space<vmem>>, vector<1x64xf32>,
    %207 = vector.extract_strided_slice %154 {offsets = [26, 0], sizes = [1, 64], strides = [1, 1]} : vector<36x64xf32> to vector<1x64xf32>
    %c0_133 = arith.constant 0 : index
    %c1664 = arith.constant 1664 : index
    %208 = vector.load %arg15[%c0_133, %c1664] : memref<1x2304xf32, #tpu.memory_space<vmem>>, vector<1x64xf32>
    tpu.vector_store %arg15[%c0_133, %c1664], %207 {strides = array<i32>} : memref<1x2304xf32, #tpu.memory_space<vmem>>, vector<1x64xf32>,
    %209 = vector.extract_strided_slice %154 {offsets = [27, 0], sizes = [1, 64], strides = [1, 1]} : vector<36x64xf32> to vector<1x64xf32>
    %c0_134 = arith.constant 0 : index
    %c1728 = arith.constant 1728 : index
    %210 = vector.load %arg15[%c0_134, %c1728] : memref<1x2304xf32, #tpu.memory_space<vmem>>, vector<1x64xf32>
    tpu.vector_store %arg15[%c0_134, %c1728], %209 {strides = array<i32>} : memref<1x2304xf32, #tpu.memory_space<vmem>>, vector<1x64xf32>,
    %211 = vector.extract_strided_slice %154 {offsets = [28, 0], sizes = [1, 64], strides = [1, 1]} : vector<36x64xf32> to vector<1x64xf32>
    %c0_135 = arith.constant 0 : index
    %c1792 = arith.constant 1792 : index
    %212 = vector.load %arg15[%c0_135, %c1792] : memref<1x2304xf32, #tpu.memory_space<vmem>>, vector<1x64xf32>
    tpu.vector_store %arg15[%c0_135, %c1792], %211 {strides = array<i32>} : memref<1x2304xf32, #tpu.memory_space<vmem>>, vector<1x64xf32>,
    %213 = vector.extract_strided_slice %154 {offsets = [29, 0], sizes = [1, 64], strides = [1, 1]} : vector<36x64xf32> to vector<1x64xf32>
    %c0_136 = arith.constant 0 : index
    %c1856 = arith.constant 1856 : index
    %214 = vector.load %arg15[%c0_136, %c1856] : memref<1x2304xf32, #tpu.memory_space<vmem>>, vector<1x64xf32>
    tpu.vector_store %arg15[%c0_136, %c1856], %213 {strides = array<i32>} : memref<1x2304xf32, #tpu.memory_space<vmem>>, vector<1x64xf32>,
    %215 = vector.extract_strided_slice %154 {offsets = [30, 0], sizes = [1, 64], strides = [1, 1]} : vector<36x64xf32> to vector<1x64xf32>
    %c0_137 = arith.constant 0 : index
    %c1920 = arith.constant 1920 : index
    %216 = vector.load %arg15[%c0_137, %c1920] : memref<1x2304xf32, #tpu.memory_space<vmem>>, vector<1x64xf32>
    tpu.vector_store %arg15[%c0_137, %c1920], %215 {strides = array<i32>} : memref<1x2304xf32, #tpu.memory_space<vmem>>, vector<1x64xf32>,
    %217 = vector.extract_strided_slice %154 {offsets = [31, 0], sizes = [1, 64], strides = [1, 1]} : vector<36x64xf32> to vector<1x64xf32>
    %c0_138 = arith.constant 0 : index
    %c1984 = arith.constant 1984 : index
    %218 = vector.load %arg15[%c0_138, %c1984] : memref<1x2304xf32, #tpu.memory_space<vmem>>, vector<1x64xf32>
    tpu.vector_store %arg15[%c0_138, %c1984], %217 {strides = array<i32>} : memref<1x2304xf32, #tpu.memory_space<vmem>>, vector<1x64xf32>,
    %219 = vector.extract_strided_slice %154 {offsets = [32, 0], sizes = [1, 64], strides = [1, 1]} : vector<36x64xf32> to vector<1x64xf32>
    %c0_139 = arith.constant 0 : index
    %c2048 = arith.constant 2048 : index
    %220 = vector.load %arg15[%c0_139, %c2048] : memref<1x2304xf32, #tpu.memory_space<vmem>>, vector<1x64xf32>
    tpu.vector_store %arg15[%c0_139, %c2048], %219 {strides = array<i32>} : memref<1x2304xf32, #tpu.memory_space<vmem>>, vector<1x64xf32>,
    %221 = vector.extract_strided_slice %154 {offsets = [33, 0], sizes = [1, 64], strides = [1, 1]} : vector<36x64xf32> to vector<1x64xf32>
    %c0_140 = arith.constant 0 : index
    %c2112 = arith.constant 2112 : index
    %222 = vector.load %arg15[%c0_140, %c2112] : memref<1x2304xf32, #tpu.memory_space<vmem>>, vector<1x64xf32>
    tpu.vector_store %arg15[%c0_140, %c2112], %221 {strides = array<i32>} : memref<1x2304xf32, #tpu.memory_space<vmem>>, vector<1x64xf32>,
    %223 = vector.extract_strided_slice %154 {offsets = [34, 0], sizes = [1, 64], strides = [1, 1]} : vector<36x64xf32> to vector<1x64xf32>
    %c0_141 = arith.constant 0 : index
    %c2176 = arith.constant 2176 : index
    %224 = vector.load %arg15[%c0_141, %c2176] : memref<1x2304xf32, #tpu.memory_space<vmem>>, vector<1x64xf32>
    tpu.vector_store %arg15[%c0_141, %c2176], %223 {strides = array<i32>} : memref<1x2304xf32, #tpu.memory_space<vmem>>, vector<1x64xf32>,
    %225 = vector.extract_strided_slice %154 {offsets = [35, 0], sizes = [1, 64], strides = [1, 1]} : vector<36x64xf32> to vector<1x64xf32>
    %c0_142 = arith.constant 0 : index
    %c2240 = arith.constant 2240 : index
    %226 = vector.load %arg15[%c0_142, %c2240] : memref<1x2304xf32, #tpu.memory_space<vmem>>, vector<1x64xf32>
    tpu.vector_store %arg15[%c0_142, %c2240], %225 {strides = array<i32>} : memref<1x2304xf32, #tpu.memory_space<vmem>>, vector<1x64xf32>,
    %c0_143 = arith.constant 0 : index
    %c0_144 = arith.constant 0 : index
    %227 = vector.load %arg15[%c0_143, %c0_144] : memref<1x2304xf32, #tpu.memory_space<vmem>>, vector<1x2304xf32>
    %228 = arith.truncf %227 : vector<1x2304xf32> to vector<1x2304xbf16>
    %c0_145 = arith.constant 0 : index
    %c0_146 = arith.constant 0 : index
    %229 = vector.load %arg10[%c0_145, %c0_146] : memref<2304x512xbf16, #tpu.memory_space<vmem>>, vector<2304x512xbf16>
    %cst_147 = arith.constant dense<0.000000e+00> : vector<1x512xf32>
    %230 = tpu.matmul %228, %229, %cst_147 {dimension_numbers = #tpu.dot_dimension_numbers<[1], [0], [0], [1], [0, 0, 1, 1], [], []>} : vector<1x2304xbf16>, vector<2304x512xbf16>, vector<1x512xf32> -> vector<1x512xf32>
    %c0_148 = arith.constant 0 : index
    %c0_149 = arith.constant 0 : index
    %231 = vector.load %arg11[%c0_148, %c0_149] : memref<1x512xf32, #tpu.memory_space<vmem>>, vector<1x512xf32>
    %232 = arith.addf %230, %231 : vector<1x512xf32>
    %cst_150 = arith.constant 0.000000e+00 : f32
    %233 = vector.broadcast %cst_150 : f32 to vector<1x512xf32>
    %234 = arith.maximumf %232, %233 : vector<1x512xf32>
    %235 = arith.truncf %234 : vector<1x512xf32> to vector<1x512xbf16>
    %c0_151 = arith.constant 0 : index
    %c0_152 = arith.constant 0 : index
    %236 = vector.load %arg12[%c0_151, %c0_152] : memref<512x128xbf16, #tpu.memory_space<vmem>>, vector<512x128xbf16>
    %cst_153 = arith.constant dense<0.000000e+00> : vector<1x128xf32>
    %237 = tpu.matmul %235, %236, %cst_153 {dimension_numbers = #tpu.dot_dimension_numbers<[1], [0], [0], [1], [0, 0, 1, 1], [], []>} : vector<1x512xbf16>, vector<512x128xbf16>, vector<1x128xf32> -> vector<1x128xf32>
    %c0_154 = arith.constant 0 : index
    %c0_155 = arith.constant 0 : index
    %238 = vector.load %arg13[%c0_154, %c0_155] : memref<1x128xf32, #tpu.memory_space<vmem>>, vector<1x128xf32>
    %239 = arith.addf %237, %238 : vector<1x128xf32>
    %c0_156 = arith.constant 0 : index
    %c0_157 = arith.constant 0 : index
    %c0_158 = arith.constant 0 : index
    %240 = vector.load %arg14[%c0_156, %c0_157, %c0_158] : memref<1x1x128xf32, #tpu.memory_space<vmem>>, vector<1x1x128xf32>
    %241 = vector.shape_cast %240 : vector<1x1x128xf32> to vector<1x128xf32>
    %242 = vector.shape_cast %239 : vector<1x128xf32> to vector<1x1x128xf32>
    tpu.vector_store %arg14[%c0_156, %c0_157, %c0_158], %242 {strides = array<i32>} : memref<1x1x128xf32, #tpu.memory_space<vmem>>, vector<1x1x128xf32>,
    return
  }
  func.func @transform_0(%arg0: i32) -> (i32, i32, i32) {
    %c0_i32 = arith.constant 0 : i32
    %c0_i32_0 = arith.constant 0 : i32
    %c0_i32_1 = arith.constant 0 : i32
    return %arg0, %c0_i32, %c0_i32_0 : i32, i32, i32
  }
  func.func @transform_1(%arg0: i32) -> (i32, i32) {
    %c0_i32 = arith.constant 0 : i32
    %c0_i32_0 = arith.constant 0 : i32
    %c0_i32_1 = arith.constant 0 : i32
    return %c0_i32, %c0_i32_0 : i32, i32
  }
  func.func @transform_2(%arg0: i32) -> (i32, i32) {
    %c0_i32 = arith.constant 0 : i32
    %c0_i32_0 = arith.constant 0 : i32
    %c0_i32_1 = arith.constant 0 : i32
    return %c0_i32, %c0_i32_0 : i32, i32
  }
  func.func @transform_3(%arg0: i32) -> (i32, i32) {
    %c0_i32 = arith.constant 0 : i32
    %c0_i32_0 = arith.constant 0 : i32
    %c0_i32_1 = arith.constant 0 : i32
    return %c0_i32, %c0_i32_0 : i32, i32
  }
  func.func @transform_4(%arg0: i32) -> (i32, i32, i32) {
    %c0_i32 = arith.constant 0 : i32
    %c0_i32_0 = arith.constant 0 : i32
    %c0_i32_1 = arith.constant 0 : i32
    %c0_i32_2 = arith.constant 0 : i32
    return %c0_i32, %c0_i32_0, %c0_i32_1 : i32, i32, i32
  }
  func.func @transform_5(%arg0: i32) -> (i32, i32) {
    %c0_i32 = arith.constant 0 : i32
    %c0_i32_0 = arith.constant 0 : i32
    %c0_i32_1 = arith.constant 0 : i32
    return %c0_i32, %c0_i32_0 : i32, i32
  }
  func.func @transform_6(%arg0: i32) -> (i32, i32) {
    %c0_i32 = arith.constant 0 : i32
    %c0_i32_0 = arith.constant 0 : i32
    %c0_i32_1 = arith.constant 0 : i32
    return %c0_i32, %c0_i32_0 : i32, i32
  }
  func.func @transform_7(%arg0: i32) -> (i32, i32, i32) {
    %c0_i32 = arith.constant 0 : i32
    %c0_i32_0 = arith.constant 0 : i32
    %c0_i32_1 = arith.constant 0 : i32
    %c0_i32_2 = arith.constant 0 : i32
    return %c0_i32, %c0_i32_0, %c0_i32_1 : i32, i32, i32
  }
  func.func @transform_8(%arg0: i32) -> (i32, i32) {
    %c0_i32 = arith.constant 0 : i32
    %c0_i32_0 = arith.constant 0 : i32
    %c0_i32_1 = arith.constant 0 : i32
    return %c0_i32, %c0_i32_0 : i32, i32
  }
  func.func @transform_9(%arg0: i32) -> (i32, i32) {
    %c0_i32 = arith.constant 0 : i32
    %c0_i32_0 = arith.constant 0 : i32
    %c0_i32_1 = arith.constant 0 : i32
    return %c0_i32, %c0_i32_0 : i32, i32
  }
  func.func @transform_10(%arg0: i32) -> (i32, i32) {
    %c0_i32 = arith.constant 0 : i32
    %c0_i32_0 = arith.constant 0 : i32
    %c0_i32_1 = arith.constant 0 : i32
    return %c0_i32, %c0_i32_0 : i32, i32
  }
  func.func @transform_11(%arg0: i32) -> (i32, i32) {
    %c0_i32 = arith.constant 0 : i32
    %c0_i32_0 = arith.constant 0 : i32
    %c0_i32_1 = arith.constant 0 : i32
    return %c0_i32, %c0_i32_0 : i32, i32
  }
  func.func @transform_12(%arg0: i32) -> (i32, i32) {
    %c0_i32 = arith.constant 0 : i32
    %c0_i32_0 = arith.constant 0 : i32
    %c0_i32_1 = arith.constant 0 : i32
    return %c0_i32, %c0_i32_0 : i32, i32
  }
  func.func @transform_13(%arg0: i32) -> (i32, i32, i32) {
    %c0_i32 = arith.constant 0 : i32
    %c0_i32_0 = arith.constant 0 : i32
    %c0_i32_1 = arith.constant 0 : i32
    return %arg0, %c0_i32, %c0_i32_0 : i32, i32, i32
  }
}

</mosaic_0001>

<llo_original>
// kernel: dqn_forward.1
$region0: #{dqn_forward.1}
  #allocation0 [shape = 'u32[]', space=smem, size = 0x4, offset = 0x4, fixed_abs, tag = 'smem constant byte address 0x4 - core index']
  #allocation1 [shape = 'u32[72,128]{1,0:T(1,128)}', space=vmem, size = 0x9000, scoped, tag = 'internal scratch']
  #allocation2 [shape = 'f32[1,2304]{1,0:T(1,128)}', space=vmem, size = 0x2400, scoped, tag = 'scratch operand']
  %s0 = inlined_call_operand.vmem [shape: bf16[2,361,256], index: 0, kind: input, shape index: {}]
  %s1 = inlined_call_operand.vmem [shape: bf16[256,32], index: 1, kind: input, shape index: {}]
  %s2 = inlined_call_operand.vmem [shape: f32[1,32], index: 2, kind: input, shape index: {}]
  %s3 = inlined_call_operand.vmem [shape: bf16[1024,361], index: 3, kind: input, shape index: {}]
  %s4 = inlined_call_operand.vmem [shape: bf16[16,32,64], index: 4, kind: input, shape index: {}]
  %s5 = inlined_call_operand.vmem [shape: f32[1,64], index: 5, kind: input, shape index: {}]
  %s6 = inlined_call_operand.vmem [shape: bf16[360,64], index: 6, kind: input, shape index: {}]
  %s7 = inlined_call_operand.vmem [shape: bf16[9,64,64], index: 7, kind: input, shape index: {}]
  %s8 = inlined_call_operand.vmem [shape: f32[1,64], index: 8, kind: input, shape index: {}]
  %s9 = inlined_call_operand.vmem [shape: bf16[2304,512], index: 9, kind: input, shape index: {}]
  %s10 = inlined_call_operand.vmem [shape: f32[1,512], index: 10, kind: input, shape index: {}]
  %s11 = inlined_call_operand.vmem [shape: bf16[512,128], index: 11, kind: input, shape index: {}]
  %s12 = inlined_call_operand.vmem [shape: f32[1,128], index: 12, kind: input, shape index: {}]
  %s13 = inlined_call_operand.hbm [shape: f32[2,1,128], index: 13, kind: output, shape index: {}]
  %s14 = sld [smem:[#allocation0]]
  $region85: #{dqn_forward.1} parent=0
    _
  %s16 = ssub.s32 1, %s14
  %s17 = scalar_select 0, %s16, %s14
  $region1: #{dqn_forward.1} parent=0
    #allocation3 [shape = 'u8[1024]{0}', space=vmem, size = 0x400, scoped, tag = 'output window, operand 0']
    #allocation4 [shape = 's32[2]{0}', space=sflag, size = 0x8, scoped, tag = 'scoped memory for dqn_forward.1']
    %18 = vsyncpa [#allocation4], 0
    %s19 = scalar_lea.sflag [#allocation4], 1
    %20 = vsyncpa %s19, 0
    loop: start=0, step=1, limit=4
    $region2: #{dqn_forward.1} parent=1 // loop_pre_header
      _
    $region3: #{dqn_forward.1} parent=1 // loop_header
      %s22 = sphi 0, %s26
      %p23 = scmp.ge.s32.totalorder %s22, 4
      %s32 = sphi 0, %s34
      %s35 = sphi 0, %s32
      %s36 = sphi 0, %s35
      %s52 = sphi 0, %s36
      %s56 = sphi 0, %s56
      %s58 = sphi 0, %s56
      %s59 = sphi 0, %s58
      %s73 = sphi 0, %s59
      %s77 = sphi 0, %s77
      %s79 = sphi 0, %s77
      %s80 = sphi 0, %s79
      %s94 = sphi 0, %s80
      %s98 = sphi 0, %s98
      %s100 = sphi 0, %s98
      %s101 = sphi 0, %s100
      %s115 = sphi 0, %s101
      %s119 = sphi 0, %s119
      %s121 = sphi 0, %s119
      %s122 = sphi 0, %s121
      %s136 = sphi 0, %s122
      %s140 = sphi 0, %s140
      %s142 = sphi 0, %s140
      %s143 = sphi 0, %s142
      %s157 = sphi 0, %s143
      %s161 = sphi 0, %s161
      %s163 = sphi 0, %s161
      %s164 = sphi 0, %s163
      %s178 = sphi 0, %s164
      %s182 = sphi 0, %s182
      %s184 = sphi 0, %s182
      %s185 = sphi 0, %s184
      %s199 = sphi 0, %s185
      %s203 = sphi 0, %s203
      %s205 = sphi 0, %s203
      %s206 = sphi 0, %s205
      %s220 = sphi 0, %s206
      %s224 = sphi 0, %s224
      %s226 = sphi 0, %s224
      %s227 = sphi 0, %s226
      %s241 = sphi 0, %s227
      %s245 = sphi 0, %s245
      %s247 = sphi 0, %s245
      %s248 = sphi 0, %s247
      %s262 = sphi 0, %s248
      %s266 = sphi 0, %s266
      %s268 = sphi 0, %s266
      %s269 = sphi 0, %s268
      %s283 = sphi 0, %s269
      %s287 = sphi 0, %s287
      %s289 = sphi 0, %s287
      %s290 = sphi 0, %s289
      %s304 = sphi 0, %s290
      %s310 = sphi 0, %s312
      %s313 = sphi 0, %s310
      %s314 = sphi 0, %s313
      %s330 = sphi 0, %s314
    $region4: #{dqn_forward.1} parent=1 // loop_header_branch
      %25 = sbr.rel (%p23) target = $region8
    $region5: #{dqn_forward.1} parent=1 // loop_body
      %s27 = ssub.s32 %s22, 1
      %s28 = ssub.s32 %s22, 2
      %s29 = sadd.s32 %s22, 1
      %s30 = ssub.s32 %s22, %s29
      %p31 = scmp.eq.s32.totalorder %s30, 0
      %s33 = sadd.s32 %s32, 1
      %s34 = scalar_select %p31, %s32, %s33
      %p37 = pneg %p31
      %p38 = scmp.eq.s32.totalorder %s22, 1
      %p39 = por %p37, %p38
      %p40 = scmp.ne.s32.totalorder %s32, %s35
      %p41 = scmp.eq.s32.totalorder %s22, 0
      %p42 = por %p40, %p41
      %p43 = scmp.ne.s32.totalorder %s32, %s35
      %p44 = scmp.eq.s32.totalorder %s27, 1
      %p45 = por %p43, %p44
      %p46 = scmp.ne.s32.totalorder %s35, %s36
      %p47 = scmp.eq.s32.totalorder %s27, 0
      %p48 = por %p46, %p47
      %p49 = scmp.ne.s32.totalorder %s35, %s36
      %p50 = scmp.eq.s32.totalorder %s28, 1
      %p51 = por %p49, %p50
      %p53 = scmp.ne.s32.totalorder %s36, %s52
      %p54 = scmp.eq.s32.totalorder %s28, 0
      %p55 = por %p53, %p54
      %s57 = sadd.s32 %s56, 1
      %p60 = scmp.eq.s32.totalorder %s22, 1
      %p61 = scmp.ne.s32.totalorder %s56, %s58
      %p62 = scmp.eq.s32.totalorder %s22, 0
      %p63 = por %p61, %p62
      %p64 = scmp.ne.s32.totalorder %s56, %s58
      %p65 = scmp.eq.s32.totalorder %s27, 1
      %p66 = por %p64, %p65
      %p67 = scmp.ne.s32.totalorder %s58, %s59
      %p68 = scmp.eq.s32.totalorder %s27, 0
      %p69 = por %p67, %p68
      %p70 = scmp.ne.s32.totalorder %s58, %s59
      %p71 = scmp.eq.s32.totalorder %s28, 1
      %p72 = por %p70, %p71
      %p74 = scmp.ne.s32.totalorder %s59, %s73
      %p75 = scmp.eq.s32.totalorder %s28, 0
      %p76 = por %p74, %p75
      %s78 = sadd.s32 %s77, 1
      %p81 = scmp.eq.s32.totalorder %s22, 1
      %p82 = scmp.ne.s32.totalorder %s77, %s79
      %p83 = scmp.eq.s32.totalorder %s22, 0
      %p84 = por %p82, %p83
      %p85 = scmp.ne.s32.totalorder %s77, %s79
      %p86 = scmp.eq.s32.totalorder %s27, 1
      %p87 = por %p85, %p86
      %p88 = scmp.ne.s32.totalorder %s79, %s80
      %p89 = scmp.eq.s32.totalorder %s27, 0
      %p90 = por %p88, %p89
      %p91 = scmp.ne.s32.totalorder %s79, %s80
      %p92 = scmp.eq.s32.totalorder %s28, 1
      %p93 = por %p91, %p92
      %p95 = scmp.ne.s32.totalorder %s80, %s94
      %p96 = scmp.eq.s32.totalorder %s28, 0
      %p97 = por %p95, %p96
      %s99 = sadd.s32 %s98, 1
      %p102 = scmp.eq.s32.totalorder %s22, 1
      %p103 = scmp.ne.s32.totalorder %s98, %s100
      %p104 = scmp.eq.s32.totalorder %s22, 0
      %p105 = por %p103, %p104
      %p106 = scmp.ne.s32.totalorder %s98, %s100
      %p107 = scmp.eq.s32.totalorder %s27, 1
      %p108 = por %p106, %p107
      %p109 = scmp.ne.s32.totalorder %s100, %s101
      %p110 = scmp.eq.s32.totalorder %s27, 0
      %p111 = por %p109, %p110
      %p112 = scmp.ne.s32.totalorder %s100, %s101
      %p113 = scmp.eq.s32.totalorder %s28, 1
      %p114 = por %p112, %p113
      %p116 = scmp.ne.s32.totalorder %s101, %s115
      %p117 = scmp.eq.s32.totalorder %s28, 0
      %p118 = por %p116, %p117
      %s120 = sadd.s32 %s119, 1
      %p123 = scmp.eq.s32.totalorder %s22, 1
      %p124 = scmp.ne.s32.totalorder %s119, %s121
      %p125 = scmp.eq.s32.totalorder %s22, 0
      %p126 = por %p124, %p125
      %p127 = scmp.ne.s32.totalorder %s119, %s121
      %p128 = scmp.eq.s32.totalorder %s27, 1
      %p129 = por %p127, %p128
      %p130 = scmp.ne.s32.totalorder %s121, %s122
      %p131 = scmp.eq.s32.totalorder %s27, 0
      %p132 = por %p130, %p131
      %p133 = scmp.ne.s32.totalorder %s121, %s122
      %p134 = scmp.eq.s32.totalorder %s28, 1
      %p135 = por %p133, %p134
      %p137 = scmp.ne.s32.totalorder %s122, %s136
      %p138 = scmp.eq.s32.totalorder %s28, 0
      %p139 = por %p137, %p138
      %s141 = sadd.s32 %s140, 1
      %p144 = scmp.eq.s32.totalorder %s22, 1
      %p145 = scmp.ne.s32.totalorder %s140, %s142
      %p146 = scmp.eq.s32.totalorder %s22, 0
      %p147 = por %p145, %p146
      %p148 = scmp.ne.s32.totalorder %s140, %s142
      %p149 = scmp.eq.s32.totalorder %s27, 1
      %p150 = por %p148, %p149
      %p151 = scmp.ne.s32.totalorder %s142, %s143
      %p152 = scmp.eq.s32.totalorder %s27, 0
      %p153 = por %p151, %p152
      %p154 = scmp.ne.s32.totalorder %s142, %s143
      %p155 = scmp.eq.s32.totalorder %s28, 1
      %p156 = por %p154, %p155
      %p158 = scmp.ne.s32.totalorder %s143, %s157
      %p159 = scmp.eq.s32.totalorder %s28, 0
      %p160 = por %p158, %p159
      %s162 = sadd.s32 %s161, 1
      %p165 = scmp.eq.s32.totalorder %s22, 1
      %p166 = scmp.ne.s32.totalorder %s161, %s163
      %p167 = scmp.eq.s32.totalorder %s22, 0
      %p168 = por %p166, %p167
      %p169 = scmp.ne.s32.totalorder %s161, %s163
      %p170 = scmp.eq.s32.totalorder %s27, 1
      %p171 = por %p169, %p170
      %p172 = scmp.ne.s32.totalorder %s163, %s164
      %p173 = scmp.eq.s32.totalorder %s27, 0
      %p174 = por %p172, %p173
      %p175 = scmp.ne.s32.totalorder %s163, %s164
      %p176 = scmp.eq.s32.totalorder %s28, 1
      %p177 = por %p175, %p176
      %p179 = scmp.ne.s32.totalorder %s164, %s178
      %p180 = scmp.eq.s32.totalorder %s28, 0
      %p181 = por %p179, %p180
      %s183 = sadd.s32 %s182, 1
      %p186 = scmp.eq.s32.totalorder %s22, 1
      %p187 = scmp.ne.s32.totalorder %s182, %s184
      %p188 = scmp.eq.s32.totalorder %s22, 0
      %p189 = por %p187, %p188
      %p190 = scmp.ne.s32.totalorder %s182, %s184
      %p191 = scmp.eq.s32.totalorder %s27, 1
      %p192 = por %p190, %p191
      %p193 = scmp.ne.s32.totalorder %s184, %s185
      %p194 = scmp.eq.s32.totalorder %s27, 0
      %p195 = por %p193, %p194
      %p196 = scmp.ne.s32.totalorder %s184, %s185
      %p197 = scmp.eq.s32.totalorder %s28, 1
      %p198 = por %p196, %p197
      %p200 = scmp.ne.s32.totalorder %s185, %s199
      %p201 = scmp.eq.s32.totalorder %s28, 0
      %p202 = por %p200, %p201
      %s204 = sadd.s32 %s203, 1
      %p207 = scmp.eq.s32.totalorder %s22, 1
      %p208 = scmp.ne.s32.totalorder %s203, %s205
      %p209 = scmp.eq.s32.totalorder %s22, 0
      %p210 = por %p208, %p209
      %p211 = scmp.ne.s32.totalorder %s203, %s205
      %p212 = scmp.eq.s32.totalorder %s27, 1
      %p213 = por %p211, %p212
      %p214 = scmp.ne.s32.totalorder %s205, %s206
      %p215 = scmp.eq.s32.totalorder %s27, 0
      %p216 = por %p214, %p215
      %p217 = scmp.ne.s32.totalorder %s205, %s206
      %p218 = scmp.eq.s32.totalorder %s28, 1
      %p219 = por %p217, %p218
      %p221 = scmp.ne.s32.totalorder %s206, %s220
      %p222 = scmp.eq.s32.totalorder %s28, 0
      %p223 = por %p221, %p222
      %s225 = sadd.s32 %s224, 1
      %p228 = scmp.eq.s32.totalorder %s22, 1
      %p229 = scmp.ne.s32.totalorder %s224, %s226
      %p230 = scmp.eq.s32.totalorder %s22, 0
      %p231 = por %p229, %p230
      %p232 = scmp.ne.s32.totalorder %s224, %s226
      %p233 = scmp.eq.s32.totalorder %s27, 1
      %p234 = por %p232, %p233
      %p235 = scmp.ne.s32.totalorder %s226, %s227
      %p236 = scmp.eq.s32.totalorder %s27, 0
      %p237 = por %p235, %p236
      %p238 = scmp.ne.s32.totalorder %s226, %s227
      %p239 = scmp.eq.s32.totalorder %s28, 1
      %p240 = por %p238, %p239
      %p242 = scmp.ne.s32.totalorder %s227, %s241
      %p243 = scmp.eq.s32.totalorder %s28, 0
      %p244 = por %p242, %p243
      %s246 = sadd.s32 %s245, 1
      %p249 = scmp.eq.s32.totalorder %s22, 1
      %p250 = scmp.ne.s32.totalorder %s245, %s247
      %p251 = scmp.eq.s32.totalorder %s22, 0
      %p252 = por %p250, %p251
      %p253 = scmp.ne.s32.totalorder %s245, %s247
      %p254 = scmp.eq.s32.totalorder %s27, 1
      %p255 = por %p253, %p254
      %p256 = scmp.ne.s32.totalorder %s247, %s248
      %p257 = scmp.eq.s32.totalorder %s27, 0
      %p258 = por %p256, %p257
      %p259 = scmp.ne.s32.totalorder %s247, %s248
      %p260 = scmp.eq.s32.totalorder %s28, 1
      %p261 = por %p259, %p260
      %p263 = scmp.ne.s32.totalorder %s248, %s262
      %p264 = scmp.eq.s32.totalorder %s28, 0
      %p265 = por %p263, %p264
      %s267 = sadd.s32 %s266, 1
      %p270 = scmp.eq.s32.totalorder %s22, 1
      %p271 = scmp.ne.s32.totalorder %s266, %s268
      %p272 = scmp.eq.s32.totalorder %s22, 0
      %p273 = por %p271, %p272
      %p274 = scmp.ne.s32.totalorder %s266, %s268
      %p275 = scmp.eq.s32.totalorder %s27, 1
      %p276 = por %p274, %p275
      %p277 = scmp.ne.s32.totalorder %s268, %s269
      %p278 = scmp.eq.s32.totalorder %s27, 0
      %p279 = por %p277, %p278
      %p280 = scmp.ne.s32.totalorder %s268, %s269
      %p281 = scmp.eq.s32.totalorder %s28, 1
      %p282 = por %p280, %p281
      %p284 = scmp.ne.s32.totalorder %s269, %s283
      %p285 = scmp.eq.s32.totalorder %s28, 0
      %p286 = por %p284, %p285
      %s288 = sadd.s32 %s287, 1
      %p291 = scmp.eq.s32.totalorder %s22, 1
      %p292 = scmp.ne.s32.totalorder %s287, %s289
      %p293 = scmp.eq.s32.totalorder %s22, 0
      %p294 = por %p292, %p293
      %p295 = scmp.ne.s32.totalorder %s287, %s289
      %p296 = scmp.eq.s32.totalorder %s27, 1
      %p297 = por %p295, %p296
      %p298 = scmp.ne.s32.totalorder %s289, %s290
      %p299 = scmp.eq.s32.totalorder %s27, 0
      %p300 = por %p298, %p299
      %p301 = scmp.ne.s32.totalorder %s289, %s290
      %p302 = scmp.eq.s32.totalorder %s28, 1
      %p303 = por %p301, %p302
      %p305 = scmp.ne.s32.totalorder %s290, %s304
      %p306 = scmp.eq.s32.totalorder %s28, 0
      %p307 = por %p305, %p306
      %s308 = ssub.s32 %s22, %s29
      %p309 = scmp.eq.s32.totalorder %s308, 0
      %s311 = sadd.s32 %s310, 1
      %s312 = scalar_select %p309, %s310, %s311
      %p315 = pneg %p309
      %p316 = scmp.eq.s32.totalorder %s22, 1
      %p317 = por %p315, %p316
      %p318 = scmp.ne.s32.totalorder %s310, %s313
      %p319 = scmp.eq.s32.totalorder %s22, 0
      %p320 = por %p318, %p319
      %p321 = scmp.ne.s32.totalorder %s310, %s313
      %p322 = scmp.eq.s32.totalorder %s27, 1
      %p323 = por %p321, %p322
      %p324 = scmp.ne.s32.totalorder %s313, %s314
      %p325 = scmp.eq.s32.totalorder %s27, 0
      %p326 = por %p324, %p325
      %p327 = scmp.ne.s32.totalorder %s313, %s314
      %p328 = scmp.eq.s32.totalorder %s28, 1
      %p329 = por %p327, %p328
      %p331 = scmp.ne.s32.totalorder %s314, %s330
      %p332 = scmp.eq.s32.totalorder %s28, 0
      %p333 = por %p331, %p332
      %p334 = scmp.le.s32.totalorder 1, %s22
      %p335 = scmp.lt.s32.totalorder %s22, 3
      %p336 = pnand %p334, %p335
      %p337 = pneg %p336
      // Predicated region
      $region9: #{dqn_forward.1} parent=5 // pred_check
        _
      $region10: #{dqn_forward.1} parent=5 // pred_check_branch
        %339 = sbr.rel (%p336) target = $region12
      $region11: #{dqn_forward.1} parent=5 // pred_region
        %s340 = ssub.s32 %s22, 1
        // Predicated region
        $region13: #{dqn_forward.1} parent=11 // pred_check
          %p341 = pneg %p69
        $region14: #{dqn_forward.1} parent=11 // pred_check_branch
          %343 = sbr.rel (%p341) target = $region16
        $region15: #{dqn_forward.1} parent=11 // pred_region
          _
        $region16: #{dqn_forward.1} parent=11 // pred_fallthru
          _
        // Predicated region
        $region17: #{dqn_forward.1} parent=11 // pred_check
          %p344 = pneg %p90
        $region18: #{dqn_forward.1} parent=11 // pred_check_branch
          %346 = sbr.rel (%p344) target = $region20
        $region19: #{dqn_forward.1} parent=11 // pred_region
          _
        $region20: #{dqn_forward.1} parent=11 // pred_fallthru
          _
        // Predicated region
        $region21: #{dqn_forward.1} parent=11 // pred_check
          %p347 = pneg %p111
        $region22: #{dqn_forward.1} parent=11 // pred_check_branch
          %349 = sbr.rel (%p347) target = $region24
        $region23: #{dqn_forward.1} parent=11 // pred_region
          _
        $region24: #{dqn_forward.1} parent=11 // pred_fallthru
          _
        // Predicated region
        $region25: #{dqn_forward.1} parent=11 // pred_check
          %p350 = pneg %p132
        $region26: #{dqn_forward.1} parent=11 // pred_check_branch
          %352 = sbr.rel (%p350) target = $region28
        $region27: #{dqn_forward.1} parent=11 // pred_region
          _
        $region28: #{dqn_forward.1} parent=11 // pred_fallthru
          _
        // Predicated region
        $region29: #{dqn_forward.1} parent=11 // pred_check
          %p353 = pneg %p153
        $region30: #{dqn_forward.1} parent=11 // pred_check_branch
          %355 = sbr.rel (%p353) target = $region32
        $region31: #{dqn_forward.1} parent=11 // pred_region
          _
        $region32: #{dqn_forward.1} parent=11 // pred_fallthru
          _
        // Predicated region
        $region33: #{dqn_forward.1} parent=11 // pred_check
          %p356 = pneg %p174
        $region34: #{dqn_forward.1} parent=11 // pred_check_branch
          %358 = sbr.rel (%p356) target = $region36
        $region35: #{dqn_forward.1} parent=11 // pred_region
          _
        $region36: #{dqn_forward.1} parent=11 // pred_fallthru
          _
        // Predicated region
        $region37: #{dqn_forward.1} parent=11 // pred_check
          %p359 = pneg %p195
        $region38: #{dqn_forward.1} parent=11 // pred_check_branch
          %361 = sbr.rel (%p359) target = $region40
        $region39: #{dqn_forward.1} parent=11 // pred_region
          _
        $region40: #{dqn_forward.1} parent=11 // pred_fallthru
          _
        // Predicated region
        $region41: #{dqn_forward.1} parent=11 // pred_check
          %p362 = pneg %p216
        $region42: #{dqn_forward.1} parent=11 // pred_check_branch
          %364 = sbr.rel (%p362) target = $region44
        $region43: #{dqn_forward.1} parent=11 // pred_region
          _
        $region44: #{dqn_forward.1} parent=11 // pred_fallthru
          _
        // Predicated region
        $region45: #{dqn_forward.1} parent=11 // pred_check
          %p365 = pneg %p237
        $region46: #{dqn_forward.1} parent=11 // pred_check_branch
          %367 = sbr.rel (%p365) target = $region48
        $region47: #{dqn_forward.1} parent=11 // pred_region
          _
        $region48: #{dqn_forward.1} parent=11 // pred_fallthru
          _
        // Predicated region
        $region49: #{dqn_forward.1} parent=11 // pred_check
          %p368 = pneg %p258
        $region50: #{dqn_forward.1} parent=11 // pred_check_branch
          %370 = sbr.rel (%p368) target = $region52
        $region51: #{dqn_forward.1} parent=11 // pred_region
          _
        $region52: #{dqn_forward.1} parent=11 // pred_fallthru
          _
        // Predicated region
        $region53: #{dqn_forward.1} parent=11 // pred_check
          %p371 = pneg %p279
        $region54: #{dqn_forward.1} parent=11 // pred_check_branch
          %373 = sbr.rel (%p371) target = $region56
        $region55: #{dqn_forward.1} parent=11 // pred_region
          _
        $region56: #{dqn_forward.1} parent=11 // pred_fallthru
          _
        // Predicated region
        $region57: #{dqn_forward.1} parent=11 // pred_check
          %p374 = pneg %p300
        $region58: #{dqn_forward.1} parent=11 // pred_check_branch
          %376 = sbr.rel (%p374) target = $region60
        $region59: #{dqn_forward.1} parent=11 // pred_region
          _
        $region60: #{dqn_forward.1} parent=11 // pred_fallthru
          _
      $region12: #{dqn_forward.1} parent=5 // pred_fallthru
        _
      %p377 = scmp.lt.s32.totalorder %s22, 2
      // Predicated region
      $region61: #{dqn_forward.1} parent=5 // pred_check
        %p378 = pneg %p377
      $region62: #{dqn_forward.1} parent=5 // pred_check_branch
        %380 = sbr.rel (%p378) target = $region64
      $region63: #{dqn_forward.1} parent=5 // pred_region
        // Predicated region
        $region65: #{dqn_forward.1} parent=63 // pred_check
          %p381 = pneg %p42
        $region66: #{dqn_forward.1} parent=63 // pred_check_branch
          %383 = sbr.rel (%p381) target = $region68
        $region67: #{dqn_forward.1} parent=63 // pred_region
          %p384 = scmp.lt.s32.totalorder %s22, 1
          %s385 = scalar_select %p384, %s22, 1
          %s386 = smul.addr %s385, 92
          %s387 = smul.addr %s386, 4
          %s388 = scalar_lea.vmem %s0, %s387
        $region68: #{dqn_forward.1} parent=63 // pred_fallthru
          _
      $region64: #{dqn_forward.1} parent=5 // pred_fallthru
        _
      %p389 = scmp.le.s32.totalorder 1, %s22
      %p390 = scmp.lt.s32.totalorder %s22, 3
      %p391 = pnand %p389, %p390
      %p392 = pneg %p391
      // Predicated region
      $region69: #{dqn_forward.1} parent=5 // pred_check
        _
      $region70: #{dqn_forward.1} parent=5 // pred_check_branch
        %394 = sbr.rel (%p391) target = $region72
      $region71: #{dqn_forward.1} parent=5 // pred_region
        %s395 = ssub.s32 %s22, 1
        %p396 = scmp.lt.s32.totalorder %s27, 1
        %s397 = scalar_select %p396, %s27, 1
        %s398 = smul.addr %s397, 92
        %s399 = smul.addr %s398, 4
        %s400 = scalar_lea.vmem %s0, %s399
        %p401 = pneg %p48
        %p402 = pneg %p45
        %p403 = pneg %p69
        %p404 = pneg %p66
        %p405 = pneg %p90
        %p406 = pneg %p87
        %p407 = pneg %p111
        %p408 = pneg %p108
        %p409 = pneg %p132
        %p410 = pneg %p129
        %p411 = pneg %p153
        %p412 = pneg %p150
        %p413 = pneg %p174
        %p414 = pneg %p171
        %p415 = pneg %p195
        %p416 = pneg %p192
        %p417 = pneg %p216
        %p418 = pneg %p213
        %p419 = pneg %p237
        %p420 = pneg %p234
        %p421 = pneg %p258
        %p422 = pneg %p255
        %p423 = pneg %p279
        %p424 = pneg %p276
        %p425 = pneg %p300
        %p426 = pneg %p297
        %p427 = pneg %p326
        %p428 = pneg %p323
        %s429 = sand.u32 %s313, 1
        %s430 = scalar_lea.sflag [#allocation4], %s429
        %s431 = sand.u32 %s313, 1
        %s432 = scalar_lea.vmem [#allocation3], %s431
        %p433 = scmp.lt.s32.totalorder %s27, 1
        %s434 = scalar_select %p433, %s27, 1
        %s435 = smul.addr %s434, 92
        %s436 = smul.addr %s435, 4
        %s437 = scalar_lea.vmem %s0, %s436
        %v439 = vld [vmem:[%s437] sm:$0xff]
        %v440 = vld [vmem:[%s437 + $0x8] sm:$0xff]
        %v441 = vld [vmem:[%s437 + $0x10] sm:$0xff]
        %v442 = vld [vmem:[%s437 + $0x18] sm:$0xff]
        %v443 = vld [vmem:[%s437 + $0x20] sm:$0xff]
        %v444 = vld [vmem:[%s437 + $0x28] sm:$0xff]
        %v445 = vld [vmem:[%s437 + $0x30] sm:$0xff]
        %v446 = vld [vmem:[%s437 + $0x38] sm:$0xff]
        %v447 = vld [vmem:[%s437 + $0x40] sm:$0xff]
        %v448 = vld [vmem:[%s437 + $0x48] sm:$0xff]
        %v449 = vld [vmem:[%s437 + $0x50] sm:$0xff]
        %v450 = vld [vmem:[%s437 + $0x58] sm:$0xff]
        %v451 = vld [vmem:[%s437 + $0x60] sm:$0xff]
        %v452 = vld [vmem:[%s437 + $0x68] sm:$0xff]
        %v453 = vld [vmem:[%s437 + $0x70] sm:$0xff]
        %v454 = vld [vmem:[%s437 + $0x78] sm:$0xff]
        %v455 = vld [vmem:[%s437 + $0x80] sm:$0xff]
        %v456 = vld [vmem:[%s437 + $0x88] sm:$0xff]
        %v457 = vld [vmem:[%s437 + $0x90] sm:$0xff]
        %v458 = vld [vmem:[%s437 + $0x98] sm:$0xff]
        %v459 = vld [vmem:[%s437 + $0xa0] sm:$0xff]
        %v460 = vld [vmem:[%s437 + $0xa8] sm:$0xff]
        %v461 = vld [vmem:[%s437 + $0xb0] sm:$0xff]
        %v462 = vld [vmem:[%s437 + $0xb8] sm:$0xff]
        %v463 = vld [vmem:[%s437 + $0xc0] sm:$0xff]
        %v464 = vld [vmem:[%s437 + $0xc8] sm:$0xff]
        %v465 = vld [vmem:[%s437 + $0xd0] sm:$0xff]
        %v466 = vld [vmem:[%s437 + $0xd8] sm:$0xff]
        %v467 = vld [vmem:[%s437 + $0xe0] sm:$0xff]
        %v468 = vld [vmem:[%s437 + $0xe8] sm:$0xff]
        %v469 = vld [vmem:[%s437 + $0xf0] sm:$0xff]
        %v470 = vld [vmem:[%s437 + $0xf8] sm:$0xff]
        %v471 = vld [vmem:[%s437 + $0x100] sm:$0xff]
        %v472 = vld [vmem:[%s437 + $0x108] sm:$0xff]
        %v473 = vld [vmem:[%s437 + $0x110] sm:$0xff]
        %v474 = vld [vmem:[%s437 + $0x118] sm:$0xff]
        %v475 = vld [vmem:[%s437 + $0x120] sm:$0xff]
        %v476 = vld [vmem:[%s437 + $0x128] sm:$0xff]
        %v477 = vld [vmem:[%s437 + $0x130] sm:$0xff]
        %v478 = vld [vmem:[%s437 + $0x138] sm:$0xff]
        %v479 = vld [vmem:[%s437 + $0x140] sm:$0xff]
        %v480 = vld [vmem:[%s437 + $0x148] sm:$0xff]
        %v481 = vld [vmem:[%s437 + $0x150] sm:$0xff]
        %v482 = vld [vmem:[%s437 + $0x158] sm:$0xff]
        %v483 = vld [vmem:[%s437 + $0x160] sm:$0xff]
        %v484 = vld [vmem:[%s437 + $0x168] sm:$0x11]
        %v485 = vld [vmem:[%s1] sm:$0xf]
        %v486 = vld [vmem:[%s1 + $0x4] sm:$0xf]
        %v487 = vld [vmem:[%s1 + $0x8] sm:$0xf]
        %v488 = vld [vmem:[%s1 + $0xc] sm:$0xf]
        %v489 = vld [vmem:[%s1 + $0x10] sm:$0xf]
        %v490 = vld [vmem:[%s1 + $0x14] sm:$0xf]
        %v491 = vld [vmem:[%s1 + $0x18] sm:$0xf]
        %v492 = vld [vmem:[%s1 + $0x1c] sm:$0xf]
        %v493 = vld [vmem:[%s1 + $0x20] sm:$0xf]
        %v494 = vld [vmem:[%s1 + $0x24] sm:$0xf]
        %v495 = vld [vmem:[%s1 + $0x28] sm:$0xf]
        %v496 = vld [vmem:[%s1 + $0x2c] sm:$0xf]
        %v497 = vld [vmem:[%s1 + $0x30] sm:$0xf]
        %v498 = vld [vmem:[%s1 + $0x34] sm:$0xf]
        %v499 = vld [vmem:[%s1 + $0x38] sm:$0xf]
        %v500 = vld [vmem:[%s1 + $0x3c] sm:$0xf]
        %v501 = vld [vmem:[%s1 + $0x40] sm:$0xf]
        %v502 = vld [vmem:[%s1 + $0x44] sm:$0xf]
        %v503 = vld [vmem:[%s1 + $0x48] sm:$0xf]
        %v504 = vld [vmem:[%s1 + $0x4c] sm:$0xf]
        %v505 = vld [vmem:[%s1 + $0x50] sm:$0xf]
        %v506 = vld [vmem:[%s1 + $0x54] sm:$0xf]
        %v507 = vld [vmem:[%s1 + $0x58] sm:$0xf]
        %v508 = vld [vmem:[%s1 + $0x5c] sm:$0xf]
        %v509 = vld [vmem:[%s1 + $0x60] sm:$0xf]
        %v510 = vld [vmem:[%s1 + $0x64] sm:$0xf]
        %v511 = vld [vmem:[%s1 + $0x68] sm:$0xf]
        %v512 = vld [vmem:[%s1 + $0x6c] sm:$0xf]
        %v513 = vld [vmem:[%s1 + $0x70] sm:$0xf]
        %v514 = vld [vmem:[%s1 + $0x74] sm:$0xf]
        %v515 = vld [vmem:[%s1 + $0x78] sm:$0xf]
        %v516 = vld [vmem:[%s1 + $0x7c] sm:$0xf]
        %v517 = vld [vmem:[%s2] sm:$0x1]
        %v519 = vperm.slane %v517, 0
        %v567 = vunpack.c.l.b16 %v439
        %v568 = vunpack.c.h.b16 %v439
        %v569 = vunpack.c.l.b16 %v440
        %v570 = vunpack.c.h.b16 %v440
        %v571 = vunpack.c.l.b16 %v441
        %v572 = vunpack.c.h.b16 %v441
        %v573 = vunpack.c.l.b16 %v442
        %v574 = vunpack.c.h.b16 %v442
        %v575 = vunpack.c.l.b16 %v443
        %v576 = vunpack.c.h.b16 %v443
        %v577 = vunpack.c.l.b16 %v444
        %v578 = vunpack.c.h.b16 %v444
        %v579 = vunpack.c.l.b16 %v445
        %v580 = vunpack.c.h.b16 %v445
        %v581 = vunpack.c.l.b16 %v446
        %v582 = vunpack.c.h.b16 %v446
        %v583 = vunpack.c.l.b16 %v447
        %v584 = vunpack.c.h.b16 %v447
        %v585 = vunpack.c.l.b16 %v448
        %v586 = vunpack.c.h.b16 %v448
        %v587 = vunpack.c.l.b16 %v449
        %v588 = vunpack.c.h.b16 %v449
        %v589 = vunpack.c.l.b16 %v450
        %v590 = vunpack.c.h.b16 %v450
        %v591 = vunpack.c.l.b16 %v451
        %v592 = vunpack.c.h.b16 %v451
        %v593 = vunpack.c.l.b16 %v452
        %v594 = vunpack.c.h.b16 %v452
        %v595 = vunpack.c.l.b16 %v453
        %v596 = vunpack.c.h.b16 %v453
        %v597 = vunpack.c.l.b16 %v454
        %v598 = vunpack.c.h.b16 %v454
        %v599 = vunpack.c.l.b16 %v455
        %v600 = vunpack.c.h.b16 %v455
        %v601 = vunpack.c.l.b16 %v456
        %v602 = vunpack.c.h.b16 %v456
        %v603 = vunpack.c.l.b16 %v457
        %v604 = vunpack.c.h.b16 %v457
        %v605 = vunpack.c.l.b16 %v458
        %v606 = vunpack.c.h.b16 %v458
        %v607 = vunpack.c.l.b16 %v459
        %v608 = vunpack.c.h.b16 %v459
        %v609 = vunpack.c.l.b16 %v460
        %v610 = vunpack.c.h.b16 %v460
        %v611 = vunpack.c.l.b16 %v461
        %v612 = vunpack.c.h.b16 %v461
        %v613 = vunpack.c.l.b16 %v462
        %v614 = vunpack.c.h.b16 %v462
        %v615 = vunpack.c.l.b16 %v463
        %v616 = vunpack.c.h.b16 %v463
        %v617 = vunpack.c.l.b16 %v464
        %v618 = vunpack.c.h.b16 %v464
        %v619 = vunpack.c.l.b16 %v465
        %v620 = vunpack.c.h.b16 %v465
        %v621 = vunpack.c.l.b16 %v466
        %v622 = vunpack.c.h.b16 %v466
        %v623 = vunpack.c.l.b16 %v467
        %v624 = vunpack.c.h.b16 %v467
        %v625 = vunpack.c.l.b16 %v468
        %v626 = vunpack.c.h.b16 %v468
        %v627 = vunpack.c.l.b16 %v469
        %v628 = vunpack.c.h.b16 %v469
        %v629 = vunpack.c.l.b16 %v470
        %v630 = vunpack.c.h.b16 %v470
        %v631 = vunpack.c.l.b16 %v471
        %v632 = vunpack.c.h.b16 %v471
        %v633 = vunpack.c.l.b16 %v472
        %v634 = vunpack.c.h.b16 %v472
        %v635 = vunpack.c.l.b16 %v473
        %v636 = vunpack.c.h.b16 %v473
        %v637 = vunpack.c.l.b16 %v474
        %v638 = vunpack.c.h.b16 %v474
        %v639 = vunpack.c.l.b16 %v475
        %v640 = vunpack.c.h.b16 %v475
        %v641 = vunpack.c.l.b16 %v476
        %v642 = vunpack.c.h.b16 %v476
        %v643 = vunpack.c.l.b16 %v477
        %v644 = vunpack.c.h.b16 %v477
        %v645 = vunpack.c.l.b16 %v478
        %v646 = vunpack.c.h.b16 %v478
        %v647 = vunpack.c.l.b16 %v479
        %v648 = vunpack.c.h.b16 %v479
        %v649 = vunpack.c.l.b16 %v480
        %v650 = vunpack.c.h.b16 %v480
        %v651 = vunpack.c.l.b16 %v481
        %v652 = vunpack.c.h.b16 %v481
        %v653 = vunpack.c.l.b16 %v482
        %v654 = vunpack.c.h.b16 %v482
        %v655 = vunpack.c.l.b16 %v483
        %v656 = vunpack.c.h.b16 %v483
        %v657 = vunpack.c.l.b16 %v484
        %v658 = vunpack.c.h.b16 %v484
        %v659 = vpack.c.b16 %v569, %v567
        %v660 = vpack.c.b16 %v570, %v568
        %v661 = vpack.c.b16 %v573, %v571
        %v662 = vpack.c.b16 %v574, %v572
        %v663 = vpack.c.b16 %v577, %v575
        %v664 = vpack.c.b16 %v578, %v576
        %v665 = vpack.c.b16 %v581, %v579
        %v666 = vpack.c.b16 %v582, %v580
        %v667 = vpack.c.b16 %v585, %v583
        %v668 = vpack.c.b16 %v586, %v584
        %v669 = vpack.c.b16 %v589, %v587
        %v670 = vpack.c.b16 %v590, %v588
        %v671 = vpack.c.b16 %v593, %v591
        %v672 = vpack.c.b16 %v594, %v592
        %v673 = vpack.c.b16 %v597, %v595
        %v674 = vpack.c.b16 %v598, %v596
        %v675 = vpack.c.b16 %v601, %v599
        %v676 = vpack.c.b16 %v602, %v600
        %v677 = vpack.c.b16 %v605, %v603
        %v678 = vpack.c.b16 %v606, %v604
        %v679 = vpack.c.b16 %v609, %v607
        %v680 = vpack.c.b16 %v610, %v608
        %v681 = vpack.c.b16 %v613, %v611
        %v682 = vpack.c.b16 %v614, %v612
        %v683 = vpack.c.b16 %v617, %v615
        %v684 = vpack.c.b16 %v618, %v616
        %v685 = vpack.c.b16 %v621, %v619
        %v686 = vpack.c.b16 %v622, %v620
        %v687 = vpack.c.b16 %v625, %v623
        %v688 = vpack.c.b16 %v626, %v624
        %v689 = vpack.c.b16 %v629, %v627
        %v690 = vpack.c.b16 %v630, %v628
        %v691 = vpack.c.b16 %v633, %v631
        %v692 = vpack.c.b16 %v634, %v632
        %v693 = vpack.c.b16 %v637, %v635
        %v694 = vpack.c.b16 %v638, %v636
        %v695 = vpack.c.b16 %v641, %v639
        %v696 = vpack.c.b16 %v642, %v640
        %v697 = vpack.c.b16 %v645, %v643
        %v698 = vpack.c.b16 %v646, %v644
        %v699 = vpack.c.b16 %v649, %v647
        %v700 = vpack.c.b16 %v650, %v648
        %v701 = vpack.c.b16 %v653, %v651
        %v702 = vpack.c.b16 %v654, %v652
        %v703 = vpack.c.b16 %v657, %v655
        %v704 = vpack.c.b16 %v658, %v656
        %v783 = vunpack.c.l.b16 %v485
        %v784 = vunpack.c.l.b16 %v486
        %v785 = vunpack.c.l.b16 %v487
        %v786 = vunpack.c.l.b16 %v488
        %v787 = vunpack.c.l.b16 %v489
        %v788 = vunpack.c.l.b16 %v490
        %v789 = vunpack.c.l.b16 %v491
        %v790 = vunpack.c.l.b16 %v492
        %v791 = vunpack.c.l.b16 %v493
        %v792 = vunpack.c.l.b16 %v494
        %v793 = vunpack.c.l.b16 %v495
        %v794 = vunpack.c.l.b16 %v496
        %v795 = vunpack.c.l.b16 %v497
        %v796 = vunpack.c.l.b16 %v498
        %v797 = vunpack.c.l.b16 %v499
        %v798 = vunpack.c.l.b16 %v500
        %v799 = vunpack.c.l.b16 %v501
        %v800 = vunpack.c.l.b16 %v502
        %v801 = vunpack.c.l.b16 %v503
        %v802 = vunpack.c.l.b16 %v504
        %v803 = vunpack.c.l.b16 %v505
        %v804 = vunpack.c.l.b16 %v506
        %v805 = vunpack.c.l.b16 %v507
        %v806 = vunpack.c.l.b16 %v508
        %v807 = vunpack.c.l.b16 %v509
        %v808 = vunpack.c.l.b16 %v510
        %v809 = vunpack.c.l.b16 %v511
        %v810 = vunpack.c.l.b16 %v512
        %v811 = vunpack.c.l.b16 %v513
        %v812 = vunpack.c.l.b16 %v514
        %v813 = vunpack.c.l.b16 %v515
        %v814 = vunpack.c.l.b16 %v516
        %v815 = vpack.c.b16 %v784, %v783
        %v816 = vpack.c.b16 %v786, %v785
        %v817 = vpack.c.b16 %v788, %v787
        %v818 = vpack.c.b16 %v790, %v789
        %v819 = vpack.c.b16 %v792, %v791
        %v820 = vpack.c.b16 %v794, %v793
        %v821 = vpack.c.b16 %v796, %v795
        %v822 = vpack.c.b16 %v798, %v797
        %v823 = vpack.c.b16 %v800, %v799
        %v824 = vpack.c.b16 %v802, %v801
        %v825 = vpack.c.b16 %v804, %v803
        %v826 = vpack.c.b16 %v806, %v805
        %v827 = vpack.c.b16 %v808, %v807
        %v828 = vpack.c.b16 %v810, %v809
        %v829 = vpack.c.b16 %v812, %v811
        %v830 = vpack.c.b16 %v814, %v813
        %847 = vmatpush.bf16.msra.mxu0 %v822
        %848 = vmatpush.bf16.msra.mxu0 %v821
        %849 = vmatpush.bf16.msra.mxu0 %v820
        %850 = vmatpush.bf16.msra.mxu0 %v819
        %851 = vmatpush.bf16.msra.mxu0 %v818
        %852 = vmatpush.bf16.msra.mxu0 %v817
        %853 = vmatpush.bf16.msra.mxu0 %v816
        %854 = vmatpush.bf16.msra.mxu0 %v815
        %855 = vmatmul.bf16.gmra.mxu0 %v659
        %v856 = vpop.f32.mrf.mxu0
        %v857 = vadd.f32 %v519, %v856
        %v858 = vpop.f32.mrf.mxu0
        %v859 = vadd.f32 %v519, %v858
        %860 = vmatmul.bf16.gmra.mxu0 %v661
        %v861 = vpop.f32.mrf.mxu0
        %v862 = vadd.f32 %v519, %v861
        %v863 = vpop.f32.mrf.mxu0
        %v864 = vadd.f32 %v519, %v863
        %865 = vmatmul.bf16.gmra.mxu0 %v663
        %v866 = vpop.f32.mrf.mxu0
        %v867 = vadd.f32 %v519, %v866
        %v868 = vpop.f32.mrf.mxu0
        %v869 = vadd.f32 %v519, %v868
        %870 = vmatmul.bf16.gmra.mxu0 %v665
        %v871 = vpop.f32.mrf.mxu0
        %v872 = vadd.f32 %v519, %v871
        %v873 = vpop.f32.mrf.mxu0
        %v874 = vadd.f32 %v519, %v873
        %875 = vmatmul.bf16.gmra.mxu0 %v667
        %v876 = vpop.f32.mrf.mxu0
        %v877 = vadd.f32 %v519, %v876
        %v878 = vpop.f32.mrf.mxu0
        %v879 = vadd.f32 %v519, %v878
        %880 = vmatmul.bf16.gmra.mxu0 %v669
        %v881 = vpop.f32.mrf.mxu0
        %v882 = vadd.f32 %v519, %v881
        %v883 = vpop.f32.mrf.mxu0
        %v884 = vadd.f32 %v519, %v883
        %885 = vmatmul.bf16.gmra.mxu0 %v671
        %v886 = vpop.f32.mrf.mxu0
        %v887 = vadd.f32 %v519, %v886
        %v888 = vpop.f32.mrf.mxu0
        %v889 = vadd.f32 %v519, %v888
        %890 = vmatmul.bf16.gmra.mxu0 %v673
        %v891 = vpop.f32.mrf.mxu0
        %v892 = vadd.f32 %v519, %v891
        %v893 = vpop.f32.mrf.mxu0
        %v894 = vadd.f32 %v519, %v893
        %895 = vmatmul.bf16.gmra.mxu0 %v675
        %v896 = vpop.f32.mrf.mxu0
        %v897 = vadd.f32 %v519, %v896
        %v898 = vpop.f32.mrf.mxu0
        %v899 = vadd.f32 %v519, %v898
        %900 = vmatmul.bf16.gmra.mxu0 %v677
        %v901 = vpop.f32.mrf.mxu0
        %v902 = vadd.f32 %v519, %v901
        %v903 = vpop.f32.mrf.mxu0
        %v904 = vadd.f32 %v519, %v903
        %905 = vmatmul.bf16.gmra.mxu0 %v679
        %v906 = vpop.f32.mrf.mxu0
        %v907 = vadd.f32 %v519, %v906
        %v908 = vpop.f32.mrf.mxu0
        %v909 = vadd.f32 %v519, %v908
        %910 = vmatmul.bf16.gmra.mxu0 %v681
        %v911 = vpop.f32.mrf.mxu0
        %v912 = vadd.f32 %v519, %v911
        %v913 = vpop.f32.mrf.mxu0
        %v914 = vadd.f32 %v519, %v913
        %915 = vmatmul.bf16.gmra.mxu0 %v683
        %v916 = vpop.f32.mrf.mxu0
        %v917 = vadd.f32 %v519, %v916
        %v918 = vpop.f32.mrf.mxu0
        %v919 = vadd.f32 %v519, %v918
        %920 = vmatmul.bf16.gmra.mxu0 %v685
        %v921 = vpop.f32.mrf.mxu0
        %v922 = vadd.f32 %v519, %v921
        %v923 = vpop.f32.mrf.mxu0
        %v924 = vadd.f32 %v519, %v923
        %925 = vmatmul.bf16.gmra.mxu0 %v687
        %v926 = vpop.f32.mrf.mxu0
        %v927 = vadd.f32 %v519, %v926
        %v928 = vpop.f32.mrf.mxu0
        %v929 = vadd.f32 %v519, %v928
        %930 = vmatmul.bf16.gmra.mxu0 %v689
        %v931 = vpop.f32.mrf.mxu0
        %v932 = vadd.f32 %v519, %v931
        %v933 = vpop.f32.mrf.mxu0
        %v934 = vadd.f32 %v519, %v933
        %935 = vmatmul.bf16.gmra.mxu0 %v691
        %v936 = vpop.f32.mrf.mxu0
        %v937 = vadd.f32 %v519, %v936
        %v938 = vpop.f32.mrf.mxu0
        %v939 = vadd.f32 %v519, %v938
        %940 = vmatmul.bf16.gmra.mxu0 %v693
        %v941 = vpop.f32.mrf.mxu0
        %v942 = vadd.f32 %v519, %v941
        %v943 = vpop.f32.mrf.mxu0
        %v944 = vadd.f32 %v519, %v943
        %945 = vmatmul.bf16.gmra.mxu0 %v695
        %v946 = vpop.f32.mrf.mxu0
        %v947 = vadd.f32 %v519, %v946
        %v948 = vpop.f32.mrf.mxu0
        %v949 = vadd.f32 %v519, %v948
        %950 = vmatmul.bf16.gmra.mxu0 %v697
        %v951 = vpop.f32.mrf.mxu0
        %v952 = vadd.f32 %v519, %v951
        %v953 = vpop.f32.mrf.mxu0
        %v954 = vadd.f32 %v519, %v953
        %955 = vmatmul.bf16.gmra.mxu0 %v699
        %v956 = vpop.f32.mrf.mxu0
        %v957 = vadd.f32 %v519, %v956
        %v958 = vpop.f32.mrf.mxu0
        %v959 = vadd.f32 %v519, %v958
        %960 = vmatmul.bf16.gmra.mxu0 %v701
        %v961 = vpop.f32.mrf.mxu0
        %v962 = vadd.f32 %v519, %v961
        %v963 = vpop.f32.mrf.mxu0
        %v964 = vadd.f32 %v519, %v963
        %965 = vmatmul.bf16.gmra.mxu0 %v703
        %v966 = vpop.f32.mrf.mxu0
        %v967 = vadd.f32 %v519, %v966
        %v968 = vpop.f32.mrf.mxu0
        %v969 = vadd.f32 %v519, %v968
        %970 = vdwg.mxu0
        %971 = vmatpush.bf16.msra.mxu0 %v830
        %972 = vmatpush.bf16.msra.mxu0 %v829
        %973 = vmatpush.bf16.msra.mxu0 %v828
        %974 = vmatpush.bf16.msra.mxu0 %v827
        %975 = vmatpush.bf16.msra.mxu0 %v826
        %976 = vmatpush.bf16.msra.mxu0 %v825
        %977 = vmatpush.bf16.msra.mxu0 %v824
        %978 = vmatpush.bf16.msra.mxu0 %v823
        %979 = vmatmul.bf16.gmra.mxu0 %v660
        %v980 = vpop.f32.mrf.mxu0
        %v981 = vadd.f32 %v857, %v980
        %v982 = vpop.f32.mrf.mxu0
        %v983 = vadd.f32 %v859, %v982
        %984 = vmatmul.bf16.gmra.mxu0 %v662
        %v985 = vpop.f32.mrf.mxu0
        %v986 = vadd.f32 %v862, %v985
        %v987 = vpop.f32.mrf.mxu0
        %v988 = vadd.f32 %v864, %v987
        %989 = vmatmul.bf16.gmra.mxu0 %v664
        %v990 = vpop.f32.mrf.mxu0
        %v991 = vadd.f32 %v867, %v990
        %v992 = vpop.f32.mrf.mxu0
        %v993 = vadd.f32 %v869, %v992
        %994 = vmatmul.bf16.gmra.mxu0 %v666
        %v995 = vpop.f32.mrf.mxu0
        %v996 = vadd.f32 %v872, %v995
        %v997 = vpop.f32.mrf.mxu0
        %v998 = vadd.f32 %v874, %v997
        %999 = vmatmul.bf16.gmra.mxu0 %v668
        %v1000 = vpop.f32.mrf.mxu0
        %v1001 = vadd.f32 %v877, %v1000
        %v1002 = vpop.f32.mrf.mxu0
        %v1003 = vadd.f32 %v879, %v1002
        %1004 = vmatmul.bf16.gmra.mxu0 %v670
        %v1005 = vpop.f32.mrf.mxu0
        %v1006 = vadd.f32 %v882, %v1005
        %v1007 = vpop.f32.mrf.mxu0
        %v1008 = vadd.f32 %v884, %v1007
        %1009 = vmatmul.bf16.gmra.mxu0 %v672
        %v1010 = vpop.f32.mrf.mxu0
        %v1011 = vadd.f32 %v887, %v1010
        %v1012 = vpop.f32.mrf.mxu0
        %v1013 = vadd.f32 %v889, %v1012
        %1014 = vmatmul.bf16.gmra.mxu0 %v674
        %v1015 = vpop.f32.mrf.mxu0
        %v1016 = vadd.f32 %v892, %v1015
        %v1017 = vpop.f32.mrf.mxu0
        %v1018 = vadd.f32 %v894, %v1017
        %1019 = vmatmul.bf16.gmra.mxu0 %v676
        %v1020 = vpop.f32.mrf.mxu0
        %v1021 = vadd.f32 %v897, %v1020
        %v1022 = vpop.f32.mrf.mxu0
        %v1023 = vadd.f32 %v899, %v1022
        %1024 = vmatmul.bf16.gmra.mxu0 %v678
        %v1025 = vpop.f32.mrf.mxu0
        %v1026 = vadd.f32 %v902, %v1025
        %v1027 = vpop.f32.mrf.mxu0
        %v1028 = vadd.f32 %v904, %v1027
        %1029 = vmatmul.bf16.gmra.mxu0 %v680
        %v1030 = vpop.f32.mrf.mxu0
        %v1031 = vadd.f32 %v907, %v1030
        %v1032 = vpop.f32.mrf.mxu0
        %v1033 = vadd.f32 %v909, %v1032
        %1034 = vmatmul.bf16.gmra.mxu0 %v682
        %v1035 = vpop.f32.mrf.mxu0
        %v1036 = vadd.f32 %v912, %v1035
        %v1037 = vpop.f32.mrf.mxu0
        %v1038 = vadd.f32 %v914, %v1037
        %1039 = vmatmul.bf16.gmra.mxu0 %v684
        %v1040 = vpop.f32.mrf.mxu0
        %v1041 = vadd.f32 %v917, %v1040
        %v1042 = vpop.f32.mrf.mxu0
        %v1043 = vadd.f32 %v919, %v1042
        %1044 = vmatmul.bf16.gmra.mxu0 %v686
        %v1045 = vpop.f32.mrf.mxu0
        %v1046 = vadd.f32 %v922, %v1045
        %v1047 = vpop.f32.mrf.mxu0
        %v1048 = vadd.f32 %v924, %v1047
        %1049 = vmatmul.bf16.gmra.mxu0 %v688
        %v1050 = vpop.f32.mrf.mxu0
        %v1051 = vadd.f32 %v927, %v1050
        %v1052 = vpop.f32.mrf.mxu0
        %v1053 = vadd.f32 %v929, %v1052
        %1054 = vmatmul.bf16.gmra.mxu0 %v690
        %v1055 = vpop.f32.mrf.mxu0
        %v1056 = vadd.f32 %v932, %v1055
        %v1057 = vpop.f32.mrf.mxu0
        %v1058 = vadd.f32 %v934, %v1057
        %1059 = vmatmul.bf16.gmra.mxu0 %v692
        %v1060 = vpop.f32.mrf.mxu0
        %v1061 = vadd.f32 %v937, %v1060
        %v1062 = vpop.f32.mrf.mxu0
        %v1063 = vadd.f32 %v939, %v1062
        %1064 = vmatmul.bf16.gmra.mxu0 %v694
        %v1065 = vpop.f32.mrf.mxu0
        %v1066 = vadd.f32 %v942, %v1065
        %v1067 = vpop.f32.mrf.mxu0
        %v1068 = vadd.f32 %v944, %v1067
        %1069 = vmatmul.bf16.gmra.mxu0 %v696
        %v1070 = vpop.f32.mrf.mxu0
        %v1071 = vadd.f32 %v947, %v1070
        %v1072 = vpop.f32.mrf.mxu0
        %v1073 = vadd.f32 %v949, %v1072
        %1074 = vmatmul.bf16.gmra.mxu0 %v698
        %v1075 = vpop.f32.mrf.mxu0
        %v1076 = vadd.f32 %v952, %v1075
        %v1077 = vpop.f32.mrf.mxu0
        %v1078 = vadd.f32 %v954, %v1077
        %1079 = vmatmul.bf16.gmra.mxu0 %v700
        %v1080 = vpop.f32.mrf.mxu0
        %v1081 = vadd.f32 %v957, %v1080
        %v1082 = vpop.f32.mrf.mxu0
        %v1083 = vadd.f32 %v959, %v1082
        %1084 = vmatmul.bf16.gmra.mxu0 %v702
        %v1085 = vpop.f32.mrf.mxu0
        %v1086 = vadd.f32 %v962, %v1085
        %v1087 = vpop.f32.mrf.mxu0
        %v1088 = vadd.f32 %v964, %v1087
        %1089 = vmatmul.bf16.gmra.mxu0 %v704
        %v1090 = vpop.f32.mrf.mxu0
        %v1091 = vadd.f32 %v967, %v1090
        %v1092 = vpop.f32.mrf.mxu0
        %v1093 = vadd.f32 %v969, %v1092
        %1094 = vdwg.mxu0
        %v1095 = vmax.f32 %v981, 0.0
        %v1096 = vmax.f32 %v983, 0.0
        %v1097 = vmax.f32 %v986, 0.0
        %v1098 = vmax.f32 %v988, 0.0
        %v1099 = vmax.f32 %v991, 0.0
        %v1100 = vmax.f32 %v993, 0.0
        %v1101 = vmax.f32 %v996, 0.0
        %v1102 = vmax.f32 %v998, 0.0
        %v1103 = vmax.f32 %v1001, 0.0
        %v1104 = vmax.f32 %v1003, 0.0
        %v1105 = vmax.f32 %v1006, 0.0
        %v1106 = vmax.f32 %v1008, 0.0
        %v1107 = vmax.f32 %v1011, 0.0
        %v1108 = vmax.f32 %v1013, 0.0
        %v1109 = vmax.f32 %v1016, 0.0
        %v1110 = vmax.f32 %v1018, 0.0
        %v1111 = vmax.f32 %v1021, 0.0
        %v1112 = vmax.f32 %v1023, 0.0
        %v1113 = vmax.f32 %v1026, 0.0
        %v1114 = vmax.f32 %v1028, 0.0
        %v1115 = vmax.f32 %v1031, 0.0
        %v1116 = vmax.f32 %v1033, 0.0
        %v1117 = vmax.f32 %v1036, 0.0
        %v1118 = vmax.f32 %v1038, 0.0
        %v1119 = vmax.f32 %v1041, 0.0
        %v1120 = vmax.f32 %v1043, 0.0
        %v1121 = vmax.f32 %v1046, 0.0
        %v1122 = vmax.f32 %v1048, 0.0
        %v1123 = vmax.f32 %v1051, 0.0
        %v1124 = vmax.f32 %v1053, 0.0
        %v1125 = vmax.f32 %v1056, 0.0
        %v1126 = vmax.f32 %v1058, 0.0
        %v1127 = vmax.f32 %v1061, 0.0
        %v1128 = vmax.f32 %v1063, 0.0
        %v1129 = vmax.f32 %v1066, 0.0
        %v1130 = vmax.f32 %v1068, 0.0
        %v1131 = vmax.f32 %v1071, 0.0
        %v1132 = vmax.f32 %v1073, 0.0
        %v1133 = vmax.f32 %v1076, 0.0
        %v1134 = vmax.f32 %v1078, 0.0
        %v1135 = vmax.f32 %v1081, 0.0
        %v1136 = vmax.f32 %v1083, 0.0
        %v1137 = vmax.f32 %v1086, 0.0
        %v1138 = vmax.f32 %v1088, 0.0
        %v1139 = vmax.f32 %v1091, 0.0
        %v1140 = vmax.f32 %v1093, 0.0
        %v1141 = vpack.c.bf16 %v1096, %v1095
        %v1142 = vpack.c.bf16 %v1098, %v1097
        %v1143 = vpack.c.bf16 %v1100, %v1099
        %v1144 = vpack.c.bf16 %v1102, %v1101
        %v1145 = vpack.c.bf16 %v1104, %v1103
        %v1146 = vpack.c.bf16 %v1106, %v1105
        %v1147 = vpack.c.bf16 %v1108, %v1107
        %v1148 = vpack.c.bf16 %v1110, %v1109
        %v1149 = vpack.c.bf16 %v1112, %v1111
        %v1150 = vpack.c.bf16 %v1114, %v1113
        %v1151 = vpack.c.bf16 %v1116, %v1115
        %v1152 = vpack.c.bf16 %v1118, %v1117
        %v1153 = vpack.c.bf16 %v1120, %v1119
        %v1154 = vpack.c.bf16 %v1122, %v1121
        %v1155 = vpack.c.bf16 %v1124, %v1123
        %v1156 = vpack.c.bf16 %v1126, %v1125
        %v1157 = vpack.c.bf16 %v1128, %v1127
        %v1158 = vpack.c.bf16 %v1130, %v1129
        %v1159 = vpack.c.bf16 %v1132, %v1131
        %v1160 = vpack.c.bf16 %v1134, %v1133
        %v1161 = vpack.c.bf16 %v1136, %v1135
        %v1162 = vpack.c.bf16 %v1138, %v1137
        %v1163 = vpack.c.bf16 %v1140, %v1139
        %v1164 = vld [vmem:[%s3] sm:$0xff]
        %v1165 = vld [vmem:[%s3 + $0x8] sm:$0xf]
        %v1166 = vld [vmem:[%s3 + $0xc] sm:$0xff]
        %v1167 = vld [vmem:[%s3 + $0x14] sm:$0xf]
        %v1168 = vld [vmem:[%s3 + $0x18] sm:$0xff]
        %v1169 = vld [vmem:[%s3 + $0x20] sm:$0xf]
        %v1170 = vld [vmem:[%s3 + $0x24] sm:$0xff]
        %v1171 = vld [vmem:[%s3 + $0x2c] sm:$0xf]
        %v1172 = vld [vmem:[%s3 + $0x30] sm:$0xff]
        %v1173 = vld [vmem:[%s3 + $0x38] sm:$0xf]
        %v1174 = vld [vmem:[%s3 + $0x3c] sm:$0xff]
        %v1175 = vld [vmem:[%s3 + $0x44] sm:$0xf]
        %v1176 = vld [vmem:[%s3 + $0x48] sm:$0xff]
        %v1177 = vld [vmem:[%s3 + $0x50] sm:$0xf]
        %v1178 = vld [vmem:[%s3 + $0x54] sm:$0xff]
        %v1179 = vld [vmem:[%s3 + $0x5c] sm:$0xf]
        %v1180 = vld [vmem:[%s3 + $0x60] sm:$0xff]
        %v1181 = vld [vmem:[%s3 + $0x68] sm:$0xf]
        %v1182 = vld [vmem:[%s3 + $0x6c] sm:$0xff]
        %v1183 = vld [vmem:[%s3 + $0x74] sm:$0xf]
        %v1184 = vld [vmem:[%s3 + $0x78] sm:$0xff]
        %v1185 = vld [vmem:[%s3 + $0x80] sm:$0xf]
        %v1186 = vld [vmem:[%s3 + $0x84] sm:$0xff]
        %v1187 = vld [vmem:[%s3 + $0x8c] sm:$0xf]
        %v1188 = vld [vmem:[%s3 + $0x90] sm:$0xff]
        %v1189 = vld [vmem:[%s3 + $0x98] sm:$0xf]
        %v1190 = vld [vmem:[%s3 + $0x9c] sm:$0xff]
        %v1191 = vld [vmem:[%s3 + $0xa4] sm:$0xf]
        %v1192 = vld [vmem:[%s3 + $0xa8] sm:$0xff]
        %v1193 = vld [vmem:[%s3 + $0xb0] sm:$0xf]
        %v1194 = vld [vmem:[%s3 + $0xb4] sm:$0xff]
        %v1195 = vld [vmem:[%s3 + $0xbc] sm:$0xf]
        %v1196 = vld [vmem:[%s3 + $0xc0] sm:$0xff]
        %v1197 = vld [vmem:[%s3 + $0xc8] sm:$0xf]
        %v1198 = vld [vmem:[%s3 + $0xcc] sm:$0xff]
        %v1199 = vld [vmem:[%s3 + $0xd4] sm:$0xf]
        %v1200 = vld [vmem:[%s3 + $0xd8] sm:$0xff]
        %v1201 = vld [vmem:[%s3 + $0xe0] sm:$0xf]
        %v1202 = vld [vmem:[%s3 + $0xe4] sm:$0xff]
        %v1203 = vld [vmem:[%s3 + $0xec] sm:$0xf]
        %v1204 = vld [vmem:[%s3 + $0xf0] sm:$0xff]
        %v1205 = vld [vmem:[%s3 + $0xf8] sm:$0xf]
        %v1206 = vld [vmem:[%s3 + $0xfc] sm:$0xff]
        %v1207 = vld [vmem:[%s3 + $0x104] sm:$0xf]
        %v1208 = vld [vmem:[%s3 + $0x108] sm:$0xff]
        %v1209 = vld [vmem:[%s3 + $0x110] sm:$0xf]
        %v1210 = vld [vmem:[%s3 + $0x114] sm:$0xff]
        %v1211 = vld [vmem:[%s3 + $0x11c] sm:$0xf]
        %v1212 = vld [vmem:[%s3 + $0x120] sm:$0xff]
        %v1213 = vld [vmem:[%s3 + $0x128] sm:$0xf]
        %v1214 = vld [vmem:[%s3 + $0x12c] sm:$0xff]
        %v1215 = vld [vmem:[%s3 + $0x134] sm:$0xf]
        %v1216 = vld [vmem:[%s3 + $0x138] sm:$0xff]
        %v1217 = vld [vmem:[%s3 + $0x140] sm:$0xf]
        %v1218 = vld [vmem:[%s3 + $0x144] sm:$0xff]
        %v1219 = vld [vmem:[%s3 + $0x14c] sm:$0xf]
        %v1220 = vld [vmem:[%s3 + $0x150] sm:$0xff]
        %v1221 = vld [vmem:[%s3 + $0x158] sm:$0xf]
        %v1222 = vld [vmem:[%s3 + $0x15c] sm:$0xff]
        %v1223 = vld [vmem:[%s3 + $0x164] sm:$0xf]
        %v1224 = vld [vmem:[%s3 + $0x168] sm:$0xff]
        %v1225 = vld [vmem:[%s3 + $0x170] sm:$0xf]
        %v1226 = vld [vmem:[%s3 + $0x174] sm:$0xff]
        %v1227 = vld [vmem:[%s3 + $0x17c] sm:$0xf]
        %v1228 = vld [vmem:[%s3 + $0x180] sm:$0xff]
        %v1229 = vld [vmem:[%s3 + $0x188] sm:$0xf]
        %v1230 = vld [vmem:[%s3 + $0x18c] sm:$0xff]
        %v1231 = vld [vmem:[%s3 + $0x194] sm:$0xf]
        %v1232 = vld [vmem:[%s3 + $0x198] sm:$0xff]
        %v1233 = vld [vmem:[%s3 + $0x1a0] sm:$0xf]
        %v1234 = vld [vmem:[%s3 + $0x1a4] sm:$0xff]
        %v1235 = vld [vmem:[%s3 + $0x1ac] sm:$0xf]
        %v1236 = vld [vmem:[%s3 + $0x1b0] sm:$0xff]
        %v1237 = vld [vmem:[%s3 + $0x1b8] sm:$0xf]
        %v1238 = vld [vmem:[%s3 + $0x1bc] sm:$0xff]
        %v1239 = vld [vmem:[%s3 + $0x1c4] sm:$0xf]
        %v1240 = vld [vmem:[%s3 + $0x1c8] sm:$0xff]
        %v1241 = vld [vmem:[%s3 + $0x1d0] sm:$0xf]
        %v1242 = vld [vmem:[%s3 + $0x1d4] sm:$0xff]
        %v1243 = vld [vmem:[%s3 + $0x1dc] sm:$0xf]
        %v1244 = vld [vmem:[%s3 + $0x1e0] sm:$0xff]
        %v1245 = vld [vmem:[%s3 + $0x1e8] sm:$0xf]
        %v1246 = vld [vmem:[%s3 + $0x1ec] sm:$0xff]
        %v1247 = vld [vmem:[%s3 + $0x1f4] sm:$0xf]
        %v1248 = vld [vmem:[%s3 + $0x1f8] sm:$0xff]
        %v1249 = vld [vmem:[%s3 + $0x200] sm:$0xf]
        %v1250 = vld [vmem:[%s3 + $0x204] sm:$0xff]
        %v1251 = vld [vmem:[%s3 + $0x20c] sm:$0xf]
        %v1252 = vld [vmem:[%s3 + $0x210] sm:$0xff]
        %v1253 = vld [vmem:[%s3 + $0x218] sm:$0xf]
        %v1254 = vld [vmem:[%s3 + $0x21c] sm:$0xff]
        %v1255 = vld [vmem:[%s3 + $0x224] sm:$0xf]
        %v1256 = vld [vmem:[%s3 + $0x228] sm:$0xff]
        %v1257 = vld [vmem:[%s3 + $0x230] sm:$0xf]
        %v1258 = vld [vmem:[%s3 + $0x234] sm:$0xff]
        %v1259 = vld [vmem:[%s3 + $0x23c] sm:$0xf]
        %v1260 = vld [vmem:[%s3 + $0x240] sm:$0xff]
        %v1261 = vld [vmem:[%s3 + $0x248] sm:$0xf]
        %v1262 = vld [vmem:[%s3 + $0x24c] sm:$0xff]
        %v1263 = vld [vmem:[%s3 + $0x254] sm:$0xf]
        %v1264 = vld [vmem:[%s3 + $0x258] sm:$0xff]
        %v1265 = vld [vmem:[%s3 + $0x260] sm:$0xf]
        %v1266 = vld [vmem:[%s3 + $0x264] sm:$0xff]
        %v1267 = vld [vmem:[%s3 + $0x26c] sm:$0xf]
        %v1268 = vld [vmem:[%s3 + $0x270] sm:$0xff]
        %v1269 = vld [vmem:[%s3 + $0x278] sm:$0xf]
        %v1270 = vld [vmem:[%s3 + $0x27c] sm:$0xff]
        %v1271 = vld [vmem:[%s3 + $0x284] sm:$0xf]
        %v1272 = vld [vmem:[%s3 + $0x288] sm:$0xff]
        %v1273 = vld [vmem:[%s3 + $0x290] sm:$0xf]
        %v1274 = vld [vmem:[%s3 + $0x294] sm:$0xff]
        %v1275 = vld [vmem:[%s3 + $0x29c] sm:$0xf]
        %v1276 = vld [vmem:[%s3 + $0x2a0] sm:$0xff]
        %v1277 = vld [vmem:[%s3 + $0x2a8] sm:$0xf]
        %v1278 = vld [vmem:[%s3 + $0x2ac] sm:$0xff]
        %v1279 = vld [vmem:[%s3 + $0x2b4] sm:$0xf]
        %v1280 = vld [vmem:[%s3 + $0x2b8] sm:$0xff]
        %v1281 = vld [vmem:[%s3 + $0x2c0] sm:$0xf]
        %v1282 = vld [vmem:[%s3 + $0x2c4] sm:$0xff]
        %v1283 = vld [vmem:[%s3 + $0x2cc] sm:$0xf]
        %v1284 = vld [vmem:[%s3 + $0x2d0] sm:$0xff]
        %v1285 = vld [vmem:[%s3 + $0x2d8] sm:$0xf]
        %v1286 = vld [vmem:[%s3 + $0x2dc] sm:$0xff]
        %v1287 = vld [vmem:[%s3 + $0x2e4] sm:$0xf]
        %v1288 = vld [vmem:[%s3 + $0x2e8] sm:$0xff]
        %v1289 = vld [vmem:[%s3 + $0x2f0] sm:$0xf]
        %v1290 = vld [vmem:[%s3 + $0x2f4] sm:$0xff]
        %v1291 = vld [vmem:[%s3 + $0x2fc] sm:$0xf]
        %v1292 = vld [vmem:[%s3 + $0x300] sm:$0xff]
        %v1293 = vld [vmem:[%s3 + $0x308] sm:$0xf]
        %v1294 = vld [vmem:[%s3 + $0x30c] sm:$0xff]
        %v1295 = vld [vmem:[%s3 + $0x314] sm:$0xf]
        %v1296 = vld [vmem:[%s3 + $0x318] sm:$0xff]
        %v1297 = vld [vmem:[%s3 + $0x320] sm:$0xf]
        %v1298 = vld [vmem:[%s3 + $0x324] sm:$0xff]
        %v1299 = vld [vmem:[%s3 + $0x32c] sm:$0xf]
        %v1300 = vld [vmem:[%s3 + $0x330] sm:$0xff]
        %v1301 = vld [vmem:[%s3 + $0x338] sm:$0xf]
        %v1302 = vld [vmem:[%s3 + $0x33c] sm:$0xff]
        %v1303 = vld [vmem:[%s3 + $0x344] sm:$0xf]
        %v1304 = vld [vmem:[%s3 + $0x348] sm:$0xff]
        %v1305 = vld [vmem:[%s3 + $0x350] sm:$0xf]
        %v1306 = vld [vmem:[%s3 + $0x354] sm:$0xff]
        %v1307 = vld [vmem:[%s3 + $0x35c] sm:$0xf]
        %v1308 = vld [vmem:[%s3 + $0x360] sm:$0xff]
        %v1309 = vld [vmem:[%s3 + $0x368] sm:$0xf]
        %v1310 = vld [vmem:[%s3 + $0x36c] sm:$0xff]
        %v1311 = vld [vmem:[%s3 + $0x374] sm:$0xf]
        %v1312 = vld [vmem:[%s3 + $0x378] sm:$0xff]
        %v1313 = vld [vmem:[%s3 + $0x380] sm:$0xf]
        %v1314 = vld [vmem:[%s3 + $0x384] sm:$0xff]
        %v1315 = vld [vmem:[%s3 + $0x38c] sm:$0xf]
        %v1316 = vld [vmem:[%s3 + $0x390] sm:$0xff]
        %v1317 = vld [vmem:[%s3 + $0x398] sm:$0xf]
        %v1318 = vld [vmem:[%s3 + $0x39c] sm:$0xff]
        %v1319 = vld [vmem:[%s3 + $0x3a4] sm:$0xf]
        %v1320 = vld [vmem:[%s3 + $0x3a8] sm:$0xff]
        %v1321 = vld [vmem:[%s3 + $0x3b0] sm:$0xf]
        %v1322 = vld [vmem:[%s3 + $0x3b4] sm:$0xff]
        %v1323 = vld [vmem:[%s3 + $0x3bc] sm:$0xf]
        %v1324 = vld [vmem:[%s3 + $0x3c0] sm:$0xff]
        %v1325 = vld [vmem:[%s3 + $0x3c8] sm:$0xf]
        %v1326 = vld [vmem:[%s3 + $0x3cc] sm:$0xff]
        %v1327 = vld [vmem:[%s3 + $0x3d4] sm:$0xf]
        %v1328 = vld [vmem:[%s3 + $0x3d8] sm:$0xff]
        %v1329 = vld [vmem:[%s3 + $0x3e0] sm:$0xf]
        %v1330 = vld [vmem:[%s3 + $0x3e4] sm:$0xff]
        %v1331 = vld [vmem:[%s3 + $0x3ec] sm:$0xf]
        %v1332 = vld [vmem:[%s3 + $0x3f0] sm:$0xff]
        %v1333 = vld [vmem:[%s3 + $0x3f8] sm:$0xf]
        %v1334 = vld [vmem:[%s3 + $0x3fc] sm:$0xff]
        %v1335 = vld [vmem:[%s3 + $0x404] sm:$0xf]
        %v1336 = vld [vmem:[%s3 + $0x408] sm:$0xff]
        %v1337 = vld [vmem:[%s3 + $0x410] sm:$0xf]
        %v1338 = vld [vmem:[%s3 + $0x414] sm:$0xff]
        %v1339 = vld [vmem:[%s3 + $0x41c] sm:$0xf]
        %v1340 = vld [vmem:[%s3 + $0x420] sm:$0xff]
        %v1341 = vld [vmem:[%s3 + $0x428] sm:$0xf]
        %v1342 = vld [vmem:[%s3 + $0x42c] sm:$0xff]
        %v1343 = vld [vmem:[%s3 + $0x434] sm:$0xf]
        %v1344 = vld [vmem:[%s3 + $0x438] sm:$0xff]
        %v1345 = vld [vmem:[%s3 + $0x440] sm:$0xf]
        %v1346 = vld [vmem:[%s3 + $0x444] sm:$0xff]
        %v1347 = vld [vmem:[%s3 + $0x44c] sm:$0xf]
        %v1348 = vld [vmem:[%s3 + $0x450] sm:$0xff]
        %v1349 = vld [vmem:[%s3 + $0x458] sm:$0xf]
        %v1350 = vld [vmem:[%s3 + $0x45c] sm:$0xff]
        %v1351 = vld [vmem:[%s3 + $0x464] sm:$0xf]
        %v1352 = vld [vmem:[%s3 + $0x468] sm:$0xff]
        %v1353 = vld [vmem:[%s3 + $0x470] sm:$0xf]
        %v1354 = vld [vmem:[%s3 + $0x474] sm:$0xff]
        %v1355 = vld [vmem:[%s3 + $0x47c] sm:$0xf]
        %v1356 = vld [vmem:[%s3 + $0x480] sm:$0xff]
        %v1357 = vld [vmem:[%s3 + $0x488] sm:$0xf]
        %v1358 = vld [vmem:[%s3 + $0x48c] sm:$0xff]
        %v1359 = vld [vmem:[%s3 + $0x494] sm:$0xf]
        %v1360 = vld [vmem:[%s3 + $0x498] sm:$0xff]
        %v1361 = vld [vmem:[%s3 + $0x4a0] sm:$0xf]
        %v1362 = vld [vmem:[%s3 + $0x4a4] sm:$0xff]
        %v1363 = vld [vmem:[%s3 + $0x4ac] sm:$0xf]
        %v1364 = vld [vmem:[%s3 + $0x4b0] sm:$0xff]
        %v1365 = vld [vmem:[%s3 + $0x4b8] sm:$0xf]
        %v1366 = vld [vmem:[%s3 + $0x4bc] sm:$0xff]
        %v1367 = vld [vmem:[%s3 + $0x4c4] sm:$0xf]
        %v1368 = vld [vmem:[%s3 + $0x4c8] sm:$0xff]
        %v1369 = vld [vmem:[%s3 + $0x4d0] sm:$0xf]
        %v1370 = vld [vmem:[%s3 + $0x4d4] sm:$0xff]
        %v1371 = vld [vmem:[%s3 + $0x4dc] sm:$0xf]
        %v1372 = vld [vmem:[%s3 + $0x4e0] sm:$0xff]
        %v1373 = vld [vmem:[%s3 + $0x4e8] sm:$0xf]
        %v1374 = vld [vmem:[%s3 + $0x4ec] sm:$0xff]
        %v1375 = vld [vmem:[%s3 + $0x4f4] sm:$0xf]
        %v1376 = vld [vmem:[%s3 + $0x4f8] sm:$0xff]
        %v1377 = vld [vmem:[%s3 + $0x500] sm:$0xf]
        %v1378 = vld [vmem:[%s3 + $0x504] sm:$0xff]
        %v1379 = vld [vmem:[%s3 + $0x50c] sm:$0xf]
        %v1380 = vld [vmem:[%s3 + $0x510] sm:$0xff]
        %v1381 = vld [vmem:[%s3 + $0x518] sm:$0xf]
        %v1382 = vld [vmem:[%s3 + $0x51c] sm:$0xff]
        %v1383 = vld [vmem:[%s3 + $0x524] sm:$0xf]
        %v1384 = vld [vmem:[%s3 + $0x528] sm:$0xff]
        %v1385 = vld [vmem:[%s3 + $0x530] sm:$0xf]
        %v1386 = vld [vmem:[%s3 + $0x534] sm:$0xff]
        %v1387 = vld [vmem:[%s3 + $0x53c] sm:$0xf]
        %v1388 = vld [vmem:[%s3 + $0x540] sm:$0xff]
        %v1389 = vld [vmem:[%s3 + $0x548] sm:$0xf]
        %v1390 = vld [vmem:[%s3 + $0x54c] sm:$0xff]
        %v1391 = vld [vmem:[%s3 + $0x554] sm:$0xf]
        %v1392 = vld [vmem:[%s3 + $0x558] sm:$0xff]
        %v1393 = vld [vmem:[%s3 + $0x560] sm:$0xf]
        %v1394 = vld [vmem:[%s3 + $0x564] sm:$0xff]
        %v1395 = vld [vmem:[%s3 + $0x56c] sm:$0xf]
        %v1396 = vld [vmem:[%s3 + $0x570] sm:$0xff]
        %v1397 = vld [vmem:[%s3 + $0x578] sm:$0xf]
        %v1398 = vld [vmem:[%s3 + $0x57c] sm:$0xff]
        %v1399 = vld [vmem:[%s3 + $0x584] sm:$0xf]
        %v1400 = vld [vmem:[%s3 + $0x588] sm:$0xff]
        %v1401 = vld [vmem:[%s3 + $0x590] sm:$0xf]
        %v1402 = vld [vmem:[%s3 + $0x594] sm:$0xff]
        %v1403 = vld [vmem:[%s3 + $0x59c] sm:$0xf]
        %v1404 = vld [vmem:[%s3 + $0x5a0] sm:$0xff]
        %v1405 = vld [vmem:[%s3 + $0x5a8] sm:$0xf]
        %v1406 = vld [vmem:[%s3 + $0x5ac] sm:$0xff]
        %v1407 = vld [vmem:[%s3 + $0x5b4] sm:$0xf]
        %v1408 = vld [vmem:[%s3 + $0x5b8] sm:$0xff]
        %v1409 = vld [vmem:[%s3 + $0x5c0] sm:$0xf]
        %v1410 = vld [vmem:[%s3 + $0x5c4] sm:$0xff]
        %v1411 = vld [vmem:[%s3 + $0x5cc] sm:$0xf]
        %v1412 = vld [vmem:[%s3 + $0x5d0] sm:$0xff]
        %v1413 = vld [vmem:[%s3 + $0x5d8] sm:$0xf]
        %v1414 = vld [vmem:[%s3 + $0x5dc] sm:$0xff]
        %v1415 = vld [vmem:[%s3 + $0x5e4] sm:$0xf]
        %v1416 = vld [vmem:[%s3 + $0x5e8] sm:$0xff]
        %v1417 = vld [vmem:[%s3 + $0x5f0] sm:$0xf]
        %v1418 = vld [vmem:[%s3 + $0x5f4] sm:$0xff]
        %v1419 = vld [vmem:[%s3 + $0x5fc] sm:$0xf]
        %v1676 = vunpack.c.l.b16 %v1164
        %v1677 = vunpack.c.h.b16 %v1164
        %v1678 = vunpack.c.l.b16 %v1165
        %v1679 = vunpack.c.l.b16 %v1166
        %v1680 = vunpack.c.h.b16 %v1166
        %v1681 = vunpack.c.l.b16 %v1167
        %v1682 = vunpack.c.l.b16 %v1168
        %v1683 = vunpack.c.h.b16 %v1168
        %v1684 = vunpack.c.l.b16 %v1169
        %v1685 = vunpack.c.l.b16 %v1170
        %v1686 = vunpack.c.h.b16 %v1170
        %v1687 = vunpack.c.l.b16 %v1171
        %v1688 = vunpack.c.l.b16 %v1172
        %v1689 = vunpack.c.h.b16 %v1172
        %v1690 = vunpack.c.l.b16 %v1173
        %v1691 = vunpack.c.l.b16 %v1174
        %v1692 = vunpack.c.h.b16 %v1174
        %v1693 = vunpack.c.l.b16 %v1175
        %v1694 = vunpack.c.l.b16 %v1176
        %v1695 = vunpack.c.h.b16 %v1176
        %v1696 = vunpack.c.l.b16 %v1177
        %v1697 = vunpack.c.l.b16 %v1178
        %v1698 = vunpack.c.h.b16 %v1178
        %v1699 = vunpack.c.l.b16 %v1179
        %v1700 = vunpack.c.l.b16 %v1180
        %v1701 = vunpack.c.h.b16 %v1180
        %v1702 = vunpack.c.l.b16 %v1181
        %v1703 = vunpack.c.l.b16 %v1182
        %v1704 = vunpack.c.h.b16 %v1182
        %v1705 = vunpack.c.l.b16 %v1183
        %v1706 = vunpack.c.l.b16 %v1184
        %v1707 = vunpack.c.h.b16 %v1184
        %v1708 = vunpack.c.l.b16 %v1185
        %v1709 = vunpack.c.l.b16 %v1186
        %v1710 = vunpack.c.h.b16 %v1186
        %v1711 = vunpack.c.l.b16 %v1187
        %v1712 = vunpack.c.l.b16 %v1188
        %v1713 = vunpack.c.h.b16 %v1188
        %v1714 = vunpack.c.l.b16 %v1189
        %v1715 = vunpack.c.l.b16 %v1190
        %v1716 = vunpack.c.h.b16 %v1190
        %v1717 = vunpack.c.l.b16 %v1191
        %v1718 = vunpack.c.l.b16 %v1192
        %v1719 = vunpack.c.h.b16 %v1192
        %v1720 = vunpack.c.l.b16 %v1193
        %v1721 = vunpack.c.l.b16 %v1194
        %v1722 = vunpack.c.h.b16 %v1194
        %v1723 = vunpack.c.l.b16 %v1195
        %v1724 = vunpack.c.l.b16 %v1196
        %v1725 = vunpack.c.h.b16 %v1196
        %v1726 = vunpack.c.l.b16 %v1197
        %v1727 = vunpack.c.l.b16 %v1198
        %v1728 = vunpack.c.h.b16 %v1198
        %v1729 = vunpack.c.l.b16 %v1199
        %v1730 = vunpack.c.l.b16 %v1200
        %v1731 = vunpack.c.h.b16 %v1200
        %v1732 = vunpack.c.l.b16 %v1201
        %v1733 = vunpack.c.l.b16 %v1202
        %v1734 = vunpack.c.h.b16 %v1202
        %v1735 = vunpack.c.l.b16 %v1203
        %v1736 = vunpack.c.l.b16 %v1204
        %v1737 = vunpack.c.h.b16 %v1204
        %v1738 = vunpack.c.l.b16 %v1205
        %v1739 = vunpack.c.l.b16 %v1206
        %v1740 = vunpack.c.h.b16 %v1206
        %v1741 = vunpack.c.l.b16 %v1207
        %v1742 = vunpack.c.l.b16 %v1208
        %v1743 = vunpack.c.h.b16 %v1208
        %v1744 = vunpack.c.l.b16 %v1209
        %v1745 = vunpack.c.l.b16 %v1210
        %v1746 = vunpack.c.h.b16 %v1210
        %v1747 = vunpack.c.l.b16 %v1211
        %v1748 = vunpack.c.l.b16 %v1212
        %v1749 = vunpack.c.h.b16 %v1212
        %v1750 = vunpack.c.l.b16 %v1213
        %v1751 = vunpack.c.l.b16 %v1214
        %v1752 = vunpack.c.h.b16 %v1214
        %v1753 = vunpack.c.l.b16 %v1215
        %v1754 = vunpack.c.l.b16 %v1216
        %v1755 = vunpack.c.h.b16 %v1216
        %v1756 = vunpack.c.l.b16 %v1217
        %v1757 = vunpack.c.l.b16 %v1218
        %v1758 = vunpack.c.h.b16 %v1218
        %v1759 = vunpack.c.l.b16 %v1219
        %v1760 = vunpack.c.l.b16 %v1220
        %v1761 = vunpack.c.h.b16 %v1220
        %v1762 = vunpack.c.l.b16 %v1221
        %v1763 = vunpack.c.l.b16 %v1222
        %v1764 = vunpack.c.h.b16 %v1222
        %v1765 = vunpack.c.l.b16 %v1223
        %v1766 = vunpack.c.l.b16 %v1224
        %v1767 = vunpack.c.h.b16 %v1224
        %v1768 = vunpack.c.l.b16 %v1225
        %v1769 = vunpack.c.l.b16 %v1226
        %v1770 = vunpack.c.h.b16 %v1226
        %v1771 = vunpack.c.l.b16 %v1227
        %v1772 = vunpack.c.l.b16 %v1228
        %v1773 = vunpack.c.h.b16 %v1228
        %v1774 = vunpack.c.l.b16 %v1229
        %v1775 = vunpack.c.l.b16 %v1230
        %v1776 = vunpack.c.h.b16 %v1230
        %v1777 = vunpack.c.l.b16 %v1231
        %v1778 = vunpack.c.l.b16 %v1232
        %v1779 = vunpack.c.h.b16 %v1232
        %v1780 = vunpack.c.l.b16 %v1233
        %v1781 = vunpack.c.l.b16 %v1234
        %v1782 = vunpack.c.h.b16 %v1234
        %v1783 = vunpack.c.l.b16 %v1235
        %v1784 = vunpack.c.l.b16 %v1236
        %v1785 = vunpack.c.h.b16 %v1236
        %v1786 = vunpack.c.l.b16 %v1237
        %v1787 = vunpack.c.l.b16 %v1238
        %v1788 = vunpack.c.h.b16 %v1238
        %v1789 = vunpack.c.l.b16 %v1239
        %v1790 = vunpack.c.l.b16 %v1240
        %v1791 = vunpack.c.h.b16 %v1240
        %v1792 = vunpack.c.l.b16 %v1241
        %v1793 = vunpack.c.l.b16 %v1242
        %v1794 = vunpack.c.h.b16 %v1242
        %v1795 = vunpack.c.l.b16 %v1243
        %v1796 = vunpack.c.l.b16 %v1244
        %v1797 = vunpack.c.h.b16 %v1244
        %v1798 = vunpack.c.l.b16 %v1245
        %v1799 = vunpack.c.l.b16 %v1246
        %v1800 = vunpack.c.h.b16 %v1246
        %v1801 = vunpack.c.l.b16 %v1247
        %v1802 = vunpack.c.l.b16 %v1248
        %v1803 = vunpack.c.h.b16 %v1248
        %v1804 = vunpack.c.l.b16 %v1249
        %v1805 = vunpack.c.l.b16 %v1250
        %v1806 = vunpack.c.h.b16 %v1250
        %v1807 = vunpack.c.l.b16 %v1251
        %v1808 = vunpack.c.l.b16 %v1252
        %v1809 = vunpack.c.h.b16 %v1252
        %v1810 = vunpack.c.l.b16 %v1253
        %v1811 = vunpack.c.l.b16 %v1254
        %v1812 = vunpack.c.h.b16 %v1254
        %v1813 = vunpack.c.l.b16 %v1255
        %v1814 = vunpack.c.l.b16 %v1256
        %v1815 = vunpack.c.h.b16 %v1256
        %v1816 = vunpack.c.l.b16 %v1257
        %v1817 = vunpack.c.l.b16 %v1258
        %v1818 = vunpack.c.h.b16 %v1258
        %v1819 = vunpack.c.l.b16 %v1259
        %v1820 = vunpack.c.l.b16 %v1260
        %v1821 = vunpack.c.h.b16 %v1260
        %v1822 = vunpack.c.l.b16 %v1261
        %v1823 = vunpack.c.l.b16 %v1262
        %v1824 = vunpack.c.h.b16 %v1262
        %v1825 = vunpack.c.l.b16 %v1263
        %v1826 = vunpack.c.l.b16 %v1264
        %v1827 = vunpack.c.h.b16 %v1264
        %v1828 = vunpack.c.l.b16 %v1265
        %v1829 = vunpack.c.l.b16 %v1266
        %v1830 = vunpack.c.h.b16 %v1266
        %v1831 = vunpack.c.l.b16 %v1267
        %v1832 = vunpack.c.l.b16 %v1268
        %v1833 = vunpack.c.h.b16 %v1268
        %v1834 = vunpack.c.l.b16 %v1269
        %v1835 = vunpack.c.l.b16 %v1270
        %v1836 = vunpack.c.h.b16 %v1270
        %v1837 = vunpack.c.l.b16 %v1271
        %v1838 = vunpack.c.l.b16 %v1272
        %v1839 = vunpack.c.h.b16 %v1272
        %v1840 = vunpack.c.l.b16 %v1273
        %v1841 = vunpack.c.l.b16 %v1274
        %v1842 = vunpack.c.h.b16 %v1274
        %v1843 = vunpack.c.l.b16 %v1275
        %v1844 = vunpack.c.l.b16 %v1276
        %v1845 = vunpack.c.h.b16 %v1276
        %v1846 = vunpack.c.l.b16 %v1277
        %v1847 = vunpack.c.l.b16 %v1278
        %v1848 = vunpack.c.h.b16 %v1278
        %v1849 = vunpack.c.l.b16 %v1279
        %v1850 = vunpack.c.l.b16 %v1280
        %v1851 = vunpack.c.h.b16 %v1280
        %v1852 = vunpack.c.l.b16 %v1281
        %v1853 = vunpack.c.l.b16 %v1282
        %v1854 = vunpack.c.h.b16 %v1282
        %v1855 = vunpack.c.l.b16 %v1283
        %v1856 = vunpack.c.l.b16 %v1284
        %v1857 = vunpack.c.h.b16 %v1284
        %v1858 = vunpack.c.l.b16 %v1285
        %v1859 = vunpack.c.l.b16 %v1286
        %v1860 = vunpack.c.h.b16 %v1286
        %v1861 = vunpack.c.l.b16 %v1287
        %v1862 = vunpack.c.l.b16 %v1288
        %v1863 = vunpack.c.h.b16 %v1288
        %v1864 = vunpack.c.l.b16 %v1289
        %v1865 = vunpack.c.l.b16 %v1290
        %v1866 = vunpack.c.h.b16 %v1290
        %v1867 = vunpack.c.l.b16 %v1291
        %v1868 = vunpack.c.l.b16 %v1292
        %v1869 = vunpack.c.h.b16 %v1292
        %v1870 = vunpack.c.l.b16 %v1293
        %v1871 = vunpack.c.l.b16 %v1294
        %v1872 = vunpack.c.h.b16 %v1294
        %v1873 = vunpack.c.l.b16 %v1295
        %v1874 = vunpack.c.l.b16 %v1296
        %v1875 = vunpack.c.h.b16 %v1296
        %v1876 = vunpack.c.l.b16 %v1297
        %v1877 = vunpack.c.l.b16 %v1298
        %v1878 = vunpack.c.h.b16 %v1298
        %v1879 = vunpack.c.l.b16 %v1299
        %v1880 = vunpack.c.l.b16 %v1300
        %v1881 = vunpack.c.h.b16 %v1300
        %v1882 = vunpack.c.l.b16 %v1301
        %v1883 = vunpack.c.l.b16 %v1302
        %v1884 = vunpack.c.h.b16 %v1302
        %v1885 = vunpack.c.l.b16 %v1303
        %v1886 = vunpack.c.l.b16 %v1304
        %v1887 = vunpack.c.h.b16 %v1304
        %v1888 = vunpack.c.l.b16 %v1305
        %v1889 = vunpack.c.l.b16 %v1306
        %v1890 = vunpack.c.h.b16 %v1306
        %v1891 = vunpack.c.l.b16 %v1307
        %v1892 = vunpack.c.l.b16 %v1308
        %v1893 = vunpack.c.h.b16 %v1308
        %v1894 = vunpack.c.l.b16 %v1309
        %v1895 = vunpack.c.l.b16 %v1310
        %v1896 = vunpack.c.h.b16 %v1310
        %v1897 = vunpack.c.l.b16 %v1311
        %v1898 = vunpack.c.l.b16 %v1312
        %v1899 = vunpack.c.h.b16 %v1312
        %v1900 = vunpack.c.l.b16 %v1313
        %v1901 = vunpack.c.l.b16 %v1314
        %v1902 = vunpack.c.h.b16 %v1314
        %v1903 = vunpack.c.l.b16 %v1315
        %v1904 = vunpack.c.l.b16 %v1316
        %v1905 = vunpack.c.h.b16 %v1316
        %v1906 = vunpack.c.l.b16 %v1317
        %v1907 = vunpack.c.l.b16 %v1318
        %v1908 = vunpack.c.h.b16 %v1318
        %v1909 = vunpack.c.l.b16 %v1319
        %v1910 = vunpack.c.l.b16 %v1320
        %v1911 = vunpack.c.h.b16 %v1320
        %v1912 = vunpack.c.l.b16 %v1321
        %v1913 = vunpack.c.l.b16 %v1322
        %v1914 = vunpack.c.h.b16 %v1322
        %v1915 = vunpack.c.l.b16 %v1323
        %v1916 = vunpack.c.l.b16 %v1324
        %v1917 = vunpack.c.h.b16 %v1324
        %v1918 = vunpack.c.l.b16 %v1325
        %v1919 = vunpack.c.l.b16 %v1326
        %v1920 = vunpack.c.h.b16 %v1326
        %v1921 = vunpack.c.l.b16 %v1327
        %v1922 = vunpack.c.l.b16 %v1328
        %v1923 = vunpack.c.h.b16 %v1328
        %v1924 = vunpack.c.l.b16 %v1329
        %v1925 = vunpack.c.l.b16 %v1330
        %v1926 = vunpack.c.h.b16 %v1330
        %v1927 = vunpack.c.l.b16 %v1331
        %v1928 = vunpack.c.l.b16 %v1332
        %v1929 = vunpack.c.h.b16 %v1332
        %v1930 = vunpack.c.l.b16 %v1333
        %v1931 = vunpack.c.l.b16 %v1334
        %v1932 = vunpack.c.h.b16 %v1334
        %v1933 = vunpack.c.l.b16 %v1335
        %v1934 = vunpack.c.l.b16 %v1336
        %v1935 = vunpack.c.h.b16 %v1336
        %v1936 = vunpack.c.l.b16 %v1337
        %v1937 = vunpack.c.l.b16 %v1338
        %v1938 = vunpack.c.h.b16 %v1338
        %v1939 = vunpack.c.l.b16 %v1339
        %v1940 = vunpack.c.l.b16 %v1340
        %v1941 = vunpack.c.h.b16 %v1340
        %v1942 = vunpack.c.l.b16 %v1341
        %v1943 = vunpack.c.l.b16 %v1342
        %v1944 = vunpack.c.h.b16 %v1342
        %v1945 = vunpack.c.l.b16 %v1343
        %v1946 = vunpack.c.l.b16 %v1344
        %v1947 = vunpack.c.h.b16 %v1344
        %v1948 = vunpack.c.l.b16 %v1345
        %v1949 = vunpack.c.l.b16 %v1346
        %v1950 = vunpack.c.h.b16 %v1346
        %v1951 = vunpack.c.l.b16 %v1347
        %v1952 = vunpack.c.l.b16 %v1348
        %v1953 = vunpack.c.h.b16 %v1348
        %v1954 = vunpack.c.l.b16 %v1349
        %v1955 = vunpack.c.l.b16 %v1350
        %v1956 = vunpack.c.h.b16 %v1350
        %v1957 = vunpack.c.l.b16 %v1351
        %v1958 = vunpack.c.l.b16 %v1352
        %v1959 = vunpack.c.h.b16 %v1352
        %v1960 = vunpack.c.l.b16 %v1353
        %v1961 = vunpack.c.l.b16 %v1354
        %v1962 = vunpack.c.h.b16 %v1354
        %v1963 = vunpack.c.l.b16 %v1355
        %v1964 = vunpack.c.l.b16 %v1356
        %v1965 = vunpack.c.h.b16 %v1356
        %v1966 = vunpack.c.l.b16 %v1357
        %v1967 = vunpack.c.l.b16 %v1358
        %v1968 = vunpack.c.h.b16 %v1358
        %v1969 = vunpack.c.l.b16 %v1359
        %v1970 = vunpack.c.l.b16 %v1360
        %v1971 = vunpack.c.h.b16 %v1360
        %v1972 = vunpack.c.l.b16 %v1361
        %v1973 = vunpack.c.l.b16 %v1362
        %v1974 = vunpack.c.h.b16 %v1362
        %v1975 = vunpack.c.l.b16 %v1363
        %v1976 = vunpack.c.l.b16 %v1364
        %v1977 = vunpack.c.h.b16 %v1364
        %v1978 = vunpack.c.l.b16 %v1365
        %v1979 = vunpack.c.l.b16 %v1366
        %v1980 = vunpack.c.h.b16 %v1366
        %v1981 = vunpack.c.l.b16 %v1367
        %v1982 = vunpack.c.l.b16 %v1368
        %v1983 = vunpack.c.h.b16 %v1368
        %v1984 = vunpack.c.l.b16 %v1369
        %v1985 = vunpack.c.l.b16 %v1370
        %v1986 = vunpack.c.h.b16 %v1370
        %v1987 = vunpack.c.l.b16 %v1371
        %v1988 = vunpack.c.l.b16 %v1372
        %v1989 = vunpack.c.h.b16 %v1372
        %v1990 = vunpack.c.l.b16 %v1373
        %v1991 = vunpack.c.l.b16 %v1374
        %v1992 = vunpack.c.h.b16 %v1374
        %v1993 = vunpack.c.l.b16 %v1375
        %v1994 = vunpack.c.l.b16 %v1376
        %v1995 = vunpack.c.h.b16 %v1376
        %v1996 = vunpack.c.l.b16 %v1377
        %v1997 = vunpack.c.l.b16 %v1378
        %v1998 = vunpack.c.h.b16 %v1378
        %v1999 = vunpack.c.l.b16 %v1379
        %v2000 = vunpack.c.l.b16 %v1380
        %v2001 = vunpack.c.h.b16 %v1380
        %v2002 = vunpack.c.l.b16 %v1381
        %v2003 = vunpack.c.l.b16 %v1382
        %v2004 = vunpack.c.h.b16 %v1382
        %v2005 = vunpack.c.l.b16 %v1383
        %v2006 = vunpack.c.l.b16 %v1384
        %v2007 = vunpack.c.h.b16 %v1384
        %v2008 = vunpack.c.l.b16 %v1385
        %v2009 = vunpack.c.l.b16 %v1386
        %v2010 = vunpack.c.h.b16 %v1386
        %v2011 = vunpack.c.l.b16 %v1387
        %v2012 = vunpack.c.l.b16 %v1388
        %v2013 = vunpack.c.h.b16 %v1388
        %v2014 = vunpack.c.l.b16 %v1389
        %v2015 = vunpack.c.l.b16 %v1390
        %v2016 = vunpack.c.h.b16 %v1390
        %v2017 = vunpack.c.l.b16 %v1391
        %v2018 = vunpack.c.l.b16 %v1392
        %v2019 = vunpack.c.h.b16 %v1392
        %v2020 = vunpack.c.l.b16 %v1393
        %v2021 = vunpack.c.l.b16 %v1394
        %v2022 = vunpack.c.h.b16 %v1394
        %v2023 = vunpack.c.l.b16 %v1395
        %v2024 = vunpack.c.l.b16 %v1396
        %v2025 = vunpack.c.h.b16 %v1396
        %v2026 = vunpack.c.l.b16 %v1397
        %v2027 = vunpack.c.l.b16 %v1398
        %v2028 = vunpack.c.h.b16 %v1398
        %v2029 = vunpack.c.l.b16 %v1399
        %v2030 = vunpack.c.l.b16 %v1400
        %v2031 = vunpack.c.h.b16 %v1400
        %v2032 = vunpack.c.l.b16 %v1401
        %v2033 = vunpack.c.l.b16 %v1402
        %v2034 = vunpack.c.h.b16 %v1402
        %v2035 = vunpack.c.l.b16 %v1403
        %v2036 = vunpack.c.l.b16 %v1404
        %v2037 = vunpack.c.h.b16 %v1404
        %v2038 = vunpack.c.l.b16 %v1405
        %v2039 = vunpack.c.l.b16 %v1406
        %v2040 = vunpack.c.h.b16 %v1406
        %v2041 = vunpack.c.l.b16 %v1407
        %v2042 = vunpack.c.l.b16 %v1408
        %v2043 = vunpack.c.h.b16 %v1408
        %v2044 = vunpack.c.l.b16 %v1409
        %v2045 = vunpack.c.l.b16 %v1410
        %v2046 = vunpack.c.h.b16 %v1410
        %v2047 = vunpack.c.l.b16 %v1411
        %v2048 = vunpack.c.l.b16 %v1412
        %v2049 = vunpack.c.h.b16 %v1412
        %v2050 = vunpack.c.l.b16 %v1413
        %v2051 = vunpack.c.l.b16 %v1414
        %v2052 = vunpack.c.h.b16 %v1414
        %v2053 = vunpack.c.l.b16 %v1415
        %v2054 = vunpack.c.l.b16 %v1416
        %v2055 = vunpack.c.h.b16 %v1416
        %v2056 = vunpack.c.l.b16 %v1417
        %v2057 = vunpack.c.l.b16 %v1418
        %v2058 = vunpack.c.h.b16 %v1418
        %v2059 = vunpack.c.l.b16 %v1419
        %v2060 = vpack.c.b16 %v1679, %v1676
        %v2061 = vpack.c.b16 %v1680, %v1677
        %v2062 = vpack.c.b16 %v1681, %v1678
        %v2063 = vpack.c.b16 %v1685, %v1682
        %v2064 = vpack.c.b16 %v1686, %v1683
        %v2065 = vpack.c.b16 %v1687, %v1684
        %v2066 = vpack.c.b16 %v1691, %v1688
        %v2067 = vpack.c.b16 %v1692, %v1689
        %v2068 = vpack.c.b16 %v1693, %v1690
        %v2069 = vpack.c.b16 %v1697, %v1694
        %v2070 = vpack.c.b16 %v1698, %v1695
        %v2071 = vpack.c.b16 %v1699, %v1696
        %v2072 = vpack.c.b16 %v1703, %v1700
        %v2073 = vpack.c.b16 %v1704, %v1701
        %v2074 = vpack.c.b16 %v1705, %v1702
        %v2075 = vpack.c.b16 %v1709, %v1706
        %v2076 = vpack.c.b16 %v1710, %v1707
        %v2077 = vpack.c.b16 %v1711, %v1708
        %v2078 = vpack.c.b16 %v1715, %v1712
        %v2079 = vpack.c.b16 %v1716, %v1713
        %v2080 = vpack.c.b16 %v1717, %v1714
        %v2081 = vpack.c.b16 %v1721, %v1718
        %v2082 = vpack.c.b16 %v1722, %v1719
        %v2083 = vpack.c.b16 %v1723, %v1720
        %v2084 = vpack.c.b16 %v1727, %v1724
        %v2085 = vpack.c.b16 %v1728, %v1725
        %v2086 = vpack.c.b16 %v1729, %v1726
        %v2087 = vpack.c.b16 %v1733, %v1730
        %v2088 = vpack.c.b16 %v1734, %v1731
        %v2089 = vpack.c.b16 %v1735, %v1732
        %v2090 = vpack.c.b16 %v1739, %v1736
        %v2091 = vpack.c.b16 %v1740, %v1737
        %v2092 = vpack.c.b16 %v1741, %v1738
        %v2093 = vpack.c.b16 %v1745, %v1742
        %v2094 = vpack.c.b16 %v1746, %v1743
        %v2095 = vpack.c.b16 %v1747, %v1744
        %v2096 = vpack.c.b16 %v1751, %v1748
        %v2097 = vpack.c.b16 %v1752, %v1749
        %v2098 = vpack.c.b16 %v1753, %v1750
        %v2099 = vpack.c.b16 %v1757, %v1754
        %v2100 = vpack.c.b16 %v1758, %v1755
        %v2101 = vpack.c.b16 %v1759, %v1756
        %v2102 = vpack.c.b16 %v1763, %v1760
        %v2103 = vpack.c.b16 %v1764, %v1761
        %v2104 = vpack.c.b16 %v1765, %v1762
        %v2105 = vpack.c.b16 %v1769, %v1766
        %v2106 = vpack.c.b16 %v1770, %v1767
        %v2107 = vpack.c.b16 %v1771, %v1768
        %v2108 = vpack.c.b16 %v1775, %v1772
        %v2109 = vpack.c.b16 %v1776, %v1773
        %v2110 = vpack.c.b16 %v1777, %v1774
        %v2111 = vpack.c.b16 %v1781, %v1778
        %v2112 = vpack.c.b16 %v1782, %v1779
        %v2113 = vpack.c.b16 %v1783, %v1780
        %v2114 = vpack.c.b16 %v1787, %v1784
        %v2115 = vpack.c.b16 %v1788, %v1785
        %v2116 = vpack.c.b16 %v1789, %v1786
        %v2117 = vpack.c.b16 %v1793, %v1790
        %v2118 = vpack.c.b16 %v1794, %v1791
        %v2119 = vpack.c.b16 %v1795, %v1792
        %v2120 = vpack.c.b16 %v1799, %v1796
        %v2121 = vpack.c.b16 %v1800, %v1797
        %v2122 = vpack.c.b16 %v1801, %v1798
        %v2123 = vpack.c.b16 %v1805, %v1802
        %v2124 = vpack.c.b16 %v1806, %v1803
        %v2125 = vpack.c.b16 %v1807, %v1804
        %v2126 = vpack.c.b16 %v1811, %v1808
        %v2127 = vpack.c.b16 %v1812, %v1809
        %v2128 = vpack.c.b16 %v1813, %v1810
        %v2129 = vpack.c.b16 %v1817, %v1814
        %v2130 = vpack.c.b16 %v1818, %v1815
        %v2131 = vpack.c.b16 %v1819, %v1816
        %v2132 = vpack.c.b16 %v1823, %v1820
        %v2133 = vpack.c.b16 %v1824, %v1821
        %v2134 = vpack.c.b16 %v1825, %v1822
        %v2135 = vpack.c.b16 %v1829, %v1826
        %v2136 = vpack.c.b16 %v1830, %v1827
        %v2137 = vpack.c.b16 %v1831, %v1828
        %v2138 = vpack.c.b16 %v1835, %v1832
        %v2139 = vpack.c.b16 %v1836, %v1833
        %v2140 = vpack.c.b16 %v1837, %v1834
        %v2141 = vpack.c.b16 %v1841, %v1838
        %v2142 = vpack.c.b16 %v1842, %v1839
        %v2143 = vpack.c.b16 %v1843, %v1840
        %v2144 = vpack.c.b16 %v1847, %v1844
        %v2145 = vpack.c.b16 %v1848, %v1845
        %v2146 = vpack.c.b16 %v1849, %v1846
        %v2147 = vpack.c.b16 %v1853, %v1850
        %v2148 = vpack.c.b16 %v1854, %v1851
        %v2149 = vpack.c.b16 %v1855, %v1852
        %v2150 = vpack.c.b16 %v1859, %v1856
        %v2151 = vpack.c.b16 %v1860, %v1857
        %v2152 = vpack.c.b16 %v1861, %v1858
        %v2153 = vpack.c.b16 %v1865, %v1862
        %v2154 = vpack.c.b16 %v1866, %v1863
        %v2155 = vpack.c.b16 %v1867, %v1864
        %v2156 = vpack.c.b16 %v1871, %v1868
        %v2157 = vpack.c.b16 %v1872, %v1869
        %v2158 = vpack.c.b16 %v1873, %v1870
        %v2159 = vpack.c.b16 %v1877, %v1874
        %v2160 = vpack.c.b16 %v1878, %v1875
        %v2161 = vpack.c.b16 %v1879, %v1876
        %v2162 = vpack.c.b16 %v1883, %v1880
        %v2163 = vpack.c.b16 %v1884, %v1881
        %v2164 = vpack.c.b16 %v1885, %v1882
        %v2165 = vpack.c.b16 %v1889, %v1886
        %v2166 = vpack.c.b16 %v1890, %v1887
        %v2167 = vpack.c.b16 %v1891, %v1888
        %v2168 = vpack.c.b16 %v1895, %v1892
        %v2169 = vpack.c.b16 %v1896, %v1893
        %v2170 = vpack.c.b16 %v1897, %v1894
        %v2171 = vpack.c.b16 %v1901, %v1898
        %v2172 = vpack.c.b16 %v1902, %v1899
        %v2173 = vpack.c.b16 %v1903, %v1900
        %v2174 = vpack.c.b16 %v1907, %v1904
        %v2175 = vpack.c.b16 %v1908, %v1905
        %v2176 = vpack.c.b16 %v1909, %v1906
        %v2177 = vpack.c.b16 %v1913, %v1910
        %v2178 = vpack.c.b16 %v1914, %v1911
        %v2179 = vpack.c.b16 %v1915, %v1912
        %v2180 = vpack.c.b16 %v1919, %v1916
        %v2181 = vpack.c.b16 %v1920, %v1917
        %v2182 = vpack.c.b16 %v1921, %v1918
        %v2183 = vpack.c.b16 %v1925, %v1922
        %v2184 = vpack.c.b16 %v1926, %v1923
        %v2185 = vpack.c.b16 %v1927, %v1924
        %v2186 = vpack.c.b16 %v1931, %v1928
        %v2187 = vpack.c.b16 %v1932, %v1929
        %v2188 = vpack.c.b16 %v1933, %v1930
        %v2189 = vpack.c.b16 %v1937, %v1934
        %v2190 = vpack.c.b16 %v1938, %v1935
        %v2191 = vpack.c.b16 %v1939, %v1936
        %v2192 = vpack.c.b16 %v1943, %v1940
        %v2193 = vpack.c.b16 %v1944, %v1941
        %v2194 = vpack.c.b16 %v1945, %v1942
        %v2195 = vpack.c.b16 %v1949, %v1946
        %v2196 = vpack.c.b16 %v1950, %v1947
        %v2197 = vpack.c.b16 %v1951, %v1948
        %v2198 = vpack.c.b16 %v1955, %v1952
        %v2199 = vpack.c.b16 %v1956, %v1953
        %v2200 = vpack.c.b16 %v1957, %v1954
        %v2201 = vpack.c.b16 %v1961, %v1958
        %v2202 = vpack.c.b16 %v1962, %v1959
        %v2203 = vpack.c.b16 %v1963, %v1960
        %v2204 = vpack.c.b16 %v1967, %v1964
        %v2205 = vpack.c.b16 %v1968, %v1965
        %v2206 = vpack.c.b16 %v1969, %v1966
        %v2207 = vpack.c.b16 %v1973, %v1970
        %v2208 = vpack.c.b16 %v1974, %v1971
        %v2209 = vpack.c.b16 %v1975, %v1972
        %v2210 = vpack.c.b16 %v1979, %v1976
        %v2211 = vpack.c.b16 %v1980, %v1977
        %v2212 = vpack.c.b16 %v1981, %v1978
        %v2213 = vpack.c.b16 %v1985, %v1982
        %v2214 = vpack.c.b16 %v1986, %v1983
        %v2215 = vpack.c.b16 %v1987, %v1984
        %v2216 = vpack.c.b16 %v1991, %v1988
        %v2217 = vpack.c.b16 %v1992, %v1989
        %v2218 = vpack.c.b16 %v1993, %v1990
        %v2219 = vpack.c.b16 %v1997, %v1994
        %v2220 = vpack.c.b16 %v1998, %v1995
        %v2221 = vpack.c.b16 %v1999, %v1996
        %v2222 = vpack.c.b16 %v2003, %v2000
        %v2223 = vpack.c.b16 %v2004, %v2001
        %v2224 = vpack.c.b16 %v2005, %v2002
        %v2225 = vpack.c.b16 %v2009, %v2006
        %v2226 = vpack.c.b16 %v2010, %v2007
        %v2227 = vpack.c.b16 %v2011, %v2008
        %v2228 = vpack.c.b16 %v2015, %v2012
        %v2229 = vpack.c.b16 %v2016, %v2013
        %v2230 = vpack.c.b16 %v2017, %v2014
        %v2231 = vpack.c.b16 %v2021, %v2018
        %v2232 = vpack.c.b16 %v2022, %v2019
        %v2233 = vpack.c.b16 %v2023, %v2020
        %v2234 = vpack.c.b16 %v2027, %v2024
        %v2235 = vpack.c.b16 %v2028, %v2025
        %v2236 = vpack.c.b16 %v2029, %v2026
        %v2237 = vpack.c.b16 %v2033, %v2030
        %v2238 = vpack.c.b16 %v2034, %v2031
        %v2239 = vpack.c.b16 %v2035, %v2032
        %v2240 = vpack.c.b16 %v2039, %v2036
        %v2241 = vpack.c.b16 %v2040, %v2037
        %v2242 = vpack.c.b16 %v2041, %v2038
        %v2243 = vpack.c.b16 %v2045, %v2042
        %v2244 = vpack.c.b16 %v2046, %v2043
        %v2245 = vpack.c.b16 %v2047, %v2044
        %v2246 = vpack.c.b16 %v2051, %v2048
        %v2247 = vpack.c.b16 %v2052, %v2049
        %v2248 = vpack.c.b16 %v2053, %v2050
        %v2249 = vpack.c.b16 %v2057, %v2054
        %v2250 = vpack.c.b16 %v2058, %v2055
        %v2251 = vpack.c.b16 %v2059, %v2056
        %vm2380 = vcmask 859136
        %v2382 = vsel %vm2380, %v2062, 0
        %v2385 = vsel %vm2380, %v2065, 0
        %v2388 = vsel %vm2380, %v2068, 0
        %v2391 = vsel %vm2380, %v2071, 0
        %v2394 = vsel %vm2380, %v2074, 0
        %v2397 = vsel %vm2380, %v2077, 0
        %v2400 = vsel %vm2380, %v2080, 0
        %v2403 = vsel %vm2380, %v2083, 0
        %v2406 = vsel %vm2380, %v2086, 0
        %v2409 = vsel %vm2380, %v2089, 0
        %v2412 = vsel %vm2380, %v2092, 0
        %v2415 = vsel %vm2380, %v2095, 0
        %v2418 = vsel %vm2380, %v2098, 0
        %v2421 = vsel %vm2380, %v2101, 0
        %v2424 = vsel %vm2380, %v2104, 0
        %v2427 = vsel %vm2380, %v2107, 0
        %v2430 = vsel %vm2380, %v2110, 0
        %v2433 = vsel %vm2380, %v2113, 0
        %v2436 = vsel %vm2380, %v2116, 0
        %v2439 = vsel %vm2380, %v2119, 0
        %v2442 = vsel %vm2380, %v2122, 0
        %v2445 = vsel %vm2380, %v2125, 0
        %v2448 = vsel %vm2380, %v2128, 0
        %v2451 = vsel %vm2380, %v2131, 0
        %v2454 = vsel %vm2380, %v2134, 0
        %v2457 = vsel %vm2380, %v2137, 0
        %v2460 = vsel %vm2380, %v2140, 0
        %v2463 = vsel %vm2380, %v2143, 0
        %v2466 = vsel %vm2380, %v2146, 0
        %v2469 = vsel %vm2380, %v2149, 0
        %v2472 = vsel %vm2380, %v2152, 0
        %v2475 = vsel %vm2380, %v2155, 0
        %v2478 = vsel %vm2380, %v2158, 0
        %v2481 = vsel %vm2380, %v2161, 0
        %v2484 = vsel %vm2380, %v2164, 0
        %v2487 = vsel %vm2380, %v2167, 0
        %v2490 = vsel %vm2380, %v2170, 0
        %v2493 = vsel %vm2380, %v2173, 0
        %v2496 = vsel %vm2380, %v2176, 0
        %v2499 = vsel %vm2380, %v2179, 0
        %v2502 = vsel %vm2380, %v2182, 0
        %v2505 = vsel %vm2380, %v2185, 0
        %v2508 = vsel %vm2380, %v2188, 0
        %v2511 = vsel %vm2380, %v2191, 0
        %v2514 = vsel %vm2380, %v2194, 0
        %v2517 = vsel %vm2380, %v2197, 0
        %v2520 = vsel %vm2380, %v2200, 0
        %v2523 = vsel %vm2380, %v2203, 0
        %v2526 = vsel %vm2380, %v2206, 0
        %v2529 = vsel %vm2380, %v2209, 0
        %v2532 = vsel %vm2380, %v2212, 0
        %v2535 = vsel %vm2380, %v2215, 0
        %v2538 = vsel %vm2380, %v2218, 0
        %v2541 = vsel %vm2380, %v2221, 0
        %v2544 = vsel %vm2380, %v2224, 0
        %v2547 = vsel %vm2380, %v2227, 0
        %v2550 = vsel %vm2380, %v2230, 0
        %v2553 = vsel %vm2380, %v2233, 0
        %v2556 = vsel %vm2380, %v2236, 0
        %v2559 = vsel %vm2380, %v2239, 0
        %v2562 = vsel %vm2380, %v2242, 0
        %v2565 = vsel %vm2380, %v2245, 0
        %v2568 = vsel %vm2380, %v2248, 0
        %v2571 = vsel %vm2380, %v2251, 0
        %vm2573 = vcmask 1043456
        %vm2574 = vcmask 1044480
        %v2575 = vsel %vm2573, 4294967295, 65535
        %v2576 = vsel %vm2574, %v2575, 0
        %v2578 = vand.u32 %v1163, %v2576
        %2580 = vmatpush.bf16.msra.mxu0 %v1148
        %2581 = vmatpush.bf16.msra.mxu0 %v1147
        %2582 = vmatpush.bf16.msra.mxu0 %v1146
        %2583 = vmatpush.bf16.msra.mxu0 %v1145
        %2584 = vmatpush.bf16.msra.mxu0 %v1144
        %2585 = vmatpush.bf16.msra.mxu0 %v1143
        %2586 = vmatpush.bf16.msra.mxu0 %v1142
        %2587 = vmatpush.bf16.msra.mxu0 %v1141
        %2588 = vmatmul.bf16.gmra.mxu0 %v2060
        %v2589 = vpop.f32.mrf.mxu0
        %v2590 = vadd.f32 0.0, %v2589
        %v2591 = vpop.f32.mrf.mxu0
        %v2592 = vadd.f32 0.0, %v2591
        %2593 = vmatmul.bf16.gmra.mxu0 %v2063
        %v2594 = vpop.f32.mrf.mxu0
        %v2595 = vadd.f32 0.0, %v2594
        %v2596 = vpop.f32.mrf.mxu0
        %v2597 = vadd.f32 0.0, %v2596
        %2598 = vmatmul.bf16.gmra.mxu0 %v2066
        %v2599 = vpop.f32.mrf.mxu0
        %v2600 = vadd.f32 0.0, %v2599
        %v2601 = vpop.f32.mrf.mxu0
        %v2602 = vadd.f32 0.0, %v2601
        %2603 = vmatmul.bf16.gmra.mxu0 %v2069
        %v2604 = vpop.f32.mrf.mxu0
        %v2605 = vadd.f32 0.0, %v2604
        %v2606 = vpop.f32.mrf.mxu0
        %v2607 = vadd.f32 0.0, %v2606
        %2608 = vmatmul.bf16.gmra.mxu0 %v2072
        %v2609 = vpop.f32.mrf.mxu0
        %v2610 = vadd.f32 0.0, %v2609
        %v2611 = vpop.f32.mrf.mxu0
        %v2612 = vadd.f32 0.0, %v2611
        %2613 = vmatmul.bf16.gmra.mxu0 %v2075
        %v2614 = vpop.f32.mrf.mxu0
        %v2615 = vadd.f32 0.0, %v2614
        %v2616 = vpop.f32.mrf.mxu0
        %v2617 = vadd.f32 0.0, %v2616
        %2618 = vmatmul.bf16.gmra.mxu0 %v2078
        %v2619 = vpop.f32.mrf.mxu0
        %v2620 = vadd.f32 0.0, %v2619
        %v2621 = vpop.f32.mrf.mxu0
        %v2622 = vadd.f32 0.0, %v2621
        %2623 = vmatmul.bf16.gmra.mxu0 %v2081
        %v2624 = vpop.f32.mrf.mxu0
        %v2625 = vadd.f32 0.0, %v2624
        %v2626 = vpop.f32.mrf.mxu0
        %v2627 = vadd.f32 0.0, %v2626
        %2628 = vmatmul.bf16.gmra.mxu0 %v2084
        %v2629 = vpop.f32.mrf.mxu0
        %v2630 = vadd.f32 0.0, %v2629
        %v2631 = vpop.f32.mrf.mxu0
        %v2632 = vadd.f32 0.0, %v2631
        %2633 = vmatmul.bf16.gmra.mxu0 %v2087
        %v2634 = vpop.f32.mrf.mxu0
        %v2635 = vadd.f32 0.0, %v2634
        %v2636 = vpop.f32.mrf.mxu0
        %v2637 = vadd.f32 0.0, %v2636
        %2638 = vmatmul.bf16.gmra.mxu0 %v2090
        %v2639 = vpop.f32.mrf.mxu0
        %v2640 = vadd.f32 0.0, %v2639
        %v2641 = vpop.f32.mrf.mxu0
        %v2642 = vadd.f32 0.0, %v2641
        %2643 = vmatmul.bf16.gmra.mxu0 %v2093
        %v2644 = vpop.f32.mrf.mxu0
        %v2645 = vadd.f32 0.0, %v2644
        %v2646 = vpop.f32.mrf.mxu0
        %v2647 = vadd.f32 0.0, %v2646
        %2648 = vmatmul.bf16.gmra.mxu0 %v2096
        %v2649 = vpop.f32.mrf.mxu0
        %v2650 = vadd.f32 0.0, %v2649
        %v2651 = vpop.f32.mrf.mxu0
        %v2652 = vadd.f32 0.0, %v2651
        %2653 = vmatmul.bf16.gmra.mxu0 %v2099
        %v2654 = vpop.f32.mrf.mxu0
        %v2655 = vadd.f32 0.0, %v2654
        %v2656 = vpop.f32.mrf.mxu0
        %v2657 = vadd.f32 0.0, %v2656
        %2658 = vmatmul.bf16.gmra.mxu0 %v2102
        %v2659 = vpop.f32.mrf.mxu0
        %v2660 = vadd.f32 0.0, %v2659
        %v2661 = vpop.f32.mrf.mxu0
        %v2662 = vadd.f32 0.0, %v2661
        %2663 = vmatmul.bf16.gmra.mxu0 %v2105
        %v2664 = vpop.f32.mrf.mxu0
        %v2665 = vadd.f32 0.0, %v2664
        %v2666 = vpop.f32.mrf.mxu0
        %v2667 = vadd.f32 0.0, %v2666
        %2668 = vmatmul.bf16.gmra.mxu0 %v2108
        %v2669 = vpop.f32.mrf.mxu0
        %v2670 = vadd.f32 0.0, %v2669
        %v2671 = vpop.f32.mrf.mxu0
        %v2672 = vadd.f32 0.0, %v2671
        %2673 = vmatmul.bf16.gmra.mxu0 %v2111
        %v2674 = vpop.f32.mrf.mxu0
        %v2675 = vadd.f32 0.0, %v2674
        %v2676 = vpop.f32.mrf.mxu0
        %v2677 = vadd.f32 0.0, %v2676
        %2678 = vmatmul.bf16.gmra.mxu0 %v2114
        %v2679 = vpop.f32.mrf.mxu0
        %v2680 = vadd.f32 0.0, %v2679
        %v2681 = vpop.f32.mrf.mxu0
        %v2682 = vadd.f32 0.0, %v2681
        %2683 = vmatmul.bf16.gmra.mxu0 %v2117
        %v2684 = vpop.f32.mrf.mxu0
        %v2685 = vadd.f32 0.0, %v2684
        %v2686 = vpop.f32.mrf.mxu0
        %v2687 = vadd.f32 0.0, %v2686
        %2688 = vmatmul.bf16.gmra.mxu0 %v2120
        %v2689 = vpop.f32.mrf.mxu0
        %v2690 = vadd.f32 0.0, %v2689
        %v2691 = vpop.f32.mrf.mxu0
        %v2692 = vadd.f32 0.0, %v2691
        %2693 = vmatmul.bf16.gmra.mxu0 %v2123
        %v2694 = vpop.f32.mrf.mxu0
        %v2695 = vadd.f32 0.0, %v2694
        %v2696 = vpop.f32.mrf.mxu0
        %v2697 = vadd.f32 0.0, %v2696
        %2698 = vmatmul.bf16.gmra.mxu0 %v2126
        %v2699 = vpop.f32.mrf.mxu0
        %v2700 = vadd.f32 0.0, %v2699
        %v2701 = vpop.f32.mrf.mxu0
        %v2702 = vadd.f32 0.0, %v2701
        %2703 = vmatmul.bf16.gmra.mxu0 %v2129
        %v2704 = vpop.f32.mrf.mxu0
        %v2705 = vadd.f32 0.0, %v2704
        %v2706 = vpop.f32.mrf.mxu0
        %v2707 = vadd.f32 0.0, %v2706
        %2708 = vmatmul.bf16.gmra.mxu0 %v2132
        %v2709 = vpop.f32.mrf.mxu0
        %v2710 = vadd.f32 0.0, %v2709
        %v2711 = vpop.f32.mrf.mxu0
        %v2712 = vadd.f32 0.0, %v2711
        %2713 = vmatmul.bf16.gmra.mxu0 %v2135
        %v2714 = vpop.f32.mrf.mxu0
        %v2715 = vadd.f32 0.0, %v2714
        %v2716 = vpop.f32.mrf.mxu0
        %v2717 = vadd.f32 0.0, %v2716
        %2718 = vmatmul.bf16.gmra.mxu0 %v2138
        %v2719 = vpop.f32.mrf.mxu0
        %v2720 = vadd.f32 0.0, %v2719
        %v2721 = vpop.f32.mrf.mxu0
        %v2722 = vadd.f32 0.0, %v2721
        %2723 = vmatmul.bf16.gmra.mxu0 %v2141
        %v2724 = vpop.f32.mrf.mxu0
        %v2725 = vadd.f32 0.0, %v2724
        %v2726 = vpop.f32.mrf.mxu0
        %v2727 = vadd.f32 0.0, %v2726
        %2728 = vmatmul.bf16.gmra.mxu0 %v2144
        %v2729 = vpop.f32.mrf.mxu0
        %v2730 = vadd.f32 0.0, %v2729
        %v2731 = vpop.f32.mrf.mxu0
        %v2732 = vadd.f32 0.0, %v2731
        %2733 = vmatmul.bf16.gmra.mxu0 %v2147
        %v2734 = vpop.f32.mrf.mxu0
        %v2735 = vadd.f32 0.0, %v2734
        %v2736 = vpop.f32.mrf.mxu0
        %v2737 = vadd.f32 0.0, %v2736
        %2738 = vmatmul.bf16.gmra.mxu0 %v2150
        %v2739 = vpop.f32.mrf.mxu0
        %v2740 = vadd.f32 0.0, %v2739
        %v2741 = vpop.f32.mrf.mxu0
        %v2742 = vadd.f32 0.0, %v2741
        %2743 = vmatmul.bf16.gmra.mxu0 %v2153
        %v2744 = vpop.f32.mrf.mxu0
        %v2745 = vadd.f32 0.0, %v2744
        %v2746 = vpop.f32.mrf.mxu0
        %v2747 = vadd.f32 0.0, %v2746
        %2748 = vmatmul.bf16.gmra.mxu0 %v2156
        %v2749 = vpop.f32.mrf.mxu0
        %v2750 = vadd.f32 0.0, %v2749
        %v2751 = vpop.f32.mrf.mxu0
        %v2752 = vadd.f32 0.0, %v2751
        %2753 = vmatmul.bf16.gmra.mxu0 %v2159
        %v2754 = vpop.f32.mrf.mxu0
        %v2755 = vadd.f32 0.0, %v2754
        %v2756 = vpop.f32.mrf.mxu0
        %v2757 = vadd.f32 0.0, %v2756
        %2758 = vmatmul.bf16.gmra.mxu0 %v2162
        %v2759 = vpop.f32.mrf.mxu0
        %v2760 = vadd.f32 0.0, %v2759
        %v2761 = vpop.f32.mrf.mxu0
        %v2762 = vadd.f32 0.0, %v2761
        %2763 = vmatmul.bf16.gmra.mxu0 %v2165
        %v2764 = vpop.f32.mrf.mxu0
        %v2765 = vadd.f32 0.0, %v2764
        %v2766 = vpop.f32.mrf.mxu0
        %v2767 = vadd.f32 0.0, %v2766
        %2768 = vmatmul.bf16.gmra.mxu0 %v2168
        %v2769 = vpop.f32.mrf.mxu0
        %v2770 = vadd.f32 0.0, %v2769
        %v2771 = vpop.f32.mrf.mxu0
        %v2772 = vadd.f32 0.0, %v2771
        %2773 = vmatmul.bf16.gmra.mxu0 %v2171
        %v2774 = vpop.f32.mrf.mxu0
        %v2775 = vadd.f32 0.0, %v2774
        %v2776 = vpop.f32.mrf.mxu0
        %v2777 = vadd.f32 0.0, %v2776
        %2778 = vmatmul.bf16.gmra.mxu0 %v2174
        %v2779 = vpop.f32.mrf.mxu0
        %v2780 = vadd.f32 0.0, %v2779
        %v2781 = vpop.f32.mrf.mxu0
        %v2782 = vadd.f32 0.0, %v2781
        %2783 = vmatmul.bf16.gmra.mxu0 %v2177
        %v2784 = vpop.f32.mrf.mxu0
        %v2785 = vadd.f32 0.0, %v2784
        %v2786 = vpop.f32.mrf.mxu0
        %v2787 = vadd.f32 0.0, %v2786
        %2788 = vmatmul.bf16.gmra.mxu0 %v2180
        %v2789 = vpop.f32.mrf.mxu0
        %v2790 = vadd.f32 0.0, %v2789
        %v2791 = vpop.f32.mrf.mxu0
        %v2792 = vadd.f32 0.0, %v2791
        %2793 = vmatmul.bf16.gmra.mxu0 %v2183
        %v2794 = vpop.f32.mrf.mxu0
        %v2795 = vadd.f32 0.0, %v2794
        %v2796 = vpop.f32.mrf.mxu0
        %v2797 = vadd.f32 0.0, %v2796
        %2798 = vmatmul.bf16.gmra.mxu0 %v2186
        %v2799 = vpop.f32.mrf.mxu0
        %v2800 = vadd.f32 0.0, %v2799
        %v2801 = vpop.f32.mrf.mxu0
        %v2802 = vadd.f32 0.0, %v2801
        %2803 = vmatmul.bf16.gmra.mxu0 %v2189
        %v2804 = vpop.f32.mrf.mxu0
        %v2805 = vadd.f32 0.0, %v2804
        %v2806 = vpop.f32.mrf.mxu0
        %v2807 = vadd.f32 0.0, %v2806
        %2808 = vmatmul.bf16.gmra.mxu0 %v2192
        %v2809 = vpop.f32.mrf.mxu0
        %v2810 = vadd.f32 0.0, %v2809
        %v2811 = vpop.f32.mrf.mxu0
        %v2812 = vadd.f32 0.0, %v2811
        %2813 = vmatmul.bf16.gmra.mxu0 %v2195
        %v2814 = vpop.f32.mrf.mxu0
        %v2815 = vadd.f32 0.0, %v2814
        %v2816 = vpop.f32.mrf.mxu0
        %v2817 = vadd.f32 0.0, %v2816
        %2818 = vmatmul.bf16.gmra.mxu0 %v2198
        %v2819 = vpop.f32.mrf.mxu0
        %v2820 = vadd.f32 0.0, %v2819
        %v2821 = vpop.f32.mrf.mxu0
        %v2822 = vadd.f32 0.0, %v2821
        %2823 = vmatmul.bf16.gmra.mxu0 %v2201
        %v2824 = vpop.f32.mrf.mxu0
        %v2825 = vadd.f32 0.0, %v2824
        %v2826 = vpop.f32.mrf.mxu0
        %v2827 = vadd.f32 0.0, %v2826
        %2828 = vmatmul.bf16.gmra.mxu0 %v2204
        %v2829 = vpop.f32.mrf.mxu0
        %v2830 = vadd.f32 0.0, %v2829
        %v2831 = vpop.f32.mrf.mxu0
        %v2832 = vadd.f32 0.0, %v2831
        %2833 = vmatmul.bf16.gmra.mxu0 %v2207
        %v2834 = vpop.f32.mrf.mxu0
        %v2835 = vadd.f32 0.0, %v2834
        %v2836 = vpop.f32.mrf.mxu0
        %v2837 = vadd.f32 0.0, %v2836
        %2838 = vmatmul.bf16.gmra.mxu0 %v2210
        %v2839 = vpop.f32.mrf.mxu0
        %v2840 = vadd.f32 0.0, %v2839
        %v2841 = vpop.f32.mrf.mxu0
        %v2842 = vadd.f32 0.0, %v2841
        %2843 = vmatmul.bf16.gmra.mxu0 %v2213
        %v2844 = vpop.f32.mrf.mxu0
        %v2845 = vadd.f32 0.0, %v2844
        %v2846 = vpop.f32.mrf.mxu0
        %v2847 = vadd.f32 0.0, %v2846
        %2848 = vmatmul.bf16.gmra.mxu0 %v2216
        %v2849 = vpop.f32.mrf.mxu0
        %v2850 = vadd.f32 0.0, %v2849
        %v2851 = vpop.f32.mrf.mxu0
        %v2852 = vadd.f32 0.0, %v2851
        %2853 = vmatmul.bf16.gmra.mxu0 %v2219
        %v2854 = vpop.f32.mrf.mxu0
        %v2855 = vadd.f32 0.0, %v2854
        %v2856 = vpop.f32.mrf.mxu0
        %v2857 = vadd.f32 0.0, %v2856
        %2858 = vmatmul.bf16.gmra.mxu0 %v2222
        %v2859 = vpop.f32.mrf.mxu0
        %v2860 = vadd.f32 0.0, %v2859
        %v2861 = vpop.f32.mrf.mxu0
        %v2862 = vadd.f32 0.0, %v2861
        %2863 = vmatmul.bf16.gmra.mxu0 %v2225
        %v2864 = vpop.f32.mrf.mxu0
        %v2865 = vadd.f32 0.0, %v2864
        %v2866 = vpop.f32.mrf.mxu0
        %v2867 = vadd.f32 0.0, %v2866
        %2868 = vmatmul.bf16.gmra.mxu0 %v2228
        %v2869 = vpop.f32.mrf.mxu0
        %v2870 = vadd.f32 0.0, %v2869
        %v2871 = vpop.f32.mrf.mxu0
        %v2872 = vadd.f32 0.0, %v2871
        %2873 = vmatmul.bf16.gmra.mxu0 %v2231
        %v2874 = vpop.f32.mrf.mxu0
        %v2875 = vadd.f32 0.0, %v2874
        %v2876 = vpop.f32.mrf.mxu0
        %v2877 = vadd.f32 0.0, %v2876
        %2878 = vmatmul.bf16.gmra.mxu0 %v2234
        %v2879 = vpop.f32.mrf.mxu0
        %v2880 = vadd.f32 0.0, %v2879
        %v2881 = vpop.f32.mrf.mxu0
        %v2882 = vadd.f32 0.0, %v2881
        %2883 = vmatmul.bf16.gmra.mxu0 %v2237
        %v2884 = vpop.f32.mrf.mxu0
        %v2885 = vadd.f32 0.0, %v2884
        %v2886 = vpop.f32.mrf.mxu0
        %v2887 = vadd.f32 0.0, %v2886
        %2888 = vmatmul.bf16.gmra.mxu0 %v2240
        %v2889 = vpop.f32.mrf.mxu0
        %v2890 = vadd.f32 0.0, %v2889
        %v2891 = vpop.f32.mrf.mxu0
        %v2892 = vadd.f32 0.0, %v2891
        %2893 = vmatmul.bf16.gmra.mxu0 %v2243
        %v2894 = vpop.f32.mrf.mxu0
        %v2895 = vadd.f32 0.0, %v2894
        %v2896 = vpop.f32.mrf.mxu0
        %v2897 = vadd.f32 0.0, %v2896
        %2898 = vmatmul.bf16.gmra.mxu0 %v2246
        %v2899 = vpop.f32.mrf.mxu0
        %v2900 = vadd.f32 0.0, %v2899
        %v2901 = vpop.f32.mrf.mxu0
        %v2902 = vadd.f32 0.0, %v2901
        %2903 = vmatmul.bf16.gmra.mxu0 %v2249
        %v2904 = vpop.f32.mrf.mxu0
        %v2905 = vadd.f32 0.0, %v2904
        %v2906 = vpop.f32.mrf.mxu0
        %v2907 = vadd.f32 0.0, %v2906
        %2908 = vdwg.mxu0
        %2909 = vmatpush.bf16.msra.mxu0 %v1156
        %2910 = vmatpush.bf16.msra.mxu0 %v1155
        %2911 = vmatpush.bf16.msra.mxu0 %v1154
        %2912 = vmatpush.bf16.msra.mxu0 %v1153
        %2913 = vmatpush.bf16.msra.mxu0 %v1152
        %2914 = vmatpush.bf16.msra.mxu0 %v1151
        %2915 = vmatpush.bf16.msra.mxu0 %v1150
        %2916 = vmatpush.bf16.msra.mxu0 %v1149
        %2917 = vmatmul.bf16.gmra.mxu0 %v2061
        %v2918 = vpop.f32.mrf.mxu0
        %v2919 = vadd.f32 %v2590, %v2918
        %v2920 = vpop.f32.mrf.mxu0
        %v2921 = vadd.f32 %v2592, %v2920
        %2922 = vmatmul.bf16.gmra.mxu0 %v2064
        %v2923 = vpop.f32.mrf.mxu0
        %v2924 = vadd.f32 %v2595, %v2923
        %v2925 = vpop.f32.mrf.mxu0
        %v2926 = vadd.f32 %v2597, %v2925
        %2927 = vmatmul.bf16.gmra.mxu0 %v2067
        %v2928 = vpop.f32.mrf.mxu0
        %v2929 = vadd.f32 %v2600, %v2928
        %v2930 = vpop.f32.mrf.mxu0
        %v2931 = vadd.f32 %v2602, %v2930
        %2932 = vmatmul.bf16.gmra.mxu0 %v2070
        %v2933 = vpop.f32.mrf.mxu0
        %v2934 = vadd.f32 %v2605, %v2933
        %v2935 = vpop.f32.mrf.mxu0
        %v2936 = vadd.f32 %v2607, %v2935
        %2937 = vmatmul.bf16.gmra.mxu0 %v2073
        %v2938 = vpop.f32.mrf.mxu0
        %v2939 = vadd.f32 %v2610, %v2938
        %v2940 = vpop.f32.mrf.mxu0
        %v2941 = vadd.f32 %v2612, %v2940
        %2942 = vmatmul.bf16.gmra.mxu0 %v2076
        %v2943 = vpop.f32.mrf.mxu0
        %v2944 = vadd.f32 %v2615, %v2943
        %v2945 = vpop.f32.mrf.mxu0
        %v2946 = vadd.f32 %v2617, %v2945
        %2947 = vmatmul.bf16.gmra.mxu0 %v2079
        %v2948 = vpop.f32.mrf.mxu0
        %v2949 = vadd.f32 %v2620, %v2948
        %v2950 = vpop.f32.mrf.mxu0
        %v2951 = vadd.f32 %v2622, %v2950
        %2952 = vmatmul.bf16.gmra.mxu0 %v2082
        %v2953 = vpop.f32.mrf.mxu0
        %v2954 = vadd.f32 %v2625, %v2953
        %v2955 = vpop.f32.mrf.mxu0
        %v2956 = vadd.f32 %v2627, %v2955
        %2957 = vmatmul.bf16.gmra.mxu0 %v2085
        %v2958 = vpop.f32.mrf.mxu0
        %v2959 = vadd.f32 %v2630, %v2958
        %v2960 = vpop.f32.mrf.mxu0
        %v2961 = vadd.f32 %v2632, %v2960
        %2962 = vmatmul.bf16.gmra.mxu0 %v2088
        %v2963 = vpop.f32.mrf.mxu0
        %v2964 = vadd.f32 %v2635, %v2963
        %v2965 = vpop.f32.mrf.mxu0
        %v2966 = vadd.f32 %v2637, %v2965
        %2967 = vmatmul.bf16.gmra.mxu0 %v2091
        %v2968 = vpop.f32.mrf.mxu0
        %v2969 = vadd.f32 %v2640, %v2968
        %v2970 = vpop.f32.mrf.mxu0
        %v2971 = vadd.f32 %v2642, %v2970
        %2972 = vmatmul.bf16.gmra.mxu0 %v2094
        %v2973 = vpop.f32.mrf.mxu0
        %v2974 = vadd.f32 %v2645, %v2973
        %v2975 = vpop.f32.mrf.mxu0
        %v2976 = vadd.f32 %v2647, %v2975
        %2977 = vmatmul.bf16.gmra.mxu0 %v2097
        %v2978 = vpop.f32.mrf.mxu0
        %v2979 = vadd.f32 %v2650, %v2978
        %v2980 = vpop.f32.mrf.mxu0
        %v2981 = vadd.f32 %v2652, %v2980
        %2982 = vmatmul.bf16.gmra.mxu0 %v2100
        %v2983 = vpop.f32.mrf.mxu0
        %v2984 = vadd.f32 %v2655, %v2983
        %v2985 = vpop.f32.mrf.mxu0
        %v2986 = vadd.f32 %v2657, %v2985
        %2987 = vmatmul.bf16.gmra.mxu0 %v2103
        %v2988 = vpop.f32.mrf.mxu0
        %v2989 = vadd.f32 %v2660, %v2988
        %v2990 = vpop.f32.mrf.mxu0
        %v2991 = vadd.f32 %v2662, %v2990
        %2992 = vmatmul.bf16.gmra.mxu0 %v2106
        %v2993 = vpop.f32.mrf.mxu0
        %v2994 = vadd.f32 %v2665, %v2993
        %v2995 = vpop.f32.mrf.mxu0
        %v2996 = vadd.f32 %v2667, %v2995
        %2997 = vmatmul.bf16.gmra.mxu0 %v2109
        %v2998 = vpop.f32.mrf.mxu0
        %v2999 = vadd.f32 %v2670, %v2998
        %v3000 = vpop.f32.mrf.mxu0
        %v3001 = vadd.f32 %v2672, %v3000
        %3002 = vmatmul.bf16.gmra.mxu0 %v2112
        %v3003 = vpop.f32.mrf.mxu0
        %v3004 = vadd.f32 %v2675, %v3003
        %v3005 = vpop.f32.mrf.mxu0
        %v3006 = vadd.f32 %v2677, %v3005
        %3007 = vmatmul.bf16.gmra.mxu0 %v2115
        %v3008 = vpop.f32.mrf.mxu0
        %v3009 = vadd.f32 %v2680, %v3008
        %v3010 = vpop.f32.mrf.mxu0
        %v3011 = vadd.f32 %v2682, %v3010
        %3012 = vmatmul.bf16.gmra.mxu0 %v2118
        %v3013 = vpop.f32.mrf.mxu0
        %v3014 = vadd.f32 %v2685, %v3013
        %v3015 = vpop.f32.mrf.mxu0
        %v3016 = vadd.f32 %v2687, %v3015
        %3017 = vmatmul.bf16.gmra.mxu0 %v2121
        %v3018 = vpop.f32.mrf.mxu0
        %v3019 = vadd.f32 %v2690, %v3018
        %v3020 = vpop.f32.mrf.mxu0
        %v3021 = vadd.f32 %v2692, %v3020
        %3022 = vmatmul.bf16.gmra.mxu0 %v2124
        %v3023 = vpop.f32.mrf.mxu0
        %v3024 = vadd.f32 %v2695, %v3023
        %v3025 = vpop.f32.mrf.mxu0
        %v3026 = vadd.f32 %v2697, %v3025
        %3027 = vmatmul.bf16.gmra.mxu0 %v2127
        %v3028 = vpop.f32.mrf.mxu0
        %v3029 = vadd.f32 %v2700, %v3028
        %v3030 = vpop.f32.mrf.mxu0
        %v3031 = vadd.f32 %v2702, %v3030
        %3032 = vmatmul.bf16.gmra.mxu0 %v2130
        %v3033 = vpop.f32.mrf.mxu0
        %v3034 = vadd.f32 %v2705, %v3033
        %v3035 = vpop.f32.mrf.mxu0
        %v3036 = vadd.f32 %v2707, %v3035
        %3037 = vmatmul.bf16.gmra.mxu0 %v2133
        %v3038 = vpop.f32.mrf.mxu0
        %v3039 = vadd.f32 %v2710, %v3038
        %v3040 = vpop.f32.mrf.mxu0
        %v3041 = vadd.f32 %v2712, %v3040
        %3042 = vmatmul.bf16.gmra.mxu0 %v2136
        %v3043 = vpop.f32.mrf.mxu0
        %v3044 = vadd.f32 %v2715, %v3043
        %v3045 = vpop.f32.mrf.mxu0
        %v3046 = vadd.f32 %v2717, %v3045
        %3047 = vmatmul.bf16.gmra.mxu0 %v2139
        %v3048 = vpop.f32.mrf.mxu0
        %v3049 = vadd.f32 %v2720, %v3048
        %v3050 = vpop.f32.mrf.mxu0
        %v3051 = vadd.f32 %v2722, %v3050
        %3052 = vmatmul.bf16.gmra.mxu0 %v2142
        %v3053 = vpop.f32.mrf.mxu0
        %v3054 = vadd.f32 %v2725, %v3053
        %v3055 = vpop.f32.mrf.mxu0
        %v3056 = vadd.f32 %v2727, %v3055
        %3057 = vmatmul.bf16.gmra.mxu0 %v2145
        %v3058 = vpop.f32.mrf.mxu0
        %v3059 = vadd.f32 %v2730, %v3058
        %v3060 = vpop.f32.mrf.mxu0
        %v3061 = vadd.f32 %v2732, %v3060
        %3062 = vmatmul.bf16.gmra.mxu0 %v2148
        %v3063 = vpop.f32.mrf.mxu0
        %v3064 = vadd.f32 %v2735, %v3063
        %v3065 = vpop.f32.mrf.mxu0
        %v3066 = vadd.f32 %v2737, %v3065
        %3067 = vmatmul.bf16.gmra.mxu0 %v2151
        %v3068 = vpop.f32.mrf.mxu0
        %v3069 = vadd.f32 %v2740, %v3068
        %v3070 = vpop.f32.mrf.mxu0
        %v3071 = vadd.f32 %v2742, %v3070
        %3072 = vmatmul.bf16.gmra.mxu0 %v2154
        %v3073 = vpop.f32.mrf.mxu0
        %v3074 = vadd.f32 %v2745, %v3073
        %v3075 = vpop.f32.mrf.mxu0
        %v3076 = vadd.f32 %v2747, %v3075
        %3077 = vmatmul.bf16.gmra.mxu0 %v2157
        %v3078 = vpop.f32.mrf.mxu0
        %v3079 = vadd.f32 %v2750, %v3078
        %v3080 = vpop.f32.mrf.mxu0
        %v3081 = vadd.f32 %v2752, %v3080
        %3082 = vmatmul.bf16.gmra.mxu0 %v2160
        %v3083 = vpop.f32.mrf.mxu0
        %v3084 = vadd.f32 %v2755, %v3083
        %v3085 = vpop.f32.mrf.mxu0
        %v3086 = vadd.f32 %v2757, %v3085
        %3087 = vmatmul.bf16.gmra.mxu0 %v2163
        %v3088 = vpop.f32.mrf.mxu0
        %v3089 = vadd.f32 %v2760, %v3088
        %v3090 = vpop.f32.mrf.mxu0
        %v3091 = vadd.f32 %v2762, %v3090
        %3092 = vmatmul.bf16.gmra.mxu0 %v2166
        %v3093 = vpop.f32.mrf.mxu0
        %v3094 = vadd.f32 %v2765, %v3093
        %v3095 = vpop.f32.mrf.mxu0
        %v3096 = vadd.f32 %v2767, %v3095
        %3097 = vmatmul.bf16.gmra.mxu0 %v2169
        %v3098 = vpop.f32.mrf.mxu0
        %v3099 = vadd.f32 %v2770, %v3098
        %v3100 = vpop.f32.mrf.mxu0
        %v3101 = vadd.f32 %v2772, %v3100
        %3102 = vmatmul.bf16.gmra.mxu0 %v2172
        %v3103 = vpop.f32.mrf.mxu0
        %v3104 = vadd.f32 %v2775, %v3103
        %v3105 = vpop.f32.mrf.mxu0
        %v3106 = vadd.f32 %v2777, %v3105
        %3107 = vmatmul.bf16.gmra.mxu0 %v2175
        %v3108 = vpop.f32.mrf.mxu0
        %v3109 = vadd.f32 %v2780, %v3108
        %v3110 = vpop.f32.mrf.mxu0
        %v3111 = vadd.f32 %v2782, %v3110
        %3112 = vmatmul.bf16.gmra.mxu0 %v2178
        %v3113 = vpop.f32.mrf.mxu0
        %v3114 = vadd.f32 %v2785, %v3113
        %v3115 = vpop.f32.mrf.mxu0
        %v3116 = vadd.f32 %v2787, %v3115
        %3117 = vmatmul.bf16.gmra.mxu0 %v2181
        %v3118 = vpop.f32.mrf.mxu0
        %v3119 = vadd.f32 %v2790, %v3118
        %v3120 = vpop.f32.mrf.mxu0
        %v3121 = vadd.f32 %v2792, %v3120
        %3122 = vmatmul.bf16.gmra.mxu0 %v2184
        %v3123 = vpop.f32.mrf.mxu0
        %v3124 = vadd.f32 %v2795, %v3123
        %v3125 = vpop.f32.mrf.mxu0
        %v3126 = vadd.f32 %v2797, %v3125
        %3127 = vmatmul.bf16.gmra.mxu0 %v2187
        %v3128 = vpop.f32.mrf.mxu0
        %v3129 = vadd.f32 %v2800, %v3128
        %v3130 = vpop.f32.mrf.mxu0
        %v3131 = vadd.f32 %v2802, %v3130
        %3132 = vmatmul.bf16.gmra.mxu0 %v2190
        %v3133 = vpop.f32.mrf.mxu0
        %v3134 = vadd.f32 %v2805, %v3133
        %v3135 = vpop.f32.mrf.mxu0
        %v3136 = vadd.f32 %v2807, %v3135
        %3137 = vmatmul.bf16.gmra.mxu0 %v2193
        %v3138 = vpop.f32.mrf.mxu0
        %v3139 = vadd.f32 %v2810, %v3138
        %v3140 = vpop.f32.mrf.mxu0
        %v3141 = vadd.f32 %v2812, %v3140
        %3142 = vmatmul.bf16.gmra.mxu0 %v2196
        %v3143 = vpop.f32.mrf.mxu0
        %v3144 = vadd.f32 %v2815, %v3143
        %v3145 = vpop.f32.mrf.mxu0
        %v3146 = vadd.f32 %v2817, %v3145
        %3147 = vmatmul.bf16.gmra.mxu0 %v2199
        %v3148 = vpop.f32.mrf.mxu0
        %v3149 = vadd.f32 %v2820, %v3148
        %v3150 = vpop.f32.mrf.mxu0
        %v3151 = vadd.f32 %v2822, %v3150
        %3152 = vmatmul.bf16.gmra.mxu0 %v2202
        %v3153 = vpop.f32.mrf.mxu0
        %v3154 = vadd.f32 %v2825, %v3153
        %v3155 = vpop.f32.mrf.mxu0
        %v3156 = vadd.f32 %v2827, %v3155
        %3157 = vmatmul.bf16.gmra.mxu0 %v2205
        %v3158 = vpop.f32.mrf.mxu0
        %v3159 = vadd.f32 %v2830, %v3158
        %v3160 = vpop.f32.mrf.mxu0
        %v3161 = vadd.f32 %v2832, %v3160
        %3162 = vmatmul.bf16.gmra.mxu0 %v2208
        %v3163 = vpop.f32.mrf.mxu0
        %v3164 = vadd.f32 %v2835, %v3163
        %v3165 = vpop.f32.mrf.mxu0
        %v3166 = vadd.f32 %v2837, %v3165
        %3167 = vmatmul.bf16.gmra.mxu0 %v2211
        %v3168 = vpop.f32.mrf.mxu0
        %v3169 = vadd.f32 %v2840, %v3168
        %v3170 = vpop.f32.mrf.mxu0
        %v3171 = vadd.f32 %v2842, %v3170
        %3172 = vmatmul.bf16.gmra.mxu0 %v2214
        %v3173 = vpop.f32.mrf.mxu0
        %v3174 = vadd.f32 %v2845, %v3173
        %v3175 = vpop.f32.mrf.mxu0
        %v3176 = vadd.f32 %v2847, %v3175
        %3177 = vmatmul.bf16.gmra.mxu0 %v2217
        %v3178 = vpop.f32.mrf.mxu0
        %v3179 = vadd.f32 %v2850, %v3178
        %v3180 = vpop.f32.mrf.mxu0
        %v3181 = vadd.f32 %v2852, %v3180
        %3182 = vmatmul.bf16.gmra.mxu0 %v2220
        %v3183 = vpop.f32.mrf.mxu0
        %v3184 = vadd.f32 %v2855, %v3183
        %v3185 = vpop.f32.mrf.mxu0
        %v3186 = vadd.f32 %v2857, %v3185
        %3187 = vmatmul.bf16.gmra.mxu0 %v2223
        %v3188 = vpop.f32.mrf.mxu0
        %v3189 = vadd.f32 %v2860, %v3188
        %v3190 = vpop.f32.mrf.mxu0
        %v3191 = vadd.f32 %v2862, %v3190
        %3192 = vmatmul.bf16.gmra.mxu0 %v2226
        %v3193 = vpop.f32.mrf.mxu0
        %v3194 = vadd.f32 %v2865, %v3193
        %v3195 = vpop.f32.mrf.mxu0
        %v3196 = vadd.f32 %v2867, %v3195
        %3197 = vmatmul.bf16.gmra.mxu0 %v2229
        %v3198 = vpop.f32.mrf.mxu0
        %v3199 = vadd.f32 %v2870, %v3198
        %v3200 = vpop.f32.mrf.mxu0
        %v3201 = vadd.f32 %v2872, %v3200
        %3202 = vmatmul.bf16.gmra.mxu0 %v2232
        %v3203 = vpop.f32.mrf.mxu0
        %v3204 = vadd.f32 %v2875, %v3203
        %v3205 = vpop.f32.mrf.mxu0
        %v3206 = vadd.f32 %v2877, %v3205
        %3207 = vmatmul.bf16.gmra.mxu0 %v2235
        %v3208 = vpop.f32.mrf.mxu0
        %v3209 = vadd.f32 %v2880, %v3208
        %v3210 = vpop.f32.mrf.mxu0
        %v3211 = vadd.f32 %v2882, %v3210
        %3212 = vmatmul.bf16.gmra.mxu0 %v2238
        %v3213 = vpop.f32.mrf.mxu0
        %v3214 = vadd.f32 %v2885, %v3213
        %v3215 = vpop.f32.mrf.mxu0
        %v3216 = vadd.f32 %v2887, %v3215
        %3217 = vmatmul.bf16.gmra.mxu0 %v2241
        %v3218 = vpop.f32.mrf.mxu0
        %v3219 = vadd.f32 %v2890, %v3218
        %v3220 = vpop.f32.mrf.mxu0
        %v3221 = vadd.f32 %v2892, %v3220
        %3222 = vmatmul.bf16.gmra.mxu0 %v2244
        %v3223 = vpop.f32.mrf.mxu0
        %v3224 = vadd.f32 %v2895, %v3223
        %v3225 = vpop.f32.mrf.mxu0
        %v3226 = vadd.f32 %v2897, %v3225
        %3227 = vmatmul.bf16.gmra.mxu0 %v2247
        %v3228 = vpop.f32.mrf.mxu0
        %v3229 = vadd.f32 %v2900, %v3228
        %v3230 = vpop.f32.mrf.mxu0
        %v3231 = vadd.f32 %v2902, %v3230
        %3232 = vmatmul.bf16.gmra.mxu0 %v2250
        %v3233 = vpop.f32.mrf.mxu0
        %v3234 = vadd.f32 %v2905, %v3233
        %v3235 = vpop.f32.mrf.mxu0
        %v3236 = vadd.f32 %v2907, %v3235
        %3237 = vdwg.mxu0
        %3238 = vmatpush.bf16.msra.mxu0 0
        %3239 = vmatpush.bf16.msra.mxu0 %v2578
        %3240 = vmatpush.bf16.msra.mxu0 %v1162
        %3241 = vmatpush.bf16.msra.mxu0 %v1161
        %3242 = vmatpush.bf16.msra.mxu0 %v1160
        %3243 = vmatpush.bf16.msra.mxu0 %v1159
        %3244 = vmatpush.bf16.msra.mxu0 %v1158
        %3245 = vmatpush.bf16.msra.mxu0 %v1157
        %3246 = vmatmul.bf16.gmra.mxu0 %v2382
        %v3247 = vpop.f32.mrf.mxu0
        %v3248 = vadd.f32 %v2919, %v3247
        %v3249 = vpop.f32.mrf.mxu0
        %v3250 = vadd.f32 %v2921, %v3249
        %3251 = vmatmul.bf16.gmra.mxu0 %v2385
        %v3252 = vpop.f32.mrf.mxu0
        %v3253 = vadd.f32 %v2924, %v3252
        %v3254 = vpop.f32.mrf.mxu0
        %v3255 = vadd.f32 %v2926, %v3254
        %3256 = vmatmul.bf16.gmra.mxu0 %v2388
        %v3257 = vpop.f32.mrf.mxu0
        %v3258 = vadd.f32 %v2929, %v3257
        %v3259 = vpop.f32.mrf.mxu0
        %v3260 = vadd.f32 %v2931, %v3259
        %3261 = vmatmul.bf16.gmra.mxu0 %v2391
        %v3262 = vpop.f32.mrf.mxu0
        %v3263 = vadd.f32 %v2934, %v3262
        %v3264 = vpop.f32.mrf.mxu0
        %v3265 = vadd.f32 %v2936, %v3264
        %3266 = vmatmul.bf16.gmra.mxu0 %v2394
        %v3267 = vpop.f32.mrf.mxu0
        %v3268 = vadd.f32 %v2939, %v3267
        %v3269 = vpop.f32.mrf.mxu0
        %v3270 = vadd.f32 %v2941, %v3269
        %3271 = vmatmul.bf16.gmra.mxu0 %v2397
        %v3272 = vpop.f32.mrf.mxu0
        %v3273 = vadd.f32 %v2944, %v3272
        %v3274 = vpop.f32.mrf.mxu0
        %v3275 = vadd.f32 %v2946, %v3274
        %3276 = vmatmul.bf16.gmra.mxu0 %v2400
        %v3277 = vpop.f32.mrf.mxu0
        %v3278 = vadd.f32 %v2949, %v3277
        %v3279 = vpop.f32.mrf.mxu0
        %v3280 = vadd.f32 %v2951, %v3279
        %3281 = vmatmul.bf16.gmra.mxu0 %v2403
        %v3282 = vpop.f32.mrf.mxu0
        %v3283 = vadd.f32 %v2954, %v3282
        %v3284 = vpop.f32.mrf.mxu0
        %v3285 = vadd.f32 %v2956, %v3284
        %3286 = vmatmul.bf16.gmra.mxu0 %v2406
        %v3287 = vpop.f32.mrf.mxu0
        %v3288 = vadd.f32 %v2959, %v3287
        %v3289 = vpop.f32.mrf.mxu0
        %v3290 = vadd.f32 %v2961, %v3289
        %3291 = vmatmul.bf16.gmra.mxu0 %v2409
        %v3292 = vpop.f32.mrf.mxu0
        %v3293 = vadd.f32 %v2964, %v3292
        %v3294 = vpop.f32.mrf.mxu0
        %v3295 = vadd.f32 %v2966, %v3294
        %3296 = vmatmul.bf16.gmra.mxu0 %v2412
        %v3297 = vpop.f32.mrf.mxu0
        %v3298 = vadd.f32 %v2969, %v3297
        %v3299 = vpop.f32.mrf.mxu0
        %v3300 = vadd.f32 %v2971, %v3299
        %3301 = vmatmul.bf16.gmra.mxu0 %v2415
        %v3302 = vpop.f32.mrf.mxu0
        %v3303 = vadd.f32 %v2974, %v3302
        %v3304 = vpop.f32.mrf.mxu0
        %v3305 = vadd.f32 %v2976, %v3304
        %3306 = vmatmul.bf16.gmra.mxu0 %v2418
        %v3307 = vpop.f32.mrf.mxu0
        %v3308 = vadd.f32 %v2979, %v3307
        %v3309 = vpop.f32.mrf.mxu0
        %v3310 = vadd.f32 %v2981, %v3309
        %3311 = vmatmul.bf16.gmra.mxu0 %v2421
        %v3312 = vpop.f32.mrf.mxu0
        %v3313 = vadd.f32 %v2984, %v3312
        %v3314 = vpop.f32.mrf.mxu0
        %v3315 = vadd.f32 %v2986, %v3314
        %3316 = vmatmul.bf16.gmra.mxu0 %v2424
        %v3317 = vpop.f32.mrf.mxu0
        %v3318 = vadd.f32 %v2989, %v3317
        %v3319 = vpop.f32.mrf.mxu0
        %v3320 = vadd.f32 %v2991, %v3319
        %3321 = vmatmul.bf16.gmra.mxu0 %v2427
        %v3322 = vpop.f32.mrf.mxu0
        %v3323 = vadd.f32 %v2994, %v3322
        %v3324 = vpop.f32.mrf.mxu0
        %v3325 = vadd.f32 %v2996, %v3324
        %3326 = vmatmul.bf16.gmra.mxu0 %v2430
        %v3327 = vpop.f32.mrf.mxu0
        %v3328 = vadd.f32 %v2999, %v3327
        %v3329 = vpop.f32.mrf.mxu0
        %v3330 = vadd.f32 %v3001, %v3329
        %3331 = vmatmul.bf16.gmra.mxu0 %v2433
        %v3332 = vpop.f32.mrf.mxu0
        %v3333 = vadd.f32 %v3004, %v3332
        %v3334 = vpop.f32.mrf.mxu0
        %v3335 = vadd.f32 %v3006, %v3334
        %3336 = vmatmul.bf16.gmra.mxu0 %v2436
        %v3337 = vpop.f32.mrf.mxu0
        %v3338 = vadd.f32 %v3009, %v3337
        %v3339 = vpop.f32.mrf.mxu0
        %v3340 = vadd.f32 %v3011, %v3339
        %3341 = vmatmul.bf16.gmra.mxu0 %v2439
        %v3342 = vpop.f32.mrf.mxu0
        %v3343 = vadd.f32 %v3014, %v3342
        %v3344 = vpop.f32.mrf.mxu0
        %v3345 = vadd.f32 %v3016, %v3344
        %3346 = vmatmul.bf16.gmra.mxu0 %v2442
        %v3347 = vpop.f32.mrf.mxu0
        %v3348 = vadd.f32 %v3019, %v3347
        %v3349 = vpop.f32.mrf.mxu0
        %v3350 = vadd.f32 %v3021, %v3349
        %3351 = vmatmul.bf16.gmra.mxu0 %v2445
        %v3352 = vpop.f32.mrf.mxu0
        %v3353 = vadd.f32 %v3024, %v3352
        %v3354 = vpop.f32.mrf.mxu0
        %v3355 = vadd.f32 %v3026, %v3354
        %3356 = vmatmul.bf16.gmra.mxu0 %v2448
        %v3357 = vpop.f32.mrf.mxu0
        %v3358 = vadd.f32 %v3029, %v3357
        %v3359 = vpop.f32.mrf.mxu0
        %v3360 = vadd.f32 %v3031, %v3359
        %3361 = vmatmul.bf16.gmra.mxu0 %v2451
        %v3362 = vpop.f32.mrf.mxu0
        %v3363 = vadd.f32 %v3034, %v3362
        %v3364 = vpop.f32.mrf.mxu0
        %v3365 = vadd.f32 %v3036, %v3364
        %3366 = vmatmul.bf16.gmra.mxu0 %v2454
        %v3367 = vpop.f32.mrf.mxu0
        %v3368 = vadd.f32 %v3039, %v3367
        %v3369 = vpop.f32.mrf.mxu0
        %v3370 = vadd.f32 %v3041, %v3369
        %3371 = vmatmul.bf16.gmra.mxu0 %v2457
        %v3372 = vpop.f32.mrf.mxu0
        %v3373 = vadd.f32 %v3044, %v3372
        %v3374 = vpop.f32.mrf.mxu0
        %v3375 = vadd.f32 %v3046, %v3374
        %3376 = vmatmul.bf16.gmra.mxu0 %v2460
        %v3377 = vpop.f32.mrf.mxu0
        %v3378 = vadd.f32 %v3049, %v3377
        %v3379 = vpop.f32.mrf.mxu0
        %v3380 = vadd.f32 %v3051, %v3379
        %3381 = vmatmul.bf16.gmra.mxu0 %v2463
        %v3382 = vpop.f32.mrf.mxu0
        %v3383 = vadd.f32 %v3054, %v3382
        %v3384 = vpop.f32.mrf.mxu0
        %v3385 = vadd.f32 %v3056, %v3384
        %3386 = vmatmul.bf16.gmra.mxu0 %v2466
        %v3387 = vpop.f32.mrf.mxu0
        %v3388 = vadd.f32 %v3059, %v3387
        %v3389 = vpop.f32.mrf.mxu0
        %v3390 = vadd.f32 %v3061, %v3389
        %3391 = vmatmul.bf16.gmra.mxu0 %v2469
        %v3392 = vpop.f32.mrf.mxu0
        %v3393 = vadd.f32 %v3064, %v3392
        %v3394 = vpop.f32.mrf.mxu0
        %v3395 = vadd.f32 %v3066, %v3394
        %3396 = vmatmul.bf16.gmra.mxu0 %v2472
        %v3397 = vpop.f32.mrf.mxu0
        %v3398 = vadd.f32 %v3069, %v3397
        %v3399 = vpop.f32.mrf.mxu0
        %v3400 = vadd.f32 %v3071, %v3399
        %3401 = vmatmul.bf16.gmra.mxu0 %v2475
        %v3402 = vpop.f32.mrf.mxu0
        %v3403 = vadd.f32 %v3074, %v3402
        %v3404 = vpop.f32.mrf.mxu0
        %v3405 = vadd.f32 %v3076, %v3404
        %3406 = vmatmul.bf16.gmra.mxu0 %v2478
        %v3407 = vpop.f32.mrf.mxu0
        %v3408 = vadd.f32 %v3079, %v3407
        %v3409 = vpop.f32.mrf.mxu0
        %v3410 = vadd.f32 %v3081, %v3409
        %3411 = vmatmul.bf16.gmra.mxu0 %v2481
        %v3412 = vpop.f32.mrf.mxu0
        %v3413 = vadd.f32 %v3084, %v3412
        %v3414 = vpop.f32.mrf.mxu0
        %v3415 = vadd.f32 %v3086, %v3414
        %3416 = vmatmul.bf16.gmra.mxu0 %v2484
        %v3417 = vpop.f32.mrf.mxu0
        %v3418 = vadd.f32 %v3089, %v3417
        %v3419 = vpop.f32.mrf.mxu0
        %v3420 = vadd.f32 %v3091, %v3419
        %3421 = vmatmul.bf16.gmra.mxu0 %v2487
        %v3422 = vpop.f32.mrf.mxu0
        %v3423 = vadd.f32 %v3094, %v3422
        %v3424 = vpop.f32.mrf.mxu0
        %v3425 = vadd.f32 %v3096, %v3424
        %3426 = vmatmul.bf16.gmra.mxu0 %v2490
        %v3427 = vpop.f32.mrf.mxu0
        %v3428 = vadd.f32 %v3099, %v3427
        %v3429 = vpop.f32.mrf.mxu0
        %v3430 = vadd.f32 %v3101, %v3429
        %3431 = vmatmul.bf16.gmra.mxu0 %v2493
        %v3432 = vpop.f32.mrf.mxu0
        %v3433 = vadd.f32 %v3104, %v3432
        %v3434 = vpop.f32.mrf.mxu0
        %v3435 = vadd.f32 %v3106, %v3434
        %3436 = vmatmul.bf16.gmra.mxu0 %v2496
        %v3437 = vpop.f32.mrf.mxu0
        %v3438 = vadd.f32 %v3109, %v3437
        %v3439 = vpop.f32.mrf.mxu0
        %v3440 = vadd.f32 %v3111, %v3439
        %3441 = vmatmul.bf16.gmra.mxu0 %v2499
        %v3442 = vpop.f32.mrf.mxu0
        %v3443 = vadd.f32 %v3114, %v3442
        %v3444 = vpop.f32.mrf.mxu0
        %v3445 = vadd.f32 %v3116, %v3444
        %3446 = vmatmul.bf16.gmra.mxu0 %v2502
        %v3447 = vpop.f32.mrf.mxu0
        %v3448 = vadd.f32 %v3119, %v3447
        %v3449 = vpop.f32.mrf.mxu0
        %v3450 = vadd.f32 %v3121, %v3449
        %3451 = vmatmul.bf16.gmra.mxu0 %v2505
        %v3452 = vpop.f32.mrf.mxu0
        %v3453 = vadd.f32 %v3124, %v3452
        %v3454 = vpop.f32.mrf.mxu0
        %v3455 = vadd.f32 %v3126, %v3454
        %3456 = vmatmul.bf16.gmra.mxu0 %v2508
        %v3457 = vpop.f32.mrf.mxu0
        %v3458 = vadd.f32 %v3129, %v3457
        %v3459 = vpop.f32.mrf.mxu0
        %v3460 = vadd.f32 %v3131, %v3459
        %3461 = vmatmul.bf16.gmra.mxu0 %v2511
        %v3462 = vpop.f32.mrf.mxu0
        %v3463 = vadd.f32 %v3134, %v3462
        %v3464 = vpop.f32.mrf.mxu0
        %v3465 = vadd.f32 %v3136, %v3464
        %3466 = vmatmul.bf16.gmra.mxu0 %v2514
        %v3467 = vpop.f32.mrf.mxu0
        %v3468 = vadd.f32 %v3139, %v3467
        %v3469 = vpop.f32.mrf.mxu0
        %v3470 = vadd.f32 %v3141, %v3469
        %3471 = vmatmul.bf16.gmra.mxu0 %v2517
        %v3472 = vpop.f32.mrf.mxu0
        %v3473 = vadd.f32 %v3144, %v3472
        %v3474 = vpop.f32.mrf.mxu0
        %v3475 = vadd.f32 %v3146, %v3474
        %3476 = vmatmul.bf16.gmra.mxu0 %v2520
        %v3477 = vpop.f32.mrf.mxu0
        %v3478 = vadd.f32 %v3149, %v3477
        %v3479 = vpop.f32.mrf.mxu0
        %v3480 = vadd.f32 %v3151, %v3479
        %3481 = vmatmul.bf16.gmra.mxu0 %v2523
        %v3482 = vpop.f32.mrf.mxu0
        %v3483 = vadd.f32 %v3154, %v3482
        %v3484 = vpop.f32.mrf.mxu0
        %v3485 = vadd.f32 %v3156, %v3484
        %3486 = vmatmul.bf16.gmra.mxu0 %v2526
        %v3487 = vpop.f32.mrf.mxu0
        %v3488 = vadd.f32 %v3159, %v3487
        %v3489 = vpop.f32.mrf.mxu0
        %v3490 = vadd.f32 %v3161, %v3489
        %3491 = vmatmul.bf16.gmra.mxu0 %v2529
        %v3492 = vpop.f32.mrf.mxu0
        %v3493 = vadd.f32 %v3164, %v3492
        %v3494 = vpop.f32.mrf.mxu0
        %v3495 = vadd.f32 %v3166, %v3494
        %3496 = vmatmul.bf16.gmra.mxu0 %v2532
        %v3497 = vpop.f32.mrf.mxu0
        %v3498 = vadd.f32 %v3169, %v3497
        %v3499 = vpop.f32.mrf.mxu0
        %v3500 = vadd.f32 %v3171, %v3499
        %3501 = vmatmul.bf16.gmra.mxu0 %v2535
        %v3502 = vpop.f32.mrf.mxu0
        %v3503 = vadd.f32 %v3174, %v3502
        %v3504 = vpop.f32.mrf.mxu0
        %v3505 = vadd.f32 %v3176, %v3504
        %3506 = vmatmul.bf16.gmra.mxu0 %v2538
        %v3507 = vpop.f32.mrf.mxu0
        %v3508 = vadd.f32 %v3179, %v3507
        %v3509 = vpop.f32.mrf.mxu0
        %v3510 = vadd.f32 %v3181, %v3509
        %3511 = vmatmul.bf16.gmra.mxu0 %v2541
        %v3512 = vpop.f32.mrf.mxu0
        %v3513 = vadd.f32 %v3184, %v3512
        %v3514 = vpop.f32.mrf.mxu0
        %v3515 = vadd.f32 %v3186, %v3514
        %3516 = vmatmul.bf16.gmra.mxu0 %v2544
        %v3517 = vpop.f32.mrf.mxu0
        %v3518 = vadd.f32 %v3189, %v3517
        %v3519 = vpop.f32.mrf.mxu0
        %v3520 = vadd.f32 %v3191, %v3519
        %3521 = vmatmul.bf16.gmra.mxu0 %v2547
        %v3522 = vpop.f32.mrf.mxu0
        %v3523 = vadd.f32 %v3194, %v3522
        %v3524 = vpop.f32.mrf.mxu0
        %v3525 = vadd.f32 %v3196, %v3524
        %3526 = vmatmul.bf16.gmra.mxu0 %v2550
        %v3527 = vpop.f32.mrf.mxu0
        %v3528 = vadd.f32 %v3199, %v3527
        %v3529 = vpop.f32.mrf.mxu0
        %v3530 = vadd.f32 %v3201, %v3529
        %3531 = vmatmul.bf16.gmra.mxu0 %v2553
        %v3532 = vpop.f32.mrf.mxu0
        %v3533 = vadd.f32 %v3204, %v3532
        %v3534 = vpop.f32.mrf.mxu0
        %v3535 = vadd.f32 %v3206, %v3534
        %3536 = vmatmul.bf16.gmra.mxu0 %v2556
        %v3537 = vpop.f32.mrf.mxu0
        %v3538 = vadd.f32 %v3209, %v3537
        %v3539 = vpop.f32.mrf.mxu0
        %v3540 = vadd.f32 %v3211, %v3539
        %3541 = vmatmul.bf16.gmra.mxu0 %v2559
        %v3542 = vpop.f32.mrf.mxu0
        %v3543 = vadd.f32 %v3214, %v3542
        %v3544 = vpop.f32.mrf.mxu0
        %v3545 = vadd.f32 %v3216, %v3544
        %3546 = vmatmul.bf16.gmra.mxu0 %v2562
        %v3547 = vpop.f32.mrf.mxu0
        %v3548 = vadd.f32 %v3219, %v3547
        %v3549 = vpop.f32.mrf.mxu0
        %v3550 = vadd.f32 %v3221, %v3549
        %3551 = vmatmul.bf16.gmra.mxu0 %v2565
        %v3552 = vpop.f32.mrf.mxu0
        %v3553 = vadd.f32 %v3224, %v3552
        %v3554 = vpop.f32.mrf.mxu0
        %v3555 = vadd.f32 %v3226, %v3554
        %3556 = vmatmul.bf16.gmra.mxu0 %v2568
        %v3557 = vpop.f32.mrf.mxu0
        %v3558 = vadd.f32 %v3229, %v3557
        %v3559 = vpop.f32.mrf.mxu0
        %v3560 = vadd.f32 %v3231, %v3559
        %3561 = vmatmul.bf16.gmra.mxu0 %v2571
        %v3562 = vpop.f32.mrf.mxu0
        %v3563 = vadd.f32 %v3234, %v3562
        %v3564 = vpop.f32.mrf.mxu0
        %v3565 = vadd.f32 %v3236, %v3564
        %3566 = vdwg.mxu0
        %v3567 = vpack.c.bf16 %v3248, %v3248
        %v3568 = vpack.c.bf16 %v3250, %v3250
        %v3569 = vpack.c.bf16 %v3253, %v3253
        %v3570 = vpack.c.bf16 %v3255, %v3255
        %v3571 = vpack.c.bf16 %v3258, %v3258
        %v3572 = vpack.c.bf16 %v3260, %v3260
        %v3573 = vpack.c.bf16 %v3263, %v3263
        %v3574 = vpack.c.bf16 %v3265, %v3265
        %v3575 = vpack.c.bf16 %v3268, %v3268
        %v3576 = vpack.c.bf16 %v3270, %v3270
        %v3577 = vpack.c.bf16 %v3273, %v3273
        %v3578 = vpack.c.bf16 %v3275, %v3275
        %v3579 = vpack.c.bf16 %v3278, %v3278
        %v3580 = vpack.c.bf16 %v3280, %v3280
        %v3581 = vpack.c.bf16 %v3283, %v3283
        %v3582 = vpack.c.bf16 %v3285, %v3285
        %v3583 = vpack.c.bf16 %v3288, %v3288
        %v3584 = vpack.c.bf16 %v3290, %v3290
        %v3585 = vpack.c.bf16 %v3293, %v3293
        %v3586 = vpack.c.bf16 %v3295, %v3295
        %v3587 = vpack.c.bf16 %v3298, %v3298
        %v3588 = vpack.c.bf16 %v3300, %v3300
        %v3589 = vpack.c.bf16 %v3303, %v3303
        %v3590 = vpack.c.bf16 %v3305, %v3305
        %v3591 = vpack.c.bf16 %v3308, %v3308
        %v3592 = vpack.c.bf16 %v3310, %v3310
        %v3593 = vpack.c.bf16 %v3313, %v3313
        %v3594 = vpack.c.bf16 %v3315, %v3315
        %v3595 = vpack.c.bf16 %v3318, %v3318
        %v3596 = vpack.c.bf16 %v3320, %v3320
        %v3597 = vpack.c.bf16 %v3323, %v3323
        %v3598 = vpack.c.bf16 %v3325, %v3325
        %v3599 = vpack.c.bf16 %v3328, %v3328
        %v3600 = vpack.c.bf16 %v3330, %v3330
        %v3601 = vpack.c.bf16 %v3333, %v3333
        %v3602 = vpack.c.bf16 %v3335, %v3335
        %v3603 = vpack.c.bf16 %v3338, %v3338
        %v3604 = vpack.c.bf16 %v3340, %v3340
        %v3605 = vpack.c.bf16 %v3343, %v3343
        %v3606 = vpack.c.bf16 %v3345, %v3345
        %v3607 = vpack.c.bf16 %v3348, %v3348
        %v3608 = vpack.c.bf16 %v3350, %v3350
        %v3609 = vpack.c.bf16 %v3353, %v3353
        %v3610 = vpack.c.bf16 %v3355, %v3355
        %v3611 = vpack.c.bf16 %v3358, %v3358
        %v3612 = vpack.c.bf16 %v3360, %v3360
        %v3613 = vpack.c.bf16 %v3363, %v3363
        %v3614 = vpack.c.bf16 %v3365, %v3365
        %v3615 = vpack.c.bf16 %v3368, %v3368
        %v3616 = vpack.c.bf16 %v3370, %v3370
        %v3617 = vpack.c.bf16 %v3373, %v3373
        %v3618 = vpack.c.bf16 %v3375, %v3375
        %v3619 = vpack.c.bf16 %v3378, %v3378
        %v3620 = vpack.c.bf16 %v3380, %v3380
        %v3621 = vpack.c.bf16 %v3383, %v3383
        %v3622 = vpack.c.bf16 %v3385, %v3385
        %v3623 = vpack.c.bf16 %v3388, %v3388
        %v3624 = vpack.c.bf16 %v3390, %v3390
        %v3625 = vpack.c.bf16 %v3393, %v3393
        %v3626 = vpack.c.bf16 %v3395, %v3395
        %v3627 = vpack.c.bf16 %v3398, %v3398
        %v3628 = vpack.c.bf16 %v3400, %v3400
        %v3629 = vpack.c.bf16 %v3403, %v3403
        %v3630 = vpack.c.bf16 %v3405, %v3405
        %v3631 = vpack.c.bf16 %v3408, %v3408
        %v3632 = vpack.c.bf16 %v3410, %v3410
        %v3633 = vpack.c.bf16 %v3413, %v3413
        %v3634 = vpack.c.bf16 %v3415, %v3415
        %v3635 = vpack.c.bf16 %v3418, %v3418
        %v3636 = vpack.c.bf16 %v3420, %v3420
        %v3637 = vpack.c.bf16 %v3423, %v3423
        %v3638 = vpack.c.bf16 %v3425, %v3425
        %v3639 = vpack.c.bf16 %v3428, %v3428
        %v3640 = vpack.c.bf16 %v3430, %v3430
        %v3641 = vpack.c.bf16 %v3433, %v3433
        %v3642 = vpack.c.bf16 %v3435, %v3435
        %v3643 = vpack.c.bf16 %v3438, %v3438
        %v3644 = vpack.c.bf16 %v3440, %v3440
        %v3645 = vpack.c.bf16 %v3443, %v3443
        %v3646 = vpack.c.bf16 %v3445, %v3445
        %v3647 = vpack.c.bf16 %v3448, %v3448
        %v3648 = vpack.c.bf16 %v3450, %v3450
        %v3649 = vpack.c.bf16 %v3453, %v3453
        %v3650 = vpack.c.bf16 %v3455, %v3455
        %v3651 = vpack.c.bf16 %v3458, %v3458
        %v3652 = vpack.c.bf16 %v3460, %v3460
        %v3653 = vpack.c.bf16 %v3463, %v3463
        %v3654 = vpack.c.bf16 %v3465, %v3465
        %v3655 = vpack.c.bf16 %v3468, %v3468
        %v3656 = vpack.c.bf16 %v3470, %v3470
        %v3657 = vpack.c.bf16 %v3473, %v3473
        %v3658 = vpack.c.bf16 %v3475, %v3475
        %v3659 = vpack.c.bf16 %v3478, %v3478
        %v3660 = vpack.c.bf16 %v3480, %v3480
        %v3661 = vpack.c.bf16 %v3483, %v3483
        %v3662 = vpack.c.bf16 %v3485, %v3485
        %v3663 = vpack.c.bf16 %v3488, %v3488
        %v3664 = vpack.c.bf16 %v3490, %v3490
        %v3665 = vpack.c.bf16 %v3493, %v3493
        %v3666 = vpack.c.bf16 %v3495, %v3495
        %v3667 = vpack.c.bf16 %v3498, %v3498
        %v3668 = vpack.c.bf16 %v3500, %v3500
        %v3669 = vpack.c.bf16 %v3503, %v3503
        %v3670 = vpack.c.bf16 %v3505, %v3505
        %v3671 = vpack.c.bf16 %v3508, %v3508
        %v3672 = vpack.c.bf16 %v3510, %v3510
        %v3673 = vpack.c.bf16 %v3513, %v3513
        %v3674 = vpack.c.bf16 %v3515, %v3515
        %v3675 = vpack.c.bf16 %v3518, %v3518
        %v3676 = vpack.c.bf16 %v3520, %v3520
        %v3677 = vpack.c.bf16 %v3523, %v3523
        %v3678 = vpack.c.bf16 %v3525, %v3525
        %v3679 = vpack.c.bf16 %v3528, %v3528
        %v3680 = vpack.c.bf16 %v3530, %v3530
        %v3681 = vpack.c.bf16 %v3533, %v3533
        %v3682 = vpack.c.bf16 %v3535, %v3535
        %v3683 = vpack.c.bf16 %v3538, %v3538
        %v3684 = vpack.c.bf16 %v3540, %v3540
        %v3685 = vpack.c.bf16 %v3543, %v3543
        %v3686 = vpack.c.bf16 %v3545, %v3545
        %v3687 = vpack.c.bf16 %v3548, %v3548
        %v3688 = vpack.c.bf16 %v3550, %v3550
        %v3689 = vpack.c.bf16 %v3553, %v3553
        %v3690 = vpack.c.bf16 %v3555, %v3555
        %v3691 = vpack.c.bf16 %v3558, %v3558
        %v3692 = vpack.c.bf16 %v3560, %v3560
        %v3693 = vpack.c.bf16 %v3563, %v3563
        %v3694 = vpack.c.bf16 %v3565, %v3565
        %v3695 = vld [vmem:[%s4] sm:$0xf]
        %v3696 = vld [vmem:[%s4 + $0x4] sm:$0xf]
        %v3697 = vld [vmem:[%s4 + $0x8] sm:$0xf]
        %v3698 = vld [vmem:[%s4 + $0xc] sm:$0xf]
        %s3699 = scalar_lea.vmem %s4, 16
        %v3700 = vld [vmem:[%s3699] sm:$0xf]
        %v3701 = vld [vmem:[%s3699 + $0x4] sm:$0xf]
        %v3702 = vld [vmem:[%s3699 + $0x8] sm:$0xf]
        %v3703 = vld [vmem:[%s3699 + $0xc] sm:$0xf]
        %v3712 = vunpack.c.l.b16 %v3575
        %v3713 = vunpack.c.l.b16 %v3576
        %v3714 = vunpack.c.l.b16 %v3577
        %v3715 = vunpack.c.l.b16 %v3578
        %v3716 = vunpack.c.l.b16 %v3579
        %v3717 = vunpack.c.l.b16 %v3580
        %v3718 = vunpack.c.l.b16 %v3581
        %v3719 = vunpack.c.l.b16 %v3582
        %v3720 = vpack.c.b16 %v3713, %v3712
        %v3721 = vpack.c.b16 %v3715, %v3714
        %v3722 = vpack.c.b16 %v3717, %v3716
        %v3723 = vpack.c.b16 %v3719, %v3718
        %v3728 = vunpack.c.l.b16 %v3700
        %v3729 = vunpack.c.l.b16 %v3701
        %v3730 = vunpack.c.l.b16 %v3702
        %v3731 = vunpack.c.l.b16 %v3703
        %v3732 = vpack.c.b16 %v3729, %v3728
        %v3733 = vpack.c.b16 %v3731, %v3730
        %vm3736 = vcmask 261120
        %v3738 = vsel %vm3736, %v3720, 0
        %v3741 = vsel %vm3736, %v3721, 0
        %v3744 = vsel %vm3736, %v3722, 0
        %v3747 = vsel %vm3736, %v3723, 0
        %3749 = vmatpush.bf16.msra.mxu0 0
        %3750 = vmatpush.bf16.msra.mxu0 0
        %3751 = vmatpush.bf16.msra.mxu0 0
        %3752 = vmatpush.bf16.msra.mxu0 0
        %3753 = vmatpush.bf16.msra.mxu0 0
        %3754 = vmatpush.bf16.msra.mxu0 0
        %3755 = vmatpush.bf16.msra.mxu0 %v3733
        %3756 = vmatpush.bf16.msra.mxu0 %v3732
        %3757 = vmatmul.bf16.gmra.mxu0 %v3738
        %v3758 = vpop.f32.mrf.mxu0
        %v3759 = vadd.f32 0.0, %v3758
        %v3760 = vpop.f32.mrf.mxu0
        %v3761 = vadd.f32 0.0, %v3760
        %3762 = vmatmul.bf16.gmra.mxu0 %v3741
        %v3763 = vpop.f32.mrf.mxu0
        %v3764 = vadd.f32 0.0, %v3763
        %v3765 = vpop.f32.mrf.mxu0
        %v3766 = vadd.f32 0.0, %v3765
        %3767 = vmatmul.bf16.gmra.mxu0 %v3744
        %v3768 = vpop.f32.mrf.mxu0
        %v3769 = vadd.f32 0.0, %v3768
        %v3770 = vpop.f32.mrf.mxu0
        %v3771 = vadd.f32 0.0, %v3770
        %3772 = vmatmul.bf16.gmra.mxu0 %v3747
        %v3773 = vpop.f32.mrf.mxu0
        %v3774 = vadd.f32 0.0, %v3773
        %v3775 = vpop.f32.mrf.mxu0
        %v3776 = vadd.f32 0.0, %v3775
        %3777 = vdwg.mxu0
        %v3786 = vunpack.c.l.b16 %v3567
        %v3787 = vunpack.c.l.b16 %v3568
        %v3788 = vunpack.c.l.b16 %v3569
        %v3789 = vunpack.c.l.b16 %v3570
        %v3790 = vunpack.c.l.b16 %v3571
        %v3791 = vunpack.c.l.b16 %v3572
        %v3792 = vunpack.c.l.b16 %v3573
        %v3793 = vunpack.c.l.b16 %v3574
        %v3794 = vpack.c.b16 %v3787, %v3786
        %v3795 = vpack.c.b16 %v3789, %v3788
        %v3796 = vpack.c.b16 %v3791, %v3790
        %v3797 = vpack.c.b16 %v3793, %v3792
        %v3802 = vunpack.c.l.b16 %v3695
        %v3803 = vunpack.c.l.b16 %v3696
        %v3804 = vunpack.c.l.b16 %v3697
        %v3805 = vunpack.c.l.b16 %v3698
        %v3806 = vpack.c.b16 %v3803, %v3802
        %v3807 = vpack.c.b16 %v3805, %v3804
        %v3811 = vsel %vm3736, %v3794, 0
        %v3814 = vsel %vm3736, %v3795, 0
        %v3817 = vsel %vm3736, %v3796, 0
        %v3820 = vsel %vm3736, %v3797, 0
        %3822 = vmatpush.bf16.msra.mxu0 0
        %3823 = vmatpush.bf16.msra.mxu0 0
        %3824 = vmatpush.bf16.msra.mxu0 0
        %3825 = vmatpush.bf16.msra.mxu0 0
        %3826 = vmatpush.bf16.msra.mxu0 0
        %3827 = vmatpush.bf16.msra.mxu0 0
        %3828 = vmatpush.bf16.msra.mxu0 %v3807
        %3829 = vmatpush.bf16.msra.mxu0 %v3806
        %3830 = vmatmul.bf16.gmra.mxu0 %v3811
        %v3831 = vpop.f32.mrf.mxu0
        %v3832 = vadd.f32 %v3759, %v3831
        %v3833 = vpop.f32.mrf.mxu0
        %v3834 = vadd.f32 %v3761, %v3833
        %3835 = vmatmul.bf16.gmra.mxu0 %v3814
        %v3836 = vpop.f32.mrf.mxu0
        %v3837 = vadd.f32 %v3764, %v3836
        %v3838 = vpop.f32.mrf.mxu0
        %v3839 = vadd.f32 %v3766, %v3838
        %3840 = vmatmul.bf16.gmra.mxu0 %v3817
        %v3841 = vpop.f32.mrf.mxu0
        %v3842 = vadd.f32 %v3769, %v3841
        %v3843 = vpop.f32.mrf.mxu0
        %v3844 = vadd.f32 %v3771, %v3843
        %3845 = vmatmul.bf16.gmra.mxu0 %v3820
        %v3846 = vpop.f32.mrf.mxu0
        %v3847 = vadd.f32 %v3774, %v3846
        %v3848 = vpop.f32.mrf.mxu0
        %v3849 = vadd.f32 %v3776, %v3848
        %3850 = vdwg.mxu0
        %s3851 = scalar_lea.vmem %s4, 32
        %v3852 = vld [vmem:[%s3851] sm:$0xf]
        %v3853 = vld [vmem:[%s3851 + $0x4] sm:$0xf]
        %v3854 = vld [vmem:[%s3851 + $0x8] sm:$0xf]
        %v3855 = vld [vmem:[%s3851 + $0xc] sm:$0xf]
        %v3864 = vunpack.c.l.b16 %v3583
        %v3865 = vunpack.c.l.b16 %v3584
        %v3866 = vunpack.c.l.b16 %v3585
        %v3867 = vunpack.c.l.b16 %v3586
        %v3868 = vunpack.c.l.b16 %v3587
        %v3869 = vunpack.c.l.b16 %v3588
        %v3870 = vunpack.c.l.b16 %v3589
        %v3871 = vunpack.c.l.b16 %v3590
        %v3872 = vpack.c.b16 %v3865, %v3864
        %v3873 = vpack.c.b16 %v3867, %v3866
        %v3874 = vpack.c.b16 %v3869, %v3868
        %v3875 = vpack.c.b16 %v3871, %v3870
        %v3880 = vunpack.c.l.b16 %v3852
        %v3881 = vunpack.c.l.b16 %v3853
        %v3882 = vunpack.c.l.b16 %v3854
        %v3883 = vunpack.c.l.b16 %v3855
        %v3884 = vpack.c.b16 %v3881, %v3880
        %v3885 = vpack.c.b16 %v3883, %v3882
        %v3889 = vsel %vm3736, %v3872, 0
        %v3892 = vsel %vm3736, %v3873, 0
        %v3895 = vsel %vm3736, %v3874, 0
        %v3898 = vsel %vm3736, %v3875, 0
        %3900 = vmatpush.bf16.msra.mxu0 0
        %3901 = vmatpush.bf16.msra.mxu0 0
        %3902 = vmatpush.bf16.msra.mxu0 0
        %3903 = vmatpush.bf16.msra.mxu0 0
        %3904 = vmatpush.bf16.msra.mxu0 0
        %3905 = vmatpush.bf16.msra.mxu0 0
        %3906 = vmatpush.bf16.msra.mxu0 %v3885
        %3907 = vmatpush.bf16.msra.mxu0 %v3884
        %3908 = vmatmul.bf16.gmra.mxu0 %v3889
        %v3909 = vpop.f32.mrf.mxu0
        %v3910 = vadd.f32 0.0, %v3909
        %v3911 = vpop.f32.mrf.mxu0
        %v3912 = vadd.f32 0.0, %v3911
        %3913 = vmatmul.bf16.gmra.mxu0 %v3892
        %v3914 = vpop.f32.mrf.mxu0
        %v3915 = vadd.f32 0.0, %v3914
        %v3916 = vpop.f32.mrf.mxu0
        %v3917 = vadd.f32 0.0, %v3916
        %3918 = vmatmul.bf16.gmra.mxu0 %v3895
        %v3919 = vpop.f32.mrf.mxu0
        %v3920 = vadd.f32 0.0, %v3919
        %v3921 = vpop.f32.mrf.mxu0
        %v3922 = vadd.f32 0.0, %v3921
        %3923 = vmatmul.bf16.gmra.mxu0 %v3898
        %v3924 = vpop.f32.mrf.mxu0
        %v3925 = vadd.f32 0.0, %v3924
        %v3926 = vpop.f32.mrf.mxu0
        %v3927 = vadd.f32 0.0, %v3926
        %3928 = vdwg.mxu0
        %v3929 = vadd.f32 %v3832, %v3910
        %v3930 = vadd.f32 %v3834, %v3912
        %v3931 = vadd.f32 %v3837, %v3915
        %v3932 = vadd.f32 %v3839, %v3917
        %v3933 = vadd.f32 %v3842, %v3920
        %v3934 = vadd.f32 %v3844, %v3922
        %v3935 = vadd.f32 %v3847, %v3925
        %v3936 = vadd.f32 %v3849, %v3927
        %s3937 = scalar_lea.vmem %s4, 48
        %v3938 = vld [vmem:[%s3937] sm:$0xf]
        %v3939 = vld [vmem:[%s3937 + $0x4] sm:$0xf]
        %v3940 = vld [vmem:[%s3937 + $0x8] sm:$0xf]
        %v3941 = vld [vmem:[%s3937 + $0xc] sm:$0xf]
        %v3950 = vunpack.c.l.b16 %v3591
        %v3951 = vunpack.c.l.b16 %v3592
        %v3952 = vunpack.c.l.b16 %v3593
        %v3953 = vunpack.c.l.b16 %v3594
        %v3954 = vunpack.c.l.b16 %v3595
        %v3955 = vunpack.c.l.b16 %v3596
        %v3956 = vunpack.c.l.b16 %v3597
        %v3957 = vunpack.c.l.b16 %v3598
        %v3958 = vpack.c.b16 %v3951, %v3950
        %v3959 = vpack.c.b16 %v3953, %v3952
        %v3960 = vpack.c.b16 %v3955, %v3954
        %v3961 = vpack.c.b16 %v3957, %v3956
        %v3966 = vunpack.c.l.b16 %v3938
        %v3967 = vunpack.c.l.b16 %v3939
        %v3968 = vunpack.c.l.b16 %v3940
        %v3969 = vunpack.c.l.b16 %v3941
        %v3970 = vpack.c.b16 %v3967, %v3966
        %v3971 = vpack.c.b16 %v3969, %v3968
        %v3975 = vsel %vm3736, %v3958, 0
        %v3978 = vsel %vm3736, %v3959, 0
        %v3981 = vsel %vm3736, %v3960, 0
        %v3984 = vsel %vm3736, %v3961, 0
        %3986 = vmatpush.bf16.msra.mxu0 0
        %3987 = vmatpush.bf16.msra.mxu0 0
        %3988 = vmatpush.bf16.msra.mxu0 0
        %3989 = vmatpush.bf16.msra.mxu0 0
        %3990 = vmatpush.bf16.msra.mxu0 0
        %3991 = vmatpush.bf16.msra.mxu0 0
        %3992 = vmatpush.bf16.msra.mxu0 %v3971
        %3993 = vmatpush.bf16.msra.mxu0 %v3970
        %3994 = vmatmul.bf16.gmra.mxu0 %v3975
        %v3995 = vpop.f32.mrf.mxu0
        %v3996 = vadd.f32 0.0, %v3995
        %v3997 = vpop.f32.mrf.mxu0
        %v3998 = vadd.f32 0.0, %v3997
        %3999 = vmatmul.bf16.gmra.mxu0 %v3978
        %v4000 = vpop.f32.mrf.mxu0
        %v4001 = vadd.f32 0.0, %v4000
        %v4002 = vpop.f32.mrf.mxu0
        %v4003 = vadd.f32 0.0, %v4002
        %4004 = vmatmul.bf16.gmra.mxu0 %v3981
        %v4005 = vpop.f32.mrf.mxu0
        %v4006 = vadd.f32 0.0, %v4005
        %v4007 = vpop.f32.mrf.mxu0
        %v4008 = vadd.f32 0.0, %v4007
        %4009 = vmatmul.bf16.gmra.mxu0 %v3984
        %v4010 = vpop.f32.mrf.mxu0
        %v4011 = vadd.f32 0.0, %v4010
        %v4012 = vpop.f32.mrf.mxu0
        %v4013 = vadd.f32 0.0, %v4012
        %4014 = vdwg.mxu0
        %v4015 = vadd.f32 %v3929, %v3996
        %v4016 = vadd.f32 %v3930, %v3998
        %v4017 = vadd.f32 %v3931, %v4001
        %v4018 = vadd.f32 %v3932, %v4003
        %v4019 = vadd.f32 %v3933, %v4006
        %v4020 = vadd.f32 %v3934, %v4008
        %v4021 = vadd.f32 %v3935, %v4011
        %v4022 = vadd.f32 %v3936, %v4013
        %s4023 = scalar_lea.vmem %s4, 64
        %v4024 = vld [vmem:[%s4023] sm:$0xf]
        %v4025 = vld [vmem:[%s4023 + $0x4] sm:$0xf]
        %v4026 = vld [vmem:[%s4023 + $0x8] sm:$0xf]
        %v4027 = vld [vmem:[%s4023 + $0xc] sm:$0xf]
        %v4036 = vunpack.c.l.b16 %v3599
        %v4037 = vunpack.c.l.b16 %v3600
        %v4038 = vunpack.c.l.b16 %v3601
        %v4039 = vunpack.c.l.b16 %v3602
        %v4040 = vunpack.c.l.b16 %v3603
        %v4041 = vunpack.c.l.b16 %v3604
        %v4042 = vunpack.c.l.b16 %v3605
        %v4043 = vunpack.c.l.b16 %v3606
        %v4044 = vpack.c.b16 %v4037, %v4036
        %v4045 = vpack.c.b16 %v4039, %v4038
        %v4046 = vpack.c.b16 %v4041, %v4040
        %v4047 = vpack.c.b16 %v4043, %v4042
        %v4052 = vunpack.c.l.b16 %v4024
        %v4053 = vunpack.c.l.b16 %v4025
        %v4054 = vunpack.c.l.b16 %v4026
        %v4055 = vunpack.c.l.b16 %v4027
        %v4056 = vpack.c.b16 %v4053, %v4052
        %v4057 = vpack.c.b16 %v4055, %v4054
        %v4061 = vsel %vm3736, %v4044, 0
        %v4064 = vsel %vm3736, %v4045, 0
        %v4067 = vsel %vm3736, %v4046, 0
        %v4070 = vsel %vm3736, %v4047, 0
        %4072 = vmatpush.bf16.msra.mxu0 0
        %4073 = vmatpush.bf16.msra.mxu0 0
        %4074 = vmatpush.bf16.msra.mxu0 0
        %4075 = vmatpush.bf16.msra.mxu0 0
        %4076 = vmatpush.bf16.msra.mxu0 0
        %4077 = vmatpush.bf16.msra.mxu0 0
        %4078 = vmatpush.bf16.msra.mxu0 %v4057
        %4079 = vmatpush.bf16.msra.mxu0 %v4056
        %4080 = vmatmul.bf16.gmra.mxu0 %v4061
        %v4081 = vpop.f32.mrf.mxu0
        %v4082 = vadd.f32 0.0, %v4081
        %v4083 = vpop.f32.mrf.mxu0
        %v4084 = vadd.f32 0.0, %v4083
        %4085 = vmatmul.bf16.gmra.mxu0 %v4064
        %v4086 = vpop.f32.mrf.mxu0
        %v4087 = vadd.f32 0.0, %v4086
        %v4088 = vpop.f32.mrf.mxu0
        %v4089 = vadd.f32 0.0, %v4088
        %4090 = vmatmul.bf16.gmra.mxu0 %v4067
        %v4091 = vpop.f32.mrf.mxu0
        %v4092 = vadd.f32 0.0, %v4091
        %v4093 = vpop.f32.mrf.mxu0
        %v4094 = vadd.f32 0.0, %v4093
        %4095 = vmatmul.bf16.gmra.mxu0 %v4070
        %v4096 = vpop.f32.mrf.mxu0
        %v4097 = vadd.f32 0.0, %v4096
        %v4098 = vpop.f32.mrf.mxu0
        %v4099 = vadd.f32 0.0, %v4098
        %4100 = vdwg.mxu0
        %v4101 = vadd.f32 %v4015, %v4082
        %v4102 = vadd.f32 %v4016, %v4084
        %v4103 = vadd.f32 %v4017, %v4087
        %v4104 = vadd.f32 %v4018, %v4089
        %v4105 = vadd.f32 %v4019, %v4092
        %v4106 = vadd.f32 %v4020, %v4094
        %v4107 = vadd.f32 %v4021, %v4097
        %v4108 = vadd.f32 %v4022, %v4099
        %s4109 = scalar_lea.vmem %s4, 80
        %v4110 = vld [vmem:[%s4109] sm:$0xf]
        %v4111 = vld [vmem:[%s4109 + $0x4] sm:$0xf]
        %v4112 = vld [vmem:[%s4109 + $0x8] sm:$0xf]
        %v4113 = vld [vmem:[%s4109 + $0xc] sm:$0xf]
        %v4122 = vunpack.c.l.b16 %v3607
        %v4123 = vunpack.c.l.b16 %v3608
        %v4124 = vunpack.c.l.b16 %v3609
        %v4125 = vunpack.c.l.b16 %v3610
        %v4126 = vunpack.c.l.b16 %v3611
        %v4127 = vunpack.c.l.b16 %v3612
        %v4128 = vunpack.c.l.b16 %v3613
        %v4129 = vunpack.c.l.b16 %v3614
        %v4130 = vpack.c.b16 %v4123, %v4122
        %v4131 = vpack.c.b16 %v4125, %v4124
        %v4132 = vpack.c.b16 %v4127, %v4126
        %v4133 = vpack.c.b16 %v4129, %v4128
        %v4138 = vunpack.c.l.b16 %v4110
        %v4139 = vunpack.c.l.b16 %v4111
        %v4140 = vunpack.c.l.b16 %v4112
        %v4141 = vunpack.c.l.b16 %v4113
        %v4142 = vpack.c.b16 %v4139, %v4138
        %v4143 = vpack.c.b16 %v4141, %v4140
        %v4147 = vsel %vm3736, %v4130, 0
        %v4150 = vsel %vm3736, %v4131, 0
        %v4153 = vsel %vm3736, %v4132, 0
        %v4156 = vsel %vm3736, %v4133, 0
        %4158 = vmatpush.bf16.msra.mxu0 0
        %4159 = vmatpush.bf16.msra.mxu0 0
        %4160 = vmatpush.bf16.msra.mxu0 0
        %4161 = vmatpush.bf16.msra.mxu0 0
        %4162 = vmatpush.bf16.msra.mxu0 0
        %4163 = vmatpush.bf16.msra.mxu0 0
        %4164 = vmatpush.bf16.msra.mxu0 %v4143
        %4165 = vmatpush.bf16.msra.mxu0 %v4142
        %4166 = vmatmul.bf16.gmra.mxu0 %v4147
        %v4167 = vpop.f32.mrf.mxu0
        %v4168 = vadd.f32 0.0, %v4167
        %v4169 = vpop.f32.mrf.mxu0
        %v4170 = vadd.f32 0.0, %v4169
        %4171 = vmatmul.bf16.gmra.mxu0 %v4150
        %v4172 = vpop.f32.mrf.mxu0
        %v4173 = vadd.f32 0.0, %v4172
        %v4174 = vpop.f32.mrf.mxu0
        %v4175 = vadd.f32 0.0, %v4174
        %4176 = vmatmul.bf16.gmra.mxu0 %v4153
        %v4177 = vpop.f32.mrf.mxu0
        %v4178 = vadd.f32 0.0, %v4177
        %v4179 = vpop.f32.mrf.mxu0
        %v4180 = vadd.f32 0.0, %v4179
        %4181 = vmatmul.bf16.gmra.mxu0 %v4156
        %v4182 = vpop.f32.mrf.mxu0
        %v4183 = vadd.f32 0.0, %v4182
        %v4184 = vpop.f32.mrf.mxu0
        %v4185 = vadd.f32 0.0, %v4184
        %4186 = vdwg.mxu0
        %v4187 = vadd.f32 %v4101, %v4168
        %v4188 = vadd.f32 %v4102, %v4170
        %v4189 = vadd.f32 %v4103, %v4173
        %v4190 = vadd.f32 %v4104, %v4175
        %v4191 = vadd.f32 %v4105, %v4178
        %v4192 = vadd.f32 %v4106, %v4180
        %v4193 = vadd.f32 %v4107, %v4183
        %v4194 = vadd.f32 %v4108, %v4185
        %s4195 = scalar_lea.vmem %s4, 96
        %v4196 = vld [vmem:[%s4195] sm:$0xf]
        %v4197 = vld [vmem:[%s4195 + $0x4] sm:$0xf]
        %v4198 = vld [vmem:[%s4195 + $0x8] sm:$0xf]
        %v4199 = vld [vmem:[%s4195 + $0xc] sm:$0xf]
        %v4208 = vunpack.c.l.b16 %v3615
        %v4209 = vunpack.c.l.b16 %v3616
        %v4210 = vunpack.c.l.b16 %v3617
        %v4211 = vunpack.c.l.b16 %v3618
        %v4212 = vunpack.c.l.b16 %v3619
        %v4213 = vunpack.c.l.b16 %v3620
        %v4214 = vunpack.c.l.b16 %v3621
        %v4215 = vunpack.c.l.b16 %v3622
        %v4216 = vpack.c.b16 %v4209, %v4208
        %v4217 = vpack.c.b16 %v4211, %v4210
        %v4218 = vpack.c.b16 %v4213, %v4212
        %v4219 = vpack.c.b16 %v4215, %v4214
        %v4224 = vunpack.c.l.b16 %v4196
        %v4225 = vunpack.c.l.b16 %v4197
        %v4226 = vunpack.c.l.b16 %v4198
        %v4227 = vunpack.c.l.b16 %v4199
        %v4228 = vpack.c.b16 %v4225, %v4224
        %v4229 = vpack.c.b16 %v4227, %v4226
        %v4233 = vsel %vm3736, %v4216, 0
        %v4236 = vsel %vm3736, %v4217, 0
        %v4239 = vsel %vm3736, %v4218, 0
        %v4242 = vsel %vm3736, %v4219, 0
        %4244 = vmatpush.bf16.msra.mxu0 0
        %4245 = vmatpush.bf16.msra.mxu0 0
        %4246 = vmatpush.bf16.msra.mxu0 0
        %4247 = vmatpush.bf16.msra.mxu0 0
        %4248 = vmatpush.bf16.msra.mxu0 0
        %4249 = vmatpush.bf16.msra.mxu0 0
        %4250 = vmatpush.bf16.msra.mxu0 %v4229
        %4251 = vmatpush.bf16.msra.mxu0 %v4228
        %4252 = vmatmul.bf16.gmra.mxu0 %v4233
        %v4253 = vpop.f32.mrf.mxu0
        %v4254 = vadd.f32 0.0, %v4253
        %v4255 = vpop.f32.mrf.mxu0
        %v4256 = vadd.f32 0.0, %v4255
        %4257 = vmatmul.bf16.gmra.mxu0 %v4236
        %v4258 = vpop.f32.mrf.mxu0
        %v4259 = vadd.f32 0.0, %v4258
        %v4260 = vpop.f32.mrf.mxu0
        %v4261 = vadd.f32 0.0, %v4260
        %4262 = vmatmul.bf16.gmra.mxu0 %v4239
        %v4263 = vpop.f32.mrf.mxu0
        %v4264 = vadd.f32 0.0, %v4263
        %v4265 = vpop.f32.mrf.mxu0
        %v4266 = vadd.f32 0.0, %v4265
        %4267 = vmatmul.bf16.gmra.mxu0 %v4242
        %v4268 = vpop.f32.mrf.mxu0
        %v4269 = vadd.f32 0.0, %v4268
        %v4270 = vpop.f32.mrf.mxu0
        %v4271 = vadd.f32 0.0, %v4270
        %4272 = vdwg.mxu0
        %v4273 = vadd.f32 %v4187, %v4254
        %v4274 = vadd.f32 %v4188, %v4256
        %v4275 = vadd.f32 %v4189, %v4259
        %v4276 = vadd.f32 %v4190, %v4261
        %v4277 = vadd.f32 %v4191, %v4264
        %v4278 = vadd.f32 %v4192, %v4266
        %v4279 = vadd.f32 %v4193, %v4269
        %v4280 = vadd.f32 %v4194, %v4271
        %s4281 = scalar_lea.vmem %s4, 112
        %v4282 = vld [vmem:[%s4281] sm:$0xf]
        %v4283 = vld [vmem:[%s4281 + $0x4] sm:$0xf]
        %v4284 = vld [vmem:[%s4281 + $0x8] sm:$0xf]
        %v4285 = vld [vmem:[%s4281 + $0xc] sm:$0xf]
        %v4294 = vunpack.c.l.b16 %v3623
        %v4295 = vunpack.c.l.b16 %v3624
        %v4296 = vunpack.c.l.b16 %v3625
        %v4297 = vunpack.c.l.b16 %v3626
        %v4298 = vunpack.c.l.b16 %v3627
        %v4299 = vunpack.c.l.b16 %v3628
        %v4300 = vunpack.c.l.b16 %v3629
        %v4301 = vunpack.c.l.b16 %v3630
        %v4302 = vpack.c.b16 %v4295, %v4294
        %v4303 = vpack.c.b16 %v4297, %v4296
        %v4304 = vpack.c.b16 %v4299, %v4298
        %v4305 = vpack.c.b16 %v4301, %v4300
        %v4310 = vunpack.c.l.b16 %v4282
        %v4311 = vunpack.c.l.b16 %v4283
        %v4312 = vunpack.c.l.b16 %v4284
        %v4313 = vunpack.c.l.b16 %v4285
        %v4314 = vpack.c.b16 %v4311, %v4310
        %v4315 = vpack.c.b16 %v4313, %v4312
        %v4319 = vsel %vm3736, %v4302, 0
        %v4322 = vsel %vm3736, %v4303, 0
        %v4325 = vsel %vm3736, %v4304, 0
        %v4328 = vsel %vm3736, %v4305, 0
        %4330 = vmatpush.bf16.msra.mxu0 0
        %4331 = vmatpush.bf16.msra.mxu0 0
        %4332 = vmatpush.bf16.msra.mxu0 0
        %4333 = vmatpush.bf16.msra.mxu0 0
        %4334 = vmatpush.bf16.msra.mxu0 0
        %4335 = vmatpush.bf16.msra.mxu0 0
        %4336 = vmatpush.bf16.msra.mxu0 %v4315
        %4337 = vmatpush.bf16.msra.mxu0 %v4314
        %4338 = vmatmul.bf16.gmra.mxu0 %v4319
        %v4339 = vpop.f32.mrf.mxu0
        %v4340 = vadd.f32 0.0, %v4339
        %v4341 = vpop.f32.mrf.mxu0
        %v4342 = vadd.f32 0.0, %v4341
        %4343 = vmatmul.bf16.gmra.mxu0 %v4322
        %v4344 = vpop.f32.mrf.mxu0
        %v4345 = vadd.f32 0.0, %v4344
        %v4346 = vpop.f32.mrf.mxu0
        %v4347 = vadd.f32 0.0, %v4346
        %4348 = vmatmul.bf16.gmra.mxu0 %v4325
        %v4349 = vpop.f32.mrf.mxu0
        %v4350 = vadd.f32 0.0, %v4349
        %v4351 = vpop.f32.mrf.mxu0
        %v4352 = vadd.f32 0.0, %v4351
        %4353 = vmatmul.bf16.gmra.mxu0 %v4328
        %v4354 = vpop.f32.mrf.mxu0
        %v4355 = vadd.f32 0.0, %v4354
        %v4356 = vpop.f32.mrf.mxu0
        %v4357 = vadd.f32 0.0, %v4356
        %4358 = vdwg.mxu0
        %v4359 = vadd.f32 %v4273, %v4340
        %v4360 = vadd.f32 %v4274, %v4342
        %v4361 = vadd.f32 %v4275, %v4345
        %v4362 = vadd.f32 %v4276, %v4347
        %v4363 = vadd.f32 %v4277, %v4350
        %v4364 = vadd.f32 %v4278, %v4352
        %v4365 = vadd.f32 %v4279, %v4355
        %v4366 = vadd.f32 %v4280, %v4357
        %s4367 = scalar_lea.vmem %s4, 128
        %v4368 = vld [vmem:[%s4367] sm:$0xf]
        %v4369 = vld [vmem:[%s4367 + $0x4] sm:$0xf]
        %v4370 = vld [vmem:[%s4367 + $0x8] sm:$0xf]
        %v4371 = vld [vmem:[%s4367 + $0xc] sm:$0xf]
        %v4380 = vunpack.c.l.b16 %v3631
        %v4381 = vunpack.c.l.b16 %v3632
        %v4382 = vunpack.c.l.b16 %v3633
        %v4383 = vunpack.c.l.b16 %v3634
        %v4384 = vunpack.c.l.b16 %v3635
        %v4385 = vunpack.c.l.b16 %v3636
        %v4386 = vunpack.c.l.b16 %v3637
        %v4387 = vunpack.c.l.b16 %v3638
        %v4388 = vpack.c.b16 %v4381, %v4380
        %v4389 = vpack.c.b16 %v4383, %v4382
        %v4390 = vpack.c.b16 %v4385, %v4384
        %v4391 = vpack.c.b16 %v4387, %v4386
        %v4396 = vunpack.c.l.b16 %v4368
        %v4397 = vunpack.c.l.b16 %v4369
        %v4398 = vunpack.c.l.b16 %v4370
        %v4399 = vunpack.c.l.b16 %v4371
        %v4400 = vpack.c.b16 %v4397, %v4396
        %v4401 = vpack.c.b16 %v4399, %v4398
        %v4405 = vsel %vm3736, %v4388, 0
        %v4408 = vsel %vm3736, %v4389, 0
        %v4411 = vsel %vm3736, %v4390, 0
        %v4414 = vsel %vm3736, %v4391, 0
        %4416 = vmatpush.bf16.msra.mxu0 0
        %4417 = vmatpush.bf16.msra.mxu0 0
        %4418 = vmatpush.bf16.msra.mxu0 0
        %4419 = vmatpush.bf16.msra.mxu0 0
        %4420 = vmatpush.bf16.msra.mxu0 0
        %4421 = vmatpush.bf16.msra.mxu0 0
        %4422 = vmatpush.bf16.msra.mxu0 %v4401
        %4423 = vmatpush.bf16.msra.mxu0 %v4400
        %4424 = vmatmul.bf16.gmra.mxu0 %v4405
        %v4425 = vpop.f32.mrf.mxu0
        %v4426 = vadd.f32 0.0, %v4425
        %v4427 = vpop.f32.mrf.mxu0
        %v4428 = vadd.f32 0.0, %v4427
        %4429 = vmatmul.bf16.gmra.mxu0 %v4408
        %v4430 = vpop.f32.mrf.mxu0
        %v4431 = vadd.f32 0.0, %v4430
        %v4432 = vpop.f32.mrf.mxu0
        %v4433 = vadd.f32 0.0, %v4432
        %4434 = vmatmul.bf16.gmra.mxu0 %v4411
        %v4435 = vpop.f32.mrf.mxu0
        %v4436 = vadd.f32 0.0, %v4435
        %v4437 = vpop.f32.mrf.mxu0
        %v4438 = vadd.f32 0.0, %v4437
        %4439 = vmatmul.bf16.gmra.mxu0 %v4414
        %v4440 = vpop.f32.mrf.mxu0
        %v4441 = vadd.f32 0.0, %v4440
        %v4442 = vpop.f32.mrf.mxu0
        %v4443 = vadd.f32 0.0, %v4442
        %4444 = vdwg.mxu0
        %v4445 = vadd.f32 %v4359, %v4426
        %v4446 = vadd.f32 %v4360, %v4428
        %v4447 = vadd.f32 %v4361, %v4431
        %v4448 = vadd.f32 %v4362, %v4433
        %v4449 = vadd.f32 %v4363, %v4436
        %v4450 = vadd.f32 %v4364, %v4438
        %v4451 = vadd.f32 %v4365, %v4441
        %v4452 = vadd.f32 %v4366, %v4443
        %s4453 = scalar_lea.vmem %s4, 144
        %v4454 = vld [vmem:[%s4453] sm:$0xf]
        %v4455 = vld [vmem:[%s4453 + $0x4] sm:$0xf]
        %v4456 = vld [vmem:[%s4453 + $0x8] sm:$0xf]
        %v4457 = vld [vmem:[%s4453 + $0xc] sm:$0xf]
        %v4466 = vunpack.c.l.b16 %v3639
        %v4467 = vunpack.c.l.b16 %v3640
        %v4468 = vunpack.c.l.b16 %v3641
        %v4469 = vunpack.c.l.b16 %v3642
        %v4470 = vunpack.c.l.b16 %v3643
        %v4471 = vunpack.c.l.b16 %v3644
        %v4472 = vunpack.c.l.b16 %v3645
        %v4473 = vunpack.c.l.b16 %v3646
        %v4474 = vpack.c.b16 %v4467, %v4466
        %v4475 = vpack.c.b16 %v4469, %v4468
        %v4476 = vpack.c.b16 %v4471, %v4470
        %v4477 = vpack.c.b16 %v4473, %v4472
        %v4482 = vunpack.c.l.b16 %v4454
        %v4483 = vunpack.c.l.b16 %v4455
        %v4484 = vunpack.c.l.b16 %v4456
        %v4485 = vunpack.c.l.b16 %v4457
        %v4486 = vpack.c.b16 %v4483, %v4482
        %v4487 = vpack.c.b16 %v4485, %v4484
        %v4491 = vsel %vm3736, %v4474, 0
        %v4494 = vsel %vm3736, %v4475, 0
        %v4497 = vsel %vm3736, %v4476, 0
        %v4500 = vsel %vm3736, %v4477, 0
        %4502 = vmatpush.bf16.msra.mxu0 0
        %4503 = vmatpush.bf16.msra.mxu0 0
        %4504 = vmatpush.bf16.msra.mxu0 0
        %4505 = vmatpush.bf16.msra.mxu0 0
        %4506 = vmatpush.bf16.msra.mxu0 0
        %4507 = vmatpush.bf16.msra.mxu0 0
        %4508 = vmatpush.bf16.msra.mxu0 %v4487
        %4509 = vmatpush.bf16.msra.mxu0 %v4486
        %4510 = vmatmul.bf16.gmra.mxu0 %v4491
        %v4511 = vpop.f32.mrf.mxu0
        %v4512 = vadd.f32 0.0, %v4511
        %v4513 = vpop.f32.mrf.mxu0
        %v4514 = vadd.f32 0.0, %v4513
        %4515 = vmatmul.bf16.gmra.mxu0 %v4494
        %v4516 = vpop.f32.mrf.mxu0
        %v4517 = vadd.f32 0.0, %v4516
        %v4518 = vpop.f32.mrf.mxu0
        %v4519 = vadd.f32 0.0, %v4518
        %4520 = vmatmul.bf16.gmra.mxu0 %v4497
        %v4521 = vpop.f32.mrf.mxu0
        %v4522 = vadd.f32 0.0, %v4521
        %v4523 = vpop.f32.mrf.mxu0
        %v4524 = vadd.f32 0.0, %v4523
        %4525 = vmatmul.bf16.gmra.mxu0 %v4500
        %v4526 = vpop.f32.mrf.mxu0
        %v4527 = vadd.f32 0.0, %v4526
        %v4528 = vpop.f32.mrf.mxu0
        %v4529 = vadd.f32 0.0, %v4528
        %4530 = vdwg.mxu0
        %v4531 = vadd.f32 %v4445, %v4512
        %v4532 = vadd.f32 %v4446, %v4514
        %v4533 = vadd.f32 %v4447, %v4517
        %v4534 = vadd.f32 %v4448, %v4519
        %v4535 = vadd.f32 %v4449, %v4522
        %v4536 = vadd.f32 %v4450, %v4524
        %v4537 = vadd.f32 %v4451, %v4527
        %v4538 = vadd.f32 %v4452, %v4529
        %s4539 = scalar_lea.vmem %s4, 160
        %v4540 = vld [vmem:[%s4539] sm:$0xf]
        %v4541 = vld [vmem:[%s4539 + $0x4] sm:$0xf]
        %v4542 = vld [vmem:[%s4539 + $0x8] sm:$0xf]
        %v4543 = vld [vmem:[%s4539 + $0xc] sm:$0xf]
        %v4552 = vunpack.c.l.b16 %v3647
        %v4553 = vunpack.c.l.b16 %v3648
        %v4554 = vunpack.c.l.b16 %v3649
        %v4555 = vunpack.c.l.b16 %v3650
        %v4556 = vunpack.c.l.b16 %v3651
        %v4557 = vunpack.c.l.b16 %v3652
        %v4558 = vunpack.c.l.b16 %v3653
        %v4559 = vunpack.c.l.b16 %v3654
        %v4560 = vpack.c.b16 %v4553, %v4552
        %v4561 = vpack.c.b16 %v4555, %v4554
        %v4562 = vpack.c.b16 %v4557, %v4556
        %v4563 = vpack.c.b16 %v4559, %v4558
        %v4568 = vunpack.c.l.b16 %v4540
        %v4569 = vunpack.c.l.b16 %v4541
        %v4570 = vunpack.c.l.b16 %v4542
        %v4571 = vunpack.c.l.b16 %v4543
        %v4572 = vpack.c.b16 %v4569, %v4568
        %v4573 = vpack.c.b16 %v4571, %v4570
        %v4577 = vsel %vm3736, %v4560, 0
        %v4580 = vsel %vm3736, %v4561, 0
        %v4583 = vsel %vm3736, %v4562, 0
        %v4586 = vsel %vm3736, %v4563, 0
        %4588 = vmatpush.bf16.msra.mxu0 0
        %4589 = vmatpush.bf16.msra.mxu0 0
        %4590 = vmatpush.bf16.msra.mxu0 0
        %4591 = vmatpush.bf16.msra.mxu0 0
        %4592 = vmatpush.bf16.msra.mxu0 0
        %4593 = vmatpush.bf16.msra.mxu0 0
        %4594 = vmatpush.bf16.msra.mxu0 %v4573
        %4595 = vmatpush.bf16.msra.mxu0 %v4572
        %4596 = vmatmul.bf16.gmra.mxu0 %v4577
        %v4597 = vpop.f32.mrf.mxu0
        %v4598 = vadd.f32 0.0, %v4597
        %v4599 = vpop.f32.mrf.mxu0
        %v4600 = vadd.f32 0.0, %v4599
        %4601 = vmatmul.bf16.gmra.mxu0 %v4580
        %v4602 = vpop.f32.mrf.mxu0
        %v4603 = vadd.f32 0.0, %v4602
        %v4604 = vpop.f32.mrf.mxu0
        %v4605 = vadd.f32 0.0, %v4604
        %4606 = vmatmul.bf16.gmra.mxu0 %v4583
        %v4607 = vpop.f32.mrf.mxu0
        %v4608 = vadd.f32 0.0, %v4607
        %v4609 = vpop.f32.mrf.mxu0
        %v4610 = vadd.f32 0.0, %v4609
        %4611 = vmatmul.bf16.gmra.mxu0 %v4586
        %v4612 = vpop.f32.mrf.mxu0
        %v4613 = vadd.f32 0.0, %v4612
        %v4614 = vpop.f32.mrf.mxu0
        %v4615 = vadd.f32 0.0, %v4614
        %4616 = vdwg.mxu0
        %v4617 = vadd.f32 %v4531, %v4598
        %v4618 = vadd.f32 %v4532, %v4600
        %v4619 = vadd.f32 %v4533, %v4603
        %v4620 = vadd.f32 %v4534, %v4605
        %v4621 = vadd.f32 %v4535, %v4608
        %v4622 = vadd.f32 %v4536, %v4610
        %v4623 = vadd.f32 %v4537, %v4613
        %v4624 = vadd.f32 %v4538, %v4615
        %s4625 = scalar_lea.vmem %s4, 176
        %v4626 = vld [vmem:[%s4625] sm:$0xf]
        %v4627 = vld [vmem:[%s4625 + $0x4] sm:$0xf]
        %v4628 = vld [vmem:[%s4625 + $0x8] sm:$0xf]
        %v4629 = vld [vmem:[%s4625 + $0xc] sm:$0xf]
        %v4638 = vunpack.c.l.b16 %v3655
        %v4639 = vunpack.c.l.b16 %v3656
        %v4640 = vunpack.c.l.b16 %v3657
        %v4641 = vunpack.c.l.b16 %v3658
        %v4642 = vunpack.c.l.b16 %v3659
        %v4643 = vunpack.c.l.b16 %v3660
        %v4644 = vunpack.c.l.b16 %v3661
        %v4645 = vunpack.c.l.b16 %v3662
        %v4646 = vpack.c.b16 %v4639, %v4638
        %v4647 = vpack.c.b16 %v4641, %v4640
        %v4648 = vpack.c.b16 %v4643, %v4642
        %v4649 = vpack.c.b16 %v4645, %v4644
        %v4654 = vunpack.c.l.b16 %v4626
        %v4655 = vunpack.c.l.b16 %v4627
        %v4656 = vunpack.c.l.b16 %v4628
        %v4657 = vunpack.c.l.b16 %v4629
        %v4658 = vpack.c.b16 %v4655, %v4654
        %v4659 = vpack.c.b16 %v4657, %v4656
        %v4663 = vsel %vm3736, %v4646, 0
        %v4666 = vsel %vm3736, %v4647, 0
        %v4669 = vsel %vm3736, %v4648, 0
        %v4672 = vsel %vm3736, %v4649, 0
        %4674 = vmatpush.bf16.msra.mxu0 0
        %4675 = vmatpush.bf16.msra.mxu0 0
        %4676 = vmatpush.bf16.msra.mxu0 0
        %4677 = vmatpush.bf16.msra.mxu0 0
        %4678 = vmatpush.bf16.msra.mxu0 0
        %4679 = vmatpush.bf16.msra.mxu0 0
        %4680 = vmatpush.bf16.msra.mxu0 %v4659
        %4681 = vmatpush.bf16.msra.mxu0 %v4658
        %4682 = vmatmul.bf16.gmra.mxu0 %v4663
        %v4683 = vpop.f32.mrf.mxu0
        %v4684 = vadd.f32 0.0, %v4683
        %v4685 = vpop.f32.mrf.mxu0
        %v4686 = vadd.f32 0.0, %v4685
        %4687 = vmatmul.bf16.gmra.mxu0 %v4666
        %v4688 = vpop.f32.mrf.mxu0
        %v4689 = vadd.f32 0.0, %v4688
        %v4690 = vpop.f32.mrf.mxu0
        %v4691 = vadd.f32 0.0, %v4690
        %4692 = vmatmul.bf16.gmra.mxu0 %v4669
        %v4693 = vpop.f32.mrf.mxu0
        %v4694 = vadd.f32 0.0, %v4693
        %v4695 = vpop.f32.mrf.mxu0
        %v4696 = vadd.f32 0.0, %v4695
        %4697 = vmatmul.bf16.gmra.mxu0 %v4672
        %v4698 = vpop.f32.mrf.mxu0
        %v4699 = vadd.f32 0.0, %v4698
        %v4700 = vpop.f32.mrf.mxu0
        %v4701 = vadd.f32 0.0, %v4700
        %4702 = vdwg.mxu0
        %v4703 = vadd.f32 %v4617, %v4684
        %v4704 = vadd.f32 %v4618, %v4686
        %v4705 = vadd.f32 %v4619, %v4689
        %v4706 = vadd.f32 %v4620, %v4691
        %v4707 = vadd.f32 %v4621, %v4694
        %v4708 = vadd.f32 %v4622, %v4696
        %v4709 = vadd.f32 %v4623, %v4699
        %v4710 = vadd.f32 %v4624, %v4701
        %s4711 = scalar_lea.vmem %s4, 192
        %v4712 = vld [vmem:[%s4711] sm:$0xf]
        %v4713 = vld [vmem:[%s4711 + $0x4] sm:$0xf]
        %v4714 = vld [vmem:[%s4711 + $0x8] sm:$0xf]
        %v4715 = vld [vmem:[%s4711 + $0xc] sm:$0xf]
        %v4724 = vunpack.c.l.b16 %v3663
        %v4725 = vunpack.c.l.b16 %v3664
        %v4726 = vunpack.c.l.b16 %v3665
        %v4727 = vunpack.c.l.b16 %v3666
        %v4728 = vunpack.c.l.b16 %v3667
        %v4729 = vunpack.c.l.b16 %v3668
        %v4730 = vunpack.c.l.b16 %v3669
        %v4731 = vunpack.c.l.b16 %v3670
        %v4732 = vpack.c.b16 %v4725, %v4724
        %v4733 = vpack.c.b16 %v4727, %v4726
        %v4734 = vpack.c.b16 %v4729, %v4728
        %v4735 = vpack.c.b16 %v4731, %v4730
        %v4740 = vunpack.c.l.b16 %v4712
        %v4741 = vunpack.c.l.b16 %v4713
        %v4742 = vunpack.c.l.b16 %v4714
        %v4743 = vunpack.c.l.b16 %v4715
        %v4744 = vpack.c.b16 %v4741, %v4740
        %v4745 = vpack.c.b16 %v4743, %v4742
        %v4749 = vsel %vm3736, %v4732, 0
        %v4752 = vsel %vm3736, %v4733, 0
        %v4755 = vsel %vm3736, %v4734, 0
        %v4758 = vsel %vm3736, %v4735, 0
        %4760 = vmatpush.bf16.msra.mxu0 0
        %4761 = vmatpush.bf16.msra.mxu0 0
        %4762 = vmatpush.bf16.msra.mxu0 0
        %4763 = vmatpush.bf16.msra.mxu0 0
        %4764 = vmatpush.bf16.msra.mxu0 0
        %4765 = vmatpush.bf16.msra.mxu0 0
        %4766 = vmatpush.bf16.msra.mxu0 %v4745
        %4767 = vmatpush.bf16.msra.mxu0 %v4744
        %4768 = vmatmul.bf16.gmra.mxu0 %v4749
        %v4769 = vpop.f32.mrf.mxu0
        %v4770 = vadd.f32 0.0, %v4769
        %v4771 = vpop.f32.mrf.mxu0
        %v4772 = vadd.f32 0.0, %v4771
        %4773 = vmatmul.bf16.gmra.mxu0 %v4752
        %v4774 = vpop.f32.mrf.mxu0
        %v4775 = vadd.f32 0.0, %v4774
        %v4776 = vpop.f32.mrf.mxu0
        %v4777 = vadd.f32 0.0, %v4776
        %4778 = vmatmul.bf16.gmra.mxu0 %v4755
        %v4779 = vpop.f32.mrf.mxu0
        %v4780 = vadd.f32 0.0, %v4779
        %v4781 = vpop.f32.mrf.mxu0
        %v4782 = vadd.f32 0.0, %v4781
        %4783 = vmatmul.bf16.gmra.mxu0 %v4758
        %v4784 = vpop.f32.mrf.mxu0
        %v4785 = vadd.f32 0.0, %v4784
        %v4786 = vpop.f32.mrf.mxu0
        %v4787 = vadd.f32 0.0, %v4786
        %4788 = vdwg.mxu0
        %v4789 = vadd.f32 %v4703, %v4770
        %v4790 = vadd.f32 %v4704, %v4772
        %v4791 = vadd.f32 %v4705, %v4775
        %v4792 = vadd.f32 %v4706, %v4777
        %v4793 = vadd.f32 %v4707, %v4780
        %v4794 = vadd.f32 %v4708, %v4782
        %v4795 = vadd.f32 %v4709, %v4785
        %v4796 = vadd.f32 %v4710, %v4787
        %s4797 = scalar_lea.vmem %s4, 208
        %v4798 = vld [vmem:[%s4797] sm:$0xf]
        %v4799 = vld [vmem:[%s4797 + $0x4] sm:$0xf]
        %v4800 = vld [vmem:[%s4797 + $0x8] sm:$0xf]
        %v4801 = vld [vmem:[%s4797 + $0xc] sm:$0xf]
        %v4810 = vunpack.c.l.b16 %v3671
        %v4811 = vunpack.c.l.b16 %v3672
        %v4812 = vunpack.c.l.b16 %v3673
        %v4813 = vunpack.c.l.b16 %v3674
        %v4814 = vunpack.c.l.b16 %v3675
        %v4815 = vunpack.c.l.b16 %v3676
        %v4816 = vunpack.c.l.b16 %v3677
        %v4817 = vunpack.c.l.b16 %v3678
        %v4818 = vpack.c.b16 %v4811, %v4810
        %v4819 = vpack.c.b16 %v4813, %v4812
        %v4820 = vpack.c.b16 %v4815, %v4814
        %v4821 = vpack.c.b16 %v4817, %v4816
        %v4826 = vunpack.c.l.b16 %v4798
        %v4827 = vunpack.c.l.b16 %v4799
        %v4828 = vunpack.c.l.b16 %v4800
        %v4829 = vunpack.c.l.b16 %v4801
        %v4830 = vpack.c.b16 %v4827, %v4826
        %v4831 = vpack.c.b16 %v4829, %v4828
        %v4835 = vsel %vm3736, %v4818, 0
        %v4838 = vsel %vm3736, %v4819, 0
        %v4841 = vsel %vm3736, %v4820, 0
        %v4844 = vsel %vm3736, %v4821, 0
        %4846 = vmatpush.bf16.msra.mxu0 0
        %4847 = vmatpush.bf16.msra.mxu0 0
        %4848 = vmatpush.bf16.msra.mxu0 0
        %4849 = vmatpush.bf16.msra.mxu0 0
        %4850 = vmatpush.bf16.msra.mxu0 0
        %4851 = vmatpush.bf16.msra.mxu0 0
        %4852 = vmatpush.bf16.msra.mxu0 %v4831
        %4853 = vmatpush.bf16.msra.mxu0 %v4830
        %4854 = vmatmul.bf16.gmra.mxu0 %v4835
        %v4855 = vpop.f32.mrf.mxu0
        %v4856 = vadd.f32 0.0, %v4855
        %v4857 = vpop.f32.mrf.mxu0
        %v4858 = vadd.f32 0.0, %v4857
        %4859 = vmatmul.bf16.gmra.mxu0 %v4838
        %v4860 = vpop.f32.mrf.mxu0
        %v4861 = vadd.f32 0.0, %v4860
        %v4862 = vpop.f32.mrf.mxu0
        %v4863 = vadd.f32 0.0, %v4862
        %4864 = vmatmul.bf16.gmra.mxu0 %v4841
        %v4865 = vpop.f32.mrf.mxu0
        %v4866 = vadd.f32 0.0, %v4865
        %v4867 = vpop.f32.mrf.mxu0
        %v4868 = vadd.f32 0.0, %v4867
        %4869 = vmatmul.bf16.gmra.mxu0 %v4844
        %v4870 = vpop.f32.mrf.mxu0
        %v4871 = vadd.f32 0.0, %v4870
        %v4872 = vpop.f32.mrf.mxu0
        %v4873 = vadd.f32 0.0, %v4872
        %4874 = vdwg.mxu0
        %v4875 = vadd.f32 %v4789, %v4856
        %v4876 = vadd.f32 %v4790, %v4858
        %v4877 = vadd.f32 %v4791, %v4861
        %v4878 = vadd.f32 %v4792, %v4863
        %v4879 = vadd.f32 %v4793, %v4866
        %v4880 = vadd.f32 %v4794, %v4868
        %v4881 = vadd.f32 %v4795, %v4871
        %v4882 = vadd.f32 %v4796, %v4873
        %s4883 = scalar_lea.vmem %s4, 224
        %v4884 = vld [vmem:[%s4883] sm:$0xf]
        %v4885 = vld [vmem:[%s4883 + $0x4] sm:$0xf]
        %v4886 = vld [vmem:[%s4883 + $0x8] sm:$0xf]
        %v4887 = vld [vmem:[%s4883 + $0xc] sm:$0xf]
        %v4896 = vunpack.c.l.b16 %v3679
        %v4897 = vunpack.c.l.b16 %v3680
        %v4898 = vunpack.c.l.b16 %v3681
        %v4899 = vunpack.c.l.b16 %v3682
        %v4900 = vunpack.c.l.b16 %v3683
        %v4901 = vunpack.c.l.b16 %v3684
        %v4902 = vunpack.c.l.b16 %v3685
        %v4903 = vunpack.c.l.b16 %v3686
        %v4904 = vpack.c.b16 %v4897, %v4896
        %v4905 = vpack.c.b16 %v4899, %v4898
        %v4906 = vpack.c.b16 %v4901, %v4900
        %v4907 = vpack.c.b16 %v4903, %v4902
        %v4912 = vunpack.c.l.b16 %v4884
        %v4913 = vunpack.c.l.b16 %v4885
        %v4914 = vunpack.c.l.b16 %v4886
        %v4915 = vunpack.c.l.b16 %v4887
        %v4916 = vpack.c.b16 %v4913, %v4912
        %v4917 = vpack.c.b16 %v4915, %v4914
        %v4921 = vsel %vm3736, %v4904, 0
        %v4924 = vsel %vm3736, %v4905, 0
        %v4927 = vsel %vm3736, %v4906, 0
        %v4930 = vsel %vm3736, %v4907, 0
        %4932 = vmatpush.bf16.msra.mxu0 0
        %4933 = vmatpush.bf16.msra.mxu0 0
        %4934 = vmatpush.bf16.msra.mxu0 0
        %4935 = vmatpush.bf16.msra.mxu0 0
        %4936 = vmatpush.bf16.msra.mxu0 0
        %4937 = vmatpush.bf16.msra.mxu0 0
        %4938 = vmatpush.bf16.msra.mxu0 %v4917
        %4939 = vmatpush.bf16.msra.mxu0 %v4916
        %4940 = vmatmul.bf16.gmra.mxu0 %v4921
        %v4941 = vpop.f32.mrf.mxu0
        %v4942 = vadd.f32 0.0, %v4941
        %v4943 = vpop.f32.mrf.mxu0
        %v4944 = vadd.f32 0.0, %v4943
        %4945 = vmatmul.bf16.gmra.mxu0 %v4924
        %v4946 = vpop.f32.mrf.mxu0
        %v4947 = vadd.f32 0.0, %v4946
        %v4948 = vpop.f32.mrf.mxu0
        %v4949 = vadd.f32 0.0, %v4948
        %4950 = vmatmul.bf16.gmra.mxu0 %v4927
        %v4951 = vpop.f32.mrf.mxu0
        %v4952 = vadd.f32 0.0, %v4951
        %v4953 = vpop.f32.mrf.mxu0
        %v4954 = vadd.f32 0.0, %v4953
        %4955 = vmatmul.bf16.gmra.mxu0 %v4930
        %v4956 = vpop.f32.mrf.mxu0
        %v4957 = vadd.f32 0.0, %v4956
        %v4958 = vpop.f32.mrf.mxu0
        %v4959 = vadd.f32 0.0, %v4958
        %4960 = vdwg.mxu0
        %v4961 = vadd.f32 %v4875, %v4942
        %v4962 = vadd.f32 %v4876, %v4944
        %v4963 = vadd.f32 %v4877, %v4947
        %v4964 = vadd.f32 %v4878, %v4949
        %v4965 = vadd.f32 %v4879, %v4952
        %v4966 = vadd.f32 %v4880, %v4954
        %v4967 = vadd.f32 %v4881, %v4957
        %v4968 = vadd.f32 %v4882, %v4959
        %s4969 = scalar_lea.vmem %s4, 240
        %v4970 = vld [vmem:[%s4969] sm:$0xf]
        %v4971 = vld [vmem:[%s4969 + $0x4] sm:$0xf]
        %v4972 = vld [vmem:[%s4969 + $0x8] sm:$0xf]
        %v4973 = vld [vmem:[%s4969 + $0xc] sm:$0xf]
        %v4982 = vunpack.c.l.b16 %v3687
        %v4983 = vunpack.c.l.b16 %v3688
        %v4984 = vunpack.c.l.b16 %v3689
        %v4985 = vunpack.c.l.b16 %v3690
        %v4986 = vunpack.c.l.b16 %v3691
        %v4987 = vunpack.c.l.b16 %v3692
        %v4988 = vunpack.c.l.b16 %v3693
        %v4989 = vunpack.c.l.b16 %v3694
        %v4990 = vpack.c.b16 %v4983, %v4982
        %v4991 = vpack.c.b16 %v4985, %v4984
        %v4992 = vpack.c.b16 %v4987, %v4986
        %v4993 = vpack.c.b16 %v4989, %v4988
        %v4998 = vunpack.c.l.b16 %v4970
        %v4999 = vunpack.c.l.b16 %v4971
        %v5000 = vunpack.c.l.b16 %v4972
        %v5001 = vunpack.c.l.b16 %v4973
        %v5002 = vpack.c.b16 %v4999, %v4998
        %v5003 = vpack.c.b16 %v5001, %v5000
        %v5007 = vsel %vm3736, %v4990, 0
        %v5010 = vsel %vm3736, %v4991, 0
        %v5013 = vsel %vm3736, %v4992, 0
        %v5016 = vsel %vm3736, %v4993, 0
        %5018 = vmatpush.bf16.msra.mxu0 0
        %5019 = vmatpush.bf16.msra.mxu0 0
        %5020 = vmatpush.bf16.msra.mxu0 0
        %5021 = vmatpush.bf16.msra.mxu0 0
        %5022 = vmatpush.bf16.msra.mxu0 0
        %5023 = vmatpush.bf16.msra.mxu0 0
        %5024 = vmatpush.bf16.msra.mxu0 %v5003
        %5025 = vmatpush.bf16.msra.mxu0 %v5002
        %5026 = vmatmul.bf16.gmra.mxu0 %v5007
        %v5027 = vpop.f32.mrf.mxu0
        %v5028 = vadd.f32 0.0, %v5027
        %v5029 = vpop.f32.mrf.mxu0
        %v5030 = vadd.f32 0.0, %v5029
        %5031 = vmatmul.bf16.gmra.mxu0 %v5010
        %v5032 = vpop.f32.mrf.mxu0
        %v5033 = vadd.f32 0.0, %v5032
        %v5034 = vpop.f32.mrf.mxu0
        %v5035 = vadd.f32 0.0, %v5034
        %5036 = vmatmul.bf16.gmra.mxu0 %v5013
        %v5037 = vpop.f32.mrf.mxu0
        %v5038 = vadd.f32 0.0, %v5037
        %v5039 = vpop.f32.mrf.mxu0
        %v5040 = vadd.f32 0.0, %v5039
        %5041 = vmatmul.bf16.gmra.mxu0 %v5016
        %v5042 = vpop.f32.mrf.mxu0
        %v5043 = vadd.f32 0.0, %v5042
        %v5044 = vpop.f32.mrf.mxu0
        %v5045 = vadd.f32 0.0, %v5044
        %5046 = vdwg.mxu0
        %v5047 = vadd.f32 %v4961, %v5028
        %v5048 = vadd.f32 %v4962, %v5030
        %v5049 = vadd.f32 %v4963, %v5033
        %v5050 = vadd.f32 %v4964, %v5035
        %v5051 = vadd.f32 %v4965, %v5038
        %v5052 = vadd.f32 %v4966, %v5040
        %v5053 = vadd.f32 %v4967, %v5043
        %v5054 = vadd.f32 %v4968, %v5045
        %v5055 = vld [vmem:[%s5] sm:$0x1]
        %v5057 = vperm.slane %v5055, 0
        %v5059 = vadd.f32 %v5047, %v5057
        %v5060 = vadd.f32 %v5048, %v5057
        %v5061 = vadd.f32 %v5049, %v5057
        %v5062 = vadd.f32 %v5050, %v5057
        %v5063 = vadd.f32 %v5051, %v5057
        %v5064 = vadd.f32 %v5052, %v5057
        %v5065 = vadd.f32 %v5053, %v5057
        %v5066 = vadd.f32 %v5054, %v5057
        %v5067 = vmax.f32 %v5059, 0.0
        %v5068 = vmax.f32 %v5060, 0.0
        %v5069 = vmax.f32 %v5061, 0.0
        %v5070 = vmax.f32 %v5062, 0.0
        %v5071 = vmax.f32 %v5063, 0.0
        %v5072 = vmax.f32 %v5064, 0.0
        %v5073 = vmax.f32 %v5065, 0.0
        %v5074 = vmax.f32 %v5066, 0.0
        %v5075 = vpack.c.bf16 %v5068, %v5067
        %v5076 = vpack.c.bf16 %v5070, %v5069
        %v5077 = vpack.c.bf16 %v5072, %v5071
        %v5078 = vpack.c.bf16 %v5074, %v5073
        %v5079 = vld [vmem:[%s6] sm:$0xf]
        %v5080 = vld [vmem:[%s6 + $0x4] sm:$0xf]
        %v5081 = vld [vmem:[%s6 + $0x8] sm:$0xf]
        %v5082 = vld [vmem:[%s6 + $0xc] sm:$0xf]
        %v5083 = vld [vmem:[%s6 + $0x10] sm:$0xf]
        %v5084 = vld [vmem:[%s6 + $0x14] sm:$0xf]
        %v5085 = vld [vmem:[%s6 + $0x18] sm:$0xf]
        %v5086 = vld [vmem:[%s6 + $0x1c] sm:$0xf]
        %v5087 = vld [vmem:[%s6 + $0x20] sm:$0xf]
        %v5088 = vld [vmem:[%s6 + $0x24] sm:$0xf]
        %v5089 = vld [vmem:[%s6 + $0x28] sm:$0xf]
        %v5090 = vld [vmem:[%s6 + $0x2c] sm:$0xf]
        %v5091 = vld [vmem:[%s6 + $0x30] sm:$0xf]
        %v5092 = vld [vmem:[%s6 + $0x34] sm:$0xf]
        %v5093 = vld [vmem:[%s6 + $0x38] sm:$0xf]
        %v5094 = vld [vmem:[%s6 + $0x3c] sm:$0xf]
        %v5095 = vld [vmem:[%s6 + $0x40] sm:$0xf]
        %v5096 = vld [vmem:[%s6 + $0x44] sm:$0xf]
        %v5097 = vld [vmem:[%s6 + $0x48] sm:$0xf]
        %v5098 = vld [vmem:[%s6 + $0x4c] sm:$0xf]
        %v5099 = vld [vmem:[%s6 + $0x50] sm:$0xf]
        %v5100 = vld [vmem:[%s6 + $0x54] sm:$0xf]
        %v5101 = vld [vmem:[%s6 + $0x58] sm:$0xf]
        %v5102 = vld [vmem:[%s6 + $0x5c] sm:$0xf]
        %v5103 = vld [vmem:[%s6 + $0x60] sm:$0xf]
        %v5104 = vld [vmem:[%s6 + $0x64] sm:$0xf]
        %v5105 = vld [vmem:[%s6 + $0x68] sm:$0xf]
        %v5106 = vld [vmem:[%s6 + $0x6c] sm:$0xf]
        %v5107 = vld [vmem:[%s6 + $0x70] sm:$0xf]
        %v5108 = vld [vmem:[%s6 + $0x74] sm:$0xf]
        %v5109 = vld [vmem:[%s6 + $0x78] sm:$0xf]
        %v5110 = vld [vmem:[%s6 + $0x7c] sm:$0xf]
        %v5111 = vld [vmem:[%s6 + $0x80] sm:$0xf]
        %v5112 = vld [vmem:[%s6 + $0x84] sm:$0xf]
        %v5113 = vld [vmem:[%s6 + $0x88] sm:$0xf]
        %v5114 = vld [vmem:[%s6 + $0x8c] sm:$0xf]
        %v5115 = vld [vmem:[%s6 + $0x90] sm:$0xf]
        %v5116 = vld [vmem:[%s6 + $0x94] sm:$0xf]
        %v5117 = vld [vmem:[%s6 + $0x98] sm:$0xf]
        %v5118 = vld [vmem:[%s6 + $0x9c] sm:$0xf]
        %v5119 = vld [vmem:[%s6 + $0xa0] sm:$0xf]
        %v5120 = vld [vmem:[%s6 + $0xa4] sm:$0xf]
        %v5121 = vld [vmem:[%s6 + $0xa8] sm:$0xf]
        %v5122 = vld [vmem:[%s6 + $0xac] sm:$0xf]
        %v5123 = vld [vmem:[%s6 + $0xb0] sm:$0xf]
        %v5169 = vunpack.c.l.b16 %v5079
        %v5170 = vunpack.c.l.b16 %v5080
        %v5171 = vunpack.c.l.b16 %v5081
        %v5172 = vunpack.c.l.b16 %v5082
        %v5173 = vunpack.c.l.b16 %v5083
        %v5174 = vunpack.c.l.b16 %v5084
        %v5175 = vunpack.c.l.b16 %v5085
        %v5176 = vunpack.c.l.b16 %v5086
        %v5177 = vunpack.c.l.b16 %v5087
        %v5178 = vunpack.c.l.b16 %v5088
        %v5179 = vunpack.c.l.b16 %v5089
        %v5180 = vunpack.c.l.b16 %v5090
        %v5181 = vunpack.c.l.b16 %v5091
        %v5182 = vunpack.c.l.b16 %v5092
        %v5183 = vunpack.c.l.b16 %v5093
        %v5184 = vunpack.c.l.b16 %v5094
        %v5185 = vunpack.c.l.b16 %v5095
        %v5186 = vunpack.c.l.b16 %v5096
        %v5187 = vunpack.c.l.b16 %v5097
        %v5188 = vunpack.c.l.b16 %v5098
        %v5189 = vunpack.c.l.b16 %v5099
        %v5190 = vunpack.c.l.b16 %v5100
        %v5191 = vunpack.c.l.b16 %v5101
        %v5192 = vunpack.c.l.b16 %v5102
        %v5193 = vunpack.c.l.b16 %v5103
        %v5194 = vunpack.c.l.b16 %v5104
        %v5195 = vunpack.c.l.b16 %v5105
        %v5196 = vunpack.c.l.b16 %v5106
        %v5197 = vunpack.c.l.b16 %v5107
        %v5198 = vunpack.c.l.b16 %v5108
        %v5199 = vunpack.c.l.b16 %v5109
        %v5200 = vunpack.c.l.b16 %v5110
        %v5201 = vunpack.c.l.b16 %v5111
        %v5202 = vunpack.c.l.b16 %v5112
        %v5203 = vunpack.c.l.b16 %v5113
        %v5204 = vunpack.c.l.b16 %v5114
        %v5205 = vunpack.c.l.b16 %v5115
        %v5206 = vunpack.c.l.b16 %v5116
        %v5207 = vunpack.c.l.b16 %v5117
        %v5208 = vunpack.c.l.b16 %v5118
        %v5209 = vunpack.c.l.b16 %v5119
        %v5210 = vunpack.c.l.b16 %v5120
        %v5211 = vunpack.c.l.b16 %v5121
        %v5212 = vunpack.c.l.b16 %v5122
        %v5213 = vunpack.c.l.b16 %v5123
        %v5214 = vpack.c.b16 %v5170, %v5169
        %v5215 = vpack.c.b16 %v5172, %v5171
        %v5216 = vpack.c.b16 %v5174, %v5173
        %v5217 = vpack.c.b16 %v5176, %v5175
        %v5218 = vpack.c.b16 %v5178, %v5177
        %v5219 = vpack.c.b16 %v5180, %v5179
        %v5220 = vpack.c.b16 %v5182, %v5181
        %v5221 = vpack.c.b16 %v5184, %v5183
        %v5222 = vpack.c.b16 %v5186, %v5185
        %v5223 = vpack.c.b16 %v5188, %v5187
        %v5224 = vpack.c.b16 %v5190, %v5189
        %v5225 = vpack.c.b16 %v5192, %v5191
        %v5226 = vpack.c.b16 %v5194, %v5193
        %v5227 = vpack.c.b16 %v5196, %v5195
        %v5228 = vpack.c.b16 %v5198, %v5197
        %v5229 = vpack.c.b16 %v5200, %v5199
        %v5230 = vpack.c.b16 %v5202, %v5201
        %v5231 = vpack.c.b16 %v5204, %v5203
        %v5232 = vpack.c.b16 %v5206, %v5205
        %v5233 = vpack.c.b16 %v5208, %v5207
        %v5234 = vpack.c.b16 %v5210, %v5209
        %v5235 = vpack.c.b16 %v5212, %v5211
        %v5236 = vpack.c.b16 %v5213, %v5213
        %vm5237 = vcmask 523264
        %v5239 = vsel %vm5237, %v5214, 0
        %v5242 = vsel %vm5237, %v5215, 0
        %v5245 = vsel %vm5237, %v5216, 0
        %v5248 = vsel %vm5237, %v5217, 0
        %v5251 = vsel %vm5237, %v5218, 0
        %v5254 = vsel %vm5237, %v5219, 0
        %v5257 = vsel %vm5237, %v5220, 0
        %v5260 = vsel %vm5237, %v5221, 0
        %v5263 = vsel %vm5237, %v5222, 0
        %v5266 = vsel %vm5237, %v5223, 0
        %v5269 = vsel %vm5237, %v5224, 0
        %v5272 = vsel %vm5237, %v5225, 0
        %v5275 = vsel %vm5237, %v5226, 0
        %v5278 = vsel %vm5237, %v5227, 0
        %v5281 = vsel %vm5237, %v5228, 0
        %v5284 = vsel %vm5237, %v5229, 0
        %v5287 = vsel %vm5237, %v5230, 0
        %v5290 = vsel %vm5237, %v5231, 0
        %v5293 = vsel %vm5237, %v5232, 0
        %v5296 = vsel %vm5237, %v5233, 0
        %v5299 = vsel %vm5237, %v5234, 0
        %v5302 = vsel %vm5237, %v5235, 0
        %v5305 = vsel %vm5237, %v5236, 0
        %5307 = vmatpush.bf16.msra.mxu0 0
        %5308 = vmatpush.bf16.msra.mxu0 0
        %5309 = vmatpush.bf16.msra.mxu0 0
        %5310 = vmatpush.bf16.msra.mxu0 0
        %5311 = vmatpush.bf16.msra.mxu0 %v5078
        %5312 = vmatpush.bf16.msra.mxu0 %v5077
        %5313 = vmatpush.bf16.msra.mxu0 %v5076
        %5314 = vmatpush.bf16.msra.mxu0 %v5075
        %5315 = vmatmul.bf16.gmra.mxu0 %v5239
        %v5316 = vpop.f32.mrf.mxu0
        %v5317 = vadd.f32 0.0, %v5316
        %v5318 = vpop.f32.mrf.mxu0
        %v5319 = vadd.f32 0.0, %v5318
        %5320 = vmatmul.bf16.gmra.mxu0 %v5242
        %v5321 = vpop.f32.mrf.mxu0
        %v5322 = vadd.f32 0.0, %v5321
        %v5323 = vpop.f32.mrf.mxu0
        %v5324 = vadd.f32 0.0, %v5323
        %5325 = vmatmul.bf16.gmra.mxu0 %v5245
        %v5326 = vpop.f32.mrf.mxu0
        %v5327 = vadd.f32 0.0, %v5326
        %v5328 = vpop.f32.mrf.mxu0
        %v5329 = vadd.f32 0.0, %v5328
        %5330 = vmatmul.bf16.gmra.mxu0 %v5248
        %v5331 = vpop.f32.mrf.mxu0
        %v5332 = vadd.f32 0.0, %v5331
        %v5333 = vpop.f32.mrf.mxu0
        %v5334 = vadd.f32 0.0, %v5333
        %5335 = vmatmul.bf16.gmra.mxu0 %v5251
        %v5336 = vpop.f32.mrf.mxu0
        %v5337 = vadd.f32 0.0, %v5336
        %v5338 = vpop.f32.mrf.mxu0
        %v5339 = vadd.f32 0.0, %v5338
        %5340 = vmatmul.bf16.gmra.mxu0 %v5254
        %v5341 = vpop.f32.mrf.mxu0
        %v5342 = vadd.f32 0.0, %v5341
        %v5343 = vpop.f32.mrf.mxu0
        %v5344 = vadd.f32 0.0, %v5343
        %5345 = vmatmul.bf16.gmra.mxu0 %v5257
        %v5346 = vpop.f32.mrf.mxu0
        %v5347 = vadd.f32 0.0, %v5346
        %v5348 = vpop.f32.mrf.mxu0
        %v5349 = vadd.f32 0.0, %v5348
        %5350 = vmatmul.bf16.gmra.mxu0 %v5260
        %v5351 = vpop.f32.mrf.mxu0
        %v5352 = vadd.f32 0.0, %v5351
        %v5353 = vpop.f32.mrf.mxu0
        %v5354 = vadd.f32 0.0, %v5353
        %5355 = vmatmul.bf16.gmra.mxu0 %v5263
        %v5356 = vpop.f32.mrf.mxu0
        %v5357 = vadd.f32 0.0, %v5356
        %v5358 = vpop.f32.mrf.mxu0
        %v5359 = vadd.f32 0.0, %v5358
        %5360 = vmatmul.bf16.gmra.mxu0 %v5266
        %v5361 = vpop.f32.mrf.mxu0
        %v5362 = vadd.f32 0.0, %v5361
        %v5363 = vpop.f32.mrf.mxu0
        %v5364 = vadd.f32 0.0, %v5363
        %5365 = vmatmul.bf16.gmra.mxu0 %v5269
        %v5366 = vpop.f32.mrf.mxu0
        %v5367 = vadd.f32 0.0, %v5366
        %v5368 = vpop.f32.mrf.mxu0
        %v5369 = vadd.f32 0.0, %v5368
        %5370 = vmatmul.bf16.gmra.mxu0 %v5272
        %v5371 = vpop.f32.mrf.mxu0
        %v5372 = vadd.f32 0.0, %v5371
        %v5373 = vpop.f32.mrf.mxu0
        %v5374 = vadd.f32 0.0, %v5373
        %5375 = vmatmul.bf16.gmra.mxu0 %v5275
        %v5376 = vpop.f32.mrf.mxu0
        %v5377 = vadd.f32 0.0, %v5376
        %v5378 = vpop.f32.mrf.mxu0
        %v5379 = vadd.f32 0.0, %v5378
        %5380 = vmatmul.bf16.gmra.mxu0 %v5278
        %v5381 = vpop.f32.mrf.mxu0
        %v5382 = vadd.f32 0.0, %v5381
        %v5383 = vpop.f32.mrf.mxu0
        %v5384 = vadd.f32 0.0, %v5383
        %5385 = vmatmul.bf16.gmra.mxu0 %v5281
        %v5386 = vpop.f32.mrf.mxu0
        %v5387 = vadd.f32 0.0, %v5386
        %v5388 = vpop.f32.mrf.mxu0
        %v5389 = vadd.f32 0.0, %v5388
        %5390 = vmatmul.bf16.gmra.mxu0 %v5284
        %v5391 = vpop.f32.mrf.mxu0
        %v5392 = vadd.f32 0.0, %v5391
        %v5393 = vpop.f32.mrf.mxu0
        %v5394 = vadd.f32 0.0, %v5393
        %5395 = vmatmul.bf16.gmra.mxu0 %v5287
        %v5396 = vpop.f32.mrf.mxu0
        %v5397 = vadd.f32 0.0, %v5396
        %v5398 = vpop.f32.mrf.mxu0
        %v5399 = vadd.f32 0.0, %v5398
        %5400 = vmatmul.bf16.gmra.mxu0 %v5290
        %v5401 = vpop.f32.mrf.mxu0
        %v5402 = vadd.f32 0.0, %v5401
        %v5403 = vpop.f32.mrf.mxu0
        %v5404 = vadd.f32 0.0, %v5403
        %5405 = vmatmul.bf16.gmra.mxu0 %v5293
        %v5406 = vpop.f32.mrf.mxu0
        %v5407 = vadd.f32 0.0, %v5406
        %v5408 = vpop.f32.mrf.mxu0
        %v5409 = vadd.f32 0.0, %v5408
        %5410 = vmatmul.bf16.gmra.mxu0 %v5296
        %v5411 = vpop.f32.mrf.mxu0
        %v5412 = vadd.f32 0.0, %v5411
        %v5413 = vpop.f32.mrf.mxu0
        %v5414 = vadd.f32 0.0, %v5413
        %5415 = vmatmul.bf16.gmra.mxu0 %v5299
        %v5416 = vpop.f32.mrf.mxu0
        %v5417 = vadd.f32 0.0, %v5416
        %v5418 = vpop.f32.mrf.mxu0
        %v5419 = vadd.f32 0.0, %v5418
        %5420 = vmatmul.bf16.gmra.mxu0 %v5302
        %v5421 = vpop.f32.mrf.mxu0
        %v5422 = vadd.f32 0.0, %v5421
        %v5423 = vpop.f32.mrf.mxu0
        %v5424 = vadd.f32 0.0, %v5423
        %5425 = vmatmul.bf16.gmra.mxu0 %v5305
        %v5426 = vpop.f32.mrf.mxu0
        %v5427 = vadd.f32 0.0, %v5426
        %v5428 = vpop.f32.mrf.mxu0
        %5429 = vdwg.mxu0
        %v5430 = vpack.c.bf16 %v5317, %v5317
        %v5431 = vpack.c.bf16 %v5319, %v5319
        %v5432 = vpack.c.bf16 %v5322, %v5322
        %v5433 = vpack.c.bf16 %v5324, %v5324
        %v5434 = vpack.c.bf16 %v5327, %v5327
        %v5435 = vpack.c.bf16 %v5329, %v5329
        %v5436 = vpack.c.bf16 %v5332, %v5332
        %v5437 = vpack.c.bf16 %v5334, %v5334
        %v5438 = vpack.c.bf16 %v5337, %v5337
        %v5439 = vpack.c.bf16 %v5339, %v5339
        %v5440 = vpack.c.bf16 %v5342, %v5342
        %v5441 = vpack.c.bf16 %v5344, %v5344
        %v5442 = vpack.c.bf16 %v5347, %v5347
        %v5443 = vpack.c.bf16 %v5349, %v5349
        %v5444 = vpack.c.bf16 %v5352, %v5352
        %v5445 = vpack.c.bf16 %v5354, %v5354
        %v5446 = vpack.c.bf16 %v5357, %v5357
        %v5447 = vpack.c.bf16 %v5359, %v5359
        %v5448 = vpack.c.bf16 %v5362, %v5362
        %v5449 = vpack.c.bf16 %v5364, %v5364
        %v5450 = vpack.c.bf16 %v5367, %v5367
        %v5451 = vpack.c.bf16 %v5369, %v5369
        %v5452 = vpack.c.bf16 %v5372, %v5372
        %v5453 = vpack.c.bf16 %v5374, %v5374
        %v5454 = vpack.c.bf16 %v5377, %v5377
        %v5455 = vpack.c.bf16 %v5379, %v5379
        %v5456 = vpack.c.bf16 %v5382, %v5382
        %v5457 = vpack.c.bf16 %v5384, %v5384
        %v5458 = vpack.c.bf16 %v5387, %v5387
        %v5459 = vpack.c.bf16 %v5389, %v5389
        %v5460 = vpack.c.bf16 %v5392, %v5392
        %v5461 = vpack.c.bf16 %v5394, %v5394
        %v5462 = vpack.c.bf16 %v5397, %v5397
        %v5463 = vpack.c.bf16 %v5399, %v5399
        %v5464 = vpack.c.bf16 %v5402, %v5402
        %v5465 = vpack.c.bf16 %v5404, %v5404
        %v5466 = vpack.c.bf16 %v5407, %v5407
        %v5467 = vpack.c.bf16 %v5409, %v5409
        %v5468 = vpack.c.bf16 %v5412, %v5412
        %v5469 = vpack.c.bf16 %v5414, %v5414
        %v5470 = vpack.c.bf16 %v5417, %v5417
        %v5471 = vpack.c.bf16 %v5419, %v5419
        %v5472 = vpack.c.bf16 %v5422, %v5422
        %v5473 = vpack.c.bf16 %v5424, %v5424
        %v5474 = vpack.c.bf16 %v5427, %v5427
        %v5475 = vld [vmem:[%s7] sm:$0xf]
        %v5476 = vld [vmem:[%s7 + $0x4] sm:$0xf]
        %v5477 = vld [vmem:[%s7 + $0x8] sm:$0xf]
        %v5478 = vld [vmem:[%s7 + $0xc] sm:$0xf]
        %v5479 = vld [vmem:[%s7 + $0x10] sm:$0xf]
        %v5480 = vld [vmem:[%s7 + $0x14] sm:$0xf]
        %v5481 = vld [vmem:[%s7 + $0x18] sm:$0xf]
        %v5482 = vld [vmem:[%s7 + $0x1c] sm:$0xf]
        %s5483 = scalar_lea.vmem %s7, 32
        %v5484 = vld [vmem:[%s5483] sm:$0xf]
        %v5485 = vld [vmem:[%s5483 + $0x4] sm:$0xf]
        %v5486 = vld [vmem:[%s5483 + $0x8] sm:$0xf]
        %v5487 = vld [vmem:[%s5483 + $0xc] sm:$0xf]
        %v5488 = vld [vmem:[%s5483 + $0x10] sm:$0xf]
        %v5489 = vld [vmem:[%s5483 + $0x14] sm:$0xf]
        %v5490 = vld [vmem:[%s5483 + $0x18] sm:$0xf]
        %v5491 = vld [vmem:[%s5483 + $0x1c] sm:$0xf]
        %v5497 = vunpack.c.l.b16 %v5435
        %v5498 = vunpack.c.l.b16 %v5436
        %v5499 = vunpack.c.l.b16 %v5437
        %v5500 = vunpack.c.l.b16 %v5438
        %v5501 = vunpack.c.l.b16 %v5439
        %v5502 = vpack.c.b16 %v5498, %v5497
        %v5503 = vpack.c.b16 %v5500, %v5499
        %v5504 = vpack.c.b16 %v5501, %v5501
        %v5513 = vunpack.c.l.b16 %v5484
        %v5514 = vunpack.c.l.b16 %v5485
        %v5515 = vunpack.c.l.b16 %v5486
        %v5516 = vunpack.c.l.b16 %v5487
        %v5517 = vunpack.c.l.b16 %v5488
        %v5518 = vunpack.c.l.b16 %v5489
        %v5519 = vunpack.c.l.b16 %v5490
        %v5520 = vunpack.c.l.b16 %v5491
        %v5521 = vpack.c.b16 %v5514, %v5513
        %v5522 = vpack.c.b16 %v5516, %v5515
        %v5523 = vpack.c.b16 %v5518, %v5517
        %v5524 = vpack.c.b16 %v5520, %v5519
        %v5530 = vsel %vm5237, %v5502, 0
        %v5533 = vsel %vm5237, %v5503, 0
        %v5536 = vsel %vm5237, %v5504, 0
        %5538 = vmatpush.bf16.msra.mxu0 0
        %5539 = vmatpush.bf16.msra.mxu0 0
        %5540 = vmatpush.bf16.msra.mxu0 0
        %5541 = vmatpush.bf16.msra.mxu0 0
        %5542 = vmatpush.bf16.msra.mxu0 %v5524
        %5543 = vmatpush.bf16.msra.mxu0 %v5523
        %5544 = vmatpush.bf16.msra.mxu0 %v5522
        %5545 = vmatpush.bf16.msra.mxu0 %v5521
        %5546 = vmatmul.bf16.gmra.mxu0 %v5530
        %v5547 = vpop.f32.mrf.mxu0
        %v5548 = vadd.f32 0.0, %v5547
        %v5549 = vpop.f32.mrf.mxu0
        %v5550 = vadd.f32 0.0, %v5549
        %5551 = vmatmul.bf16.gmra.mxu0 %v5533
        %v5552 = vpop.f32.mrf.mxu0
        %v5553 = vadd.f32 0.0, %v5552
        %v5554 = vpop.f32.mrf.mxu0
        %v5555 = vadd.f32 0.0, %v5554
        %5556 = vmatmul.bf16.gmra.mxu0 %v5536
        %v5557 = vpop.f32.mrf.mxu0
        %v5558 = vadd.f32 0.0, %v5557
        %v5559 = vpop.f32.mrf.mxu0
        %5560 = vdwg.mxu0
        %v5566 = vunpack.c.l.b16 %v5430
        %v5567 = vunpack.c.l.b16 %v5431
        %v5568 = vunpack.c.l.b16 %v5432
        %v5569 = vunpack.c.l.b16 %v5433
        %v5570 = vunpack.c.l.b16 %v5434
        %v5571 = vpack.c.b16 %v5567, %v5566
        %v5572 = vpack.c.b16 %v5569, %v5568
        %v5573 = vpack.c.b16 %v5570, %v5570
        %v5582 = vunpack.c.l.b16 %v5475
        %v5583 = vunpack.c.l.b16 %v5476
        %v5584 = vunpack.c.l.b16 %v5477
        %v5585 = vunpack.c.l.b16 %v5478
        %v5586 = vunpack.c.l.b16 %v5479
        %v5587 = vunpack.c.l.b16 %v5480
        %v5588 = vunpack.c.l.b16 %v5481
        %v5589 = vunpack.c.l.b16 %v5482
        %v5590 = vpack.c.b16 %v5583, %v5582
        %v5591 = vpack.c.b16 %v5585, %v5584
        %v5592 = vpack.c.b16 %v5587, %v5586
        %v5593 = vpack.c.b16 %v5589, %v5588
        %v5599 = vsel %vm5237, %v5571, 0
        %v5602 = vsel %vm5237, %v5572, 0
        %v5605 = vsel %vm5237, %v5573, 0
        %5607 = vmatpush.bf16.msra.mxu0 0
        %5608 = vmatpush.bf16.msra.mxu0 0
        %5609 = vmatpush.bf16.msra.mxu0 0
        %5610 = vmatpush.bf16.msra.mxu0 0
        %5611 = vmatpush.bf16.msra.mxu0 %v5593
        %5612 = vmatpush.bf16.msra.mxu0 %v5592
        %5613 = vmatpush.bf16.msra.mxu0 %v5591
        %5614 = vmatpush.bf16.msra.mxu0 %v5590
        %5615 = vmatmul.bf16.gmra.mxu0 %v5599
        %v5616 = vpop.f32.mrf.mxu0
        %v5617 = vadd.f32 %v5548, %v5616
        %v5618 = vpop.f32.mrf.mxu0
        %v5619 = vadd.f32 %v5550, %v5618
        %5620 = vmatmul.bf16.gmra.mxu0 %v5602
        %v5621 = vpop.f32.mrf.mxu0
        %v5622 = vadd.f32 %v5553, %v5621
        %v5623 = vpop.f32.mrf.mxu0
        %v5624 = vadd.f32 %v5555, %v5623
        %5625 = vmatmul.bf16.gmra.mxu0 %v5605
        %v5626 = vpop.f32.mrf.mxu0
        %v5627 = vadd.f32 %v5558, %v5626
        %v5628 = vpop.f32.mrf.mxu0
        %5629 = vdwg.mxu0
        %s5630 = scalar_lea.vmem %s7, 64
        %v5631 = vld [vmem:[%s5630] sm:$0xf]
        %v5632 = vld [vmem:[%s5630 + $0x4] sm:$0xf]
        %v5633 = vld [vmem:[%s5630 + $0x8] sm:$0xf]
        %v5634 = vld [vmem:[%s5630 + $0xc] sm:$0xf]
        %v5635 = vld [vmem:[%s5630 + $0x10] sm:$0xf]
        %v5636 = vld [vmem:[%s5630 + $0x14] sm:$0xf]
        %v5637 = vld [vmem:[%s5630 + $0x18] sm:$0xf]
        %v5638 = vld [vmem:[%s5630 + $0x1c] sm:$0xf]
        %v5644 = vunpack.c.l.b16 %v5440
        %v5645 = vunpack.c.l.b16 %v5441
        %v5646 = vunpack.c.l.b16 %v5442
        %v5647 = vunpack.c.l.b16 %v5443
        %v5648 = vunpack.c.l.b16 %v5444
        %v5649 = vpack.c.b16 %v5645, %v5644
        %v5650 = vpack.c.b16 %v5647, %v5646
        %v5651 = vpack.c.b16 %v5648, %v5648
        %v5660 = vunpack.c.l.b16 %v5631
        %v5661 = vunpack.c.l.b16 %v5632
        %v5662 = vunpack.c.l.b16 %v5633
        %v5663 = vunpack.c.l.b16 %v5634
        %v5664 = vunpack.c.l.b16 %v5635
        %v5665 = vunpack.c.l.b16 %v5636
        %v5666 = vunpack.c.l.b16 %v5637
        %v5667 = vunpack.c.l.b16 %v5638
        %v5668 = vpack.c.b16 %v5661, %v5660
        %v5669 = vpack.c.b16 %v5663, %v5662
        %v5670 = vpack.c.b16 %v5665, %v5664
        %v5671 = vpack.c.b16 %v5667, %v5666
        %v5677 = vsel %vm5237, %v5649, 0
        %v5680 = vsel %vm5237, %v5650, 0
        %v5683 = vsel %vm5237, %v5651, 0
        %5685 = vmatpush.bf16.msra.mxu0 0
        %5686 = vmatpush.bf16.msra.mxu0 0
        %5687 = vmatpush.bf16.msra.mxu0 0
        %5688 = vmatpush.bf16.msra.mxu0 0
        %5689 = vmatpush.bf16.msra.mxu0 %v5671
        %5690 = vmatpush.bf16.msra.mxu0 %v5670
        %5691 = vmatpush.bf16.msra.mxu0 %v5669
        %5692 = vmatpush.bf16.msra.mxu0 %v5668
        %5693 = vmatmul.bf16.gmra.mxu0 %v5677
        %v5694 = vpop.f32.mrf.mxu0
        %v5695 = vadd.f32 0.0, %v5694
        %v5696 = vpop.f32.mrf.mxu0
        %v5697 = vadd.f32 0.0, %v5696
        %5698 = vmatmul.bf16.gmra.mxu0 %v5680
        %v5699 = vpop.f32.mrf.mxu0
        %v5700 = vadd.f32 0.0, %v5699
        %v5701 = vpop.f32.mrf.mxu0
        %v5702 = vadd.f32 0.0, %v5701
        %5703 = vmatmul.bf16.gmra.mxu0 %v5683
        %v5704 = vpop.f32.mrf.mxu0
        %v5705 = vadd.f32 0.0, %v5704
        %v5706 = vpop.f32.mrf.mxu0
        %5707 = vdwg.mxu0
        %v5708 = vadd.f32 %v5617, %v5695
        %v5709 = vadd.f32 %v5619, %v5697
        %v5710 = vadd.f32 %v5622, %v5700
        %v5711 = vadd.f32 %v5624, %v5702
        %v5712 = vadd.f32 %v5627, %v5705
        %s5713 = scalar_lea.vmem %s7, 96
        %v5714 = vld [vmem:[%s5713] sm:$0xf]
        %v5715 = vld [vmem:[%s5713 + $0x4] sm:$0xf]
        %v5716 = vld [vmem:[%s5713 + $0x8] sm:$0xf]
        %v5717 = vld [vmem:[%s5713 + $0xc] sm:$0xf]
        %v5718 = vld [vmem:[%s5713 + $0x10] sm:$0xf]
        %v5719 = vld [vmem:[%s5713 + $0x14] sm:$0xf]
        %v5720 = vld [vmem:[%s5713 + $0x18] sm:$0xf]
        %v5721 = vld [vmem:[%s5713 + $0x1c] sm:$0xf]
        %v5727 = vunpack.c.l.b16 %v5445
        %v5728 = vunpack.c.l.b16 %v5446
        %v5729 = vunpack.c.l.b16 %v5447
        %v5730 = vunpack.c.l.b16 %v5448
        %v5731 = vunpack.c.l.b16 %v5449
        %v5732 = vpack.c.b16 %v5728, %v5727
        %v5733 = vpack.c.b16 %v5730, %v5729
        %v5734 = vpack.c.b16 %v5731, %v5731
        %v5743 = vunpack.c.l.b16 %v5714
        %v5744 = vunpack.c.l.b16 %v5715
        %v5745 = vunpack.c.l.b16 %v5716
        %v5746 = vunpack.c.l.b16 %v5717
        %v5747 = vunpack.c.l.b16 %v5718
        %v5748 = vunpack.c.l.b16 %v5719
        %v5749 = vunpack.c.l.b16 %v5720
        %v5750 = vunpack.c.l.b16 %v5721
        %v5751 = vpack.c.b16 %v5744, %v5743
        %v5752 = vpack.c.b16 %v5746, %v5745
        %v5753 = vpack.c.b16 %v5748, %v5747
        %v5754 = vpack.c.b16 %v5750, %v5749
        %v5760 = vsel %vm5237, %v5732, 0
        %v5763 = vsel %vm5237, %v5733, 0
        %v5766 = vsel %vm5237, %v5734, 0
        %5768 = vmatpush.bf16.msra.mxu0 0
        %5769 = vmatpush.bf16.msra.mxu0 0
        %5770 = vmatpush.bf16.msra.mxu0 0
        %5771 = vmatpush.bf16.msra.mxu0 0
        %5772 = vmatpush.bf16.msra.mxu0 %v5754
        %5773 = vmatpush.bf16.msra.mxu0 %v5753
        %5774 = vmatpush.bf16.msra.mxu0 %v5752
        %5775 = vmatpush.bf16.msra.mxu0 %v5751
        %5776 = vmatmul.bf16.gmra.mxu0 %v5760
        %v5777 = vpop.f32.mrf.mxu0
        %v5778 = vadd.f32 0.0, %v5777
        %v5779 = vpop.f32.mrf.mxu0
        %v5780 = vadd.f32 0.0, %v5779
        %5781 = vmatmul.bf16.gmra.mxu0 %v5763
        %v5782 = vpop.f32.mrf.mxu0
        %v5783 = vadd.f32 0.0, %v5782
        %v5784 = vpop.f32.mrf.mxu0
        %v5785 = vadd.f32 0.0, %v5784
        %5786 = vmatmul.bf16.gmra.mxu0 %v5766
        %v5787 = vpop.f32.mrf.mxu0
        %v5788 = vadd.f32 0.0, %v5787
        %v5789 = vpop.f32.mrf.mxu0
        %5790 = vdwg.mxu0
        %v5791 = vadd.f32 %v5708, %v5778
        %v5792 = vadd.f32 %v5709, %v5780
        %v5793 = vadd.f32 %v5710, %v5783
        %v5794 = vadd.f32 %v5711, %v5785
        %v5795 = vadd.f32 %v5712, %v5788
        %s5796 = scalar_lea.vmem %s7, 128
        %v5797 = vld [vmem:[%s5796] sm:$0xf]
        %v5798 = vld [vmem:[%s5796 + $0x4] sm:$0xf]
        %v5799 = vld [vmem:[%s5796 + $0x8] sm:$0xf]
        %v5800 = vld [vmem:[%s5796 + $0xc] sm:$0xf]
        %v5801 = vld [vmem:[%s5796 + $0x10] sm:$0xf]
        %v5802 = vld [vmem:[%s5796 + $0x14] sm:$0xf]
        %v5803 = vld [vmem:[%s5796 + $0x18] sm:$0xf]
        %v5804 = vld [vmem:[%s5796 + $0x1c] sm:$0xf]
        %v5810 = vunpack.c.l.b16 %v5450
        %v5811 = vunpack.c.l.b16 %v5451
        %v5812 = vunpack.c.l.b16 %v5452
        %v5813 = vunpack.c.l.b16 %v5453
        %v5814 = vunpack.c.l.b16 %v5454
        %v5815 = vpack.c.b16 %v5811, %v5810
        %v5816 = vpack.c.b16 %v5813, %v5812
        %v5817 = vpack.c.b16 %v5814, %v5814
        %v5826 = vunpack.c.l.b16 %v5797
        %v5827 = vunpack.c.l.b16 %v5798
        %v5828 = vunpack.c.l.b16 %v5799
        %v5829 = vunpack.c.l.b16 %v5800
        %v5830 = vunpack.c.l.b16 %v5801
        %v5831 = vunpack.c.l.b16 %v5802
        %v5832 = vunpack.c.l.b16 %v5803
        %v5833 = vunpack.c.l.b16 %v5804
        %v5834 = vpack.c.b16 %v5827, %v5826
        %v5835 = vpack.c.b16 %v5829, %v5828
        %v5836 = vpack.c.b16 %v5831, %v5830
        %v5837 = vpack.c.b16 %v5833, %v5832
        %v5843 = vsel %vm5237, %v5815, 0
        %v5846 = vsel %vm5237, %v5816, 0
        %v5849 = vsel %vm5237, %v5817, 0
        %5851 = vmatpush.bf16.msra.mxu0 0
        %5852 = vmatpush.bf16.msra.mxu0 0
        %5853 = vmatpush.bf16.msra.mxu0 0
        %5854 = vmatpush.bf16.msra.mxu0 0
        %5855 = vmatpush.bf16.msra.mxu0 %v5837
        %5856 = vmatpush.bf16.msra.mxu0 %v5836
        %5857 = vmatpush.bf16.msra.mxu0 %v5835
        %5858 = vmatpush.bf16.msra.mxu0 %v5834
        %5859 = vmatmul.bf16.gmra.mxu0 %v5843
        %v5860 = vpop.f32.mrf.mxu0
        %v5861 = vadd.f32 0.0, %v5860
        %v5862 = vpop.f32.mrf.mxu0
        %v5863 = vadd.f32 0.0, %v5862
        %5864 = vmatmul.bf16.gmra.mxu0 %v5846
        %v5865 = vpop.f32.mrf.mxu0
        %v5866 = vadd.f32 0.0, %v5865
        %v5867 = vpop.f32.mrf.mxu0
        %v5868 = vadd.f32 0.0, %v5867
        %5869 = vmatmul.bf16.gmra.mxu0 %v5849
        %v5870 = vpop.f32.mrf.mxu0
        %v5871 = vadd.f32 0.0, %v5870
        %v5872 = vpop.f32.mrf.mxu0
        %5873 = vdwg.mxu0
        %v5874 = vadd.f32 %v5791, %v5861
        %v5875 = vadd.f32 %v5792, %v5863
        %v5876 = vadd.f32 %v5793, %v5866
        %v5877 = vadd.f32 %v5794, %v5868
        %v5878 = vadd.f32 %v5795, %v5871
        %s5879 = scalar_lea.vmem %s7, 160
        %v5880 = vld [vmem:[%s5879] sm:$0xf]
        %v5881 = vld [vmem:[%s5879 + $0x4] sm:$0xf]
        %v5882 = vld [vmem:[%s5879 + $0x8] sm:$0xf]
        %v5883 = vld [vmem:[%s5879 + $0xc] sm:$0xf]
        %v5884 = vld [vmem:[%s5879 + $0x10] sm:$0xf]
        %v5885 = vld [vmem:[%s5879 + $0x14] sm:$0xf]
        %v5886 = vld [vmem:[%s5879 + $0x18] sm:$0xf]
        %v5887 = vld [vmem:[%s5879 + $0x1c] sm:$0xf]
        %v5893 = vunpack.c.l.b16 %v5455
        %v5894 = vunpack.c.l.b16 %v5456
        %v5895 = vunpack.c.l.b16 %v5457
        %v5896 = vunpack.c.l.b16 %v5458
        %v5897 = vunpack.c.l.b16 %v5459
        %v5898 = vpack.c.b16 %v5894, %v5893
        %v5899 = vpack.c.b16 %v5896, %v5895
        %v5900 = vpack.c.b16 %v5897, %v5897
        %v5909 = vunpack.c.l.b16 %v5880
        %v5910 = vunpack.c.l.b16 %v5881
        %v5911 = vunpack.c.l.b16 %v5882
        %v5912 = vunpack.c.l.b16 %v5883
        %v5913 = vunpack.c.l.b16 %v5884
        %v5914 = vunpack.c.l.b16 %v5885
        %v5915 = vunpack.c.l.b16 %v5886
        %v5916 = vunpack.c.l.b16 %v5887
        %v5917 = vpack.c.b16 %v5910, %v5909
        %v5918 = vpack.c.b16 %v5912, %v5911
        %v5919 = vpack.c.b16 %v5914, %v5913
        %v5920 = vpack.c.b16 %v5916, %v5915
        %v5926 = vsel %vm5237, %v5898, 0
        %v5929 = vsel %vm5237, %v5899, 0
        %v5932 = vsel %vm5237, %v5900, 0
        %5934 = vmatpush.bf16.msra.mxu0 0
        %5935 = vmatpush.bf16.msra.mxu0 0
        %5936 = vmatpush.bf16.msra.mxu0 0
        %5937 = vmatpush.bf16.msra.mxu0 0
        %5938 = vmatpush.bf16.msra.mxu0 %v5920
        %5939 = vmatpush.bf16.msra.mxu0 %v5919
        %5940 = vmatpush.bf16.msra.mxu0 %v5918
        %5941 = vmatpush.bf16.msra.mxu0 %v5917
        %5942 = vmatmul.bf16.gmra.mxu0 %v5926
        %v5943 = vpop.f32.mrf.mxu0
        %v5944 = vadd.f32 0.0, %v5943
        %v5945 = vpop.f32.mrf.mxu0
        %v5946 = vadd.f32 0.0, %v5945
        %5947 = vmatmul.bf16.gmra.mxu0 %v5929
        %v5948 = vpop.f32.mrf.mxu0
        %v5949 = vadd.f32 0.0, %v5948
        %v5950 = vpop.f32.mrf.mxu0
        %v5951 = vadd.f32 0.0, %v5950
        %5952 = vmatmul.bf16.gmra.mxu0 %v5932
        %v5953 = vpop.f32.mrf.mxu0
        %v5954 = vadd.f32 0.0, %v5953
        %v5955 = vpop.f32.mrf.mxu0
        %5956 = vdwg.mxu0
        %v5957 = vadd.f32 %v5874, %v5944
        %v5958 = vadd.f32 %v5875, %v5946
        %v5959 = vadd.f32 %v5876, %v5949
        %v5960 = vadd.f32 %v5877, %v5951
        %v5961 = vadd.f32 %v5878, %v5954
        %s5962 = scalar_lea.vmem %s7, 192
        %v5963 = vld [vmem:[%s5962] sm:$0xf]
        %v5964 = vld [vmem:[%s5962 + $0x4] sm:$0xf]
        %v5965 = vld [vmem:[%s5962 + $0x8] sm:$0xf]
        %v5966 = vld [vmem:[%s5962 + $0xc] sm:$0xf]
        %v5967 = vld [vmem:[%s5962 + $0x10] sm:$0xf]
        %v5968 = vld [vmem:[%s5962 + $0x14] sm:$0xf]
        %v5969 = vld [vmem:[%s5962 + $0x18] sm:$0xf]
        %v5970 = vld [vmem:[%s5962 + $0x1c] sm:$0xf]
        %v5976 = vunpack.c.l.b16 %v5460
        %v5977 = vunpack.c.l.b16 %v5461
        %v5978 = vunpack.c.l.b16 %v5462
        %v5979 = vunpack.c.l.b16 %v5463
        %v5980 = vunpack.c.l.b16 %v5464
        %v5981 = vpack.c.b16 %v5977, %v5976
        %v5982 = vpack.c.b16 %v5979, %v5978
        %v5983 = vpack.c.b16 %v5980, %v5980
        %v5992 = vunpack.c.l.b16 %v5963
        %v5993 = vunpack.c.l.b16 %v5964
        %v5994 = vunpack.c.l.b16 %v5965
        %v5995 = vunpack.c.l.b16 %v5966
        %v5996 = vunpack.c.l.b16 %v5967
        %v5997 = vunpack.c.l.b16 %v5968
        %v5998 = vunpack.c.l.b16 %v5969
        %v5999 = vunpack.c.l.b16 %v5970
        %v6000 = vpack.c.b16 %v5993, %v5992
        %v6001 = vpack.c.b16 %v5995, %v5994
        %v6002 = vpack.c.b16 %v5997, %v5996
        %v6003 = vpack.c.b16 %v5999, %v5998
        %v6009 = vsel %vm5237, %v5981, 0
        %v6012 = vsel %vm5237, %v5982, 0
        %v6015 = vsel %vm5237, %v5983, 0
        %6017 = vmatpush.bf16.msra.mxu0 0
        %6018 = vmatpush.bf16.msra.mxu0 0
        %6019 = vmatpush.bf16.msra.mxu0 0
        %6020 = vmatpush.bf16.msra.mxu0 0
        %6021 = vmatpush.bf16.msra.mxu0 %v6003
        %6022 = vmatpush.bf16.msra.mxu0 %v6002
        %6023 = vmatpush.bf16.msra.mxu0 %v6001
        %6024 = vmatpush.bf16.msra.mxu0 %v6000
        %6025 = vmatmul.bf16.gmra.mxu0 %v6009
        %v6026 = vpop.f32.mrf.mxu0
        %v6027 = vadd.f32 0.0, %v6026
        %v6028 = vpop.f32.mrf.mxu0
        %v6029 = vadd.f32 0.0, %v6028
        %6030 = vmatmul.bf16.gmra.mxu0 %v6012
        %v6031 = vpop.f32.mrf.mxu0
        %v6032 = vadd.f32 0.0, %v6031
        %v6033 = vpop.f32.mrf.mxu0
        %v6034 = vadd.f32 0.0, %v6033
        %6035 = vmatmul.bf16.gmra.mxu0 %v6015
        %v6036 = vpop.f32.mrf.mxu0
        %v6037 = vadd.f32 0.0, %v6036
        %v6038 = vpop.f32.mrf.mxu0
        %6039 = vdwg.mxu0
        %v6040 = vadd.f32 %v5957, %v6027
        %v6041 = vadd.f32 %v5958, %v6029
        %v6042 = vadd.f32 %v5959, %v6032
        %v6043 = vadd.f32 %v5960, %v6034
        %v6044 = vadd.f32 %v5961, %v6037
        %s6045 = scalar_lea.vmem %s7, 224
        %v6046 = vld [vmem:[%s6045] sm:$0xf]
        %v6047 = vld [vmem:[%s6045 + $0x4] sm:$0xf]
        %v6048 = vld [vmem:[%s6045 + $0x8] sm:$0xf]
        %v6049 = vld [vmem:[%s6045 + $0xc] sm:$0xf]
        %v6050 = vld [vmem:[%s6045 + $0x10] sm:$0xf]
        %v6051 = vld [vmem:[%s6045 + $0x14] sm:$0xf]
        %v6052 = vld [vmem:[%s6045 + $0x18] sm:$0xf]
        %v6053 = vld [vmem:[%s6045 + $0x1c] sm:$0xf]
        %v6059 = vunpack.c.l.b16 %v5465
        %v6060 = vunpack.c.l.b16 %v5466
        %v6061 = vunpack.c.l.b16 %v5467
        %v6062 = vunpack.c.l.b16 %v5468
        %v6063 = vunpack.c.l.b16 %v5469
        %v6064 = vpack.c.b16 %v6060, %v6059
        %v6065 = vpack.c.b16 %v6062, %v6061
        %v6066 = vpack.c.b16 %v6063, %v6063
        %v6075 = vunpack.c.l.b16 %v6046
        %v6076 = vunpack.c.l.b16 %v6047
        %v6077 = vunpack.c.l.b16 %v6048
        %v6078 = vunpack.c.l.b16 %v6049
        %v6079 = vunpack.c.l.b16 %v6050
        %v6080 = vunpack.c.l.b16 %v6051
        %v6081 = vunpack.c.l.b16 %v6052
        %v6082 = vunpack.c.l.b16 %v6053
        %v6083 = vpack.c.b16 %v6076, %v6075
        %v6084 = vpack.c.b16 %v6078, %v6077
        %v6085 = vpack.c.b16 %v6080, %v6079
        %v6086 = vpack.c.b16 %v6082, %v6081
        %v6092 = vsel %vm5237, %v6064, 0
        %v6095 = vsel %vm5237, %v6065, 0
        %v6098 = vsel %vm5237, %v6066, 0
        %6100 = vmatpush.bf16.msra.mxu0 0
        %6101 = vmatpush.bf16.msra.mxu0 0
        %6102 = vmatpush.bf16.msra.mxu0 0
        %6103 = vmatpush.bf16.msra.mxu0 0
        %6104 = vmatpush.bf16.msra.mxu0 %v6086
        %6105 = vmatpush.bf16.msra.mxu0 %v6085
        %6106 = vmatpush.bf16.msra.mxu0 %v6084
        %6107 = vmatpush.bf16.msra.mxu0 %v6083
        %6108 = vmatmul.bf16.gmra.mxu0 %v6092
        %v6109 = vpop.f32.mrf.mxu0
        %v6110 = vadd.f32 0.0, %v6109
        %v6111 = vpop.f32.mrf.mxu0
        %v6112 = vadd.f32 0.0, %v6111
        %6113 = vmatmul.bf16.gmra.mxu0 %v6095
        %v6114 = vpop.f32.mrf.mxu0
        %v6115 = vadd.f32 0.0, %v6114
        %v6116 = vpop.f32.mrf.mxu0
        %v6117 = vadd.f32 0.0, %v6116
        %6118 = vmatmul.bf16.gmra.mxu0 %v6098
        %v6119 = vpop.f32.mrf.mxu0
        %v6120 = vadd.f32 0.0, %v6119
        %v6121 = vpop.f32.mrf.mxu0
        %6122 = vdwg.mxu0
        %v6123 = vadd.f32 %v6040, %v6110
        %v6124 = vadd.f32 %v6041, %v6112
        %v6125 = vadd.f32 %v6042, %v6115
        %v6126 = vadd.f32 %v6043, %v6117
        %v6127 = vadd.f32 %v6044, %v6120
        %s6128 = scalar_lea.vmem %s7, 256
        %v6129 = vld [vmem:[%s6128] sm:$0xf]
        %v6130 = vld [vmem:[%s6128 + $0x4] sm:$0xf]
        %v6131 = vld [vmem:[%s6128 + $0x8] sm:$0xf]
        %v6132 = vld [vmem:[%s6128 + $0xc] sm:$0xf]
        %v6133 = vld [vmem:[%s6128 + $0x10] sm:$0xf]
        %v6134 = vld [vmem:[%s6128 + $0x14] sm:$0xf]
        %v6135 = vld [vmem:[%s6128 + $0x18] sm:$0xf]
        %v6136 = vld [vmem:[%s6128 + $0x1c] sm:$0xf]
        %v6142 = vunpack.c.l.b16 %v5470
        %v6143 = vunpack.c.l.b16 %v5471
        %v6144 = vunpack.c.l.b16 %v5472
        %v6145 = vunpack.c.l.b16 %v5473
        %v6146 = vunpack.c.l.b16 %v5474
        %v6147 = vpack.c.b16 %v6143, %v6142
        %v6148 = vpack.c.b16 %v6145, %v6144
        %v6149 = vpack.c.b16 %v6146, %v6146
        %v6158 = vunpack.c.l.b16 %v6129
        %v6159 = vunpack.c.l.b16 %v6130
        %v6160 = vunpack.c.l.b16 %v6131
        %v6161 = vunpack.c.l.b16 %v6132
        %v6162 = vunpack.c.l.b16 %v6133
        %v6163 = vunpack.c.l.b16 %v6134
        %v6164 = vunpack.c.l.b16 %v6135
        %v6165 = vunpack.c.l.b16 %v6136
        %v6166 = vpack.c.b16 %v6159, %v6158
        %v6167 = vpack.c.b16 %v6161, %v6160
        %v6168 = vpack.c.b16 %v6163, %v6162
        %v6169 = vpack.c.b16 %v6165, %v6164
        %v6175 = vsel %vm5237, %v6147, 0
        %v6178 = vsel %vm5237, %v6148, 0
        %v6181 = vsel %vm5237, %v6149, 0
        %6183 = vmatpush.bf16.msra.mxu0 0
        %6184 = vmatpush.bf16.msra.mxu0 0
        %6185 = vmatpush.bf16.msra.mxu0 0
        %6186 = vmatpush.bf16.msra.mxu0 0
        %6187 = vmatpush.bf16.msra.mxu0 %v6169
        %6188 = vmatpush.bf16.msra.mxu0 %v6168
        %6189 = vmatpush.bf16.msra.mxu0 %v6167
        %6190 = vmatpush.bf16.msra.mxu0 %v6166
        %6191 = vmatmul.bf16.gmra.mxu0 %v6175
        %v6192 = vpop.f32.mrf.mxu0
        %v6193 = vadd.f32 0.0, %v6192
        %v6194 = vpop.f32.mrf.mxu0
        %v6195 = vadd.f32 0.0, %v6194
        %6196 = vmatmul.bf16.gmra.mxu0 %v6178
        %v6197 = vpop.f32.mrf.mxu0
        %v6198 = vadd.f32 0.0, %v6197
        %v6199 = vpop.f32.mrf.mxu0
        %v6200 = vadd.f32 0.0, %v6199
        %6201 = vmatmul.bf16.gmra.mxu0 %v6181
        %v6202 = vpop.f32.mrf.mxu0
        %v6203 = vadd.f32 0.0, %v6202
        %v6204 = vpop.f32.mrf.mxu0
        %6205 = vdwg.mxu0
        %v6206 = vadd.f32 %v6123, %v6193
        %v6207 = vadd.f32 %v6124, %v6195
        %v6208 = vadd.f32 %v6125, %v6198
        %v6209 = vadd.f32 %v6126, %v6200
        %v6210 = vadd.f32 %v6127, %v6203
        %v6211 = vld [vmem:[%s8] sm:$0x1]
        %v6213 = vperm.slane %v6211, 0
        %v6215 = vadd.f32 %v6206, %v6213
        %v6216 = vadd.f32 %v6207, %v6213
        %v6217 = vadd.f32 %v6208, %v6213
        %v6218 = vadd.f32 %v6209, %v6213
        %v6219 = vadd.f32 %v6210, %v6213
        %v6220 = vmax.f32 %v6215, 0.0
        %v6221 = vmax.f32 %v6216, 0.0
        %v6222 = vmax.f32 %v6217, 0.0
        %v6223 = vmax.f32 %v6218, 0.0
        %v6224 = vmax.f32 %v6219, 0.0
        %v6225 = vlaneseq
        %vm6226 = vcmp.ge.s32.totalorder %v6225, 0
        %vm6227 = vcmp.lt.s32.totalorder %v6225, 64
        %vm6228 = vmand %vm6226, %vm6227
        %6229 = vst.msk [vmem:[#allocation2] sm:$0x1] %vm6228, %v6220
        %6231 = vst [vmem:[#allocation1] sm:$0xff] %v6220
        %s6232 = scalar_lea.vmem [#allocation1], 1
        %v6233 = vld [vmem:[%s6232] ss:$9 sm:$0xff]
        %6234 = vrot.lane.b32.xlu0 %v6233, 64
        %v6235 = vpop.permute.xlu0 %6234
        %vm6237 = vcmp.ge.s32.totalorder %v6225, 64
        %vm6238 = vcmp.lt.s32.totalorder %v6225, 128
        %vm6239 = vmand %vm6237, %vm6238
        %6240 = vst.msk [vmem:[#allocation2] sm:$0x1] %vm6239, %v6235
        %6241 = vst [vmem:[#allocation1] sm:$0xff] %v6220
        %s6242 = scalar_lea.vmem [#allocation1], 2
        %v6243 = vld [vmem:[%s6242] ss:$9 sm:$0xff]
        %6245 = vst.msk [vmem:[#allocation2 + $0x1] sm:$0x1] %vm6228, %v6243
        %6246 = vst [vmem:[#allocation1] sm:$0xff] %v6220
        %s6247 = scalar_lea.vmem [#allocation1], 3
        %v6248 = vld [vmem:[%s6247] ss:$9 sm:$0xff]
        %6249 = vrot.lane.b32.xlu0 %v6248, 64
        %v6250 = vpop.permute.xlu0 %6249
        %6252 = vst.msk [vmem:[#allocation2 + $0x1] sm:$0x1] %vm6239, %v6250
        %6253 = vst [vmem:[#allocation1] sm:$0xff] %v6220
        %s6254 = scalar_lea.vmem [#allocation1], 4
        %v6255 = vld [vmem:[%s6254] ss:$9 sm:$0xff]
        %6257 = vst.msk [vmem:[#allocation2 + $0x2] sm:$0x1] %vm6228, %v6255
        %6258 = vst [vmem:[#allocation1] sm:$0xff] %v6220
        %s6259 = scalar_lea.vmem [#allocation1], 5
        %v6260 = vld [vmem:[%s6259] ss:$9 sm:$0xff]
        %6261 = vrot.lane.b32.xlu0 %v6260, 64
        %v6262 = vpop.permute.xlu0 %6261
        %6264 = vst.msk [vmem:[#allocation2 + $0x2] sm:$0x1] %vm6239, %v6262
        %6265 = vst [vmem:[#allocation1] sm:$0xff] %v6220
        %s6266 = scalar_lea.vmem [#allocation1], 6
        %v6267 = vld [vmem:[%s6266] ss:$9 sm:$0xff]
        %6269 = vst.msk [vmem:[#allocation2 + $0x3] sm:$0x1] %vm6228, %v6267
        %6270 = vst [vmem:[#allocation1] sm:$0xff] %v6220
        %s6271 = scalar_lea.vmem [#allocation1], 7
        %v6272 = vld [vmem:[%s6271] ss:$9 sm:$0xff]
        %6273 = vrot.lane.b32.xlu0 %v6272, 64
        %v6274 = vpop.permute.xlu0 %6273
        %6276 = vst.msk [vmem:[#allocation2 + $0x3] sm:$0x1] %vm6239, %v6274
        %6277 = vst.msk [vmem:[#allocation2 + $0x4] sm:$0x1] %vm6228, %v6221
        %6279 = vst [vmem:[#allocation1] sm:$0xff] %v6221
        %s6280 = scalar_lea.vmem [#allocation1], 1
        %v6281 = vld [vmem:[%s6280] ss:$9 sm:$0xff]
        %6282 = vrot.lane.b32.xlu0 %v6281, 64
        %v6283 = vpop.permute.xlu0 %6282
        %6285 = vst.msk [vmem:[#allocation2 + $0x4] sm:$0x1] %vm6239, %v6283
        %6286 = vst [vmem:[#allocation1] sm:$0xff] %v6221
        %s6287 = scalar_lea.vmem [#allocation1], 2
        %v6288 = vld [vmem:[%s6287] ss:$9 sm:$0xff]
        %6290 = vst.msk [vmem:[#allocation2 + $0x5] sm:$0x1] %vm6228, %v6288
        %6291 = vst [vmem:[#allocation1] sm:$0xff] %v6221
        %s6292 = scalar_lea.vmem [#allocation1], 3
        %v6293 = vld [vmem:[%s6292] ss:$9 sm:$0xff]
        %6294 = vrot.lane.b32.xlu0 %v6293, 64
        %v6295 = vpop.permute.xlu0 %6294
        %6297 = vst.msk [vmem:[#allocation2 + $0x5] sm:$0x1] %vm6239, %v6295
        %6298 = vst [vmem:[#allocation1] sm:$0xff] %v6221
        %s6299 = scalar_lea.vmem [#allocation1], 4
        %v6300 = vld [vmem:[%s6299] ss:$9 sm:$0xff]
        %6302 = vst.msk [vmem:[#allocation2 + $0x6] sm:$0x1] %vm6228, %v6300
        %6303 = vst [vmem:[#allocation1] sm:$0xff] %v6221
        %s6304 = scalar_lea.vmem [#allocation1], 5
        %v6305 = vld [vmem:[%s6304] ss:$9 sm:$0xff]
        %6306 = vrot.lane.b32.xlu0 %v6305, 64
        %v6307 = vpop.permute.xlu0 %6306
        %6309 = vst.msk [vmem:[#allocation2 + $0x6] sm:$0x1] %vm6239, %v6307
        %6310 = vst [vmem:[#allocation1] sm:$0xff] %v6221
        %s6311 = scalar_lea.vmem [#allocation1], 6
        %v6312 = vld [vmem:[%s6311] ss:$9 sm:$0xff]
        %6314 = vst.msk [vmem:[#allocation2 + $0x7] sm:$0x1] %vm6228, %v6312
        %6315 = vst [vmem:[#allocation1] sm:$0xff] %v6221
        %s6316 = scalar_lea.vmem [#allocation1], 7
        %v6317 = vld [vmem:[%s6316] ss:$9 sm:$0xff]
        %6318 = vrot.lane.b32.xlu0 %v6317, 64
        %v6319 = vpop.permute.xlu0 %6318
        %6321 = vst.msk [vmem:[#allocation2 + $0x7] sm:$0x1] %vm6239, %v6319
        %6322 = vst.msk [vmem:[#allocation2 + $0x8] sm:$0x1] %vm6228, %v6222
        %6324 = vst [vmem:[#allocation1] sm:$0xff] %v6222
        %s6325 = scalar_lea.vmem [#allocation1], 1
        %v6326 = vld [vmem:[%s6325] ss:$9 sm:$0xff]
        %6327 = vrot.lane.b32.xlu0 %v6326, 64
        %v6328 = vpop.permute.xlu0 %6327
        %6330 = vst.msk [vmem:[#allocation2 + $0x8] sm:$0x1] %vm6239, %v6328
        %6331 = vst [vmem:[#allocation1] sm:$0xff] %v6222
        %s6332 = scalar_lea.vmem [#allocation1], 2
        %v6333 = vld [vmem:[%s6332] ss:$9 sm:$0xff]
        %6335 = vst.msk [vmem:[#allocation2 + $0x9] sm:$0x1] %vm6228, %v6333
        %6336 = vst [vmem:[#allocation1] sm:$0xff] %v6222
        %s6337 = scalar_lea.vmem [#allocation1], 3
        %v6338 = vld [vmem:[%s6337] ss:$9 sm:$0xff]
        %6339 = vrot.lane.b32.xlu0 %v6338, 64
        %v6340 = vpop.permute.xlu0 %6339
        %6342 = vst.msk [vmem:[#allocation2 + $0x9] sm:$0x1] %vm6239, %v6340
        %6343 = vst [vmem:[#allocation1] sm:$0xff] %v6222
        %s6344 = scalar_lea.vmem [#allocation1], 4
        %v6345 = vld [vmem:[%s6344] ss:$9 sm:$0xff]
        %6347 = vst.msk [vmem:[#allocation2 + $0xa] sm:$0x1] %vm6228, %v6345
        %6348 = vst [vmem:[#allocation1] sm:$0xff] %v6222
        %s6349 = scalar_lea.vmem [#allocation1], 5
        %v6350 = vld [vmem:[%s6349] ss:$9 sm:$0xff]
        %6351 = vrot.lane.b32.xlu0 %v6350, 64
        %v6352 = vpop.permute.xlu0 %6351
        %6354 = vst.msk [vmem:[#allocation2 + $0xa] sm:$0x1] %vm6239, %v6352
        %6355 = vst [vmem:[#allocation1] sm:$0xff] %v6222
        %s6356 = scalar_lea.vmem [#allocation1], 6
        %v6357 = vld [vmem:[%s6356] ss:$9 sm:$0xff]
        %6359 = vst.msk [vmem:[#allocation2 + $0xb] sm:$0x1] %vm6228, %v6357
        %6360 = vst [vmem:[#allocation1] sm:$0xff] %v6222
        %s6361 = scalar_lea.vmem [#allocation1], 7
        %v6362 = vld [vmem:[%s6361] ss:$9 sm:$0xff]
        %6363 = vrot.lane.b32.xlu0 %v6362, 64
        %v6364 = vpop.permute.xlu0 %6363
        %6366 = vst.msk [vmem:[#allocation2 + $0xb] sm:$0x1] %vm6239, %v6364
        %6367 = vst.msk [vmem:[#allocation2 + $0xc] sm:$0x1] %vm6228, %v6223
        %6369 = vst [vmem:[#allocation1] sm:$0xff] %v6223
        %s6370 = scalar_lea.vmem [#allocation1], 1
        %v6371 = vld [vmem:[%s6370] ss:$9 sm:$0xff]
        %6372 = vrot.lane.b32.xlu0 %v6371, 64
        %v6373 = vpop.permute.xlu0 %6372
        %6375 = vst.msk [vmem:[#allocation2 + $0xc] sm:$0x1] %vm6239, %v6373
        %6376 = vst [vmem:[#allocation1] sm:$0xff] %v6223
        %s6377 = scalar_lea.vmem [#allocation1], 2
        %v6378 = vld [vmem:[%s6377] ss:$9 sm:$0xff]
        %6380 = vst.msk [vmem:[#allocation2 + $0xd] sm:$0x1] %vm6228, %v6378
        %6381 = vst [vmem:[#allocation1] sm:$0xff] %v6223
        %s6382 = scalar_lea.vmem [#allocation1], 3
        %v6383 = vld [vmem:[%s6382] ss:$9 sm:$0xff]
        %6384 = vrot.lane.b32.xlu0 %v6383, 64
        %v6385 = vpop.permute.xlu0 %6384
        %6387 = vst.msk [vmem:[#allocation2 + $0xd] sm:$0x1] %vm6239, %v6385
        %6388 = vst [vmem:[#allocation1] sm:$0xff] %v6223
        %s6389 = scalar_lea.vmem [#allocation1], 4
        %v6390 = vld [vmem:[%s6389] ss:$9 sm:$0xff]
        %6392 = vst.msk [vmem:[#allocation2 + $0xe] sm:$0x1] %vm6228, %v6390
        %6393 = vst [vmem:[#allocation1] sm:$0xff] %v6223
        %s6394 = scalar_lea.vmem [#allocation1], 5
        %v6395 = vld [vmem:[%s6394] ss:$9 sm:$0xff]
        %6396 = vrot.lane.b32.xlu0 %v6395, 64
        %v6397 = vpop.permute.xlu0 %6396
        %6399 = vst.msk [vmem:[#allocation2 + $0xe] sm:$0x1] %vm6239, %v6397
        %6400 = vst [vmem:[#allocation1] sm:$0xff] %v6223
        %s6401 = scalar_lea.vmem [#allocation1], 6
        %v6402 = vld [vmem:[%s6401] ss:$9 sm:$0xff]
        %6404 = vst.msk [vmem:[#allocation2 + $0xf] sm:$0x1] %vm6228, %v6402
        %6405 = vst [vmem:[#allocation1] sm:$0xff] %v6223
        %s6406 = scalar_lea.vmem [#allocation1], 7
        %v6407 = vld [vmem:[%s6406] ss:$9 sm:$0xff]
        %6408 = vrot.lane.b32.xlu0 %v6407, 64
        %v6409 = vpop.permute.xlu0 %6408
        %6411 = vst.msk [vmem:[#allocation2 + $0xf] sm:$0x1] %vm6239, %v6409
        %6412 = vst.msk [vmem:[#allocation2 + $0x10] sm:$0x1] %vm6228, %v6224
        %6414 = vst [vmem:[#allocation1] sm:$0xff] %v6224
        %s6415 = scalar_lea.vmem [#allocation1], 1
        %v6416 = vld [vmem:[%s6415] ss:$9 sm:$0xff]
        %6417 = vrot.lane.b32.xlu0 %v6416, 64
        %v6418 = vpop.permute.xlu0 %6417
        %6420 = vst.msk [vmem:[#allocation2 + $0x10] sm:$0x1] %vm6239, %v6418
        %6421 = vst [vmem:[#allocation1] sm:$0xff] %v6224
        %s6422 = scalar_lea.vmem [#allocation1], 2
        %v6423 = vld [vmem:[%s6422] ss:$9 sm:$0xff]
        %6425 = vst.msk [vmem:[#allocation2 + $0x11] sm:$0x1] %vm6228, %v6423
        %6426 = vst [vmem:[#allocation1] sm:$0xff] %v6224
        %s6427 = scalar_lea.vmem [#allocation1], 3
        %v6428 = vld [vmem:[%s6427] ss:$9 sm:$0xff]
        %6429 = vrot.lane.b32.xlu0 %v6428, 64
        %v6430 = vpop.permute.xlu0 %6429
        %6432 = vst.msk [vmem:[#allocation2 + $0x11] sm:$0x1] %vm6239, %v6430
        %v6433 = vld [vmem:[#allocation2] sm:$0xff]
        %v6434 = vld [vmem:[#allocation2 + $0x8] sm:$0xff]
        %v6435 = vld [vmem:[#allocation2 + $0x10] sm:$0x3]
        %v6439 = vperm.slane %v6433, 0
        %v6440 = vperm.slane %v6433, 1
        %v6441 = vperm.slane %v6433, 2
        %v6442 = vperm.slane %v6433, 3
        %v6443 = vperm.slane %v6433, 4
        %v6444 = vperm.slane %v6433, 5
        %v6445 = vperm.slane %v6433, 6
        %v6446 = vperm.slane %v6433, 7
        %v6447 = vperm.slane %v6434, 0
        %v6448 = vperm.slane %v6434, 1
        %v6449 = vperm.slane %v6434, 2
        %v6450 = vperm.slane %v6434, 3
        %v6451 = vperm.slane %v6434, 4
        %v6452 = vperm.slane %v6434, 5
        %v6453 = vperm.slane %v6434, 6
        %v6454 = vperm.slane %v6434, 7
        %v6455 = vperm.slane %v6435, 0
        %v6456 = vperm.slane %v6435, 1
        %v6475 = vpack.c.bf16 %v6439, %v6439
        %v6476 = vpack.c.bf16 %v6440, %v6440
        %v6477 = vpack.c.bf16 %v6441, %v6441
        %v6478 = vpack.c.bf16 %v6442, %v6442
        %v6479 = vpack.c.bf16 %v6443, %v6443
        %v6480 = vpack.c.bf16 %v6444, %v6444
        %v6481 = vpack.c.bf16 %v6445, %v6445
        %v6482 = vpack.c.bf16 %v6446, %v6446
        %v6483 = vpack.c.bf16 %v6447, %v6447
        %v6484 = vpack.c.bf16 %v6448, %v6448
        %v6485 = vpack.c.bf16 %v6449, %v6449
        %v6486 = vpack.c.bf16 %v6450, %v6450
        %v6487 = vpack.c.bf16 %v6451, %v6451
        %v6488 = vpack.c.bf16 %v6452, %v6452
        %v6489 = vpack.c.bf16 %v6453, %v6453
        %v6490 = vpack.c.bf16 %v6454, %v6454
        %v6491 = vpack.c.bf16 %v6455, %v6455
        %v6492 = vpack.c.bf16 %v6456, %v6456
        %v6493 = vld [vmem:[%s9] sm:$0xff]
        %v6494 = vld [vmem:[%s9 + $0x8] sm:$0xff]
        %v6495 = vld [vmem:[%s9 + $0x10] sm:$0xff]
        %v6496 = vld [vmem:[%s9 + $0x18] sm:$0xff]
        %v6497 = vld [vmem:[%s9 + $0x20] sm:$0xff]
        %v6498 = vld [vmem:[%s9 + $0x28] sm:$0xff]
        %v6499 = vld [vmem:[%s9 + $0x30] sm:$0xff]
        %v6500 = vld [vmem:[%s9 + $0x38] sm:$0xff]
        %v6501 = vld [vmem:[%s9 + $0x40] sm:$0xff]
        %v6502 = vld [vmem:[%s9 + $0x48] sm:$0xff]
        %v6503 = vld [vmem:[%s9 + $0x50] sm:$0xff]
        %v6504 = vld [vmem:[%s9 + $0x58] sm:$0xff]
        %v6505 = vld [vmem:[%s9 + $0x60] sm:$0xff]
        %v6506 = vld [vmem:[%s9 + $0x68] sm:$0xff]
        %v6507 = vld [vmem:[%s9 + $0x70] sm:$0xff]
        %v6508 = vld [vmem:[%s9 + $0x78] sm:$0xff]
        %v6509 = vld [vmem:[%s9 + $0x80] sm:$0xff]
        %v6510 = vld [vmem:[%s9 + $0x88] sm:$0xff]
        %v6511 = vld [vmem:[%s9 + $0x90] sm:$0xff]
        %v6512 = vld [vmem:[%s9 + $0x98] sm:$0xff]
        %v6513 = vld [vmem:[%s9 + $0xa0] sm:$0xff]
        %v6514 = vld [vmem:[%s9 + $0xa8] sm:$0xff]
        %v6515 = vld [vmem:[%s9 + $0xb0] sm:$0xff]
        %v6516 = vld [vmem:[%s9 + $0xb8] sm:$0xff]
        %v6517 = vld [vmem:[%s9 + $0xc0] sm:$0xff]
        %v6518 = vld [vmem:[%s9 + $0xc8] sm:$0xff]
        %v6519 = vld [vmem:[%s9 + $0xd0] sm:$0xff]
        %v6520 = vld [vmem:[%s9 + $0xd8] sm:$0xff]
        %v6521 = vld [vmem:[%s9 + $0xe0] sm:$0xff]
        %v6522 = vld [vmem:[%s9 + $0xe8] sm:$0xff]
        %v6523 = vld [vmem:[%s9 + $0xf0] sm:$0xff]
        %v6524 = vld [vmem:[%s9 + $0xf8] sm:$0xff]
        %v6525 = vld [vmem:[%s9 + $0x100] sm:$0xff]
        %v6526 = vld [vmem:[%s9 + $0x108] sm:$0xff]
        %v6527 = vld [vmem:[%s9 + $0x110] sm:$0xff]
        %v6528 = vld [vmem:[%s9 + $0x118] sm:$0xff]
        %v6529 = vld [vmem:[%s9 + $0x120] sm:$0xff]
        %v6530 = vld [vmem:[%s9 + $0x128] sm:$0xff]
        %v6531 = vld [vmem:[%s9 + $0x130] sm:$0xff]
        %v6532 = vld [vmem:[%s9 + $0x138] sm:$0xff]
        %v6533 = vld [vmem:[%s9 + $0x140] sm:$0xff]
        %v6534 = vld [vmem:[%s9 + $0x148] sm:$0xff]
        %v6535 = vld [vmem:[%s9 + $0x150] sm:$0xff]
        %v6536 = vld [vmem:[%s9 + $0x158] sm:$0xff]
        %v6537 = vld [vmem:[%s9 + $0x160] sm:$0xff]
        %v6538 = vld [vmem:[%s9 + $0x168] sm:$0xff]
        %v6539 = vld [vmem:[%s9 + $0x170] sm:$0xff]
        %v6540 = vld [vmem:[%s9 + $0x178] sm:$0xff]
        %v6541 = vld [vmem:[%s9 + $0x180] sm:$0xff]
        %v6542 = vld [vmem:[%s9 + $0x188] sm:$0xff]
        %v6543 = vld [vmem:[%s9 + $0x190] sm:$0xff]
        %v6544 = vld [vmem:[%s9 + $0x198] sm:$0xff]
        %v6545 = vld [vmem:[%s9 + $0x1a0] sm:$0xff]
        %v6546 = vld [vmem:[%s9 + $0x1a8] sm:$0xff]
        %v6547 = vld [vmem:[%s9 + $0x1b0] sm:$0xff]
        %v6548 = vld [vmem:[%s9 + $0x1b8] sm:$0xff]
        %v6549 = vld [vmem:[%s9 + $0x1c0] sm:$0xff]
        %v6550 = vld [vmem:[%s9 + $0x1c8] sm:$0xff]
        %v6551 = vld [vmem:[%s9 + $0x1d0] sm:$0xff]
        %v6552 = vld [vmem:[%s9 + $0x1d8] sm:$0xff]
        %v6553 = vld [vmem:[%s9 + $0x1e0] sm:$0xff]
        %v6554 = vld [vmem:[%s9 + $0x1e8] sm:$0xff]
        %v6555 = vld [vmem:[%s9 + $0x1f0] sm:$0xff]
        %v6556 = vld [vmem:[%s9 + $0x1f8] sm:$0xff]
        %v6557 = vld [vmem:[%s9 + $0x200] sm:$0xff]
        %v6558 = vld [vmem:[%s9 + $0x208] sm:$0xff]
        %v6559 = vld [vmem:[%s9 + $0x210] sm:$0xff]
        %v6560 = vld [vmem:[%s9 + $0x218] sm:$0xff]
        %v6561 = vld [vmem:[%s9 + $0x220] sm:$0xff]
        %v6562 = vld [vmem:[%s9 + $0x228] sm:$0xff]
        %v6563 = vld [vmem:[%s9 + $0x230] sm:$0xff]
        %v6564 = vld [vmem:[%s9 + $0x238] sm:$0xff]
        %v6565 = vld [vmem:[%s9 + $0x240] sm:$0xff]
        %v6566 = vld [vmem:[%s9 + $0x248] sm:$0xff]
        %v6567 = vld [vmem:[%s9 + $0x250] sm:$0xff]
        %v6568 = vld [vmem:[%s9 + $0x258] sm:$0xff]
        %v6569 = vld [vmem:[%s9 + $0x260] sm:$0xff]
        %v6570 = vld [vmem:[%s9 + $0x268] sm:$0xff]
        %v6571 = vld [vmem:[%s9 + $0x270] sm:$0xff]
        %v6572 = vld [vmem:[%s9 + $0x278] sm:$0xff]
        %v6573 = vld [vmem:[%s9 + $0x280] sm:$0xff]
        %v6574 = vld [vmem:[%s9 + $0x288] sm:$0xff]
        %v6575 = vld [vmem:[%s9 + $0x290] sm:$0xff]
        %v6576 = vld [vmem:[%s9 + $0x298] sm:$0xff]
        %v6577 = vld [vmem:[%s9 + $0x2a0] sm:$0xff]
        %v6578 = vld [vmem:[%s9 + $0x2a8] sm:$0xff]
        %v6579 = vld [vmem:[%s9 + $0x2b0] sm:$0xff]
        %v6580 = vld [vmem:[%s9 + $0x2b8] sm:$0xff]
        %v6581 = vld [vmem:[%s9 + $0x2c0] sm:$0xff]
        %v6582 = vld [vmem:[%s9 + $0x2c8] sm:$0xff]
        %v6583 = vld [vmem:[%s9 + $0x2d0] sm:$0xff]
        %v6584 = vld [vmem:[%s9 + $0x2d8] sm:$0xff]
        %v6585 = vld [vmem:[%s9 + $0x2e0] sm:$0xff]
        %v6586 = vld [vmem:[%s9 + $0x2e8] sm:$0xff]
        %v6587 = vld [vmem:[%s9 + $0x2f0] sm:$0xff]
        %v6588 = vld [vmem:[%s9 + $0x2f8] sm:$0xff]
        %v6589 = vld [vmem:[%s9 + $0x300] sm:$0xff]
        %v6590 = vld [vmem:[%s9 + $0x308] sm:$0xff]
        %v6591 = vld [vmem:[%s9 + $0x310] sm:$0xff]
        %v6592 = vld [vmem:[%s9 + $0x318] sm:$0xff]
        %v6593 = vld [vmem:[%s9 + $0x320] sm:$0xff]
        %v6594 = vld [vmem:[%s9 + $0x328] sm:$0xff]
        %v6595 = vld [vmem:[%s9 + $0x330] sm:$0xff]
        %v6596 = vld [vmem:[%s9 + $0x338] sm:$0xff]
        %v6597 = vld [vmem:[%s9 + $0x340] sm:$0xff]
        %v6598 = vld [vmem:[%s9 + $0x348] sm:$0xff]
        %v6599 = vld [vmem:[%s9 + $0x350] sm:$0xff]
        %v6600 = vld [vmem:[%s9 + $0x358] sm:$0xff]
        %v6601 = vld [vmem:[%s9 + $0x360] sm:$0xff]
        %v6602 = vld [vmem:[%s9 + $0x368] sm:$0xff]
        %v6603 = vld [vmem:[%s9 + $0x370] sm:$0xff]
        %v6604 = vld [vmem:[%s9 + $0x378] sm:$0xff]
        %v6605 = vld [vmem:[%s9 + $0x380] sm:$0xff]
        %v6606 = vld [vmem:[%s9 + $0x388] sm:$0xff]
        %v6607 = vld [vmem:[%s9 + $0x390] sm:$0xff]
        %v6608 = vld [vmem:[%s9 + $0x398] sm:$0xff]
        %v6609 = vld [vmem:[%s9 + $0x3a0] sm:$0xff]
        %v6610 = vld [vmem:[%s9 + $0x3a8] sm:$0xff]
        %v6611 = vld [vmem:[%s9 + $0x3b0] sm:$0xff]
        %v6612 = vld [vmem:[%s9 + $0x3b8] sm:$0xff]
        %v6613 = vld [vmem:[%s9 + $0x3c0] sm:$0xff]
        %v6614 = vld [vmem:[%s9 + $0x3c8] sm:$0xff]
        %v6615 = vld [vmem:[%s9 + $0x3d0] sm:$0xff]
        %v6616 = vld [vmem:[%s9 + $0x3d8] sm:$0xff]
        %v6617 = vld [vmem:[%s9 + $0x3e0] sm:$0xff]
        %v6618 = vld [vmem:[%s9 + $0x3e8] sm:$0xff]
        %v6619 = vld [vmem:[%s9 + $0x3f0] sm:$0xff]
        %v6620 = vld [vmem:[%s9 + $0x3f8] sm:$0xff]
        %v6621 = vld [vmem:[%s9 + $0x400] sm:$0xff]
        %v6622 = vld [vmem:[%s9 + $0x408] sm:$0xff]
        %v6623 = vld [vmem:[%s9 + $0x410] sm:$0xff]
        %v6624 = vld [vmem:[%s9 + $0x418] sm:$0xff]
        %v6625 = vld [vmem:[%s9 + $0x420] sm:$0xff]
        %v6626 = vld [vmem:[%s9 + $0x428] sm:$0xff]
        %v6627 = vld [vmem:[%s9 + $0x430] sm:$0xff]
        %v6628 = vld [vmem:[%s9 + $0x438] sm:$0xff]
        %v6629 = vld [vmem:[%s9 + $0x440] sm:$0xff]
        %v6630 = vld [vmem:[%s9 + $0x448] sm:$0xff]
        %v6631 = vld [vmem:[%s9 + $0x450] sm:$0xff]
        %v6632 = vld [vmem:[%s9 + $0x458] sm:$0xff]
        %v6633 = vld [vmem:[%s9 + $0x460] sm:$0xff]
        %v6634 = vld [vmem:[%s9 + $0x468] sm:$0xff]
        %v6635 = vld [vmem:[%s9 + $0x470] sm:$0xff]
        %v6636 = vld [vmem:[%s9 + $0x478] sm:$0xff]
        %v6637 = vld [vmem:[%s9 + $0x480] sm:$0xff]
        %v6638 = vld [vmem:[%s9 + $0x488] sm:$0xff]
        %v6639 = vld [vmem:[%s9 + $0x490] sm:$0xff]
        %v6640 = vld [vmem:[%s9 + $0x498] sm:$0xff]
        %v6641 = vld [vmem:[%s9 + $0x4a0] sm:$0xff]
        %v6642 = vld [vmem:[%s9 + $0x4a8] sm:$0xff]
        %v6643 = vld [vmem:[%s9 + $0x4b0] sm:$0xff]
        %v6644 = vld [vmem:[%s9 + $0x4b8] sm:$0xff]
        %v6645 = vld [vmem:[%s9 + $0x4c0] sm:$0xff]
        %v6646 = vld [vmem:[%s9 + $0x4c8] sm:$0xff]
        %v6647 = vld [vmem:[%s9 + $0x4d0] sm:$0xff]
        %v6648 = vld [vmem:[%s9 + $0x4d8] sm:$0xff]
        %v6649 = vld [vmem:[%s9 + $0x4e0] sm:$0xff]
        %v6650 = vld [vmem:[%s9 + $0x4e8] sm:$0xff]
        %v6651 = vld [vmem:[%s9 + $0x4f0] sm:$0xff]
        %v6652 = vld [vmem:[%s9 + $0x4f8] sm:$0xff]
        %v6653 = vld [vmem:[%s9 + $0x500] sm:$0xff]
        %v6654 = vld [vmem:[%s9 + $0x508] sm:$0xff]
        %v6655 = vld [vmem:[%s9 + $0x510] sm:$0xff]
        %v6656 = vld [vmem:[%s9 + $0x518] sm:$0xff]
        %v6657 = vld [vmem:[%s9 + $0x520] sm:$0xff]
        %v6658 = vld [vmem:[%s9 + $0x528] sm:$0xff]
        %v6659 = vld [vmem:[%s9 + $0x530] sm:$0xff]
        %v6660 = vld [vmem:[%s9 + $0x538] sm:$0xff]
        %v6661 = vld [vmem:[%s9 + $0x540] sm:$0xff]
        %v6662 = vld [vmem:[%s9 + $0x548] sm:$0xff]
        %v6663 = vld [vmem:[%s9 + $0x550] sm:$0xff]
        %v6664 = vld [vmem:[%s9 + $0x558] sm:$0xff]
        %v6665 = vld [vmem:[%s9 + $0x560] sm:$0xff]
        %v6666 = vld [vmem:[%s9 + $0x568] sm:$0xff]
        %v6667 = vld [vmem:[%s9 + $0x570] sm:$0xff]
        %v6668 = vld [vmem:[%s9 + $0x578] sm:$0xff]
        %v6669 = vld [vmem:[%s9 + $0x580] sm:$0xff]
        %v6670 = vld [vmem:[%s9 + $0x588] sm:$0xff]
        %v6671 = vld [vmem:[%s9 + $0x590] sm:$0xff]
        %v6672 = vld [vmem:[%s9 + $0x598] sm:$0xff]
        %v6673 = vld [vmem:[%s9 + $0x5a0] sm:$0xff]
        %v6674 = vld [vmem:[%s9 + $0x5a8] sm:$0xff]
        %v6675 = vld [vmem:[%s9 + $0x5b0] sm:$0xff]
        %v6676 = vld [vmem:[%s9 + $0x5b8] sm:$0xff]
        %v6677 = vld [vmem:[%s9 + $0x5c0] sm:$0xff]
        %v6678 = vld [vmem:[%s9 + $0x5c8] sm:$0xff]
        %v6679 = vld [vmem:[%s9 + $0x5d0] sm:$0xff]
        %v6680 = vld [vmem:[%s9 + $0x5d8] sm:$0xff]
        %v6681 = vld [vmem:[%s9 + $0x5e0] sm:$0xff]
        %v6682 = vld [vmem:[%s9 + $0x5e8] sm:$0xff]
        %v6683 = vld [vmem:[%s9 + $0x5f0] sm:$0xff]
        %v6684 = vld [vmem:[%s9 + $0x5f8] sm:$0xff]
        %v6685 = vld [vmem:[%s9 + $0x600] sm:$0xff]
        %v6686 = vld [vmem:[%s9 + $0x608] sm:$0xff]
        %v6687 = vld [vmem:[%s9 + $0x610] sm:$0xff]
        %v6688 = vld [vmem:[%s9 + $0x618] sm:$0xff]
        %v6689 = vld [vmem:[%s9 + $0x620] sm:$0xff]
        %v6690 = vld [vmem:[%s9 + $0x628] sm:$0xff]
        %v6691 = vld [vmem:[%s9 + $0x630] sm:$0xff]
        %v6692 = vld [vmem:[%s9 + $0x638] sm:$0xff]
        %v6693 = vld [vmem:[%s9 + $0x640] sm:$0xff]
        %v6694 = vld [vmem:[%s9 + $0x648] sm:$0xff]
        %v6695 = vld [vmem:[%s9 + $0x650] sm:$0xff]
        %v6696 = vld [vmem:[%s9 + $0x658] sm:$0xff]
        %v6697 = vld [vmem:[%s9 + $0x660] sm:$0xff]
        %v6698 = vld [vmem:[%s9 + $0x668] sm:$0xff]
        %v6699 = vld [vmem:[%s9 + $0x670] sm:$0xff]
        %v6700 = vld [vmem:[%s9 + $0x678] sm:$0xff]
        %v6701 = vld [vmem:[%s9 + $0x680] sm:$0xff]
        %v6702 = vld [vmem:[%s9 + $0x688] sm:$0xff]
        %v6703 = vld [vmem:[%s9 + $0x690] sm:$0xff]
        %v6704 = vld [vmem:[%s9 + $0x698] sm:$0xff]
        %v6705 = vld [vmem:[%s9 + $0x6a0] sm:$0xff]
        %v6706 = vld [vmem:[%s9 + $0x6a8] sm:$0xff]
        %v6707 = vld [vmem:[%s9 + $0x6b0] sm:$0xff]
        %v6708 = vld [vmem:[%s9 + $0x6b8] sm:$0xff]
        %v6709 = vld [vmem:[%s9 + $0x6c0] sm:$0xff]
        %v6710 = vld [vmem:[%s9 + $0x6c8] sm:$0xff]
        %v6711 = vld [vmem:[%s9 + $0x6d0] sm:$0xff]
        %v6712 = vld [vmem:[%s9 + $0x6d8] sm:$0xff]
        %v6713 = vld [vmem:[%s9 + $0x6e0] sm:$0xff]
        %v6714 = vld [vmem:[%s9 + $0x6e8] sm:$0xff]
        %v6715 = vld [vmem:[%s9 + $0x6f0] sm:$0xff]
        %v6716 = vld [vmem:[%s9 + $0x6f8] sm:$0xff]
        %v6717 = vld [vmem:[%s9 + $0x700] sm:$0xff]
        %v6718 = vld [vmem:[%s9 + $0x708] sm:$0xff]
        %v6719 = vld [vmem:[%s9 + $0x710] sm:$0xff]
        %v6720 = vld [vmem:[%s9 + $0x718] sm:$0xff]
        %v6721 = vld [vmem:[%s9 + $0x720] sm:$0xff]
        %v6722 = vld [vmem:[%s9 + $0x728] sm:$0xff]
        %v6723 = vld [vmem:[%s9 + $0x730] sm:$0xff]
        %v6724 = vld [vmem:[%s9 + $0x738] sm:$0xff]
        %v6725 = vld [vmem:[%s9 + $0x740] sm:$0xff]
        %v6726 = vld [vmem:[%s9 + $0x748] sm:$0xff]
        %v6727 = vld [vmem:[%s9 + $0x750] sm:$0xff]
        %v6728 = vld [vmem:[%s9 + $0x758] sm:$0xff]
        %v6729 = vld [vmem:[%s9 + $0x760] sm:$0xff]
        %v6730 = vld [vmem:[%s9 + $0x768] sm:$0xff]
        %v6731 = vld [vmem:[%s9 + $0x770] sm:$0xff]
        %v6732 = vld [vmem:[%s9 + $0x778] sm:$0xff]
        %v6733 = vld [vmem:[%s9 + $0x780] sm:$0xff]
        %v6734 = vld [vmem:[%s9 + $0x788] sm:$0xff]
        %v6735 = vld [vmem:[%s9 + $0x790] sm:$0xff]
        %v6736 = vld [vmem:[%s9 + $0x798] sm:$0xff]
        %v6737 = vld [vmem:[%s9 + $0x7a0] sm:$0xff]
        %v6738 = vld [vmem:[%s9 + $0x7a8] sm:$0xff]
        %v6739 = vld [vmem:[%s9 + $0x7b0] sm:$0xff]
        %v6740 = vld [vmem:[%s9 + $0x7b8] sm:$0xff]
        %v6741 = vld [vmem:[%s9 + $0x7c0] sm:$0xff]
        %v6742 = vld [vmem:[%s9 + $0x7c8] sm:$0xff]
        %v6743 = vld [vmem:[%s9 + $0x7d0] sm:$0xff]
        %v6744 = vld [vmem:[%s9 + $0x7d8] sm:$0xff]
        %v6745 = vld [vmem:[%s9 + $0x7e0] sm:$0xff]
        %v6746 = vld [vmem:[%s9 + $0x7e8] sm:$0xff]
        %v6747 = vld [vmem:[%s9 + $0x7f0] sm:$0xff]
        %v6748 = vld [vmem:[%s9 + $0x7f8] sm:$0xff]
        %v6749 = vld [vmem:[%s9 + $0x800] sm:$0xff]
        %v6750 = vld [vmem:[%s9 + $0x808] sm:$0xff]
        %v6751 = vld [vmem:[%s9 + $0x810] sm:$0xff]
        %v6752 = vld [vmem:[%s9 + $0x818] sm:$0xff]
        %v6753 = vld [vmem:[%s9 + $0x820] sm:$0xff]
        %v6754 = vld [vmem:[%s9 + $0x828] sm:$0xff]
        %v6755 = vld [vmem:[%s9 + $0x830] sm:$0xff]
        %v6756 = vld [vmem:[%s9 + $0x838] sm:$0xff]
        %v6757 = vld [vmem:[%s9 + $0x840] sm:$0xff]
        %v6758 = vld [vmem:[%s9 + $0x848] sm:$0xff]
        %v6759 = vld [vmem:[%s9 + $0x850] sm:$0xff]
        %v6760 = vld [vmem:[%s9 + $0x858] sm:$0xff]
        %v6761 = vld [vmem:[%s9 + $0x860] sm:$0xff]
        %v6762 = vld [vmem:[%s9 + $0x868] sm:$0xff]
        %v6763 = vld [vmem:[%s9 + $0x870] sm:$0xff]
        %v6764 = vld [vmem:[%s9 + $0x878] sm:$0xff]
        %v6765 = vld [vmem:[%s9 + $0x880] sm:$0xff]
        %v6766 = vld [vmem:[%s9 + $0x888] sm:$0xff]
        %v6767 = vld [vmem:[%s9 + $0x890] sm:$0xff]
        %v6768 = vld [vmem:[%s9 + $0x898] sm:$0xff]
        %v6769 = vld [vmem:[%s9 + $0x8a0] sm:$0xff]
        %v6770 = vld [vmem:[%s9 + $0x8a8] sm:$0xff]
        %v6771 = vld [vmem:[%s9 + $0x8b0] sm:$0xff]
        %v6772 = vld [vmem:[%s9 + $0x8b8] sm:$0xff]
        %v6773 = vld [vmem:[%s9 + $0x8c0] sm:$0xff]
        %v6774 = vld [vmem:[%s9 + $0x8c8] sm:$0xff]
        %v6775 = vld [vmem:[%s9 + $0x8d0] sm:$0xff]
        %v6776 = vld [vmem:[%s9 + $0x8d8] sm:$0xff]
        %v6777 = vld [vmem:[%s9 + $0x8e0] sm:$0xff]
        %v6778 = vld [vmem:[%s9 + $0x8e8] sm:$0xff]
        %v6779 = vld [vmem:[%s9 + $0x8f0] sm:$0xff]
        %v6780 = vld [vmem:[%s9 + $0x8f8] sm:$0xff]
        %v6781 = vld [vmem:[%s9 + $0x900] sm:$0xff]
        %v6782 = vld [vmem:[%s9 + $0x908] sm:$0xff]
        %v6783 = vld [vmem:[%s9 + $0x910] sm:$0xff]
        %v6784 = vld [vmem:[%s9 + $0x918] sm:$0xff]
        %v6785 = vld [vmem:[%s9 + $0x920] sm:$0xff]
        %v6786 = vld [vmem:[%s9 + $0x928] sm:$0xff]
        %v6787 = vld [vmem:[%s9 + $0x930] sm:$0xff]
        %v6788 = vld [vmem:[%s9 + $0x938] sm:$0xff]
        %v6789 = vld [vmem:[%s9 + $0x940] sm:$0xff]
        %v6790 = vld [vmem:[%s9 + $0x948] sm:$0xff]
        %v6791 = vld [vmem:[%s9 + $0x950] sm:$0xff]
        %v6792 = vld [vmem:[%s9 + $0x958] sm:$0xff]
        %v6793 = vld [vmem:[%s9 + $0x960] sm:$0xff]
        %v6794 = vld [vmem:[%s9 + $0x968] sm:$0xff]
        %v6795 = vld [vmem:[%s9 + $0x970] sm:$0xff]
        %v6796 = vld [vmem:[%s9 + $0x978] sm:$0xff]
        %v6797 = vld [vmem:[%s9 + $0x980] sm:$0xff]
        %v6798 = vld [vmem:[%s9 + $0x988] sm:$0xff]
        %v6799 = vld [vmem:[%s9 + $0x990] sm:$0xff]
        %v6800 = vld [vmem:[%s9 + $0x998] sm:$0xff]
        %v6801 = vld [vmem:[%s9 + $0x9a0] sm:$0xff]
        %v6802 = vld [vmem:[%s9 + $0x9a8] sm:$0xff]
        %v6803 = vld [vmem:[%s9 + $0x9b0] sm:$0xff]
        %v6804 = vld [vmem:[%s9 + $0x9b8] sm:$0xff]
        %v6805 = vld [vmem:[%s9 + $0x9c0] sm:$0xff]
        %v6806 = vld [vmem:[%s9 + $0x9c8] sm:$0xff]
        %v6807 = vld [vmem:[%s9 + $0x9d0] sm:$0xff]
        %v6808 = vld [vmem:[%s9 + $0x9d8] sm:$0xff]
        %v6809 = vld [vmem:[%s9 + $0x9e0] sm:$0xff]
        %v6810 = vld [vmem:[%s9 + $0x9e8] sm:$0xff]
        %v6811 = vld [vmem:[%s9 + $0x9f0] sm:$0xff]
        %v6812 = vld [vmem:[%s9 + $0x9f8] sm:$0xff]
        %v6813 = vld [vmem:[%s9 + $0xa00] sm:$0xff]
        %v6814 = vld [vmem:[%s9 + $0xa08] sm:$0xff]
        %v6815 = vld [vmem:[%s9 + $0xa10] sm:$0xff]
        %v6816 = vld [vmem:[%s9 + $0xa18] sm:$0xff]
        %v6817 = vld [vmem:[%s9 + $0xa20] sm:$0xff]
        %v6818 = vld [vmem:[%s9 + $0xa28] sm:$0xff]
        %v6819 = vld [vmem:[%s9 + $0xa30] sm:$0xff]
        %v6820 = vld [vmem:[%s9 + $0xa38] sm:$0xff]
        %v6821 = vld [vmem:[%s9 + $0xa40] sm:$0xff]
        %v6822 = vld [vmem:[%s9 + $0xa48] sm:$0xff]
        %v6823 = vld [vmem:[%s9 + $0xa50] sm:$0xff]
        %v6824 = vld [vmem:[%s9 + $0xa58] sm:$0xff]
        %v6825 = vld [vmem:[%s9 + $0xa60] sm:$0xff]
        %v6826 = vld [vmem:[%s9 + $0xa68] sm:$0xff]
        %v6827 = vld [vmem:[%s9 + $0xa70] sm:$0xff]
        %v6828 = vld [vmem:[%s9 + $0xa78] sm:$0xff]
        %v6829 = vld [vmem:[%s9 + $0xa80] sm:$0xff]
        %v6830 = vld [vmem:[%s9 + $0xa88] sm:$0xff]
        %v6831 = vld [vmem:[%s9 + $0xa90] sm:$0xff]
        %v6832 = vld [vmem:[%s9 + $0xa98] sm:$0xff]
        %v6833 = vld [vmem:[%s9 + $0xaa0] sm:$0xff]
        %v6834 = vld [vmem:[%s9 + $0xaa8] sm:$0xff]
        %v6835 = vld [vmem:[%s9 + $0xab0] sm:$0xff]
        %v6836 = vld [vmem:[%s9 + $0xab8] sm:$0xff]
        %v6837 = vld [vmem:[%s9 + $0xac0] sm:$0xff]
        %v6838 = vld [vmem:[%s9 + $0xac8] sm:$0xff]
        %v6839 = vld [vmem:[%s9 + $0xad0] sm:$0xff]
        %v6840 = vld [vmem:[%s9 + $0xad8] sm:$0xff]
        %v6841 = vld [vmem:[%s9 + $0xae0] sm:$0xff]
        %v6842 = vld [vmem:[%s9 + $0xae8] sm:$0xff]
        %v6843 = vld [vmem:[%s9 + $0xaf0] sm:$0xff]
        %v6844 = vld [vmem:[%s9 + $0xaf8] sm:$0xff]
        %v6845 = vld [vmem:[%s9 + $0xb00] sm:$0xff]
        %v6846 = vld [vmem:[%s9 + $0xb08] sm:$0xff]
        %v6847 = vld [vmem:[%s9 + $0xb10] sm:$0xff]
        %v6848 = vld [vmem:[%s9 + $0xb18] sm:$0xff]
        %v6849 = vld [vmem:[%s9 + $0xb20] sm:$0xff]
        %v6850 = vld [vmem:[%s9 + $0xb28] sm:$0xff]
        %v6851 = vld [vmem:[%s9 + $0xb30] sm:$0xff]
        %v6852 = vld [vmem:[%s9 + $0xb38] sm:$0xff]
        %v6853 = vld [vmem:[%s9 + $0xb40] sm:$0xff]
        %v6854 = vld [vmem:[%s9 + $0xb48] sm:$0xff]
        %v6855 = vld [vmem:[%s9 + $0xb50] sm:$0xff]
        %v6856 = vld [vmem:[%s9 + $0xb58] sm:$0xff]
        %v6857 = vld [vmem:[%s9 + $0xb60] sm:$0xff]
        %v6858 = vld [vmem:[%s9 + $0xb68] sm:$0xff]
        %v6859 = vld [vmem:[%s9 + $0xb70] sm:$0xff]
        %v6860 = vld [vmem:[%s9 + $0xb78] sm:$0xff]
        %v6861 = vld [vmem:[%s9 + $0xb80] sm:$0xff]
        %v6862 = vld [vmem:[%s9 + $0xb88] sm:$0xff]
        %v6863 = vld [vmem:[%s9 + $0xb90] sm:$0xff]
        %v6864 = vld [vmem:[%s9 + $0xb98] sm:$0xff]
        %v6865 = vld [vmem:[%s9 + $0xba0] sm:$0xff]
        %v6866 = vld [vmem:[%s9 + $0xba8] sm:$0xff]
        %v6867 = vld [vmem:[%s9 + $0xbb0] sm:$0xff]
        %v6868 = vld [vmem:[%s9 + $0xbb8] sm:$0xff]
        %v6869 = vld [vmem:[%s9 + $0xbc0] sm:$0xff]
        %v6870 = vld [vmem:[%s9 + $0xbc8] sm:$0xff]
        %v6871 = vld [vmem:[%s9 + $0xbd0] sm:$0xff]
        %v6872 = vld [vmem:[%s9 + $0xbd8] sm:$0xff]
        %v6873 = vld [vmem:[%s9 + $0xbe0] sm:$0xff]
        %v6874 = vld [vmem:[%s9 + $0xbe8] sm:$0xff]
        %v6875 = vld [vmem:[%s9 + $0xbf0] sm:$0xff]
        %v6876 = vld [vmem:[%s9 + $0xbf8] sm:$0xff]
        %v6877 = vld [vmem:[%s9 + $0xc00] sm:$0xff]
        %v6878 = vld [vmem:[%s9 + $0xc08] sm:$0xff]
        %v6879 = vld [vmem:[%s9 + $0xc10] sm:$0xff]
        %v6880 = vld [vmem:[%s9 + $0xc18] sm:$0xff]
        %v6881 = vld [vmem:[%s9 + $0xc20] sm:$0xff]
        %v6882 = vld [vmem:[%s9 + $0xc28] sm:$0xff]
        %v6883 = vld [vmem:[%s9 + $0xc30] sm:$0xff]
        %v6884 = vld [vmem:[%s9 + $0xc38] sm:$0xff]
        %v6885 = vld [vmem:[%s9 + $0xc40] sm:$0xff]
        %v6886 = vld [vmem:[%s9 + $0xc48] sm:$0xff]
        %v6887 = vld [vmem:[%s9 + $0xc50] sm:$0xff]
        %v6888 = vld [vmem:[%s9 + $0xc58] sm:$0xff]
        %v6889 = vld [vmem:[%s9 + $0xc60] sm:$0xff]
        %v6890 = vld [vmem:[%s9 + $0xc68] sm:$0xff]
        %v6891 = vld [vmem:[%s9 + $0xc70] sm:$0xff]
        %v6892 = vld [vmem:[%s9 + $0xc78] sm:$0xff]
        %v6893 = vld [vmem:[%s9 + $0xc80] sm:$0xff]
        %v6894 = vld [vmem:[%s9 + $0xc88] sm:$0xff]
        %v6895 = vld [vmem:[%s9 + $0xc90] sm:$0xff]
        %v6896 = vld [vmem:[%s9 + $0xc98] sm:$0xff]
        %v6897 = vld [vmem:[%s9 + $0xca0] sm:$0xff]
        %v6898 = vld [vmem:[%s9 + $0xca8] sm:$0xff]
        %v6899 = vld [vmem:[%s9 + $0xcb0] sm:$0xff]
        %v6900 = vld [vmem:[%s9 + $0xcb8] sm:$0xff]
        %v6901 = vld [vmem:[%s9 + $0xcc0] sm:$0xff]
        %v6902 = vld [vmem:[%s9 + $0xcc8] sm:$0xff]
        %v6903 = vld [vmem:[%s9 + $0xcd0] sm:$0xff]
        %v6904 = vld [vmem:[%s9 + $0xcd8] sm:$0xff]
        %v6905 = vld [vmem:[%s9 + $0xce0] sm:$0xff]
        %v6906 = vld [vmem:[%s9 + $0xce8] sm:$0xff]
        %v6907 = vld [vmem:[%s9 + $0xcf0] sm:$0xff]
        %v6908 = vld [vmem:[%s9 + $0xcf8] sm:$0xff]
        %v6909 = vld [vmem:[%s9 + $0xd00] sm:$0xff]
        %v6910 = vld [vmem:[%s9 + $0xd08] sm:$0xff]
        %v6911 = vld [vmem:[%s9 + $0xd10] sm:$0xff]
        %v6912 = vld [vmem:[%s9 + $0xd18] sm:$0xff]
        %v6913 = vld [vmem:[%s9 + $0xd20] sm:$0xff]
        %v6914 = vld [vmem:[%s9 + $0xd28] sm:$0xff]
        %v6915 = vld [vmem:[%s9 + $0xd30] sm:$0xff]
        %v6916 = vld [vmem:[%s9 + $0xd38] sm:$0xff]
        %v6917 = vld [vmem:[%s9 + $0xd40] sm:$0xff]
        %v6918 = vld [vmem:[%s9 + $0xd48] sm:$0xff]
        %v6919 = vld [vmem:[%s9 + $0xd50] sm:$0xff]
        %v6920 = vld [vmem:[%s9 + $0xd58] sm:$0xff]
        %v6921 = vld [vmem:[%s9 + $0xd60] sm:$0xff]
        %v6922 = vld [vmem:[%s9 + $0xd68] sm:$0xff]
        %v6923 = vld [vmem:[%s9 + $0xd70] sm:$0xff]
        %v6924 = vld [vmem:[%s9 + $0xd78] sm:$0xff]
        %v6925 = vld [vmem:[%s9 + $0xd80] sm:$0xff]
        %v6926 = vld [vmem:[%s9 + $0xd88] sm:$0xff]
        %v6927 = vld [vmem:[%s9 + $0xd90] sm:$0xff]
        %v6928 = vld [vmem:[%s9 + $0xd98] sm:$0xff]
        %v6929 = vld [vmem:[%s9 + $0xda0] sm:$0xff]
        %v6930 = vld [vmem:[%s9 + $0xda8] sm:$0xff]
        %v6931 = vld [vmem:[%s9 + $0xdb0] sm:$0xff]
        %v6932 = vld [vmem:[%s9 + $0xdb8] sm:$0xff]
        %v6933 = vld [vmem:[%s9 + $0xdc0] sm:$0xff]
        %v6934 = vld [vmem:[%s9 + $0xdc8] sm:$0xff]
        %v6935 = vld [vmem:[%s9 + $0xdd0] sm:$0xff]
        %v6936 = vld [vmem:[%s9 + $0xdd8] sm:$0xff]
        %v6937 = vld [vmem:[%s9 + $0xde0] sm:$0xff]
        %v6938 = vld [vmem:[%s9 + $0xde8] sm:$0xff]
        %v6939 = vld [vmem:[%s9 + $0xdf0] sm:$0xff]
        %v6940 = vld [vmem:[%s9 + $0xdf8] sm:$0xff]
        %v6941 = vld [vmem:[%s9 + $0xe00] sm:$0xff]
        %v6942 = vld [vmem:[%s9 + $0xe08] sm:$0xff]
        %v6943 = vld [vmem:[%s9 + $0xe10] sm:$0xff]
        %v6944 = vld [vmem:[%s9 + $0xe18] sm:$0xff]
        %v6945 = vld [vmem:[%s9 + $0xe20] sm:$0xff]
        %v6946 = vld [vmem:[%s9 + $0xe28] sm:$0xff]
        %v6947 = vld [vmem:[%s9 + $0xe30] sm:$0xff]
        %v6948 = vld [vmem:[%s9 + $0xe38] sm:$0xff]
        %v6949 = vld [vmem:[%s9 + $0xe40] sm:$0xff]
        %v6950 = vld [vmem:[%s9 + $0xe48] sm:$0xff]
        %v6951 = vld [vmem:[%s9 + $0xe50] sm:$0xff]
        %v6952 = vld [vmem:[%s9 + $0xe58] sm:$0xff]
        %v6953 = vld [vmem:[%s9 + $0xe60] sm:$0xff]
        %v6954 = vld [vmem:[%s9 + $0xe68] sm:$0xff]
        %v6955 = vld [vmem:[%s9 + $0xe70] sm:$0xff]
        %v6956 = vld [vmem:[%s9 + $0xe78] sm:$0xff]
        %v6957 = vld [vmem:[%s9 + $0xe80] sm:$0xff]
        %v6958 = vld [vmem:[%s9 + $0xe88] sm:$0xff]
        %v6959 = vld [vmem:[%s9 + $0xe90] sm:$0xff]
        %v6960 = vld [vmem:[%s9 + $0xe98] sm:$0xff]
        %v6961 = vld [vmem:[%s9 + $0xea0] sm:$0xff]
        %v6962 = vld [vmem:[%s9 + $0xea8] sm:$0xff]
        %v6963 = vld [vmem:[%s9 + $0xeb0] sm:$0xff]
        %v6964 = vld [vmem:[%s9 + $0xeb8] sm:$0xff]
        %v6965 = vld [vmem:[%s9 + $0xec0] sm:$0xff]
        %v6966 = vld [vmem:[%s9 + $0xec8] sm:$0xff]
        %v6967 = vld [vmem:[%s9 + $0xed0] sm:$0xff]
        %v6968 = vld [vmem:[%s9 + $0xed8] sm:$0xff]
        %v6969 = vld [vmem:[%s9 + $0xee0] sm:$0xff]
        %v6970 = vld [vmem:[%s9 + $0xee8] sm:$0xff]
        %v6971 = vld [vmem:[%s9 + $0xef0] sm:$0xff]
        %v6972 = vld [vmem:[%s9 + $0xef8] sm:$0xff]
        %v6973 = vld [vmem:[%s9 + $0xf00] sm:$0xff]
        %v6974 = vld [vmem:[%s9 + $0xf08] sm:$0xff]
        %v6975 = vld [vmem:[%s9 + $0xf10] sm:$0xff]
        %v6976 = vld [vmem:[%s9 + $0xf18] sm:$0xff]
        %v6977 = vld [vmem:[%s9 + $0xf20] sm:$0xff]
        %v6978 = vld [vmem:[%s9 + $0xf28] sm:$0xff]
        %v6979 = vld [vmem:[%s9 + $0xf30] sm:$0xff]
        %v6980 = vld [vmem:[%s9 + $0xf38] sm:$0xff]
        %v6981 = vld [vmem:[%s9 + $0xf40] sm:$0xff]
        %v6982 = vld [vmem:[%s9 + $0xf48] sm:$0xff]
        %v6983 = vld [vmem:[%s9 + $0xf50] sm:$0xff]
        %v6984 = vld [vmem:[%s9 + $0xf58] sm:$0xff]
        %v6985 = vld [vmem:[%s9 + $0xf60] sm:$0xff]
        %v6986 = vld [vmem:[%s9 + $0xf68] sm:$0xff]
        %v6987 = vld [vmem:[%s9 + $0xf70] sm:$0xff]
        %v6988 = vld [vmem:[%s9 + $0xf78] sm:$0xff]
        %v6989 = vld [vmem:[%s9 + $0xf80] sm:$0xff]
        %v6990 = vld [vmem:[%s9 + $0xf88] sm:$0xff]
        %v6991 = vld [vmem:[%s9 + $0xf90] sm:$0xff]
        %v6992 = vld [vmem:[%s9 + $0xf98] sm:$0xff]
        %v6993 = vld [vmem:[%s9 + $0xfa0] sm:$0xff]
        %v6994 = vld [vmem:[%s9 + $0xfa8] sm:$0xff]
        %v6995 = vld [vmem:[%s9 + $0xfb0] sm:$0xff]
        %v6996 = vld [vmem:[%s9 + $0xfb8] sm:$0xff]
        %v6997 = vld [vmem:[%s9 + $0xfc0] sm:$0xff]
        %v6998 = vld [vmem:[%s9 + $0xfc8] sm:$0xff]
        %v6999 = vld [vmem:[%s9 + $0xfd0] sm:$0xff]
        %v7000 = vld [vmem:[%s9 + $0xfd8] sm:$0xff]
        %v7001 = vld [vmem:[%s9 + $0xfe0] sm:$0xff]
        %v7002 = vld [vmem:[%s9 + $0xfe8] sm:$0xff]
        %v7003 = vld [vmem:[%s9 + $0xff0] sm:$0xff]
        %v7004 = vld [vmem:[%s9 + $0xff8] sm:$0xff]
        %v7005 = vld [vmem:[%s9 + $0x1000] sm:$0xff]
        %v7006 = vld [vmem:[%s9 + $0x1008] sm:$0xff]
        %v7007 = vld [vmem:[%s9 + $0x1010] sm:$0xff]
        %v7008 = vld [vmem:[%s9 + $0x1018] sm:$0xff]
        %v7009 = vld [vmem:[%s9 + $0x1020] sm:$0xff]
        %v7010 = vld [vmem:[%s9 + $0x1028] sm:$0xff]
        %v7011 = vld [vmem:[%s9 + $0x1030] sm:$0xff]
        %v7012 = vld [vmem:[%s9 + $0x1038] sm:$0xff]
        %v7013 = vld [vmem:[%s9 + $0x1040] sm:$0xff]
        %v7014 = vld [vmem:[%s9 + $0x1048] sm:$0xff]
        %v7015 = vld [vmem:[%s9 + $0x1050] sm:$0xff]
        %v7016 = vld [vmem:[%s9 + $0x1058] sm:$0xff]
        %v7017 = vld [vmem:[%s9 + $0x1060] sm:$0xff]
        %v7018 = vld [vmem:[%s9 + $0x1068] sm:$0xff]
        %v7019 = vld [vmem:[%s9 + $0x1070] sm:$0xff]
        %v7020 = vld [vmem:[%s9 + $0x1078] sm:$0xff]
        %v7021 = vld [vmem:[%s9 + $0x1080] sm:$0xff]
        %v7022 = vld [vmem:[%s9 + $0x1088] sm:$0xff]
        %v7023 = vld [vmem:[%s9 + $0x1090] sm:$0xff]
        %v7024 = vld [vmem:[%s9 + $0x1098] sm:$0xff]
        %v7025 = vld [vmem:[%s9 + $0x10a0] sm:$0xff]
        %v7026 = vld [vmem:[%s9 + $0x10a8] sm:$0xff]
        %v7027 = vld [vmem:[%s9 + $0x10b0] sm:$0xff]
        %v7028 = vld [vmem:[%s9 + $0x10b8] sm:$0xff]
        %v7029 = vld [vmem:[%s9 + $0x10c0] sm:$0xff]
        %v7030 = vld [vmem:[%s9 + $0x10c8] sm:$0xff]
        %v7031 = vld [vmem:[%s9 + $0x10d0] sm:$0xff]
        %v7032 = vld [vmem:[%s9 + $0x10d8] sm:$0xff]
        %v7033 = vld [vmem:[%s9 + $0x10e0] sm:$0xff]
        %v7034 = vld [vmem:[%s9 + $0x10e8] sm:$0xff]
        %v7035 = vld [vmem:[%s9 + $0x10f0] sm:$0xff]
        %v7036 = vld [vmem:[%s9 + $0x10f8] sm:$0xff]
        %v7037 = vld [vmem:[%s9 + $0x1100] sm:$0xff]
        %v7038 = vld [vmem:[%s9 + $0x1108] sm:$0xff]
        %v7039 = vld [vmem:[%s9 + $0x1110] sm:$0xff]
        %v7040 = vld [vmem:[%s9 + $0x1118] sm:$0xff]
        %v7041 = vld [vmem:[%s9 + $0x1120] sm:$0xff]
        %v7042 = vld [vmem:[%s9 + $0x1128] sm:$0xff]
        %v7043 = vld [vmem:[%s9 + $0x1130] sm:$0xff]
        %v7044 = vld [vmem:[%s9 + $0x1138] sm:$0xff]
        %v7045 = vld [vmem:[%s9 + $0x1140] sm:$0xff]
        %v7046 = vld [vmem:[%s9 + $0x1148] sm:$0xff]
        %v7047 = vld [vmem:[%s9 + $0x1150] sm:$0xff]
        %v7048 = vld [vmem:[%s9 + $0x1158] sm:$0xff]
        %v7049 = vld [vmem:[%s9 + $0x1160] sm:$0xff]
        %v7050 = vld [vmem:[%s9 + $0x1168] sm:$0xff]
        %v7051 = vld [vmem:[%s9 + $0x1170] sm:$0xff]
        %v7052 = vld [vmem:[%s9 + $0x1178] sm:$0xff]
        %v7053 = vld [vmem:[%s9 + $0x1180] sm:$0xff]
        %v7054 = vld [vmem:[%s9 + $0x1188] sm:$0xff]
        %v7055 = vld [vmem:[%s9 + $0x1190] sm:$0xff]
        %v7056 = vld [vmem:[%s9 + $0x1198] sm:$0xff]
        %v7057 = vld [vmem:[%s9 + $0x11a0] sm:$0xff]
        %v7058 = vld [vmem:[%s9 + $0x11a8] sm:$0xff]
        %v7059 = vld [vmem:[%s9 + $0x11b0] sm:$0xff]
        %v7060 = vld [vmem:[%s9 + $0x11b8] sm:$0xff]
        %v7061 = vld [vmem:[%s9 + $0x11c0] sm:$0xff]
        %v7062 = vld [vmem:[%s9 + $0x11c8] sm:$0xff]
        %v7063 = vld [vmem:[%s9 + $0x11d0] sm:$0xff]
        %v7064 = vld [vmem:[%s9 + $0x11d8] sm:$0xff]
        %v7065 = vld [vmem:[%s9 + $0x11e0] sm:$0xff]
        %v7066 = vld [vmem:[%s9 + $0x11e8] sm:$0xff]
        %v7067 = vld [vmem:[%s9 + $0x11f0] sm:$0xff]
        %v7068 = vld [vmem:[%s9 + $0x11f8] sm:$0xff]
        %v7069 = vld [vmem:[%s10] sm:$0xf]
        %v7646 = vunpack.c.l.b16 %v6493
        %v7647 = vunpack.c.h.b16 %v6493
        %v7648 = vunpack.c.l.b16 %v6494
        %v7649 = vunpack.c.h.b16 %v6494
        %v7650 = vunpack.c.l.b16 %v6495
        %v7651 = vunpack.c.h.b16 %v6495
        %v7652 = vunpack.c.l.b16 %v6496
        %v7653 = vunpack.c.h.b16 %v6496
        %v7654 = vunpack.c.l.b16 %v6497
        %v7655 = vunpack.c.h.b16 %v6497
        %v7656 = vunpack.c.l.b16 %v6498
        %v7657 = vunpack.c.h.b16 %v6498
        %v7658 = vunpack.c.l.b16 %v6499
        %v7659 = vunpack.c.h.b16 %v6499
        %v7660 = vunpack.c.l.b16 %v6500
        %v7661 = vunpack.c.h.b16 %v6500
        %v7662 = vunpack.c.l.b16 %v6501
        %v7663 = vunpack.c.h.b16 %v6501
        %v7664 = vunpack.c.l.b16 %v6502
        %v7665 = vunpack.c.h.b16 %v6502
        %v7666 = vunpack.c.l.b16 %v6503
        %v7667 = vunpack.c.h.b16 %v6503
        %v7668 = vunpack.c.l.b16 %v6504
        %v7669 = vunpack.c.h.b16 %v6504
        %v7670 = vunpack.c.l.b16 %v6505
        %v7671 = vunpack.c.h.b16 %v6505
        %v7672 = vunpack.c.l.b16 %v6506
        %v7673 = vunpack.c.h.b16 %v6506
        %v7674 = vunpack.c.l.b16 %v6507
        %v7675 = vunpack.c.h.b16 %v6507
        %v7676 = vunpack.c.l.b16 %v6508
        %v7677 = vunpack.c.h.b16 %v6508
        %v7678 = vunpack.c.l.b16 %v6509
        %v7679 = vunpack.c.h.b16 %v6509
        %v7680 = vunpack.c.l.b16 %v6510
        %v7681 = vunpack.c.h.b16 %v6510
        %v7682 = vunpack.c.l.b16 %v6511
        %v7683 = vunpack.c.h.b16 %v6511
        %v7684 = vunpack.c.l.b16 %v6512
        %v7685 = vunpack.c.h.b16 %v6512
        %v7686 = vunpack.c.l.b16 %v6513
        %v7687 = vunpack.c.h.b16 %v6513
        %v7688 = vunpack.c.l.b16 %v6514
        %v7689 = vunpack.c.h.b16 %v6514
        %v7690 = vunpack.c.l.b16 %v6515
        %v7691 = vunpack.c.h.b16 %v6515
        %v7692 = vunpack.c.l.b16 %v6516
        %v7693 = vunpack.c.h.b16 %v6516
        %v7694 = vunpack.c.l.b16 %v6517
        %v7695 = vunpack.c.h.b16 %v6517
        %v7696 = vunpack.c.l.b16 %v6518
        %v7697 = vunpack.c.h.b16 %v6518
        %v7698 = vunpack.c.l.b16 %v6519
        %v7699 = vunpack.c.h.b16 %v6519
        %v7700 = vunpack.c.l.b16 %v6520
        %v7701 = vunpack.c.h.b16 %v6520
        %v7702 = vunpack.c.l.b16 %v6521
        %v7703 = vunpack.c.h.b16 %v6521
        %v7704 = vunpack.c.l.b16 %v6522
        %v7705 = vunpack.c.h.b16 %v6522
        %v7706 = vunpack.c.l.b16 %v6523
        %v7707 = vunpack.c.h.b16 %v6523
        %v7708 = vunpack.c.l.b16 %v6524
        %v7709 = vunpack.c.h.b16 %v6524
        %v7710 = vunpack.c.l.b16 %v6525
        %v7711 = vunpack.c.h.b16 %v6525
        %v7712 = vunpack.c.l.b16 %v6526
        %v7713 = vunpack.c.h.b16 %v6526
        %v7714 = vunpack.c.l.b16 %v6527
        %v7715 = vunpack.c.h.b16 %v6527
        %v7716 = vunpack.c.l.b16 %v6528
        %v7717 = vunpack.c.h.b16 %v6528
        %v7718 = vunpack.c.l.b16 %v6529
        %v7719 = vunpack.c.h.b16 %v6529
        %v7720 = vunpack.c.l.b16 %v6530
        %v7721 = vunpack.c.h.b16 %v6530
        %v7722 = vunpack.c.l.b16 %v6531
        %v7723 = vunpack.c.h.b16 %v6531
        %v7724 = vunpack.c.l.b16 %v6532
        %v7725 = vunpack.c.h.b16 %v6532
        %v7726 = vunpack.c.l.b16 %v6533
        %v7727 = vunpack.c.h.b16 %v6533
        %v7728 = vunpack.c.l.b16 %v6534
        %v7729 = vunpack.c.h.b16 %v6534
        %v7730 = vunpack.c.l.b16 %v6535
        %v7731 = vunpack.c.h.b16 %v6535
        %v7732 = vunpack.c.l.b16 %v6536
        %v7733 = vunpack.c.h.b16 %v6536
        %v7734 = vunpack.c.l.b16 %v6537
        %v7735 = vunpack.c.h.b16 %v6537
        %v7736 = vunpack.c.l.b16 %v6538
        %v7737 = vunpack.c.h.b16 %v6538
        %v7738 = vunpack.c.l.b16 %v6539
        %v7739 = vunpack.c.h.b16 %v6539
        %v7740 = vunpack.c.l.b16 %v6540
        %v7741 = vunpack.c.h.b16 %v6540
        %v7742 = vunpack.c.l.b16 %v6541
        %v7743 = vunpack.c.h.b16 %v6541
        %v7744 = vunpack.c.l.b16 %v6542
        %v7745 = vunpack.c.h.b16 %v6542
        %v7746 = vunpack.c.l.b16 %v6543
        %v7747 = vunpack.c.h.b16 %v6543
        %v7748 = vunpack.c.l.b16 %v6544
        %v7749 = vunpack.c.h.b16 %v6544
        %v7750 = vunpack.c.l.b16 %v6545
        %v7751 = vunpack.c.h.b16 %v6545
        %v7752 = vunpack.c.l.b16 %v6546
        %v7753 = vunpack.c.h.b16 %v6546
        %v7754 = vunpack.c.l.b16 %v6547
        %v7755 = vunpack.c.h.b16 %v6547
        %v7756 = vunpack.c.l.b16 %v6548
        %v7757 = vunpack.c.h.b16 %v6548
        %v7758 = vunpack.c.l.b16 %v6549
        %v7759 = vunpack.c.h.b16 %v6549
        %v7760 = vunpack.c.l.b16 %v6550
        %v7761 = vunpack.c.h.b16 %v6550
        %v7762 = vunpack.c.l.b16 %v6551
        %v7763 = vunpack.c.h.b16 %v6551
        %v7764 = vunpack.c.l.b16 %v6552
        %v7765 = vunpack.c.h.b16 %v6552
        %v7766 = vunpack.c.l.b16 %v6553
        %v7767 = vunpack.c.h.b16 %v6553
        %v7768 = vunpack.c.l.b16 %v6554
        %v7769 = vunpack.c.h.b16 %v6554
        %v7770 = vunpack.c.l.b16 %v6555
        %v7771 = vunpack.c.h.b16 %v6555
        %v7772 = vunpack.c.l.b16 %v6556
        %v7773 = vunpack.c.h.b16 %v6556
        %v7774 = vunpack.c.l.b16 %v6557
        %v7775 = vunpack.c.h.b16 %v6557
        %v7776 = vunpack.c.l.b16 %v6558
        %v7777 = vunpack.c.h.b16 %v6558
        %v7778 = vunpack.c.l.b16 %v6559
        %v7779 = vunpack.c.h.b16 %v6559
        %v7780 = vunpack.c.l.b16 %v6560
        %v7781 = vunpack.c.h.b16 %v6560
        %v7782 = vunpack.c.l.b16 %v6561
        %v7783 = vunpack.c.h.b16 %v6561
        %v7784 = vunpack.c.l.b16 %v6562
        %v7785 = vunpack.c.h.b16 %v6562
        %v7786 = vunpack.c.l.b16 %v6563
        %v7787 = vunpack.c.h.b16 %v6563
        %v7788 = vunpack.c.l.b16 %v6564
        %v7789 = vunpack.c.h.b16 %v6564
        %v7790 = vunpack.c.l.b16 %v6565
        %v7791 = vunpack.c.h.b16 %v6565
        %v7792 = vunpack.c.l.b16 %v6566
        %v7793 = vunpack.c.h.b16 %v6566
        %v7794 = vunpack.c.l.b16 %v6567
        %v7795 = vunpack.c.h.b16 %v6567
        %v7796 = vunpack.c.l.b16 %v6568
        %v7797 = vunpack.c.h.b16 %v6568
        %v7798 = vunpack.c.l.b16 %v6569
        %v7799 = vunpack.c.h.b16 %v6569
        %v7800 = vunpack.c.l.b16 %v6570
        %v7801 = vunpack.c.h.b16 %v6570
        %v7802 = vunpack.c.l.b16 %v6571
        %v7803 = vunpack.c.h.b16 %v6571
        %v7804 = vunpack.c.l.b16 %v6572
        %v7805 = vunpack.c.h.b16 %v6572
        %v7806 = vunpack.c.l.b16 %v6573
        %v7807 = vunpack.c.h.b16 %v6573
        %v7808 = vunpack.c.l.b16 %v6574
        %v7809 = vunpack.c.h.b16 %v6574
        %v7810 = vunpack.c.l.b16 %v6575
        %v7811 = vunpack.c.h.b16 %v6575
        %v7812 = vunpack.c.l.b16 %v6576
        %v7813 = vunpack.c.h.b16 %v6576
        %v7814 = vunpack.c.l.b16 %v6577
        %v7815 = vunpack.c.h.b16 %v6577
        %v7816 = vunpack.c.l.b16 %v6578
        %v7817 = vunpack.c.h.b16 %v6578
        %v7818 = vunpack.c.l.b16 %v6579
        %v7819 = vunpack.c.h.b16 %v6579
        %v7820 = vunpack.c.l.b16 %v6580
        %v7821 = vunpack.c.h.b16 %v6580
        %v7822 = vunpack.c.l.b16 %v6581
        %v7823 = vunpack.c.h.b16 %v6581
        %v7824 = vunpack.c.l.b16 %v6582
        %v7825 = vunpack.c.h.b16 %v6582
        %v7826 = vunpack.c.l.b16 %v6583
        %v7827 = vunpack.c.h.b16 %v6583
        %v7828 = vunpack.c.l.b16 %v6584
        %v7829 = vunpack.c.h.b16 %v6584
        %v7830 = vunpack.c.l.b16 %v6585
        %v7831 = vunpack.c.h.b16 %v6585
        %v7832 = vunpack.c.l.b16 %v6586
        %v7833 = vunpack.c.h.b16 %v6586
        %v7834 = vunpack.c.l.b16 %v6587
        %v7835 = vunpack.c.h.b16 %v6587
        %v7836 = vunpack.c.l.b16 %v6588
        %v7837 = vunpack.c.h.b16 %v6588
        %v7838 = vunpack.c.l.b16 %v6589
        %v7839 = vunpack.c.h.b16 %v6589
        %v7840 = vunpack.c.l.b16 %v6590
        %v7841 = vunpack.c.h.b16 %v6590
        %v7842 = vunpack.c.l.b16 %v6591
        %v7843 = vunpack.c.h.b16 %v6591
        %v7844 = vunpack.c.l.b16 %v6592
        %v7845 = vunpack.c.h.b16 %v6592
        %v7846 = vunpack.c.l.b16 %v6593
        %v7847 = vunpack.c.h.b16 %v6593
        %v7848 = vunpack.c.l.b16 %v6594
        %v7849 = vunpack.c.h.b16 %v6594
        %v7850 = vunpack.c.l.b16 %v6595
        %v7851 = vunpack.c.h.b16 %v6595
        %v7852 = vunpack.c.l.b16 %v6596
        %v7853 = vunpack.c.h.b16 %v6596
        %v7854 = vunpack.c.l.b16 %v6597
        %v7855 = vunpack.c.h.b16 %v6597
        %v7856 = vunpack.c.l.b16 %v6598
        %v7857 = vunpack.c.h.b16 %v6598
        %v7858 = vunpack.c.l.b16 %v6599
        %v7859 = vunpack.c.h.b16 %v6599
        %v7860 = vunpack.c.l.b16 %v6600
        %v7861 = vunpack.c.h.b16 %v6600
        %v7862 = vunpack.c.l.b16 %v6601
        %v7863 = vunpack.c.h.b16 %v6601
        %v7864 = vunpack.c.l.b16 %v6602
        %v7865 = vunpack.c.h.b16 %v6602
        %v7866 = vunpack.c.l.b16 %v6603
        %v7867 = vunpack.c.h.b16 %v6603
        %v7868 = vunpack.c.l.b16 %v6604
        %v7869 = vunpack.c.h.b16 %v6604
        %v7870 = vunpack.c.l.b16 %v6605
        %v7871 = vunpack.c.h.b16 %v6605
        %v7872 = vunpack.c.l.b16 %v6606
        %v7873 = vunpack.c.h.b16 %v6606
        %v7874 = vunpack.c.l.b16 %v6607
        %v7875 = vunpack.c.h.b16 %v6607
        %v7876 = vunpack.c.l.b16 %v6608
        %v7877 = vunpack.c.h.b16 %v6608
        %v7878 = vunpack.c.l.b16 %v6609
        %v7879 = vunpack.c.h.b16 %v6609
        %v7880 = vunpack.c.l.b16 %v6610
        %v7881 = vunpack.c.h.b16 %v6610
        %v7882 = vunpack.c.l.b16 %v6611
        %v7883 = vunpack.c.h.b16 %v6611
        %v7884 = vunpack.c.l.b16 %v6612
        %v7885 = vunpack.c.h.b16 %v6612
        %v7886 = vunpack.c.l.b16 %v6613
        %v7887 = vunpack.c.h.b16 %v6613
        %v7888 = vunpack.c.l.b16 %v6614
        %v7889 = vunpack.c.h.b16 %v6614
        %v7890 = vunpack.c.l.b16 %v6615
        %v7891 = vunpack.c.h.b16 %v6615
        %v7892 = vunpack.c.l.b16 %v6616
        %v7893 = vunpack.c.h.b16 %v6616
        %v7894 = vunpack.c.l.b16 %v6617
        %v7895 = vunpack.c.h.b16 %v6617
        %v7896 = vunpack.c.l.b16 %v6618
        %v7897 = vunpack.c.h.b16 %v6618
        %v7898 = vunpack.c.l.b16 %v6619
        %v7899 = vunpack.c.h.b16 %v6619
        %v7900 = vunpack.c.l.b16 %v6620
        %v7901 = vunpack.c.h.b16 %v6620
        %v7902 = vunpack.c.l.b16 %v6621
        %v7903 = vunpack.c.h.b16 %v6621
        %v7904 = vunpack.c.l.b16 %v6622
        %v7905 = vunpack.c.h.b16 %v6622
        %v7906 = vunpack.c.l.b16 %v6623
        %v7907 = vunpack.c.h.b16 %v6623
        %v7908 = vunpack.c.l.b16 %v6624
        %v7909 = vunpack.c.h.b16 %v6624
        %v7910 = vunpack.c.l.b16 %v6625
        %v7911 = vunpack.c.h.b16 %v6625
        %v7912 = vunpack.c.l.b16 %v6626
        %v7913 = vunpack.c.h.b16 %v6626
        %v7914 = vunpack.c.l.b16 %v6627
        %v7915 = vunpack.c.h.b16 %v6627
        %v7916 = vunpack.c.l.b16 %v6628
        %v7917 = vunpack.c.h.b16 %v6628
        %v7918 = vunpack.c.l.b16 %v6629
        %v7919 = vunpack.c.h.b16 %v6629
        %v7920 = vunpack.c.l.b16 %v6630
        %v7921 = vunpack.c.h.b16 %v6630
        %v7922 = vunpack.c.l.b16 %v6631
        %v7923 = vunpack.c.h.b16 %v6631
        %v7924 = vunpack.c.l.b16 %v6632
        %v7925 = vunpack.c.h.b16 %v6632
        %v7926 = vunpack.c.l.b16 %v6633
        %v7927 = vunpack.c.h.b16 %v6633
        %v7928 = vunpack.c.l.b16 %v6634
        %v7929 = vunpack.c.h.b16 %v6634
        %v7930 = vunpack.c.l.b16 %v6635
        %v7931 = vunpack.c.h.b16 %v6635
        %v7932 = vunpack.c.l.b16 %v6636
        %v7933 = vunpack.c.h.b16 %v6636
        %v7934 = vunpack.c.l.b16 %v6637
        %v7935 = vunpack.c.h.b16 %v6637
        %v7936 = vunpack.c.l.b16 %v6638
        %v7937 = vunpack.c.h.b16 %v6638
        %v7938 = vunpack.c.l.b16 %v6639
        %v7939 = vunpack.c.h.b16 %v6639
        %v7940 = vunpack.c.l.b16 %v6640
        %v7941 = vunpack.c.h.b16 %v6640
        %v7942 = vunpack.c.l.b16 %v6641
        %v7943 = vunpack.c.h.b16 %v6641
        %v7944 = vunpack.c.l.b16 %v6642
        %v7945 = vunpack.c.h.b16 %v6642
        %v7946 = vunpack.c.l.b16 %v6643
        %v7947 = vunpack.c.h.b16 %v6643
        %v7948 = vunpack.c.l.b16 %v6644
        %v7949 = vunpack.c.h.b16 %v6644
        %v7950 = vunpack.c.l.b16 %v6645
        %v7951 = vunpack.c.h.b16 %v6645
        %v7952 = vunpack.c.l.b16 %v6646
        %v7953 = vunpack.c.h.b16 %v6646
        %v7954 = vunpack.c.l.b16 %v6647
        %v7955 = vunpack.c.h.b16 %v6647
        %v7956 = vunpack.c.l.b16 %v6648
        %v7957 = vunpack.c.h.b16 %v6648
        %v7958 = vunpack.c.l.b16 %v6649
        %v7959 = vunpack.c.h.b16 %v6649
        %v7960 = vunpack.c.l.b16 %v6650
        %v7961 = vunpack.c.h.b16 %v6650
        %v7962 = vunpack.c.l.b16 %v6651
        %v7963 = vunpack.c.h.b16 %v6651
        %v7964 = vunpack.c.l.b16 %v6652
        %v7965 = vunpack.c.h.b16 %v6652
        %v7966 = vunpack.c.l.b16 %v6653
        %v7967 = vunpack.c.h.b16 %v6653
        %v7968 = vunpack.c.l.b16 %v6654
        %v7969 = vunpack.c.h.b16 %v6654
        %v7970 = vunpack.c.l.b16 %v6655
        %v7971 = vunpack.c.h.b16 %v6655
        %v7972 = vunpack.c.l.b16 %v6656
        %v7973 = vunpack.c.h.b16 %v6656
        %v7974 = vunpack.c.l.b16 %v6657
        %v7975 = vunpack.c.h.b16 %v6657
        %v7976 = vunpack.c.l.b16 %v6658
        %v7977 = vunpack.c.h.b16 %v6658
        %v7978 = vunpack.c.l.b16 %v6659
        %v7979 = vunpack.c.h.b16 %v6659
        %v7980 = vunpack.c.l.b16 %v6660
        %v7981 = vunpack.c.h.b16 %v6660
        %v7982 = vunpack.c.l.b16 %v6661
        %v7983 = vunpack.c.h.b16 %v6661
        %v7984 = vunpack.c.l.b16 %v6662
        %v7985 = vunpack.c.h.b16 %v6662
        %v7986 = vunpack.c.l.b16 %v6663
        %v7987 = vunpack.c.h.b16 %v6663
        %v7988 = vunpack.c.l.b16 %v6664
        %v7989 = vunpack.c.h.b16 %v6664
        %v7990 = vunpack.c.l.b16 %v6665
        %v7991 = vunpack.c.h.b16 %v6665
        %v7992 = vunpack.c.l.b16 %v6666
        %v7993 = vunpack.c.h.b16 %v6666
        %v7994 = vunpack.c.l.b16 %v6667
        %v7995 = vunpack.c.h.b16 %v6667
        %v7996 = vunpack.c.l.b16 %v6668
        %v7997 = vunpack.c.h.b16 %v6668
        %v7998 = vunpack.c.l.b16 %v6669
        %v7999 = vunpack.c.h.b16 %v6669
        %v8000 = vunpack.c.l.b16 %v6670
        %v8001 = vunpack.c.h.b16 %v6670
        %v8002 = vunpack.c.l.b16 %v6671
        %v8003 = vunpack.c.h.b16 %v6671
        %v8004 = vunpack.c.l.b16 %v6672
        %v8005 = vunpack.c.h.b16 %v6672
        %v8006 = vunpack.c.l.b16 %v6673
        %v8007 = vunpack.c.h.b16 %v6673
        %v8008 = vunpack.c.l.b16 %v6674
        %v8009 = vunpack.c.h.b16 %v6674
        %v8010 = vunpack.c.l.b16 %v6675
        %v8011 = vunpack.c.h.b16 %v6675
        %v8012 = vunpack.c.l.b16 %v6676
        %v8013 = vunpack.c.h.b16 %v6676
        %v8014 = vunpack.c.l.b16 %v6677
        %v8015 = vunpack.c.h.b16 %v6677
        %v8016 = vunpack.c.l.b16 %v6678
        %v8017 = vunpack.c.h.b16 %v6678
        %v8018 = vunpack.c.l.b16 %v6679
        %v8019 = vunpack.c.h.b16 %v6679
        %v8020 = vunpack.c.l.b16 %v6680
        %v8021 = vunpack.c.h.b16 %v6680
        %v8022 = vunpack.c.l.b16 %v6681
        %v8023 = vunpack.c.h.b16 %v6681
        %v8024 = vunpack.c.l.b16 %v6682
        %v8025 = vunpack.c.h.b16 %v6682
        %v8026 = vunpack.c.l.b16 %v6683
        %v8027 = vunpack.c.h.b16 %v6683
        %v8028 = vunpack.c.l.b16 %v6684
        %v8029 = vunpack.c.h.b16 %v6684
        %v8030 = vunpack.c.l.b16 %v6685
        %v8031 = vunpack.c.h.b16 %v6685
        %v8032 = vunpack.c.l.b16 %v6686
        %v8033 = vunpack.c.h.b16 %v6686
        %v8034 = vunpack.c.l.b16 %v6687
        %v8035 = vunpack.c.h.b16 %v6687
        %v8036 = vunpack.c.l.b16 %v6688
        %v8037 = vunpack.c.h.b16 %v6688
        %v8038 = vunpack.c.l.b16 %v6689
        %v8039 = vunpack.c.h.b16 %v6689
        %v8040 = vunpack.c.l.b16 %v6690
        %v8041 = vunpack.c.h.b16 %v6690
        %v8042 = vunpack.c.l.b16 %v6691
        %v8043 = vunpack.c.h.b16 %v6691
        %v8044 = vunpack.c.l.b16 %v6692
        %v8045 = vunpack.c.h.b16 %v6692
        %v8046 = vunpack.c.l.b16 %v6693
        %v8047 = vunpack.c.h.b16 %v6693
        %v8048 = vunpack.c.l.b16 %v6694
        %v8049 = vunpack.c.h.b16 %v6694
        %v8050 = vunpack.c.l.b16 %v6695
        %v8051 = vunpack.c.h.b16 %v6695
        %v8052 = vunpack.c.l.b16 %v6696
        %v8053 = vunpack.c.h.b16 %v6696
        %v8054 = vunpack.c.l.b16 %v6697
        %v8055 = vunpack.c.h.b16 %v6697
        %v8056 = vunpack.c.l.b16 %v6698
        %v8057 = vunpack.c.h.b16 %v6698
        %v8058 = vunpack.c.l.b16 %v6699
        %v8059 = vunpack.c.h.b16 %v6699
        %v8060 = vunpack.c.l.b16 %v6700
        %v8061 = vunpack.c.h.b16 %v6700
        %v8062 = vunpack.c.l.b16 %v6701
        %v8063 = vunpack.c.h.b16 %v6701
        %v8064 = vunpack.c.l.b16 %v6702
        %v8065 = vunpack.c.h.b16 %v6702
        %v8066 = vunpack.c.l.b16 %v6703
        %v8067 = vunpack.c.h.b16 %v6703
        %v8068 = vunpack.c.l.b16 %v6704
        %v8069 = vunpack.c.h.b16 %v6704
        %v8070 = vunpack.c.l.b16 %v6705
        %v8071 = vunpack.c.h.b16 %v6705
        %v8072 = vunpack.c.l.b16 %v6706
        %v8073 = vunpack.c.h.b16 %v6706
        %v8074 = vunpack.c.l.b16 %v6707
        %v8075 = vunpack.c.h.b16 %v6707
        %v8076 = vunpack.c.l.b16 %v6708
        %v8077 = vunpack.c.h.b16 %v6708
        %v8078 = vunpack.c.l.b16 %v6709
        %v8079 = vunpack.c.h.b16 %v6709
        %v8080 = vunpack.c.l.b16 %v6710
        %v8081 = vunpack.c.h.b16 %v6710
        %v8082 = vunpack.c.l.b16 %v6711
        %v8083 = vunpack.c.h.b16 %v6711
        %v8084 = vunpack.c.l.b16 %v6712
        %v8085 = vunpack.c.h.b16 %v6712
        %v8086 = vunpack.c.l.b16 %v6713
        %v8087 = vunpack.c.h.b16 %v6713
        %v8088 = vunpack.c.l.b16 %v6714
        %v8089 = vunpack.c.h.b16 %v6714
        %v8090 = vunpack.c.l.b16 %v6715
        %v8091 = vunpack.c.h.b16 %v6715
        %v8092 = vunpack.c.l.b16 %v6716
        %v8093 = vunpack.c.h.b16 %v6716
        %v8094 = vunpack.c.l.b16 %v6717
        %v8095 = vunpack.c.h.b16 %v6717
        %v8096 = vunpack.c.l.b16 %v6718
        %v8097 = vunpack.c.h.b16 %v6718
        %v8098 = vunpack.c.l.b16 %v6719
        %v8099 = vunpack.c.h.b16 %v6719
        %v8100 = vunpack.c.l.b16 %v6720
        %v8101 = vunpack.c.h.b16 %v6720
        %v8102 = vunpack.c.l.b16 %v6721
        %v8103 = vunpack.c.h.b16 %v6721
        %v8104 = vunpack.c.l.b16 %v6722
        %v8105 = vunpack.c.h.b16 %v6722
        %v8106 = vunpack.c.l.b16 %v6723
        %v8107 = vunpack.c.h.b16 %v6723
        %v8108 = vunpack.c.l.b16 %v6724
        %v8109 = vunpack.c.h.b16 %v6724
        %v8110 = vunpack.c.l.b16 %v6725
        %v8111 = vunpack.c.h.b16 %v6725
        %v8112 = vunpack.c.l.b16 %v6726
        %v8113 = vunpack.c.h.b16 %v6726
        %v8114 = vunpack.c.l.b16 %v6727
        %v8115 = vunpack.c.h.b16 %v6727
        %v8116 = vunpack.c.l.b16 %v6728
        %v8117 = vunpack.c.h.b16 %v6728
        %v8118 = vunpack.c.l.b16 %v6729
        %v8119 = vunpack.c.h.b16 %v6729
        %v8120 = vunpack.c.l.b16 %v6730
        %v8121 = vunpack.c.h.b16 %v6730
        %v8122 = vunpack.c.l.b16 %v6731
        %v8123 = vunpack.c.h.b16 %v6731
        %v8124 = vunpack.c.l.b16 %v6732
        %v8125 = vunpack.c.h.b16 %v6732
        %v8126 = vunpack.c.l.b16 %v6733
        %v8127 = vunpack.c.h.b16 %v6733
        %v8128 = vunpack.c.l.b16 %v6734
        %v8129 = vunpack.c.h.b16 %v6734
        %v8130 = vunpack.c.l.b16 %v6735
        %v8131 = vunpack.c.h.b16 %v6735
        %v8132 = vunpack.c.l.b16 %v6736
        %v8133 = vunpack.c.h.b16 %v6736
        %v8134 = vunpack.c.l.b16 %v6737
        %v8135 = vunpack.c.h.b16 %v6737
        %v8136 = vunpack.c.l.b16 %v6738
        %v8137 = vunpack.c.h.b16 %v6738
        %v8138 = vunpack.c.l.b16 %v6739
        %v8139 = vunpack.c.h.b16 %v6739
        %v8140 = vunpack.c.l.b16 %v6740
        %v8141 = vunpack.c.h.b16 %v6740
        %v8142 = vunpack.c.l.b16 %v6741
        %v8143 = vunpack.c.h.b16 %v6741
        %v8144 = vunpack.c.l.b16 %v6742
        %v8145 = vunpack.c.h.b16 %v6742
        %v8146 = vunpack.c.l.b16 %v6743
        %v8147 = vunpack.c.h.b16 %v6743
        %v8148 = vunpack.c.l.b16 %v6744
        %v8149 = vunpack.c.h.b16 %v6744
        %v8150 = vunpack.c.l.b16 %v6745
        %v8151 = vunpack.c.h.b16 %v6745
        %v8152 = vunpack.c.l.b16 %v6746
        %v8153 = vunpack.c.h.b16 %v6746
        %v8154 = vunpack.c.l.b16 %v6747
        %v8155 = vunpack.c.h.b16 %v6747
        %v8156 = vunpack.c.l.b16 %v6748
        %v8157 = vunpack.c.h.b16 %v6748
        %v8158 = vunpack.c.l.b16 %v6749
        %v8159 = vunpack.c.h.b16 %v6749
        %v8160 = vunpack.c.l.b16 %v6750
        %v8161 = vunpack.c.h.b16 %v6750
        %v8162 = vunpack.c.l.b16 %v6751
        %v8163 = vunpack.c.h.b16 %v6751
        %v8164 = vunpack.c.l.b16 %v6752
        %v8165 = vunpack.c.h.b16 %v6752
        %v8166 = vunpack.c.l.b16 %v6753
        %v8167 = vunpack.c.h.b16 %v6753
        %v8168 = vunpack.c.l.b16 %v6754
        %v8169 = vunpack.c.h.b16 %v6754
        %v8170 = vunpack.c.l.b16 %v6755
        %v8171 = vunpack.c.h.b16 %v6755
        %v8172 = vunpack.c.l.b16 %v6756
        %v8173 = vunpack.c.h.b16 %v6756
        %v8174 = vunpack.c.l.b16 %v6757
        %v8175 = vunpack.c.h.b16 %v6757
        %v8176 = vunpack.c.l.b16 %v6758
        %v8177 = vunpack.c.h.b16 %v6758
        %v8178 = vunpack.c.l.b16 %v6759
        %v8179 = vunpack.c.h.b16 %v6759
        %v8180 = vunpack.c.l.b16 %v6760
        %v8181 = vunpack.c.h.b16 %v6760
        %v8182 = vunpack.c.l.b16 %v6761
        %v8183 = vunpack.c.h.b16 %v6761
        %v8184 = vunpack.c.l.b16 %v6762
        %v8185 = vunpack.c.h.b16 %v6762
        %v8186 = vunpack.c.l.b16 %v6763
        %v8187 = vunpack.c.h.b16 %v6763
        %v8188 = vunpack.c.l.b16 %v6764
        %v8189 = vunpack.c.h.b16 %v6764
        %v8190 = vunpack.c.l.b16 %v6765
        %v8191 = vunpack.c.h.b16 %v6765
        %v8192 = vunpack.c.l.b16 %v6766
        %v8193 = vunpack.c.h.b16 %v6766
        %v8194 = vunpack.c.l.b16 %v6767
        %v8195 = vunpack.c.h.b16 %v6767
        %v8196 = vunpack.c.l.b16 %v6768
        %v8197 = vunpack.c.h.b16 %v6768
        %v8198 = vunpack.c.l.b16 %v6769
        %v8199 = vunpack.c.h.b16 %v6769
        %v8200 = vunpack.c.l.b16 %v6770
        %v8201 = vunpack.c.h.b16 %v6770
        %v8202 = vunpack.c.l.b16 %v6771
        %v8203 = vunpack.c.h.b16 %v6771
        %v8204 = vunpack.c.l.b16 %v6772
        %v8205 = vunpack.c.h.b16 %v6772
        %v8206 = vunpack.c.l.b16 %v6773
        %v8207 = vunpack.c.h.b16 %v6773
        %v8208 = vunpack.c.l.b16 %v6774
        %v8209 = vunpack.c.h.b16 %v6774
        %v8210 = vunpack.c.l.b16 %v6775
        %v8211 = vunpack.c.h.b16 %v6775
        %v8212 = vunpack.c.l.b16 %v6776
        %v8213 = vunpack.c.h.b16 %v6776
        %v8214 = vunpack.c.l.b16 %v6777
        %v8215 = vunpack.c.h.b16 %v6777
        %v8216 = vunpack.c.l.b16 %v6778
        %v8217 = vunpack.c.h.b16 %v6778
        %v8218 = vunpack.c.l.b16 %v6779
        %v8219 = vunpack.c.h.b16 %v6779
        %v8220 = vunpack.c.l.b16 %v6780
        %v8221 = vunpack.c.h.b16 %v6780
        %v8222 = vunpack.c.l.b16 %v6781
        %v8223 = vunpack.c.h.b16 %v6781
        %v8224 = vunpack.c.l.b16 %v6782
        %v8225 = vunpack.c.h.b16 %v6782
        %v8226 = vunpack.c.l.b16 %v6783
        %v8227 = vunpack.c.h.b16 %v6783
        %v8228 = vunpack.c.l.b16 %v6784
        %v8229 = vunpack.c.h.b16 %v6784
        %v8230 = vunpack.c.l.b16 %v6785
        %v8231 = vunpack.c.h.b16 %v6785
        %v8232 = vunpack.c.l.b16 %v6786
        %v8233 = vunpack.c.h.b16 %v6786
        %v8234 = vunpack.c.l.b16 %v6787
        %v8235 = vunpack.c.h.b16 %v6787
        %v8236 = vunpack.c.l.b16 %v6788
        %v8237 = vunpack.c.h.b16 %v6788
        %v8238 = vunpack.c.l.b16 %v6789
        %v8239 = vunpack.c.h.b16 %v6789
        %v8240 = vunpack.c.l.b16 %v6790
        %v8241 = vunpack.c.h.b16 %v6790
        %v8242 = vunpack.c.l.b16 %v6791
        %v8243 = vunpack.c.h.b16 %v6791
        %v8244 = vunpack.c.l.b16 %v6792
        %v8245 = vunpack.c.h.b16 %v6792
        %v8246 = vunpack.c.l.b16 %v6793
        %v8247 = vunpack.c.h.b16 %v6793
        %v8248 = vunpack.c.l.b16 %v6794
        %v8249 = vunpack.c.h.b16 %v6794
        %v8250 = vunpack.c.l.b16 %v6795
        %v8251 = vunpack.c.h.b16 %v6795
        %v8252 = vunpack.c.l.b16 %v6796
        %v8253 = vunpack.c.h.b16 %v6796
        %v8254 = vunpack.c.l.b16 %v6797
        %v8255 = vunpack.c.h.b16 %v6797
        %v8256 = vunpack.c.l.b16 %v6798
        %v8257 = vunpack.c.h.b16 %v6798
        %v8258 = vunpack.c.l.b16 %v6799
        %v8259 = vunpack.c.h.b16 %v6799
        %v8260 = vunpack.c.l.b16 %v6800
        %v8261 = vunpack.c.h.b16 %v6800
        %v8262 = vunpack.c.l.b16 %v6801
        %v8263 = vunpack.c.h.b16 %v6801
        %v8264 = vunpack.c.l.b16 %v6802
        %v8265 = vunpack.c.h.b16 %v6802
        %v8266 = vunpack.c.l.b16 %v6803
        %v8267 = vunpack.c.h.b16 %v6803
        %v8268 = vunpack.c.l.b16 %v6804
        %v8269 = vunpack.c.h.b16 %v6804
        %v8270 = vunpack.c.l.b16 %v6805
        %v8271 = vunpack.c.h.b16 %v6805
        %v8272 = vunpack.c.l.b16 %v6806
        %v8273 = vunpack.c.h.b16 %v6806
        %v8274 = vunpack.c.l.b16 %v6807
        %v8275 = vunpack.c.h.b16 %v6807
        %v8276 = vunpack.c.l.b16 %v6808
        %v8277 = vunpack.c.h.b16 %v6808
        %v8278 = vunpack.c.l.b16 %v6809
        %v8279 = vunpack.c.h.b16 %v6809
        %v8280 = vunpack.c.l.b16 %v6810
        %v8281 = vunpack.c.h.b16 %v6810
        %v8282 = vunpack.c.l.b16 %v6811
        %v8283 = vunpack.c.h.b16 %v6811
        %v8284 = vunpack.c.l.b16 %v6812
        %v8285 = vunpack.c.h.b16 %v6812
        %v8286 = vunpack.c.l.b16 %v6813
        %v8287 = vunpack.c.h.b16 %v6813
        %v8288 = vunpack.c.l.b16 %v6814
        %v8289 = vunpack.c.h.b16 %v6814
        %v8290 = vunpack.c.l.b16 %v6815
        %v8291 = vunpack.c.h.b16 %v6815
        %v8292 = vunpack.c.l.b16 %v6816
        %v8293 = vunpack.c.h.b16 %v6816
        %v8294 = vunpack.c.l.b16 %v6817
        %v8295 = vunpack.c.h.b16 %v6817
        %v8296 = vunpack.c.l.b16 %v6818
        %v8297 = vunpack.c.h.b16 %v6818
        %v8298 = vunpack.c.l.b16 %v6819
        %v8299 = vunpack.c.h.b16 %v6819
        %v8300 = vunpack.c.l.b16 %v6820
        %v8301 = vunpack.c.h.b16 %v6820
        %v8302 = vunpack.c.l.b16 %v6821
        %v8303 = vunpack.c.h.b16 %v6821
        %v8304 = vunpack.c.l.b16 %v6822
        %v8305 = vunpack.c.h.b16 %v6822
        %v8306 = vunpack.c.l.b16 %v6823
        %v8307 = vunpack.c.h.b16 %v6823
        %v8308 = vunpack.c.l.b16 %v6824
        %v8309 = vunpack.c.h.b16 %v6824
        %v8310 = vunpack.c.l.b16 %v6825
        %v8311 = vunpack.c.h.b16 %v6825
        %v8312 = vunpack.c.l.b16 %v6826
        %v8313 = vunpack.c.h.b16 %v6826
        %v8314 = vunpack.c.l.b16 %v6827
        %v8315 = vunpack.c.h.b16 %v6827
        %v8316 = vunpack.c.l.b16 %v6828
        %v8317 = vunpack.c.h.b16 %v6828
        %v8318 = vunpack.c.l.b16 %v6829
        %v8319 = vunpack.c.h.b16 %v6829
        %v8320 = vunpack.c.l.b16 %v6830
        %v8321 = vunpack.c.h.b16 %v6830
        %v8322 = vunpack.c.l.b16 %v6831
        %v8323 = vunpack.c.h.b16 %v6831
        %v8324 = vunpack.c.l.b16 %v6832
        %v8325 = vunpack.c.h.b16 %v6832
        %v8326 = vunpack.c.l.b16 %v6833
        %v8327 = vunpack.c.h.b16 %v6833
        %v8328 = vunpack.c.l.b16 %v6834
        %v8329 = vunpack.c.h.b16 %v6834
        %v8330 = vunpack.c.l.b16 %v6835
        %v8331 = vunpack.c.h.b16 %v6835
        %v8332 = vunpack.c.l.b16 %v6836
        %v8333 = vunpack.c.h.b16 %v6836
        %v8334 = vunpack.c.l.b16 %v6837
        %v8335 = vunpack.c.h.b16 %v6837
        %v8336 = vunpack.c.l.b16 %v6838
        %v8337 = vunpack.c.h.b16 %v6838
        %v8338 = vunpack.c.l.b16 %v6839
        %v8339 = vunpack.c.h.b16 %v6839
        %v8340 = vunpack.c.l.b16 %v6840
        %v8341 = vunpack.c.h.b16 %v6840
        %v8342 = vunpack.c.l.b16 %v6841
        %v8343 = vunpack.c.h.b16 %v6841
        %v8344 = vunpack.c.l.b16 %v6842
        %v8345 = vunpack.c.h.b16 %v6842
        %v8346 = vunpack.c.l.b16 %v6843
        %v8347 = vunpack.c.h.b16 %v6843
        %v8348 = vunpack.c.l.b16 %v6844
        %v8349 = vunpack.c.h.b16 %v6844
        %v8350 = vunpack.c.l.b16 %v6845
        %v8351 = vunpack.c.h.b16 %v6845
        %v8352 = vunpack.c.l.b16 %v6846
        %v8353 = vunpack.c.h.b16 %v6846
        %v8354 = vunpack.c.l.b16 %v6847
        %v8355 = vunpack.c.h.b16 %v6847
        %v8356 = vunpack.c.l.b16 %v6848
        %v8357 = vunpack.c.h.b16 %v6848
        %v8358 = vunpack.c.l.b16 %v6849
        %v8359 = vunpack.c.h.b16 %v6849
        %v8360 = vunpack.c.l.b16 %v6850
        %v8361 = vunpack.c.h.b16 %v6850
        %v8362 = vunpack.c.l.b16 %v6851
        %v8363 = vunpack.c.h.b16 %v6851
        %v8364 = vunpack.c.l.b16 %v6852
        %v8365 = vunpack.c.h.b16 %v6852
        %v8366 = vunpack.c.l.b16 %v6853
        %v8367 = vunpack.c.h.b16 %v6853
        %v8368 = vunpack.c.l.b16 %v6854
        %v8369 = vunpack.c.h.b16 %v6854
        %v8370 = vunpack.c.l.b16 %v6855
        %v8371 = vunpack.c.h.b16 %v6855
        %v8372 = vunpack.c.l.b16 %v6856
        %v8373 = vunpack.c.h.b16 %v6856
        %v8374 = vunpack.c.l.b16 %v6857
        %v8375 = vunpack.c.h.b16 %v6857
        %v8376 = vunpack.c.l.b16 %v6858
        %v8377 = vunpack.c.h.b16 %v6858
        %v8378 = vunpack.c.l.b16 %v6859
        %v8379 = vunpack.c.h.b16 %v6859
        %v8380 = vunpack.c.l.b16 %v6860
        %v8381 = vunpack.c.h.b16 %v6860
        %v8382 = vunpack.c.l.b16 %v6861
        %v8383 = vunpack.c.h.b16 %v6861
        %v8384 = vunpack.c.l.b16 %v6862
        %v8385 = vunpack.c.h.b16 %v6862
        %v8386 = vunpack.c.l.b16 %v6863
        %v8387 = vunpack.c.h.b16 %v6863
        %v8388 = vunpack.c.l.b16 %v6864
        %v8389 = vunpack.c.h.b16 %v6864
        %v8390 = vunpack.c.l.b16 %v6865
        %v8391 = vunpack.c.h.b16 %v6865
        %v8392 = vunpack.c.l.b16 %v6866
        %v8393 = vunpack.c.h.b16 %v6866
        %v8394 = vunpack.c.l.b16 %v6867
        %v8395 = vunpack.c.h.b16 %v6867
        %v8396 = vunpack.c.l.b16 %v6868
        %v8397 = vunpack.c.h.b16 %v6868
        %v8398 = vunpack.c.l.b16 %v6869
        %v8399 = vunpack.c.h.b16 %v6869
        %v8400 = vunpack.c.l.b16 %v6870
        %v8401 = vunpack.c.h.b16 %v6870
        %v8402 = vunpack.c.l.b16 %v6871
        %v8403 = vunpack.c.h.b16 %v6871
        %v8404 = vunpack.c.l.b16 %v6872
        %v8405 = vunpack.c.h.b16 %v6872
        %v8406 = vunpack.c.l.b16 %v6873
        %v8407 = vunpack.c.h.b16 %v6873
        %v8408 = vunpack.c.l.b16 %v6874
        %v8409 = vunpack.c.h.b16 %v6874
        %v8410 = vunpack.c.l.b16 %v6875
        %v8411 = vunpack.c.h.b16 %v6875
        %v8412 = vunpack.c.l.b16 %v6876
        %v8413 = vunpack.c.h.b16 %v6876
        %v8414 = vunpack.c.l.b16 %v6877
        %v8415 = vunpack.c.h.b16 %v6877
        %v8416 = vunpack.c.l.b16 %v6878
        %v8417 = vunpack.c.h.b16 %v6878
        %v8418 = vunpack.c.l.b16 %v6879
        %v8419 = vunpack.c.h.b16 %v6879
        %v8420 = vunpack.c.l.b16 %v6880
        %v8421 = vunpack.c.h.b16 %v6880
        %v8422 = vunpack.c.l.b16 %v6881
        %v8423 = vunpack.c.h.b16 %v6881
        %v8424 = vunpack.c.l.b16 %v6882
        %v8425 = vunpack.c.h.b16 %v6882
        %v8426 = vunpack.c.l.b16 %v6883
        %v8427 = vunpack.c.h.b16 %v6883
        %v8428 = vunpack.c.l.b16 %v6884
        %v8429 = vunpack.c.h.b16 %v6884
        %v8430 = vunpack.c.l.b16 %v6885
        %v8431 = vunpack.c.h.b16 %v6885
        %v8432 = vunpack.c.l.b16 %v6886
        %v8433 = vunpack.c.h.b16 %v6886
        %v8434 = vunpack.c.l.b16 %v6887
        %v8435 = vunpack.c.h.b16 %v6887
        %v8436 = vunpack.c.l.b16 %v6888
        %v8437 = vunpack.c.h.b16 %v6888
        %v8438 = vunpack.c.l.b16 %v6889
        %v8439 = vunpack.c.h.b16 %v6889
        %v8440 = vunpack.c.l.b16 %v6890
        %v8441 = vunpack.c.h.b16 %v6890
        %v8442 = vunpack.c.l.b16 %v6891
        %v8443 = vunpack.c.h.b16 %v6891
        %v8444 = vunpack.c.l.b16 %v6892
        %v8445 = vunpack.c.h.b16 %v6892
        %v8446 = vunpack.c.l.b16 %v6893
        %v8447 = vunpack.c.h.b16 %v6893
        %v8448 = vunpack.c.l.b16 %v6894
        %v8449 = vunpack.c.h.b16 %v6894
        %v8450 = vunpack.c.l.b16 %v6895
        %v8451 = vunpack.c.h.b16 %v6895
        %v8452 = vunpack.c.l.b16 %v6896
        %v8453 = vunpack.c.h.b16 %v6896
        %v8454 = vunpack.c.l.b16 %v6897
        %v8455 = vunpack.c.h.b16 %v6897
        %v8456 = vunpack.c.l.b16 %v6898
        %v8457 = vunpack.c.h.b16 %v6898
        %v8458 = vunpack.c.l.b16 %v6899
        %v8459 = vunpack.c.h.b16 %v6899
        %v8460 = vunpack.c.l.b16 %v6900
        %v8461 = vunpack.c.h.b16 %v6900
        %v8462 = vunpack.c.l.b16 %v6901
        %v8463 = vunpack.c.h.b16 %v6901
        %v8464 = vunpack.c.l.b16 %v6902
        %v8465 = vunpack.c.h.b16 %v6902
        %v8466 = vunpack.c.l.b16 %v6903
        %v8467 = vunpack.c.h.b16 %v6903
        %v8468 = vunpack.c.l.b16 %v6904
        %v8469 = vunpack.c.h.b16 %v6904
        %v8470 = vunpack.c.l.b16 %v6905
        %v8471 = vunpack.c.h.b16 %v6905
        %v8472 = vunpack.c.l.b16 %v6906
        %v8473 = vunpack.c.h.b16 %v6906
        %v8474 = vunpack.c.l.b16 %v6907
        %v8475 = vunpack.c.h.b16 %v6907
        %v8476 = vunpack.c.l.b16 %v6908
        %v8477 = vunpack.c.h.b16 %v6908
        %v8478 = vunpack.c.l.b16 %v6909
        %v8479 = vunpack.c.h.b16 %v6909
        %v8480 = vunpack.c.l.b16 %v6910
        %v8481 = vunpack.c.h.b16 %v6910
        %v8482 = vunpack.c.l.b16 %v6911
        %v8483 = vunpack.c.h.b16 %v6911
        %v8484 = vunpack.c.l.b16 %v6912
        %v8485 = vunpack.c.h.b16 %v6912
        %v8486 = vunpack.c.l.b16 %v6913
        %v8487 = vunpack.c.h.b16 %v6913
        %v8488 = vunpack.c.l.b16 %v6914
        %v8489 = vunpack.c.h.b16 %v6914
        %v8490 = vunpack.c.l.b16 %v6915
        %v8491 = vunpack.c.h.b16 %v6915
        %v8492 = vunpack.c.l.b16 %v6916
        %v8493 = vunpack.c.h.b16 %v6916
        %v8494 = vunpack.c.l.b16 %v6917
        %v8495 = vunpack.c.h.b16 %v6917
        %v8496 = vunpack.c.l.b16 %v6918
        %v8497 = vunpack.c.h.b16 %v6918
        %v8498 = vunpack.c.l.b16 %v6919
        %v8499 = vunpack.c.h.b16 %v6919
        %v8500 = vunpack.c.l.b16 %v6920
        %v8501 = vunpack.c.h.b16 %v6920
        %v8502 = vunpack.c.l.b16 %v6921
        %v8503 = vunpack.c.h.b16 %v6921
        %v8504 = vunpack.c.l.b16 %v6922
        %v8505 = vunpack.c.h.b16 %v6922
        %v8506 = vunpack.c.l.b16 %v6923
        %v8507 = vunpack.c.h.b16 %v6923
        %v8508 = vunpack.c.l.b16 %v6924
        %v8509 = vunpack.c.h.b16 %v6924
        %v8510 = vunpack.c.l.b16 %v6925
        %v8511 = vunpack.c.h.b16 %v6925
        %v8512 = vunpack.c.l.b16 %v6926
        %v8513 = vunpack.c.h.b16 %v6926
        %v8514 = vunpack.c.l.b16 %v6927
        %v8515 = vunpack.c.h.b16 %v6927
        %v8516 = vunpack.c.l.b16 %v6928
        %v8517 = vunpack.c.h.b16 %v6928
        %v8518 = vunpack.c.l.b16 %v6929
        %v8519 = vunpack.c.h.b16 %v6929
        %v8520 = vunpack.c.l.b16 %v6930
        %v8521 = vunpack.c.h.b16 %v6930
        %v8522 = vunpack.c.l.b16 %v6931
        %v8523 = vunpack.c.h.b16 %v6931
        %v8524 = vunpack.c.l.b16 %v6932
        %v8525 = vunpack.c.h.b16 %v6932
        %v8526 = vunpack.c.l.b16 %v6933
        %v8527 = vunpack.c.h.b16 %v6933
        %v8528 = vunpack.c.l.b16 %v6934
        %v8529 = vunpack.c.h.b16 %v6934
        %v8530 = vunpack.c.l.b16 %v6935
        %v8531 = vunpack.c.h.b16 %v6935
        %v8532 = vunpack.c.l.b16 %v6936
        %v8533 = vunpack.c.h.b16 %v6936
        %v8534 = vunpack.c.l.b16 %v6937
        %v8535 = vunpack.c.h.b16 %v6937
        %v8536 = vunpack.c.l.b16 %v6938
        %v8537 = vunpack.c.h.b16 %v6938
        %v8538 = vunpack.c.l.b16 %v6939
        %v8539 = vunpack.c.h.b16 %v6939
        %v8540 = vunpack.c.l.b16 %v6940
        %v8541 = vunpack.c.h.b16 %v6940
        %v8542 = vunpack.c.l.b16 %v6941
        %v8543 = vunpack.c.h.b16 %v6941
        %v8544 = vunpack.c.l.b16 %v6942
        %v8545 = vunpack.c.h.b16 %v6942
        %v8546 = vunpack.c.l.b16 %v6943
        %v8547 = vunpack.c.h.b16 %v6943
        %v8548 = vunpack.c.l.b16 %v6944
        %v8549 = vunpack.c.h.b16 %v6944
        %v8550 = vunpack.c.l.b16 %v6945
        %v8551 = vunpack.c.h.b16 %v6945
        %v8552 = vunpack.c.l.b16 %v6946
        %v8553 = vunpack.c.h.b16 %v6946
        %v8554 = vunpack.c.l.b16 %v6947
        %v8555 = vunpack.c.h.b16 %v6947
        %v8556 = vunpack.c.l.b16 %v6948
        %v8557 = vunpack.c.h.b16 %v6948
        %v8558 = vunpack.c.l.b16 %v6949
        %v8559 = vunpack.c.h.b16 %v6949
        %v8560 = vunpack.c.l.b16 %v6950
        %v8561 = vunpack.c.h.b16 %v6950
        %v8562 = vunpack.c.l.b16 %v6951
        %v8563 = vunpack.c.h.b16 %v6951
        %v8564 = vunpack.c.l.b16 %v6952
        %v8565 = vunpack.c.h.b16 %v6952
        %v8566 = vunpack.c.l.b16 %v6953
        %v8567 = vunpack.c.h.b16 %v6953
        %v8568 = vunpack.c.l.b16 %v6954
        %v8569 = vunpack.c.h.b16 %v6954
        %v8570 = vunpack.c.l.b16 %v6955
        %v8571 = vunpack.c.h.b16 %v6955
        %v8572 = vunpack.c.l.b16 %v6956
        %v8573 = vunpack.c.h.b16 %v6956
        %v8574 = vunpack.c.l.b16 %v6957
        %v8575 = vunpack.c.h.b16 %v6957
        %v8576 = vunpack.c.l.b16 %v6958
        %v8577 = vunpack.c.h.b16 %v6958
        %v8578 = vunpack.c.l.b16 %v6959
        %v8579 = vunpack.c.h.b16 %v6959
        %v8580 = vunpack.c.l.b16 %v6960
        %v8581 = vunpack.c.h.b16 %v6960
        %v8582 = vunpack.c.l.b16 %v6961
        %v8583 = vunpack.c.h.b16 %v6961
        %v8584 = vunpack.c.l.b16 %v6962
        %v8585 = vunpack.c.h.b16 %v6962
        %v8586 = vunpack.c.l.b16 %v6963
        %v8587 = vunpack.c.h.b16 %v6963
        %v8588 = vunpack.c.l.b16 %v6964
        %v8589 = vunpack.c.h.b16 %v6964
        %v8590 = vunpack.c.l.b16 %v6965
        %v8591 = vunpack.c.h.b16 %v6965
        %v8592 = vunpack.c.l.b16 %v6966
        %v8593 = vunpack.c.h.b16 %v6966
        %v8594 = vunpack.c.l.b16 %v6967
        %v8595 = vunpack.c.h.b16 %v6967
        %v8596 = vunpack.c.l.b16 %v6968
        %v8597 = vunpack.c.h.b16 %v6968
        %v8598 = vunpack.c.l.b16 %v6969
        %v8599 = vunpack.c.h.b16 %v6969
        %v8600 = vunpack.c.l.b16 %v6970
        %v8601 = vunpack.c.h.b16 %v6970
        %v8602 = vunpack.c.l.b16 %v6971
        %v8603 = vunpack.c.h.b16 %v6971
        %v8604 = vunpack.c.l.b16 %v6972
        %v8605 = vunpack.c.h.b16 %v6972
        %v8606 = vunpack.c.l.b16 %v6973
        %v8607 = vunpack.c.h.b16 %v6973
        %v8608 = vunpack.c.l.b16 %v6974
        %v8609 = vunpack.c.h.b16 %v6974
        %v8610 = vunpack.c.l.b16 %v6975
        %v8611 = vunpack.c.h.b16 %v6975
        %v8612 = vunpack.c.l.b16 %v6976
        %v8613 = vunpack.c.h.b16 %v6976
        %v8614 = vunpack.c.l.b16 %v6977
        %v8615 = vunpack.c.h.b16 %v6977
        %v8616 = vunpack.c.l.b16 %v6978
        %v8617 = vunpack.c.h.b16 %v6978
        %v8618 = vunpack.c.l.b16 %v6979
        %v8619 = vunpack.c.h.b16 %v6979
        %v8620 = vunpack.c.l.b16 %v6980
        %v8621 = vunpack.c.h.b16 %v6980
        %v8622 = vunpack.c.l.b16 %v6981
        %v8623 = vunpack.c.h.b16 %v6981
        %v8624 = vunpack.c.l.b16 %v6982
        %v8625 = vunpack.c.h.b16 %v6982
        %v8626 = vunpack.c.l.b16 %v6983
        %v8627 = vunpack.c.h.b16 %v6983
        %v8628 = vunpack.c.l.b16 %v6984
        %v8629 = vunpack.c.h.b16 %v6984
        %v8630 = vunpack.c.l.b16 %v6985
        %v8631 = vunpack.c.h.b16 %v6985
        %v8632 = vunpack.c.l.b16 %v6986
        %v8633 = vunpack.c.h.b16 %v6986
        %v8634 = vunpack.c.l.b16 %v6987
        %v8635 = vunpack.c.h.b16 %v6987
        %v8636 = vunpack.c.l.b16 %v6988
        %v8637 = vunpack.c.h.b16 %v6988
        %v8638 = vunpack.c.l.b16 %v6989
        %v8639 = vunpack.c.h.b16 %v6989
        %v8640 = vunpack.c.l.b16 %v6990
        %v8641 = vunpack.c.h.b16 %v6990
        %v8642 = vunpack.c.l.b16 %v6991
        %v8643 = vunpack.c.h.b16 %v6991
        %v8644 = vunpack.c.l.b16 %v6992
        %v8645 = vunpack.c.h.b16 %v6992
        %v8646 = vunpack.c.l.b16 %v6993
        %v8647 = vunpack.c.h.b16 %v6993
        %v8648 = vunpack.c.l.b16 %v6994
        %v8649 = vunpack.c.h.b16 %v6994
        %v8650 = vunpack.c.l.b16 %v6995
        %v8651 = vunpack.c.h.b16 %v6995
        %v8652 = vunpack.c.l.b16 %v6996
        %v8653 = vunpack.c.h.b16 %v6996
        %v8654 = vunpack.c.l.b16 %v6997
        %v8655 = vunpack.c.h.b16 %v6997
        %v8656 = vunpack.c.l.b16 %v6998
        %v8657 = vunpack.c.h.b16 %v6998
        %v8658 = vunpack.c.l.b16 %v6999
        %v8659 = vunpack.c.h.b16 %v6999
        %v8660 = vunpack.c.l.b16 %v7000
        %v8661 = vunpack.c.h.b16 %v7000
        %v8662 = vunpack.c.l.b16 %v7001
        %v8663 = vunpack.c.h.b16 %v7001
        %v8664 = vunpack.c.l.b16 %v7002
        %v8665 = vunpack.c.h.b16 %v7002
        %v8666 = vunpack.c.l.b16 %v7003
        %v8667 = vunpack.c.h.b16 %v7003
        %v8668 = vunpack.c.l.b16 %v7004
        %v8669 = vunpack.c.h.b16 %v7004
        %v8670 = vunpack.c.l.b16 %v7005
        %v8671 = vunpack.c.h.b16 %v7005
        %v8672 = vunpack.c.l.b16 %v7006
        %v8673 = vunpack.c.h.b16 %v7006
        %v8674 = vunpack.c.l.b16 %v7007
        %v8675 = vunpack.c.h.b16 %v7007
        %v8676 = vunpack.c.l.b16 %v7008
        %v8677 = vunpack.c.h.b16 %v7008
        %v8678 = vunpack.c.l.b16 %v7009
        %v8679 = vunpack.c.h.b16 %v7009
        %v8680 = vunpack.c.l.b16 %v7010
        %v8681 = vunpack.c.h.b16 %v7010
        %v8682 = vunpack.c.l.b16 %v7011
        %v8683 = vunpack.c.h.b16 %v7011
        %v8684 = vunpack.c.l.b16 %v7012
        %v8685 = vunpack.c.h.b16 %v7012
        %v8686 = vunpack.c.l.b16 %v7013
        %v8687 = vunpack.c.h.b16 %v7013
        %v8688 = vunpack.c.l.b16 %v7014
        %v8689 = vunpack.c.h.b16 %v7014
        %v8690 = vunpack.c.l.b16 %v7015
        %v8691 = vunpack.c.h.b16 %v7015
        %v8692 = vunpack.c.l.b16 %v7016
        %v8693 = vunpack.c.h.b16 %v7016
        %v8694 = vunpack.c.l.b16 %v7017
        %v8695 = vunpack.c.h.b16 %v7017
        %v8696 = vunpack.c.l.b16 %v7018
        %v8697 = vunpack.c.h.b16 %v7018
        %v8698 = vunpack.c.l.b16 %v7019
        %v8699 = vunpack.c.h.b16 %v7019
        %v8700 = vunpack.c.l.b16 %v7020
        %v8701 = vunpack.c.h.b16 %v7020
        %v8702 = vunpack.c.l.b16 %v7021
        %v8703 = vunpack.c.h.b16 %v7021
        %v8704 = vunpack.c.l.b16 %v7022
        %v8705 = vunpack.c.h.b16 %v7022
        %v8706 = vunpack.c.l.b16 %v7023
        %v8707 = vunpack.c.h.b16 %v7023
        %v8708 = vunpack.c.l.b16 %v7024
        %v8709 = vunpack.c.h.b16 %v7024
        %v8710 = vunpack.c.l.b16 %v7025
        %v8711 = vunpack.c.h.b16 %v7025
        %v8712 = vunpack.c.l.b16 %v7026
        %v8713 = vunpack.c.h.b16 %v7026
        %v8714 = vunpack.c.l.b16 %v7027
        %v8715 = vunpack.c.h.b16 %v7027
        %v8716 = vunpack.c.l.b16 %v7028
        %v8717 = vunpack.c.h.b16 %v7028
        %v8718 = vunpack.c.l.b16 %v7029
        %v8719 = vunpack.c.h.b16 %v7029
        %v8720 = vunpack.c.l.b16 %v7030
        %v8721 = vunpack.c.h.b16 %v7030
        %v8722 = vunpack.c.l.b16 %v7031
        %v8723 = vunpack.c.h.b16 %v7031
        %v8724 = vunpack.c.l.b16 %v7032
        %v8725 = vunpack.c.h.b16 %v7032
        %v8726 = vunpack.c.l.b16 %v7033
        %v8727 = vunpack.c.h.b16 %v7033
        %v8728 = vunpack.c.l.b16 %v7034
        %v8729 = vunpack.c.h.b16 %v7034
        %v8730 = vunpack.c.l.b16 %v7035
        %v8731 = vunpack.c.h.b16 %v7035
        %v8732 = vunpack.c.l.b16 %v7036
        %v8733 = vunpack.c.h.b16 %v7036
        %v8734 = vunpack.c.l.b16 %v7037
        %v8735 = vunpack.c.h.b16 %v7037
        %v8736 = vunpack.c.l.b16 %v7038
        %v8737 = vunpack.c.h.b16 %v7038
        %v8738 = vunpack.c.l.b16 %v7039
        %v8739 = vunpack.c.h.b16 %v7039
        %v8740 = vunpack.c.l.b16 %v7040
        %v8741 = vunpack.c.h.b16 %v7040
        %v8742 = vunpack.c.l.b16 %v7041
        %v8743 = vunpack.c.h.b16 %v7041
        %v8744 = vunpack.c.l.b16 %v7042
        %v8745 = vunpack.c.h.b16 %v7042
        %v8746 = vunpack.c.l.b16 %v7043
        %v8747 = vunpack.c.h.b16 %v7043
        %v8748 = vunpack.c.l.b16 %v7044
        %v8749 = vunpack.c.h.b16 %v7044
        %v8750 = vunpack.c.l.b16 %v7045
        %v8751 = vunpack.c.h.b16 %v7045
        %v8752 = vunpack.c.l.b16 %v7046
        %v8753 = vunpack.c.h.b16 %v7046
        %v8754 = vunpack.c.l.b16 %v7047
        %v8755 = vunpack.c.h.b16 %v7047
        %v8756 = vunpack.c.l.b16 %v7048
        %v8757 = vunpack.c.h.b16 %v7048
        %v8758 = vunpack.c.l.b16 %v7049
        %v8759 = vunpack.c.h.b16 %v7049
        %v8760 = vunpack.c.l.b16 %v7050
        %v8761 = vunpack.c.h.b16 %v7050
        %v8762 = vunpack.c.l.b16 %v7051
        %v8763 = vunpack.c.h.b16 %v7051
        %v8764 = vunpack.c.l.b16 %v7052
        %v8765 = vunpack.c.h.b16 %v7052
        %v8766 = vunpack.c.l.b16 %v7053
        %v8767 = vunpack.c.h.b16 %v7053
        %v8768 = vunpack.c.l.b16 %v7054
        %v8769 = vunpack.c.h.b16 %v7054
        %v8770 = vunpack.c.l.b16 %v7055
        %v8771 = vunpack.c.h.b16 %v7055
        %v8772 = vunpack.c.l.b16 %v7056
        %v8773 = vunpack.c.h.b16 %v7056
        %v8774 = vunpack.c.l.b16 %v7057
        %v8775 = vunpack.c.h.b16 %v7057
        %v8776 = vunpack.c.l.b16 %v7058
        %v8777 = vunpack.c.h.b16 %v7058
        %v8778 = vunpack.c.l.b16 %v7059
        %v8779 = vunpack.c.h.b16 %v7059
        %v8780 = vunpack.c.l.b16 %v7060
        %v8781 = vunpack.c.h.b16 %v7060
        %v8782 = vunpack.c.l.b16 %v7061
        %v8783 = vunpack.c.h.b16 %v7061
        %v8784 = vunpack.c.l.b16 %v7062
        %v8785 = vunpack.c.h.b16 %v7062
        %v8786 = vunpack.c.l.b16 %v7063
        %v8787 = vunpack.c.h.b16 %v7063
        %v8788 = vunpack.c.l.b16 %v7064
        %v8789 = vunpack.c.h.b16 %v7064
        %v8790 = vunpack.c.l.b16 %v7065
        %v8791 = vunpack.c.h.b16 %v7065
        %v8792 = vunpack.c.l.b16 %v7066
        %v8793 = vunpack.c.h.b16 %v7066
        %v8794 = vunpack.c.l.b16 %v7067
        %v8795 = vunpack.c.h.b16 %v7067
        %v8796 = vunpack.c.l.b16 %v7068
        %v8797 = vunpack.c.h.b16 %v7068
        %v8798 = vpack.c.b16 %v7650, %v7646
        %v8799 = vpack.c.b16 %v7651, %v7647
        %v8800 = vpack.c.b16 %v7652, %v7648
        %v8801 = vpack.c.b16 %v7653, %v7649
        %v8802 = vpack.c.b16 %v7658, %v7654
        %v8803 = vpack.c.b16 %v7659, %v7655
        %v8804 = vpack.c.b16 %v7660, %v7656
        %v8805 = vpack.c.b16 %v7661, %v7657
        %v8806 = vpack.c.b16 %v7666, %v7662
        %v8807 = vpack.c.b16 %v7667, %v7663
        %v8808 = vpack.c.b16 %v7668, %v7664
        %v8809 = vpack.c.b16 %v7669, %v7665
        %v8810 = vpack.c.b16 %v7674, %v7670
        %v8811 = vpack.c.b16 %v7675, %v7671
        %v8812 = vpack.c.b16 %v7676, %v7672
        %v8813 = vpack.c.b16 %v7677, %v7673
        %v8814 = vpack.c.b16 %v7682, %v7678
        %v8815 = vpack.c.b16 %v7683, %v7679
        %v8816 = vpack.c.b16 %v7684, %v7680
        %v8817 = vpack.c.b16 %v7685, %v7681
        %v8818 = vpack.c.b16 %v7690, %v7686
        %v8819 = vpack.c.b16 %v7691, %v7687
        %v8820 = vpack.c.b16 %v7692, %v7688
        %v8821 = vpack.c.b16 %v7693, %v7689
        %v8822 = vpack.c.b16 %v7698, %v7694
        %v8823 = vpack.c.b16 %v7699, %v7695
        %v8824 = vpack.c.b16 %v7700, %v7696
        %v8825 = vpack.c.b16 %v7701, %v7697
        %v8826 = vpack.c.b16 %v7706, %v7702
        %v8827 = vpack.c.b16 %v7707, %v7703
        %v8828 = vpack.c.b16 %v7708, %v7704
        %v8829 = vpack.c.b16 %v7709, %v7705
        %v8830 = vpack.c.b16 %v7714, %v7710
        %v8831 = vpack.c.b16 %v7715, %v7711
        %v8832 = vpack.c.b16 %v7716, %v7712
        %v8833 = vpack.c.b16 %v7717, %v7713
        %v8834 = vpack.c.b16 %v7722, %v7718
        %v8835 = vpack.c.b16 %v7723, %v7719
        %v8836 = vpack.c.b16 %v7724, %v7720
        %v8837 = vpack.c.b16 %v7725, %v7721
        %v8838 = vpack.c.b16 %v7730, %v7726
        %v8839 = vpack.c.b16 %v7731, %v7727
        %v8840 = vpack.c.b16 %v7732, %v7728
        %v8841 = vpack.c.b16 %v7733, %v7729
        %v8842 = vpack.c.b16 %v7738, %v7734
        %v8843 = vpack.c.b16 %v7739, %v7735
        %v8844 = vpack.c.b16 %v7740, %v7736
        %v8845 = vpack.c.b16 %v7741, %v7737
        %v8846 = vpack.c.b16 %v7746, %v7742
        %v8847 = vpack.c.b16 %v7747, %v7743
        %v8848 = vpack.c.b16 %v7748, %v7744
        %v8849 = vpack.c.b16 %v7749, %v7745
        %v8850 = vpack.c.b16 %v7754, %v7750
        %v8851 = vpack.c.b16 %v7755, %v7751
        %v8852 = vpack.c.b16 %v7756, %v7752
        %v8853 = vpack.c.b16 %v7757, %v7753
        %v8854 = vpack.c.b16 %v7762, %v7758
        %v8855 = vpack.c.b16 %v7763, %v7759
        %v8856 = vpack.c.b16 %v7764, %v7760
        %v8857 = vpack.c.b16 %v7765, %v7761
        %v8858 = vpack.c.b16 %v7770, %v7766
        %v8859 = vpack.c.b16 %v7771, %v7767
        %v8860 = vpack.c.b16 %v7772, %v7768
        %v8861 = vpack.c.b16 %v7773, %v7769
        %v8862 = vpack.c.b16 %v7778, %v7774
        %v8863 = vpack.c.b16 %v7779, %v7775
        %v8864 = vpack.c.b16 %v7780, %v7776
        %v8865 = vpack.c.b16 %v7781, %v7777
        %v8866 = vpack.c.b16 %v7786, %v7782
        %v8867 = vpack.c.b16 %v7787, %v7783
        %v8868 = vpack.c.b16 %v7788, %v7784
        %v8869 = vpack.c.b16 %v7789, %v7785
        %v8870 = vpack.c.b16 %v7794, %v7790
        %v8871 = vpack.c.b16 %v7795, %v7791
        %v8872 = vpack.c.b16 %v7796, %v7792
        %v8873 = vpack.c.b16 %v7797, %v7793
        %v8874 = vpack.c.b16 %v7802, %v7798
        %v8875 = vpack.c.b16 %v7803, %v7799
        %v8876 = vpack.c.b16 %v7804, %v7800
        %v8877 = vpack.c.b16 %v7805, %v7801
        %v8878 = vpack.c.b16 %v7810, %v7806
        %v8879 = vpack.c.b16 %v7811, %v7807
        %v8880 = vpack.c.b16 %v7812, %v7808
        %v8881 = vpack.c.b16 %v7813, %v7809
        %v8882 = vpack.c.b16 %v7818, %v7814
        %v8883 = vpack.c.b16 %v7819, %v7815
        %v8884 = vpack.c.b16 %v7820, %v7816
        %v8885 = vpack.c.b16 %v7821, %v7817
        %v8886 = vpack.c.b16 %v7826, %v7822
        %v8887 = vpack.c.b16 %v7827, %v7823
        %v8888 = vpack.c.b16 %v7828, %v7824
        %v8889 = vpack.c.b16 %v7829, %v7825
        %v8890 = vpack.c.b16 %v7834, %v7830
        %v8891 = vpack.c.b16 %v7835, %v7831
        %v8892 = vpack.c.b16 %v7836, %v7832
        %v8893 = vpack.c.b16 %v7837, %v7833
        %v8894 = vpack.c.b16 %v7842, %v7838
        %v8895 = vpack.c.b16 %v7843, %v7839
        %v8896 = vpack.c.b16 %v7844, %v7840
        %v8897 = vpack.c.b16 %v7845, %v7841
        %v8898 = vpack.c.b16 %v7850, %v7846
        %v8899 = vpack.c.b16 %v7851, %v7847
        %v8900 = vpack.c.b16 %v7852, %v7848
        %v8901 = vpack.c.b16 %v7853, %v7849
        %v8902 = vpack.c.b16 %v7858, %v7854
        %v8903 = vpack.c.b16 %v7859, %v7855
        %v8904 = vpack.c.b16 %v7860, %v7856
        %v8905 = vpack.c.b16 %v7861, %v7857
        %v8906 = vpack.c.b16 %v7866, %v7862
        %v8907 = vpack.c.b16 %v7867, %v7863
        %v8908 = vpack.c.b16 %v7868, %v7864
        %v8909 = vpack.c.b16 %v7869, %v7865
        %v8910 = vpack.c.b16 %v7874, %v7870
        %v8911 = vpack.c.b16 %v7875, %v7871
        %v8912 = vpack.c.b16 %v7876, %v7872
        %v8913 = vpack.c.b16 %v7877, %v7873
        %v8914 = vpack.c.b16 %v7882, %v7878
        %v8915 = vpack.c.b16 %v7883, %v7879
        %v8916 = vpack.c.b16 %v7884, %v7880
        %v8917 = vpack.c.b16 %v7885, %v7881
        %v8918 = vpack.c.b16 %v7890, %v7886
        %v8919 = vpack.c.b16 %v7891, %v7887
        %v8920 = vpack.c.b16 %v7892, %v7888
        %v8921 = vpack.c.b16 %v7893, %v7889
        %v8922 = vpack.c.b16 %v7898, %v7894
        %v8923 = vpack.c.b16 %v7899, %v7895
        %v8924 = vpack.c.b16 %v7900, %v7896
        %v8925 = vpack.c.b16 %v7901, %v7897
        %v8926 = vpack.c.b16 %v7906, %v7902
        %v8927 = vpack.c.b16 %v7907, %v7903
        %v8928 = vpack.c.b16 %v7908, %v7904
        %v8929 = vpack.c.b16 %v7909, %v7905
        %v8930 = vpack.c.b16 %v7914, %v7910
        %v8931 = vpack.c.b16 %v7915, %v7911
        %v8932 = vpack.c.b16 %v7916, %v7912
        %v8933 = vpack.c.b16 %v7917, %v7913
        %v8934 = vpack.c.b16 %v7922, %v7918
        %v8935 = vpack.c.b16 %v7923, %v7919
        %v8936 = vpack.c.b16 %v7924, %v7920
        %v8937 = vpack.c.b16 %v7925, %v7921
        %v8938 = vpack.c.b16 %v7930, %v7926
        %v8939 = vpack.c.b16 %v7931, %v7927
        %v8940 = vpack.c.b16 %v7932, %v7928
        %v8941 = vpack.c.b16 %v7933, %v7929
        %v8942 = vpack.c.b16 %v7938, %v7934
        %v8943 = vpack.c.b16 %v7939, %v7935
        %v8944 = vpack.c.b16 %v7940, %v7936
        %v8945 = vpack.c.b16 %v7941, %v7937
        %v8946 = vpack.c.b16 %v7946, %v7942
        %v8947 = vpack.c.b16 %v7947, %v7943
        %v8948 = vpack.c.b16 %v7948, %v7944
        %v8949 = vpack.c.b16 %v7949, %v7945
        %v8950 = vpack.c.b16 %v7954, %v7950
        %v8951 = vpack.c.b16 %v7955, %v7951
        %v8952 = vpack.c.b16 %v7956, %v7952
        %v8953 = vpack.c.b16 %v7957, %v7953
        %v8954 = vpack.c.b16 %v7962, %v7958
        %v8955 = vpack.c.b16 %v7963, %v7959
        %v8956 = vpack.c.b16 %v7964, %v7960
        %v8957 = vpack.c.b16 %v7965, %v7961
        %v8958 = vpack.c.b16 %v7970, %v7966
        %v8959 = vpack.c.b16 %v7971, %v7967
        %v8960 = vpack.c.b16 %v7972, %v7968
        %v8961 = vpack.c.b16 %v7973, %v7969
        %v8962 = vpack.c.b16 %v7978, %v7974
        %v8963 = vpack.c.b16 %v7979, %v7975
        %v8964 = vpack.c.b16 %v7980, %v7976
        %v8965 = vpack.c.b16 %v7981, %v7977
        %v8966 = vpack.c.b16 %v7986, %v7982
        %v8967 = vpack.c.b16 %v7987, %v7983
        %v8968 = vpack.c.b16 %v7988, %v7984
        %v8969 = vpack.c.b16 %v7989, %v7985
        %v8970 = vpack.c.b16 %v7994, %v7990
        %v8971 = vpack.c.b16 %v7995, %v7991
        %v8972 = vpack.c.b16 %v7996, %v7992
        %v8973 = vpack.c.b16 %v7997, %v7993
        %v8974 = vpack.c.b16 %v8002, %v7998
        %v8975 = vpack.c.b16 %v8003, %v7999
        %v8976 = vpack.c.b16 %v8004, %v8000
        %v8977 = vpack.c.b16 %v8005, %v8001
        %v8978 = vpack.c.b16 %v8010, %v8006
        %v8979 = vpack.c.b16 %v8011, %v8007
        %v8980 = vpack.c.b16 %v8012, %v8008
        %v8981 = vpack.c.b16 %v8013, %v8009
        %v8982 = vpack.c.b16 %v8018, %v8014
        %v8983 = vpack.c.b16 %v8019, %v8015
        %v8984 = vpack.c.b16 %v8020, %v8016
        %v8985 = vpack.c.b16 %v8021, %v8017
        %v8986 = vpack.c.b16 %v8026, %v8022
        %v8987 = vpack.c.b16 %v8027, %v8023
        %v8988 = vpack.c.b16 %v8028, %v8024
        %v8989 = vpack.c.b16 %v8029, %v8025
        %v8990 = vpack.c.b16 %v8034, %v8030
        %v8991 = vpack.c.b16 %v8035, %v8031
        %v8992 = vpack.c.b16 %v8036, %v8032
        %v8993 = vpack.c.b16 %v8037, %v8033
        %v8994 = vpack.c.b16 %v8042, %v8038
        %v8995 = vpack.c.b16 %v8043, %v8039
        %v8996 = vpack.c.b16 %v8044, %v8040
        %v8997 = vpack.c.b16 %v8045, %v8041
        %v8998 = vpack.c.b16 %v8050, %v8046
        %v8999 = vpack.c.b16 %v8051, %v8047
        %v9000 = vpack.c.b16 %v8052, %v8048
        %v9001 = vpack.c.b16 %v8053, %v8049
        %v9002 = vpack.c.b16 %v8058, %v8054
        %v9003 = vpack.c.b16 %v8059, %v8055
        %v9004 = vpack.c.b16 %v8060, %v8056
        %v9005 = vpack.c.b16 %v8061, %v8057
        %v9006 = vpack.c.b16 %v8066, %v8062
        %v9007 = vpack.c.b16 %v8067, %v8063
        %v9008 = vpack.c.b16 %v8068, %v8064
        %v9009 = vpack.c.b16 %v8069, %v8065
        %v9010 = vpack.c.b16 %v8074, %v8070
        %v9011 = vpack.c.b16 %v8075, %v8071
        %v9012 = vpack.c.b16 %v8076, %v8072
        %v9013 = vpack.c.b16 %v8077, %v8073
        %v9014 = vpack.c.b16 %v8082, %v8078
        %v9015 = vpack.c.b16 %v8083, %v8079
        %v9016 = vpack.c.b16 %v8084, %v8080
        %v9017 = vpack.c.b16 %v8085, %v8081
        %v9018 = vpack.c.b16 %v8090, %v8086
        %v9019 = vpack.c.b16 %v8091, %v8087
        %v9020 = vpack.c.b16 %v8092, %v8088
        %v9021 = vpack.c.b16 %v8093, %v8089
        %v9022 = vpack.c.b16 %v8098, %v8094
        %v9023 = vpack.c.b16 %v8099, %v8095
        %v9024 = vpack.c.b16 %v8100, %v8096
        %v9025 = vpack.c.b16 %v8101, %v8097
        %v9026 = vpack.c.b16 %v8106, %v8102
        %v9027 = vpack.c.b16 %v8107, %v8103
        %v9028 = vpack.c.b16 %v8108, %v8104
        %v9029 = vpack.c.b16 %v8109, %v8105
        %v9030 = vpack.c.b16 %v8114, %v8110
        %v9031 = vpack.c.b16 %v8115, %v8111
        %v9032 = vpack.c.b16 %v8116, %v8112
        %v9033 = vpack.c.b16 %v8117, %v8113
        %v9034 = vpack.c.b16 %v8122, %v8118
        %v9035 = vpack.c.b16 %v8123, %v8119
        %v9036 = vpack.c.b16 %v8124, %v8120
        %v9037 = vpack.c.b16 %v8125, %v8121
        %v9038 = vpack.c.b16 %v8130, %v8126
        %v9039 = vpack.c.b16 %v8131, %v8127
        %v9040 = vpack.c.b16 %v8132, %v8128
        %v9041 = vpack.c.b16 %v8133, %v8129
        %v9042 = vpack.c.b16 %v8138, %v8134
        %v9043 = vpack.c.b16 %v8139, %v8135
        %v9044 = vpack.c.b16 %v8140, %v8136
        %v9045 = vpack.c.b16 %v8141, %v8137
        %v9046 = vpack.c.b16 %v8146, %v8142
        %v9047 = vpack.c.b16 %v8147, %v8143
        %v9048 = vpack.c.b16 %v8148, %v8144
        %v9049 = vpack.c.b16 %v8149, %v8145
        %v9050 = vpack.c.b16 %v8154, %v8150
        %v9051 = vpack.c.b16 %v8155, %v8151
        %v9052 = vpack.c.b16 %v8156, %v8152
        %v9053 = vpack.c.b16 %v8157, %v8153
        %v9054 = vpack.c.b16 %v8162, %v8158
        %v9055 = vpack.c.b16 %v8163, %v8159
        %v9056 = vpack.c.b16 %v8164, %v8160
        %v9057 = vpack.c.b16 %v8165, %v8161
        %v9058 = vpack.c.b16 %v8170, %v8166
        %v9059 = vpack.c.b16 %v8171, %v8167
        %v9060 = vpack.c.b16 %v8172, %v8168
        %v9061 = vpack.c.b16 %v8173, %v8169
        %v9062 = vpack.c.b16 %v8178, %v8174
        %v9063 = vpack.c.b16 %v8179, %v8175
        %v9064 = vpack.c.b16 %v8180, %v8176
        %v9065 = vpack.c.b16 %v8181, %v8177
        %v9066 = vpack.c.b16 %v8186, %v8182
        %v9067 = vpack.c.b16 %v8187, %v8183
        %v9068 = vpack.c.b16 %v8188, %v8184
        %v9069 = vpack.c.b16 %v8189, %v8185
        %v9070 = vpack.c.b16 %v8194, %v8190
        %v9071 = vpack.c.b16 %v8195, %v8191
        %v9072 = vpack.c.b16 %v8196, %v8192
        %v9073 = vpack.c.b16 %v8197, %v8193
        %v9074 = vpack.c.b16 %v8202, %v8198
        %v9075 = vpack.c.b16 %v8203, %v8199
        %v9076 = vpack.c.b16 %v8204, %v8200
        %v9077 = vpack.c.b16 %v8205, %v8201
        %v9078 = vpack.c.b16 %v8210, %v8206
        %v9079 = vpack.c.b16 %v8211, %v8207
        %v9080 = vpack.c.b16 %v8212, %v8208
        %v9081 = vpack.c.b16 %v8213, %v8209
        %v9082 = vpack.c.b16 %v8218, %v8214
        %v9083 = vpack.c.b16 %v8219, %v8215
        %v9084 = vpack.c.b16 %v8220, %v8216
        %v9085 = vpack.c.b16 %v8221, %v8217
        %v9086 = vpack.c.b16 %v8226, %v8222
        %v9087 = vpack.c.b16 %v8227, %v8223
        %v9088 = vpack.c.b16 %v8228, %v8224
        %v9089 = vpack.c.b16 %v8229, %v8225
        %v9090 = vpack.c.b16 %v8234, %v8230
        %v9091 = vpack.c.b16 %v8235, %v8231
        %v9092 = vpack.c.b16 %v8236, %v8232
        %v9093 = vpack.c.b16 %v8237, %v8233
        %v9094 = vpack.c.b16 %v8242, %v8238
        %v9095 = vpack.c.b16 %v8243, %v8239
        %v9096 = vpack.c.b16 %v8244, %v8240
        %v9097 = vpack.c.b16 %v8245, %v8241
        %v9098 = vpack.c.b16 %v8250, %v8246
        %v9099 = vpack.c.b16 %v8251, %v8247
        %v9100 = vpack.c.b16 %v8252, %v8248
        %v9101 = vpack.c.b16 %v8253, %v8249
        %v9102 = vpack.c.b16 %v8258, %v8254
        %v9103 = vpack.c.b16 %v8259, %v8255
        %v9104 = vpack.c.b16 %v8260, %v8256
        %v9105 = vpack.c.b16 %v8261, %v8257
        %v9106 = vpack.c.b16 %v8266, %v8262
        %v9107 = vpack.c.b16 %v8267, %v8263
        %v9108 = vpack.c.b16 %v8268, %v8264
        %v9109 = vpack.c.b16 %v8269, %v8265
        %v9110 = vpack.c.b16 %v8274, %v8270
        %v9111 = vpack.c.b16 %v8275, %v8271
        %v9112 = vpack.c.b16 %v8276, %v8272
        %v9113 = vpack.c.b16 %v8277, %v8273
        %v9114 = vpack.c.b16 %v8282, %v8278
        %v9115 = vpack.c.b16 %v8283, %v8279
        %v9116 = vpack.c.b16 %v8284, %v8280
        %v9117 = vpack.c.b16 %v8285, %v8281
        %v9118 = vpack.c.b16 %v8290, %v8286
        %v9119 = vpack.c.b16 %v8291, %v8287
        %v9120 = vpack.c.b16 %v8292, %v8288
        %v9121 = vpack.c.b16 %v8293, %v8289
        %v9122 = vpack.c.b16 %v8298, %v8294
        %v9123 = vpack.c.b16 %v8299, %v8295
        %v9124 = vpack.c.b16 %v8300, %v8296
        %v9125 = vpack.c.b16 %v8301, %v8297
        %v9126 = vpack.c.b16 %v8306, %v8302
        %v9127 = vpack.c.b16 %v8307, %v8303
        %v9128 = vpack.c.b16 %v8308, %v8304
        %v9129 = vpack.c.b16 %v8309, %v8305
        %v9130 = vpack.c.b16 %v8314, %v8310
        %v9131 = vpack.c.b16 %v8315, %v8311
        %v9132 = vpack.c.b16 %v8316, %v8312
        %v9133 = vpack.c.b16 %v8317, %v8313
        %v9134 = vpack.c.b16 %v8322, %v8318
        %v9135 = vpack.c.b16 %v8323, %v8319
        %v9136 = vpack.c.b16 %v8324, %v8320
        %v9137 = vpack.c.b16 %v8325, %v8321
        %v9138 = vpack.c.b16 %v8330, %v8326
        %v9139 = vpack.c.b16 %v8331, %v8327
        %v9140 = vpack.c.b16 %v8332, %v8328
        %v9141 = vpack.c.b16 %v8333, %v8329
        %v9142 = vpack.c.b16 %v8338, %v8334
        %v9143 = vpack.c.b16 %v8339, %v8335
        %v9144 = vpack.c.b16 %v8340, %v8336
        %v9145 = vpack.c.b16 %v8341, %v8337
        %v9146 = vpack.c.b16 %v8346, %v8342
        %v9147 = vpack.c.b16 %v8347, %v8343
        %v9148 = vpack.c.b16 %v8348, %v8344
        %v9149 = vpack.c.b16 %v8349, %v8345
        %v9150 = vpack.c.b16 %v8354, %v8350
        %v9151 = vpack.c.b16 %v8355, %v8351
        %v9152 = vpack.c.b16 %v8356, %v8352
        %v9153 = vpack.c.b16 %v8357, %v8353
        %v9154 = vpack.c.b16 %v8362, %v8358
        %v9155 = vpack.c.b16 %v8363, %v8359
        %v9156 = vpack.c.b16 %v8364, %v8360
        %v9157 = vpack.c.b16 %v8365, %v8361
        %v9158 = vpack.c.b16 %v8370, %v8366
        %v9159 = vpack.c.b16 %v8371, %v8367
        %v9160 = vpack.c.b16 %v8372, %v8368
        %v9161 = vpack.c.b16 %v8373, %v8369
        %v9162 = vpack.c.b16 %v8378, %v8374
        %v9163 = vpack.c.b16 %v8379, %v8375
        %v9164 = vpack.c.b16 %v8380, %v8376
        %v9165 = vpack.c.b16 %v8381, %v8377
        %v9166 = vpack.c.b16 %v8386, %v8382
        %v9167 = vpack.c.b16 %v8387, %v8383
        %v9168 = vpack.c.b16 %v8388, %v8384
        %v9169 = vpack.c.b16 %v8389, %v8385
        %v9170 = vpack.c.b16 %v8394, %v8390
        %v9171 = vpack.c.b16 %v8395, %v8391
        %v9172 = vpack.c.b16 %v8396, %v8392
        %v9173 = vpack.c.b16 %v8397, %v8393
        %v9174 = vpack.c.b16 %v8402, %v8398
        %v9175 = vpack.c.b16 %v8403, %v8399
        %v9176 = vpack.c.b16 %v8404, %v8400
        %v9177 = vpack.c.b16 %v8405, %v8401
        %v9178 = vpack.c.b16 %v8410, %v8406
        %v9179 = vpack.c.b16 %v8411, %v8407
        %v9180 = vpack.c.b16 %v8412, %v8408
        %v9181 = vpack.c.b16 %v8413, %v8409
        %v9182 = vpack.c.b16 %v8418, %v8414
        %v9183 = vpack.c.b16 %v8419, %v8415
        %v9184 = vpack.c.b16 %v8420, %v8416
        %v9185 = vpack.c.b16 %v8421, %v8417
        %v9186 = vpack.c.b16 %v8426, %v8422
        %v9187 = vpack.c.b16 %v8427, %v8423
        %v9188 = vpack.c.b16 %v8428, %v8424
        %v9189 = vpack.c.b16 %v8429, %v8425
        %v9190 = vpack.c.b16 %v8434, %v8430
        %v9191 = vpack.c.b16 %v8435, %v8431
        %v9192 = vpack.c.b16 %v8436, %v8432
        %v9193 = vpack.c.b16 %v8437, %v8433
        %v9194 = vpack.c.b16 %v8442, %v8438
        %v9195 = vpack.c.b16 %v8443, %v8439
        %v9196 = vpack.c.b16 %v8444, %v8440
        %v9197 = vpack.c.b16 %v8445, %v8441
        %v9198 = vpack.c.b16 %v8450, %v8446
        %v9199 = vpack.c.b16 %v8451, %v8447
        %v9200 = vpack.c.b16 %v8452, %v8448
        %v9201 = vpack.c.b16 %v8453, %v8449
        %v9202 = vpack.c.b16 %v8458, %v8454
        %v9203 = vpack.c.b16 %v8459, %v8455
        %v9204 = vpack.c.b16 %v8460, %v8456
        %v9205 = vpack.c.b16 %v8461, %v8457
        %v9206 = vpack.c.b16 %v8466, %v8462
        %v9207 = vpack.c.b16 %v8467, %v8463
        %v9208 = vpack.c.b16 %v8468, %v8464
        %v9209 = vpack.c.b16 %v8469, %v8465
        %v9210 = vpack.c.b16 %v8474, %v8470
        %v9211 = vpack.c.b16 %v8475, %v8471
        %v9212 = vpack.c.b16 %v8476, %v8472
        %v9213 = vpack.c.b16 %v8477, %v8473
        %v9214 = vpack.c.b16 %v8482, %v8478
        %v9215 = vpack.c.b16 %v8483, %v8479
        %v9216 = vpack.c.b16 %v8484, %v8480
        %v9217 = vpack.c.b16 %v8485, %v8481
        %v9218 = vpack.c.b16 %v8490, %v8486
        %v9219 = vpack.c.b16 %v8491, %v8487
        %v9220 = vpack.c.b16 %v8492, %v8488
        %v9221 = vpack.c.b16 %v8493, %v8489
        %v9222 = vpack.c.b16 %v8498, %v8494
        %v9223 = vpack.c.b16 %v8499, %v8495
        %v9224 = vpack.c.b16 %v8500, %v8496
        %v9225 = vpack.c.b16 %v8501, %v8497
        %v9226 = vpack.c.b16 %v8506, %v8502
        %v9227 = vpack.c.b16 %v8507, %v8503
        %v9228 = vpack.c.b16 %v8508, %v8504
        %v9229 = vpack.c.b16 %v8509, %v8505
        %v9230 = vpack.c.b16 %v8514, %v8510
        %v9231 = vpack.c.b16 %v8515, %v8511
        %v9232 = vpack.c.b16 %v8516, %v8512
        %v9233 = vpack.c.b16 %v8517, %v8513
        %v9234 = vpack.c.b16 %v8522, %v8518
        %v9235 = vpack.c.b16 %v8523, %v8519
        %v9236 = vpack.c.b16 %v8524, %v8520
        %v9237 = vpack.c.b16 %v8525, %v8521
        %v9238 = vpack.c.b16 %v8530, %v8526
        %v9239 = vpack.c.b16 %v8531, %v8527
        %v9240 = vpack.c.b16 %v8532, %v8528
        %v9241 = vpack.c.b16 %v8533, %v8529
        %v9242 = vpack.c.b16 %v8538, %v8534
        %v9243 = vpack.c.b16 %v8539, %v8535
        %v9244 = vpack.c.b16 %v8540, %v8536
        %v9245 = vpack.c.b16 %v8541, %v8537
        %v9246 = vpack.c.b16 %v8546, %v8542
        %v9247 = vpack.c.b16 %v8547, %v8543
        %v9248 = vpack.c.b16 %v8548, %v8544
        %v9249 = vpack.c.b16 %v8549, %v8545
        %v9250 = vpack.c.b16 %v8554, %v8550
        %v9251 = vpack.c.b16 %v8555, %v8551
        %v9252 = vpack.c.b16 %v8556, %v8552
        %v9253 = vpack.c.b16 %v8557, %v8553
        %v9254 = vpack.c.b16 %v8562, %v8558
        %v9255 = vpack.c.b16 %v8563, %v8559
        %v9256 = vpack.c.b16 %v8564, %v8560
        %v9257 = vpack.c.b16 %v8565, %v8561
        %v9258 = vpack.c.b16 %v8570, %v8566
        %v9259 = vpack.c.b16 %v8571, %v8567
        %v9260 = vpack.c.b16 %v8572, %v8568
        %v9261 = vpack.c.b16 %v8573, %v8569
        %v9262 = vpack.c.b16 %v8578, %v8574
        %v9263 = vpack.c.b16 %v8579, %v8575
        %v9264 = vpack.c.b16 %v8580, %v8576
        %v9265 = vpack.c.b16 %v8581, %v8577
        %v9266 = vpack.c.b16 %v8586, %v8582
        %v9267 = vpack.c.b16 %v8587, %v8583
        %v9268 = vpack.c.b16 %v8588, %v8584
        %v9269 = vpack.c.b16 %v8589, %v8585
        %v9270 = vpack.c.b16 %v8594, %v8590
        %v9271 = vpack.c.b16 %v8595, %v8591
        %v9272 = vpack.c.b16 %v8596, %v8592
        %v9273 = vpack.c.b16 %v8597, %v8593
        %v9274 = vpack.c.b16 %v8602, %v8598
        %v9275 = vpack.c.b16 %v8603, %v8599
        %v9276 = vpack.c.b16 %v8604, %v8600
        %v9277 = vpack.c.b16 %v8605, %v8601
        %v9278 = vpack.c.b16 %v8610, %v8606
        %v9279 = vpack.c.b16 %v8611, %v8607
        %v9280 = vpack.c.b16 %v8612, %v8608
        %v9281 = vpack.c.b16 %v8613, %v8609
        %v9282 = vpack.c.b16 %v8618, %v8614
        %v9283 = vpack.c.b16 %v8619, %v8615
        %v9284 = vpack.c.b16 %v8620, %v8616
        %v9285 = vpack.c.b16 %v8621, %v8617
        %v9286 = vpack.c.b16 %v8626, %v8622
        %v9287 = vpack.c.b16 %v8627, %v8623
        %v9288 = vpack.c.b16 %v8628, %v8624
        %v9289 = vpack.c.b16 %v8629, %v8625
        %v9290 = vpack.c.b16 %v8634, %v8630
        %v9291 = vpack.c.b16 %v8635, %v8631
        %v9292 = vpack.c.b16 %v8636, %v8632
        %v9293 = vpack.c.b16 %v8637, %v8633
        %v9294 = vpack.c.b16 %v8642, %v8638
        %v9295 = vpack.c.b16 %v8643, %v8639
        %v9296 = vpack.c.b16 %v8644, %v8640
        %v9297 = vpack.c.b16 %v8645, %v8641
        %v9298 = vpack.c.b16 %v8650, %v8646
        %v9299 = vpack.c.b16 %v8651, %v8647
        %v9300 = vpack.c.b16 %v8652, %v8648
        %v9301 = vpack.c.b16 %v8653, %v8649
        %v9302 = vpack.c.b16 %v8658, %v8654
        %v9303 = vpack.c.b16 %v8659, %v8655
        %v9304 = vpack.c.b16 %v8660, %v8656
        %v9305 = vpack.c.b16 %v8661, %v8657
        %v9306 = vpack.c.b16 %v8666, %v8662
        %v9307 = vpack.c.b16 %v8667, %v8663
        %v9308 = vpack.c.b16 %v8668, %v8664
        %v9309 = vpack.c.b16 %v8669, %v8665
        %v9310 = vpack.c.b16 %v8674, %v8670
        %v9311 = vpack.c.b16 %v8675, %v8671
        %v9312 = vpack.c.b16 %v8676, %v8672
        %v9313 = vpack.c.b16 %v8677, %v8673
        %v9314 = vpack.c.b16 %v8682, %v8678
        %v9315 = vpack.c.b16 %v8683, %v8679
        %v9316 = vpack.c.b16 %v8684, %v8680
        %v9317 = vpack.c.b16 %v8685, %v8681
        %v9318 = vpack.c.b16 %v8690, %v8686
        %v9319 = vpack.c.b16 %v8691, %v8687
        %v9320 = vpack.c.b16 %v8692, %v8688
        %v9321 = vpack.c.b16 %v8693, %v8689
        %v9322 = vpack.c.b16 %v8698, %v8694
        %v9323 = vpack.c.b16 %v8699, %v8695
        %v9324 = vpack.c.b16 %v8700, %v8696
        %v9325 = vpack.c.b16 %v8701, %v8697
        %v9326 = vpack.c.b16 %v8706, %v8702
        %v9327 = vpack.c.b16 %v8707, %v8703
        %v9328 = vpack.c.b16 %v8708, %v8704
        %v9329 = vpack.c.b16 %v8709, %v8705
        %v9330 = vpack.c.b16 %v8714, %v8710
        %v9331 = vpack.c.b16 %v8715, %v8711
        %v9332 = vpack.c.b16 %v8716, %v8712
        %v9333 = vpack.c.b16 %v8717, %v8713
        %v9334 = vpack.c.b16 %v8722, %v8718
        %v9335 = vpack.c.b16 %v8723, %v8719
        %v9336 = vpack.c.b16 %v8724, %v8720
        %v9337 = vpack.c.b16 %v8725, %v8721
        %v9338 = vpack.c.b16 %v8730, %v8726
        %v9339 = vpack.c.b16 %v8731, %v8727
        %v9340 = vpack.c.b16 %v8732, %v8728
        %v9341 = vpack.c.b16 %v8733, %v8729
        %v9342 = vpack.c.b16 %v8738, %v8734
        %v9343 = vpack.c.b16 %v8739, %v8735
        %v9344 = vpack.c.b16 %v8740, %v8736
        %v9345 = vpack.c.b16 %v8741, %v8737
        %v9346 = vpack.c.b16 %v8746, %v8742
        %v9347 = vpack.c.b16 %v8747, %v8743
        %v9348 = vpack.c.b16 %v8748, %v8744
        %v9349 = vpack.c.b16 %v8749, %v8745
        %v9350 = vpack.c.b16 %v8754, %v8750
        %v9351 = vpack.c.b16 %v8755, %v8751
        %v9352 = vpack.c.b16 %v8756, %v8752
        %v9353 = vpack.c.b16 %v8757, %v8753
        %v9354 = vpack.c.b16 %v8762, %v8758
        %v9355 = vpack.c.b16 %v8763, %v8759
        %v9356 = vpack.c.b16 %v8764, %v8760
        %v9357 = vpack.c.b16 %v8765, %v8761
        %v9358 = vpack.c.b16 %v8770, %v8766
        %v9359 = vpack.c.b16 %v8771, %v8767
        %v9360 = vpack.c.b16 %v8772, %v8768
        %v9361 = vpack.c.b16 %v8773, %v8769
        %v9362 = vpack.c.b16 %v8778, %v8774
        %v9363 = vpack.c.b16 %v8779, %v8775
        %v9364 = vpack.c.b16 %v8780, %v8776
        %v9365 = vpack.c.b16 %v8781, %v8777
        %v9366 = vpack.c.b16 %v8786, %v8782
        %v9367 = vpack.c.b16 %v8787, %v8783
        %v9368 = vpack.c.b16 %v8788, %v8784
        %v9369 = vpack.c.b16 %v8789, %v8785
        %v9370 = vpack.c.b16 %v8794, %v8790
        %v9371 = vpack.c.b16 %v8795, %v8791
        %v9372 = vpack.c.b16 %v8796, %v8792
        %v9373 = vpack.c.b16 %v8797, %v8793
        %v9951 = vperm.slane %v7069, 0
        %v9952 = vperm.slane %v7069, 1
        %v9953 = vperm.slane %v7069, 2
        %v9954 = vperm.slane %v7069, 3
        %9959 = vmatpush.bf16.msra.mxu0 %v8826
        %9960 = vmatpush.bf16.msra.mxu0 %v8822
        %9961 = vmatpush.bf16.msra.mxu0 %v8818
        %9962 = vmatpush.bf16.msra.mxu0 %v8814
        %9963 = vmatpush.bf16.msra.mxu0 %v8810
        %9964 = vmatpush.bf16.msra.mxu0 %v8806
        %9965 = vmatpush.bf16.msra.mxu0 %v8802
        %9966 = vmatpush.bf16.msra.mxu0 %v8798
        %9967 = vmatmul.bf16.gmra.mxu0 %v6475
        %v9968 = vpop.f32.mrf.mxu0
        %v9969 = vadd.f32 %v9951, %v9968
        %v9970 = vpop.f32.mrf.mxu0
        %9971 = vdwg.mxu0
        %9972 = vmatpush.bf16.msra.mxu0 %v8858
        %9973 = vmatpush.bf16.msra.mxu0 %v8854
        %9974 = vmatpush.bf16.msra.mxu0 %v8850
        %9975 = vmatpush.bf16.msra.mxu0 %v8846
        %9976 = vmatpush.bf16.msra.mxu0 %v8842
        %9977 = vmatpush.bf16.msra.mxu0 %v8838
        %9978 = vmatpush.bf16.msra.mxu0 %v8834
        %9979 = vmatpush.bf16.msra.mxu0 %v8830
        %9980 = vmatmul.bf16.gmra.mxu0 %v6476
        %v9981 = vpop.f32.mrf.mxu0
        %v9982 = vadd.f32 %v9969, %v9981
        %v9983 = vpop.f32.mrf.mxu0
        %9984 = vdwg.mxu0
        %9985 = vmatpush.bf16.msra.mxu0 %v8890
        %9986 = vmatpush.bf16.msra.mxu0 %v8886
        %9987 = vmatpush.bf16.msra.mxu0 %v8882
        %9988 = vmatpush.bf16.msra.mxu0 %v8878
        %9989 = vmatpush.bf16.msra.mxu0 %v8874
        %9990 = vmatpush.bf16.msra.mxu0 %v8870
        %9991 = vmatpush.bf16.msra.mxu0 %v8866
        %9992 = vmatpush.bf16.msra.mxu0 %v8862
        %9993 = vmatmul.bf16.gmra.mxu0 %v6477
        %v9994 = vpop.f32.mrf.mxu0
        %v9995 = vadd.f32 %v9982, %v9994
        %v9996 = vpop.f32.mrf.mxu0
        %9997 = vdwg.mxu0
        %9998 = vmatpush.bf16.msra.mxu0 %v8922
        %9999 = vmatpush.bf16.msra.mxu0 %v8918
        %10000 = vmatpush.bf16.msra.mxu0 %v8914
        %10001 = vmatpush.bf16.msra.mxu0 %v8910
        %10002 = vmatpush.bf16.msra.mxu0 %v8906
        %10003 = vmatpush.bf16.msra.mxu0 %v8902
        %10004 = vmatpush.bf16.msra.mxu0 %v8898
        %10005 = vmatpush.bf16.msra.mxu0 %v8894
        %10006 = vmatmul.bf16.gmra.mxu0 %v6478
        %v10007 = vpop.f32.mrf.mxu0
        %v10008 = vadd.f32 %v9995, %v10007
        %v10009 = vpop.f32.mrf.mxu0
        %10010 = vdwg.mxu0
        %10011 = vmatpush.bf16.msra.mxu0 %v8954
        %10012 = vmatpush.bf16.msra.mxu0 %v8950
        %10013 = vmatpush.bf16.msra.mxu0 %v8946
        %10014 = vmatpush.bf16.msra.mxu0 %v8942
        %10015 = vmatpush.bf16.msra.mxu0 %v8938
        %10016 = vmatpush.bf16.msra.mxu0 %v8934
        %10017 = vmatpush.bf16.msra.mxu0 %v8930
        %10018 = vmatpush.bf16.msra.mxu0 %v8926
        %10019 = vmatmul.bf16.gmra.mxu0 %v6479
        %v10020 = vpop.f32.mrf.mxu0
        %v10021 = vadd.f32 %v10008, %v10020
        %v10022 = vpop.f32.mrf.mxu0
        %10023 = vdwg.mxu0
        %10024 = vmatpush.bf16.msra.mxu0 %v8986
        %10025 = vmatpush.bf16.msra.mxu0 %v8982
        %10026 = vmatpush.bf16.msra.mxu0 %v8978
        %10027 = vmatpush.bf16.msra.mxu0 %v8974
        %10028 = vmatpush.bf16.msra.mxu0 %v8970
        %10029 = vmatpush.bf16.msra.mxu0 %v8966
        %10030 = vmatpush.bf16.msra.mxu0 %v8962
        %10031 = vmatpush.bf16.msra.mxu0 %v8958
        %10032 = vmatmul.bf16.gmra.mxu0 %v6480
        %v10033 = vpop.f32.mrf.mxu0
        %v10034 = vadd.f32 %v10021, %v10033
        %v10035 = vpop.f32.mrf.mxu0
        %10036 = vdwg.mxu0
        %10037 = vmatpush.bf16.msra.mxu0 %v9018
        %10038 = vmatpush.bf16.msra.mxu0 %v9014
        %10039 = vmatpush.bf16.msra.mxu0 %v9010
        %10040 = vmatpush.bf16.msra.mxu0 %v9006
        %10041 = vmatpush.bf16.msra.mxu0 %v9002
        %10042 = vmatpush.bf16.msra.mxu0 %v8998
        %10043 = vmatpush.bf16.msra.mxu0 %v8994
        %10044 = vmatpush.bf16.msra.mxu0 %v8990
        %10045 = vmatmul.bf16.gmra.mxu0 %v6481
        %v10046 = vpop.f32.mrf.mxu0
        %v10047 = vadd.f32 %v10034, %v10046
        %v10048 = vpop.f32.mrf.mxu0
        %10049 = vdwg.mxu0
        %10050 = vmatpush.bf16.msra.mxu0 %v9050
        %10051 = vmatpush.bf16.msra.mxu0 %v9046
        %10052 = vmatpush.bf16.msra.mxu0 %v9042
        %10053 = vmatpush.bf16.msra.mxu0 %v9038
        %10054 = vmatpush.bf16.msra.mxu0 %v9034
        %10055 = vmatpush.bf16.msra.mxu0 %v9030
        %10056 = vmatpush.bf16.msra.mxu0 %v9026
        %10057 = vmatpush.bf16.msra.mxu0 %v9022
        %10058 = vmatmul.bf16.gmra.mxu0 %v6482
        %v10059 = vpop.f32.mrf.mxu0
        %v10060 = vadd.f32 %v10047, %v10059
        %v10061 = vpop.f32.mrf.mxu0
        %10062 = vdwg.mxu0
        %10063 = vmatpush.bf16.msra.mxu0 %v9082
        %10064 = vmatpush.bf16.msra.mxu0 %v9078
        %10065 = vmatpush.bf16.msra.mxu0 %v9074
        %10066 = vmatpush.bf16.msra.mxu0 %v9070
        %10067 = vmatpush.bf16.msra.mxu0 %v9066
        %10068 = vmatpush.bf16.msra.mxu0 %v9062
        %10069 = vmatpush.bf16.msra.mxu0 %v9058
        %10070 = vmatpush.bf16.msra.mxu0 %v9054
        %10071 = vmatmul.bf16.gmra.mxu0 %v6483
        %v10072 = vpop.f32.mrf.mxu0
        %v10073 = vadd.f32 %v10060, %v10072
        %v10074 = vpop.f32.mrf.mxu0
        %10075 = vdwg.mxu0
        %10076 = vmatpush.bf16.msra.mxu0 %v9114
        %10077 = vmatpush.bf16.msra.mxu0 %v9110
        %10078 = vmatpush.bf16.msra.mxu0 %v9106
        %10079 = vmatpush.bf16.msra.mxu0 %v9102
        %10080 = vmatpush.bf16.msra.mxu0 %v9098
        %10081 = vmatpush.bf16.msra.mxu0 %v9094
        %10082 = vmatpush.bf16.msra.mxu0 %v9090
        %10083 = vmatpush.bf16.msra.mxu0 %v9086
        %10084 = vmatmul.bf16.gmra.mxu0 %v6484
        %v10085 = vpop.f32.mrf.mxu0
        %v10086 = vadd.f32 %v10073, %v10085
        %v10087 = vpop.f32.mrf.mxu0
        %10088 = vdwg.mxu0
        %10089 = vmatpush.bf16.msra.mxu0 %v9146
        %10090 = vmatpush.bf16.msra.mxu0 %v9142
        %10091 = vmatpush.bf16.msra.mxu0 %v9138
        %10092 = vmatpush.bf16.msra.mxu0 %v9134
        %10093 = vmatpush.bf16.msra.mxu0 %v9130
        %10094 = vmatpush.bf16.msra.mxu0 %v9126
        %10095 = vmatpush.bf16.msra.mxu0 %v9122
        %10096 = vmatpush.bf16.msra.mxu0 %v9118
        %10097 = vmatmul.bf16.gmra.mxu0 %v6485
        %v10098 = vpop.f32.mrf.mxu0
        %v10099 = vadd.f32 %v10086, %v10098
        %v10100 = vpop.f32.mrf.mxu0
        %10101 = vdwg.mxu0
        %10102 = vmatpush.bf16.msra.mxu0 %v9178
        %10103 = vmatpush.bf16.msra.mxu0 %v9174
        %10104 = vmatpush.bf16.msra.mxu0 %v9170
        %10105 = vmatpush.bf16.msra.mxu0 %v9166
        %10106 = vmatpush.bf16.msra.mxu0 %v9162
        %10107 = vmatpush.bf16.msra.mxu0 %v9158
        %10108 = vmatpush.bf16.msra.mxu0 %v9154
        %10109 = vmatpush.bf16.msra.mxu0 %v9150
        %10110 = vmatmul.bf16.gmra.mxu0 %v6486
        %v10111 = vpop.f32.mrf.mxu0
        %v10112 = vadd.f32 %v10099, %v10111
        %v10113 = vpop.f32.mrf.mxu0
        %10114 = vdwg.mxu0
        %10115 = vmatpush.bf16.msra.mxu0 %v9210
        %10116 = vmatpush.bf16.msra.mxu0 %v9206
        %10117 = vmatpush.bf16.msra.mxu0 %v9202
        %10118 = vmatpush.bf16.msra.mxu0 %v9198
        %10119 = vmatpush.bf16.msra.mxu0 %v9194
        %10120 = vmatpush.bf16.msra.mxu0 %v9190
        %10121 = vmatpush.bf16.msra.mxu0 %v9186
        %10122 = vmatpush.bf16.msra.mxu0 %v9182
        %10123 = vmatmul.bf16.gmra.mxu0 %v6487
        %v10124 = vpop.f32.mrf.mxu0
        %v10125 = vadd.f32 %v10112, %v10124
        %v10126 = vpop.f32.mrf.mxu0
        %10127 = vdwg.mxu0
        %10128 = vmatpush.bf16.msra.mxu0 %v9242
        %10129 = vmatpush.bf16.msra.mxu0 %v9238
        %10130 = vmatpush.bf16.msra.mxu0 %v9234
        %10131 = vmatpush.bf16.msra.mxu0 %v9230
        %10132 = vmatpush.bf16.msra.mxu0 %v9226
        %10133 = vmatpush.bf16.msra.mxu0 %v9222
        %10134 = vmatpush.bf16.msra.mxu0 %v9218
        %10135 = vmatpush.bf16.msra.mxu0 %v9214
        %10136 = vmatmul.bf16.gmra.mxu0 %v6488
        %v10137 = vpop.f32.mrf.mxu0
        %v10138 = vadd.f32 %v10125, %v10137
        %v10139 = vpop.f32.mrf.mxu0
        %10140 = vdwg.mxu0
        %10141 = vmatpush.bf16.msra.mxu0 %v9274
        %10142 = vmatpush.bf16.msra.mxu0 %v9270
        %10143 = vmatpush.bf16.msra.mxu0 %v9266
        %10144 = vmatpush.bf16.msra.mxu0 %v9262
        %10145 = vmatpush.bf16.msra.mxu0 %v9258
        %10146 = vmatpush.bf16.msra.mxu0 %v9254
        %10147 = vmatpush.bf16.msra.mxu0 %v9250
        %10148 = vmatpush.bf16.msra.mxu0 %v9246
        %10149 = vmatmul.bf16.gmra.mxu0 %v6489
        %v10150 = vpop.f32.mrf.mxu0
        %v10151 = vadd.f32 %v10138, %v10150
        %v10152 = vpop.f32.mrf.mxu0
        %10153 = vdwg.mxu0
        %10154 = vmatpush.bf16.msra.mxu0 %v9306
        %10155 = vmatpush.bf16.msra.mxu0 %v9302
        %10156 = vmatpush.bf16.msra.mxu0 %v9298
        %10157 = vmatpush.bf16.msra.mxu0 %v9294
        %10158 = vmatpush.bf16.msra.mxu0 %v9290
        %10159 = vmatpush.bf16.msra.mxu0 %v9286
        %10160 = vmatpush.bf16.msra.mxu0 %v9282
        %10161 = vmatpush.bf16.msra.mxu0 %v9278
        %10162 = vmatmul.bf16.gmra.mxu0 %v6490
        %v10163 = vpop.f32.mrf.mxu0
        %v10164 = vadd.f32 %v10151, %v10163
        %v10165 = vpop.f32.mrf.mxu0
        %10166 = vdwg.mxu0
        %10167 = vmatpush.bf16.msra.mxu0 %v9338
        %10168 = vmatpush.bf16.msra.mxu0 %v9334
        %10169 = vmatpush.bf16.msra.mxu0 %v9330
        %10170 = vmatpush.bf16.msra.mxu0 %v9326
        %10171 = vmatpush.bf16.msra.mxu0 %v9322
        %10172 = vmatpush.bf16.msra.mxu0 %v9318
        %10173 = vmatpush.bf16.msra.mxu0 %v9314
        %10174 = vmatpush.bf16.msra.mxu0 %v9310
        %10175 = vmatmul.bf16.gmra.mxu0 %v6491
        %v10176 = vpop.f32.mrf.mxu0
        %v10177 = vadd.f32 %v10164, %v10176
        %v10178 = vpop.f32.mrf.mxu0
        %10179 = vdwg.mxu0
        %10180 = vmatpush.bf16.msra.mxu0 %v9370
        %10181 = vmatpush.bf16.msra.mxu0 %v9366
        %10182 = vmatpush.bf16.msra.mxu0 %v9362
        %10183 = vmatpush.bf16.msra.mxu0 %v9358
        %10184 = vmatpush.bf16.msra.mxu0 %v9354
        %10185 = vmatpush.bf16.msra.mxu0 %v9350
        %10186 = vmatpush.bf16.msra.mxu0 %v9346
        %10187 = vmatpush.bf16.msra.mxu0 %v9342
        %10188 = vmatmul.bf16.gmra.mxu0 %v6492
        %v10189 = vpop.f32.mrf.mxu0
        %v10190 = vadd.f32 %v10177, %v10189
        %v10191 = vpop.f32.mrf.mxu0
        %10192 = vdwg.mxu0
        %10193 = vmatpush.bf16.msra.mxu0 %v8827
        %10194 = vmatpush.bf16.msra.mxu0 %v8823
        %10195 = vmatpush.bf16.msra.mxu0 %v8819
        %10196 = vmatpush.bf16.msra.mxu0 %v8815
        %10197 = vmatpush.bf16.msra.mxu0 %v8811
        %10198 = vmatpush.bf16.msra.mxu0 %v8807
        %10199 = vmatpush.bf16.msra.mxu0 %v8803
        %10200 = vmatpush.bf16.msra.mxu0 %v8799
        %10201 = vmatmul.bf16.gmra.mxu0 %v6475
        %v10202 = vpop.f32.mrf.mxu0
        %v10203 = vadd.f32 %v9952, %v10202
        %v10204 = vpop.f32.mrf.mxu0
        %10205 = vdwg.mxu0
        %10206 = vmatpush.bf16.msra.mxu0 %v8859
        %10207 = vmatpush.bf16.msra.mxu0 %v8855
        %10208 = vmatpush.bf16.msra.mxu0 %v8851
        %10209 = vmatpush.bf16.msra.mxu0 %v8847
        %10210 = vmatpush.bf16.msra.mxu0 %v8843
        %10211 = vmatpush.bf16.msra.mxu0 %v8839
        %10212 = vmatpush.bf16.msra.mxu0 %v8835
        %10213 = vmatpush.bf16.msra.mxu0 %v8831
        %10214 = vmatmul.bf16.gmra.mxu0 %v6476
        %v10215 = vpop.f32.mrf.mxu0
        %v10216 = vadd.f32 %v10203, %v10215
        %v10217 = vpop.f32.mrf.mxu0
        %10218 = vdwg.mxu0
        %10219 = vmatpush.bf16.msra.mxu0 %v8891
        %10220 = vmatpush.bf16.msra.mxu0 %v8887
        %10221 = vmatpush.bf16.msra.mxu0 %v8883
        %10222 = vmatpush.bf16.msra.mxu0 %v8879
        %10223 = vmatpush.bf16.msra.mxu0 %v8875
        %10224 = vmatpush.bf16.msra.mxu0 %v8871
        %10225 = vmatpush.bf16.msra.mxu0 %v8867
        %10226 = vmatpush.bf16.msra.mxu0 %v8863
        %10227 = vmatmul.bf16.gmra.mxu0 %v6477
        %v10228 = vpop.f32.mrf.mxu0
        %v10229 = vadd.f32 %v10216, %v10228
        %v10230 = vpop.f32.mrf.mxu0
        %10231 = vdwg.mxu0
        %10232 = vmatpush.bf16.msra.mxu0 %v8923
        %10233 = vmatpush.bf16.msra.mxu0 %v8919
        %10234 = vmatpush.bf16.msra.mxu0 %v8915
        %10235 = vmatpush.bf16.msra.mxu0 %v8911
        %10236 = vmatpush.bf16.msra.mxu0 %v8907
        %10237 = vmatpush.bf16.msra.mxu0 %v8903
        %10238 = vmatpush.bf16.msra.mxu0 %v8899
        %10239 = vmatpush.bf16.msra.mxu0 %v8895
        %10240 = vmatmul.bf16.gmra.mxu0 %v6478
        %v10241 = vpop.f32.mrf.mxu0
        %v10242 = vadd.f32 %v10229, %v10241
        %v10243 = vpop.f32.mrf.mxu0
        %10244 = vdwg.mxu0
        %10245 = vmatpush.bf16.msra.mxu0 %v8955
        %10246 = vmatpush.bf16.msra.mxu0 %v8951
        %10247 = vmatpush.bf16.msra.mxu0 %v8947
        %10248 = vmatpush.bf16.msra.mxu0 %v8943
        %10249 = vmatpush.bf16.msra.mxu0 %v8939
        %10250 = vmatpush.bf16.msra.mxu0 %v8935
        %10251 = vmatpush.bf16.msra.mxu0 %v8931
        %10252 = vmatpush.bf16.msra.mxu0 %v8927
        %10253 = vmatmul.bf16.gmra.mxu0 %v6479
        %v10254 = vpop.f32.mrf.mxu0
        %v10255 = vadd.f32 %v10242, %v10254
        %v10256 = vpop.f32.mrf.mxu0
        %10257 = vdwg.mxu0
        %10258 = vmatpush.bf16.msra.mxu0 %v8987
        %10259 = vmatpush.bf16.msra.mxu0 %v8983
        %10260 = vmatpush.bf16.msra.mxu0 %v8979
        %10261 = vmatpush.bf16.msra.mxu0 %v8975
        %10262 = vmatpush.bf16.msra.mxu0 %v8971
        %10263 = vmatpush.bf16.msra.mxu0 %v8967
        %10264 = vmatpush.bf16.msra.mxu0 %v8963
        %10265 = vmatpush.bf16.msra.mxu0 %v8959
        %10266 = vmatmul.bf16.gmra.mxu0 %v6480
        %v10267 = vpop.f32.mrf.mxu0
        %v10268 = vadd.f32 %v10255, %v10267
        %v10269 = vpop.f32.mrf.mxu0
        %10270 = vdwg.mxu0
        %10271 = vmatpush.bf16.msra.mxu0 %v9019
        %10272 = vmatpush.bf16.msra.mxu0 %v9015
        %10273 = vmatpush.bf16.msra.mxu0 %v9011
        %10274 = vmatpush.bf16.msra.mxu0 %v9007
        %10275 = vmatpush.bf16.msra.mxu0 %v9003
        %10276 = vmatpush.bf16.msra.mxu0 %v8999
        %10277 = vmatpush.bf16.msra.mxu0 %v8995
        %10278 = vmatpush.bf16.msra.mxu0 %v8991
        %10279 = vmatmul.bf16.gmra.mxu0 %v6481
        %v10280 = vpop.f32.mrf.mxu0
        %v10281 = vadd.f32 %v10268, %v10280
        %v10282 = vpop.f32.mrf.mxu0
        %10283 = vdwg.mxu0
        %10284 = vmatpush.bf16.msra.mxu0 %v9051
        %10285 = vmatpush.bf16.msra.mxu0 %v9047
        %10286 = vmatpush.bf16.msra.mxu0 %v9043
        %10287 = vmatpush.bf16.msra.mxu0 %v9039
        %10288 = vmatpush.bf16.msra.mxu0 %v9035
        %10289 = vmatpush.bf16.msra.mxu0 %v9031
        %10290 = vmatpush.bf16.msra.mxu0 %v9027
        %10291 = vmatpush.bf16.msra.mxu0 %v9023
        %10292 = vmatmul.bf16.gmra.mxu0 %v6482
        %v10293 = vpop.f32.mrf.mxu0
        %v10294 = vadd.f32 %v10281, %v10293
        %v10295 = vpop.f32.mrf.mxu0
        %10296 = vdwg.mxu0
        %10297 = vmatpush.bf16.msra.mxu0 %v9083
        %10298 = vmatpush.bf16.msra.mxu0 %v9079
        %10299 = vmatpush.bf16.msra.mxu0 %v9075
        %10300 = vmatpush.bf16.msra.mxu0 %v9071
        %10301 = vmatpush.bf16.msra.mxu0 %v9067
        %10302 = vmatpush.bf16.msra.mxu0 %v9063
        %10303 = vmatpush.bf16.msra.mxu0 %v9059
        %10304 = vmatpush.bf16.msra.mxu0 %v9055
        %10305 = vmatmul.bf16.gmra.mxu0 %v6483
        %v10306 = vpop.f32.mrf.mxu0
        %v10307 = vadd.f32 %v10294, %v10306
        %v10308 = vpop.f32.mrf.mxu0
        %10309 = vdwg.mxu0
        %10310 = vmatpush.bf16.msra.mxu0 %v9115
        %10311 = vmatpush.bf16.msra.mxu0 %v9111
        %10312 = vmatpush.bf16.msra.mxu0 %v9107
        %10313 = vmatpush.bf16.msra.mxu0 %v9103
        %10314 = vmatpush.bf16.msra.mxu0 %v9099
        %10315 = vmatpush.bf16.msra.mxu0 %v9095
        %10316 = vmatpush.bf16.msra.mxu0 %v9091
        %10317 = vmatpush.bf16.msra.mxu0 %v9087
        %10318 = vmatmul.bf16.gmra.mxu0 %v6484
        %v10319 = vpop.f32.mrf.mxu0
        %v10320 = vadd.f32 %v10307, %v10319
        %v10321 = vpop.f32.mrf.mxu0
        %10322 = vdwg.mxu0
        %10323 = vmatpush.bf16.msra.mxu0 %v9147
        %10324 = vmatpush.bf16.msra.mxu0 %v9143
        %10325 = vmatpush.bf16.msra.mxu0 %v9139
        %10326 = vmatpush.bf16.msra.mxu0 %v9135
        %10327 = vmatpush.bf16.msra.mxu0 %v9131
        %10328 = vmatpush.bf16.msra.mxu0 %v9127
        %10329 = vmatpush.bf16.msra.mxu0 %v9123
        %10330 = vmatpush.bf16.msra.mxu0 %v9119
        %10331 = vmatmul.bf16.gmra.mxu0 %v6485
        %v10332 = vpop.f32.mrf.mxu0
        %v10333 = vadd.f32 %v10320, %v10332
        %v10334 = vpop.f32.mrf.mxu0
        %10335 = vdwg.mxu0
        %10336 = vmatpush.bf16.msra.mxu0 %v9179
        %10337 = vmatpush.bf16.msra.mxu0 %v9175
        %10338 = vmatpush.bf16.msra.mxu0 %v9171
        %10339 = vmatpush.bf16.msra.mxu0 %v9167
        %10340 = vmatpush.bf16.msra.mxu0 %v9163
        %10341 = vmatpush.bf16.msra.mxu0 %v9159
        %10342 = vmatpush.bf16.msra.mxu0 %v9155
        %10343 = vmatpush.bf16.msra.mxu0 %v9151
        %10344 = vmatmul.bf16.gmra.mxu0 %v6486
        %v10345 = vpop.f32.mrf.mxu0
        %v10346 = vadd.f32 %v10333, %v10345
        %v10347 = vpop.f32.mrf.mxu0
        %10348 = vdwg.mxu0
        %10349 = vmatpush.bf16.msra.mxu0 %v9211
        %10350 = vmatpush.bf16.msra.mxu0 %v9207
        %10351 = vmatpush.bf16.msra.mxu0 %v9203
        %10352 = vmatpush.bf16.msra.mxu0 %v9199
        %10353 = vmatpush.bf16.msra.mxu0 %v9195
        %10354 = vmatpush.bf16.msra.mxu0 %v9191
        %10355 = vmatpush.bf16.msra.mxu0 %v9187
        %10356 = vmatpush.bf16.msra.mxu0 %v9183
        %10357 = vmatmul.bf16.gmra.mxu0 %v6487
        %v10358 = vpop.f32.mrf.mxu0
        %v10359 = vadd.f32 %v10346, %v10358
        %v10360 = vpop.f32.mrf.mxu0
        %10361 = vdwg.mxu0
        %10362 = vmatpush.bf16.msra.mxu0 %v9243
        %10363 = vmatpush.bf16.msra.mxu0 %v9239
        %10364 = vmatpush.bf16.msra.mxu0 %v9235
        %10365 = vmatpush.bf16.msra.mxu0 %v9231
        %10366 = vmatpush.bf16.msra.mxu0 %v9227
        %10367 = vmatpush.bf16.msra.mxu0 %v9223
        %10368 = vmatpush.bf16.msra.mxu0 %v9219
        %10369 = vmatpush.bf16.msra.mxu0 %v9215
        %10370 = vmatmul.bf16.gmra.mxu0 %v6488
        %v10371 = vpop.f32.mrf.mxu0
        %v10372 = vadd.f32 %v10359, %v10371
        %v10373 = vpop.f32.mrf.mxu0
        %10374 = vdwg.mxu0
        %10375 = vmatpush.bf16.msra.mxu0 %v9275
        %10376 = vmatpush.bf16.msra.mxu0 %v9271
        %10377 = vmatpush.bf16.msra.mxu0 %v9267
        %10378 = vmatpush.bf16.msra.mxu0 %v9263
        %10379 = vmatpush.bf16.msra.mxu0 %v9259
        %10380 = vmatpush.bf16.msra.mxu0 %v9255
        %10381 = vmatpush.bf16.msra.mxu0 %v9251
        %10382 = vmatpush.bf16.msra.mxu0 %v9247
        %10383 = vmatmul.bf16.gmra.mxu0 %v6489
        %v10384 = vpop.f32.mrf.mxu0
        %v10385 = vadd.f32 %v10372, %v10384
        %v10386 = vpop.f32.mrf.mxu0
        %10387 = vdwg.mxu0
        %10388 = vmatpush.bf16.msra.mxu0 %v9307
        %10389 = vmatpush.bf16.msra.mxu0 %v9303
        %10390 = vmatpush.bf16.msra.mxu0 %v9299
        %10391 = vmatpush.bf16.msra.mxu0 %v9295
        %10392 = vmatpush.bf16.msra.mxu0 %v9291
        %10393 = vmatpush.bf16.msra.mxu0 %v9287
        %10394 = vmatpush.bf16.msra.mxu0 %v9283
        %10395 = vmatpush.bf16.msra.mxu0 %v9279
        %10396 = vmatmul.bf16.gmra.mxu0 %v6490
        %v10397 = vpop.f32.mrf.mxu0
        %v10398 = vadd.f32 %v10385, %v10397
        %v10399 = vpop.f32.mrf.mxu0
        %10400 = vdwg.mxu0
        %10401 = vmatpush.bf16.msra.mxu0 %v9339
        %10402 = vmatpush.bf16.msra.mxu0 %v9335
        %10403 = vmatpush.bf16.msra.mxu0 %v9331
        %10404 = vmatpush.bf16.msra.mxu0 %v9327
        %10405 = vmatpush.bf16.msra.mxu0 %v9323
        %10406 = vmatpush.bf16.msra.mxu0 %v9319
        %10407 = vmatpush.bf16.msra.mxu0 %v9315
        %10408 = vmatpush.bf16.msra.mxu0 %v9311
        %10409 = vmatmul.bf16.gmra.mxu0 %v6491
        %v10410 = vpop.f32.mrf.mxu0
        %v10411 = vadd.f32 %v10398, %v10410
        %v10412 = vpop.f32.mrf.mxu0
        %10413 = vdwg.mxu0
        %10414 = vmatpush.bf16.msra.mxu0 %v9371
        %10415 = vmatpush.bf16.msra.mxu0 %v9367
        %10416 = vmatpush.bf16.msra.mxu0 %v9363
        %10417 = vmatpush.bf16.msra.mxu0 %v9359
        %10418 = vmatpush.bf16.msra.mxu0 %v9355
        %10419 = vmatpush.bf16.msra.mxu0 %v9351
        %10420 = vmatpush.bf16.msra.mxu0 %v9347
        %10421 = vmatpush.bf16.msra.mxu0 %v9343
        %10422 = vmatmul.bf16.gmra.mxu0 %v6492
        %v10423 = vpop.f32.mrf.mxu0
        %v10424 = vadd.f32 %v10411, %v10423
        %v10425 = vpop.f32.mrf.mxu0
        %10426 = vdwg.mxu0
        %10427 = vmatpush.bf16.msra.mxu0 %v8828
        %10428 = vmatpush.bf16.msra.mxu0 %v8824
        %10429 = vmatpush.bf16.msra.mxu0 %v8820
        %10430 = vmatpush.bf16.msra.mxu0 %v8816
        %10431 = vmatpush.bf16.msra.mxu0 %v8812
        %10432 = vmatpush.bf16.msra.mxu0 %v8808
        %10433 = vmatpush.bf16.msra.mxu0 %v8804
        %10434 = vmatpush.bf16.msra.mxu0 %v8800
        %10435 = vmatmul.bf16.gmra.mxu0 %v6475
        %v10436 = vpop.f32.mrf.mxu0
        %v10437 = vadd.f32 %v9953, %v10436
        %v10438 = vpop.f32.mrf.mxu0
        %10439 = vdwg.mxu0
        %10440 = vmatpush.bf16.msra.mxu0 %v8860
        %10441 = vmatpush.bf16.msra.mxu0 %v8856
        %10442 = vmatpush.bf16.msra.mxu0 %v8852
        %10443 = vmatpush.bf16.msra.mxu0 %v8848
        %10444 = vmatpush.bf16.msra.mxu0 %v8844
        %10445 = vmatpush.bf16.msra.mxu0 %v8840
        %10446 = vmatpush.bf16.msra.mxu0 %v8836
        %10447 = vmatpush.bf16.msra.mxu0 %v8832
        %10448 = vmatmul.bf16.gmra.mxu0 %v6476
        %v10449 = vpop.f32.mrf.mxu0
        %v10450 = vadd.f32 %v10437, %v10449
        %v10451 = vpop.f32.mrf.mxu0
        %10452 = vdwg.mxu0
        %10453 = vmatpush.bf16.msra.mxu0 %v8892
        %10454 = vmatpush.bf16.msra.mxu0 %v8888
        %10455 = vmatpush.bf16.msra.mxu0 %v8884
        %10456 = vmatpush.bf16.msra.mxu0 %v8880
        %10457 = vmatpush.bf16.msra.mxu0 %v8876
        %10458 = vmatpush.bf16.msra.mxu0 %v8872
        %10459 = vmatpush.bf16.msra.mxu0 %v8868
        %10460 = vmatpush.bf16.msra.mxu0 %v8864
        %10461 = vmatmul.bf16.gmra.mxu0 %v6477
        %v10462 = vpop.f32.mrf.mxu0
        %v10463 = vadd.f32 %v10450, %v10462
        %v10464 = vpop.f32.mrf.mxu0
        %10465 = vdwg.mxu0
        %10466 = vmatpush.bf16.msra.mxu0 %v8924
        %10467 = vmatpush.bf16.msra.mxu0 %v8920
        %10468 = vmatpush.bf16.msra.mxu0 %v8916
        %10469 = vmatpush.bf16.msra.mxu0 %v8912
        %10470 = vmatpush.bf16.msra.mxu0 %v8908
        %10471 = vmatpush.bf16.msra.mxu0 %v8904
        %10472 = vmatpush.bf16.msra.mxu0 %v8900
        %10473 = vmatpush.bf16.msra.mxu0 %v8896
        %10474 = vmatmul.bf16.gmra.mxu0 %v6478
        %v10475 = vpop.f32.mrf.mxu0
        %v10476 = vadd.f32 %v10463, %v10475
        %v10477 = vpop.f32.mrf.mxu0
        %10478 = vdwg.mxu0
        %10479 = vmatpush.bf16.msra.mxu0 %v8956
        %10480 = vmatpush.bf16.msra.mxu0 %v8952
        %10481 = vmatpush.bf16.msra.mxu0 %v8948
        %10482 = vmatpush.bf16.msra.mxu0 %v8944
        %10483 = vmatpush.bf16.msra.mxu0 %v8940
        %10484 = vmatpush.bf16.msra.mxu0 %v8936
        %10485 = vmatpush.bf16.msra.mxu0 %v8932
        %10486 = vmatpush.bf16.msra.mxu0 %v8928
        %10487 = vmatmul.bf16.gmra.mxu0 %v6479
        %v10488 = vpop.f32.mrf.mxu0
        %v10489 = vadd.f32 %v10476, %v10488
        %v10490 = vpop.f32.mrf.mxu0
        %10491 = vdwg.mxu0
        %10492 = vmatpush.bf16.msra.mxu0 %v8988
        %10493 = vmatpush.bf16.msra.mxu0 %v8984
        %10494 = vmatpush.bf16.msra.mxu0 %v8980
        %10495 = vmatpush.bf16.msra.mxu0 %v8976
        %10496 = vmatpush.bf16.msra.mxu0 %v8972
        %10497 = vmatpush.bf16.msra.mxu0 %v8968
        %10498 = vmatpush.bf16.msra.mxu0 %v8964
        %10499 = vmatpush.bf16.msra.mxu0 %v8960
        %10500 = vmatmul.bf16.gmra.mxu0 %v6480
        %v10501 = vpop.f32.mrf.mxu0
        %v10502 = vadd.f32 %v10489, %v10501
        %v10503 = vpop.f32.mrf.mxu0
        %10504 = vdwg.mxu0
        %10505 = vmatpush.bf16.msra.mxu0 %v9020
        %10506 = vmatpush.bf16.msra.mxu0 %v9016
        %10507 = vmatpush.bf16.msra.mxu0 %v9012
        %10508 = vmatpush.bf16.msra.mxu0 %v9008
        %10509 = vmatpush.bf16.msra.mxu0 %v9004
        %10510 = vmatpush.bf16.msra.mxu0 %v9000
        %10511 = vmatpush.bf16.msra.mxu0 %v8996
        %10512 = vmatpush.bf16.msra.mxu0 %v8992
        %10513 = vmatmul.bf16.gmra.mxu0 %v6481
        %v10514 = vpop.f32.mrf.mxu0
        %v10515 = vadd.f32 %v10502, %v10514
        %v10516 = vpop.f32.mrf.mxu0
        %10517 = vdwg.mxu0
        %10518 = vmatpush.bf16.msra.mxu0 %v9052
        %10519 = vmatpush.bf16.msra.mxu0 %v9048
        %10520 = vmatpush.bf16.msra.mxu0 %v9044
        %10521 = vmatpush.bf16.msra.mxu0 %v9040
        %10522 = vmatpush.bf16.msra.mxu0 %v9036
        %10523 = vmatpush.bf16.msra.mxu0 %v9032
        %10524 = vmatpush.bf16.msra.mxu0 %v9028
        %10525 = vmatpush.bf16.msra.mxu0 %v9024
        %10526 = vmatmul.bf16.gmra.mxu0 %v6482
        %v10527 = vpop.f32.mrf.mxu0
        %v10528 = vadd.f32 %v10515, %v10527
        %v10529 = vpop.f32.mrf.mxu0
        %10530 = vdwg.mxu0
        %10531 = vmatpush.bf16.msra.mxu0 %v9084
        %10532 = vmatpush.bf16.msra.mxu0 %v9080
        %10533 = vmatpush.bf16.msra.mxu0 %v9076
        %10534 = vmatpush.bf16.msra.mxu0 %v9072
        %10535 = vmatpush.bf16.msra.mxu0 %v9068
        %10536 = vmatpush.bf16.msra.mxu0 %v9064
        %10537 = vmatpush.bf16.msra.mxu0 %v9060
        %10538 = vmatpush.bf16.msra.mxu0 %v9056
        %10539 = vmatmul.bf16.gmra.mxu0 %v6483
        %v10540 = vpop.f32.mrf.mxu0
        %v10541 = vadd.f32 %v10528, %v10540
        %v10542 = vpop.f32.mrf.mxu0
        %10543 = vdwg.mxu0
        %10544 = vmatpush.bf16.msra.mxu0 %v9116
        %10545 = vmatpush.bf16.msra.mxu0 %v9112
        %10546 = vmatpush.bf16.msra.mxu0 %v9108
        %10547 = vmatpush.bf16.msra.mxu0 %v9104
        %10548 = vmatpush.bf16.msra.mxu0 %v9100
        %10549 = vmatpush.bf16.msra.mxu0 %v9096
        %10550 = vmatpush.bf16.msra.mxu0 %v9092
        %10551 = vmatpush.bf16.msra.mxu0 %v9088
        %10552 = vmatmul.bf16.gmra.mxu0 %v6484
        %v10553 = vpop.f32.mrf.mxu0
        %v10554 = vadd.f32 %v10541, %v10553
        %v10555 = vpop.f32.mrf.mxu0
        %10556 = vdwg.mxu0
        %10557 = vmatpush.bf16.msra.mxu0 %v9148
        %10558 = vmatpush.bf16.msra.mxu0 %v9144
        %10559 = vmatpush.bf16.msra.mxu0 %v9140
        %10560 = vmatpush.bf16.msra.mxu0 %v9136
        %10561 = vmatpush.bf16.msra.mxu0 %v9132
        %10562 = vmatpush.bf16.msra.mxu0 %v9128
        %10563 = vmatpush.bf16.msra.mxu0 %v9124
        %10564 = vmatpush.bf16.msra.mxu0 %v9120
        %10565 = vmatmul.bf16.gmra.mxu0 %v6485
        %v10566 = vpop.f32.mrf.mxu0
        %v10567 = vadd.f32 %v10554, %v10566
        %v10568 = vpop.f32.mrf.mxu0
        %10569 = vdwg.mxu0
        %10570 = vmatpush.bf16.msra.mxu0 %v9180
        %10571 = vmatpush.bf16.msra.mxu0 %v9176
        %10572 = vmatpush.bf16.msra.mxu0 %v9172
        %10573 = vmatpush.bf16.msra.mxu0 %v9168
        %10574 = vmatpush.bf16.msra.mxu0 %v9164
        %10575 = vmatpush.bf16.msra.mxu0 %v9160
        %10576 = vmatpush.bf16.msra.mxu0 %v9156
        %10577 = vmatpush.bf16.msra.mxu0 %v9152
        %10578 = vmatmul.bf16.gmra.mxu0 %v6486
        %v10579 = vpop.f32.mrf.mxu0
        %v10580 = vadd.f32 %v10567, %v10579
        %v10581 = vpop.f32.mrf.mxu0
        %10582 = vdwg.mxu0
        %10583 = vmatpush.bf16.msra.mxu0 %v9212
        %10584 = vmatpush.bf16.msra.mxu0 %v9208
        %10585 = vmatpush.bf16.msra.mxu0 %v9204
        %10586 = vmatpush.bf16.msra.mxu0 %v9200
        %10587 = vmatpush.bf16.msra.mxu0 %v9196
        %10588 = vmatpush.bf16.msra.mxu0 %v9192
        %10589 = vmatpush.bf16.msra.mxu0 %v9188
        %10590 = vmatpush.bf16.msra.mxu0 %v9184
        %10591 = vmatmul.bf16.gmra.mxu0 %v6487
        %v10592 = vpop.f32.mrf.mxu0
        %v10593 = vadd.f32 %v10580, %v10592
        %v10594 = vpop.f32.mrf.mxu0
        %10595 = vdwg.mxu0
        %10596 = vmatpush.bf16.msra.mxu0 %v9244
        %10597 = vmatpush.bf16.msra.mxu0 %v9240
        %10598 = vmatpush.bf16.msra.mxu0 %v9236
        %10599 = vmatpush.bf16.msra.mxu0 %v9232
        %10600 = vmatpush.bf16.msra.mxu0 %v9228
        %10601 = vmatpush.bf16.msra.mxu0 %v9224
        %10602 = vmatpush.bf16.msra.mxu0 %v9220
        %10603 = vmatpush.bf16.msra.mxu0 %v9216
        %10604 = vmatmul.bf16.gmra.mxu0 %v6488
        %v10605 = vpop.f32.mrf.mxu0
        %v10606 = vadd.f32 %v10593, %v10605
        %v10607 = vpop.f32.mrf.mxu0
        %10608 = vdwg.mxu0
        %10609 = vmatpush.bf16.msra.mxu0 %v9276
        %10610 = vmatpush.bf16.msra.mxu0 %v9272
        %10611 = vmatpush.bf16.msra.mxu0 %v9268
        %10612 = vmatpush.bf16.msra.mxu0 %v9264
        %10613 = vmatpush.bf16.msra.mxu0 %v9260
        %10614 = vmatpush.bf16.msra.mxu0 %v9256
        %10615 = vmatpush.bf16.msra.mxu0 %v9252
        %10616 = vmatpush.bf16.msra.mxu0 %v9248
        %10617 = vmatmul.bf16.gmra.mxu0 %v6489
        %v10618 = vpop.f32.mrf.mxu0
        %v10619 = vadd.f32 %v10606, %v10618
        %v10620 = vpop.f32.mrf.mxu0
        %10621 = vdwg.mxu0
        %10622 = vmatpush.bf16.msra.mxu0 %v9308
        %10623 = vmatpush.bf16.msra.mxu0 %v9304
        %10624 = vmatpush.bf16.msra.mxu0 %v9300
        %10625 = vmatpush.bf16.msra.mxu0 %v9296
        %10626 = vmatpush.bf16.msra.mxu0 %v9292
        %10627 = vmatpush.bf16.msra.mxu0 %v9288
        %10628 = vmatpush.bf16.msra.mxu0 %v9284
        %10629 = vmatpush.bf16.msra.mxu0 %v9280
        %10630 = vmatmul.bf16.gmra.mxu0 %v6490
        %v10631 = vpop.f32.mrf.mxu0
        %v10632 = vadd.f32 %v10619, %v10631
        %v10633 = vpop.f32.mrf.mxu0
        %10634 = vdwg.mxu0
        %10635 = vmatpush.bf16.msra.mxu0 %v9340
        %10636 = vmatpush.bf16.msra.mxu0 %v9336
        %10637 = vmatpush.bf16.msra.mxu0 %v9332
        %10638 = vmatpush.bf16.msra.mxu0 %v9328
        %10639 = vmatpush.bf16.msra.mxu0 %v9324
        %10640 = vmatpush.bf16.msra.mxu0 %v9320
        %10641 = vmatpush.bf16.msra.mxu0 %v9316
        %10642 = vmatpush.bf16.msra.mxu0 %v9312
        %10643 = vmatmul.bf16.gmra.mxu0 %v6491
        %v10644 = vpop.f32.mrf.mxu0
        %v10645 = vadd.f32 %v10632, %v10644
        %v10646 = vpop.f32.mrf.mxu0
        %10647 = vdwg.mxu0
        %10648 = vmatpush.bf16.msra.mxu0 %v9372
        %10649 = vmatpush.bf16.msra.mxu0 %v9368
        %10650 = vmatpush.bf16.msra.mxu0 %v9364
        %10651 = vmatpush.bf16.msra.mxu0 %v9360
        %10652 = vmatpush.bf16.msra.mxu0 %v9356
        %10653 = vmatpush.bf16.msra.mxu0 %v9352
        %10654 = vmatpush.bf16.msra.mxu0 %v9348
        %10655 = vmatpush.bf16.msra.mxu0 %v9344
        %10656 = vmatmul.bf16.gmra.mxu0 %v6492
        %v10657 = vpop.f32.mrf.mxu0
        %v10658 = vadd.f32 %v10645, %v10657
        %v10659 = vpop.f32.mrf.mxu0
        %10660 = vdwg.mxu0
        %10661 = vmatpush.bf16.msra.mxu0 %v8829
        %10662 = vmatpush.bf16.msra.mxu0 %v8825
        %10663 = vmatpush.bf16.msra.mxu0 %v8821
        %10664 = vmatpush.bf16.msra.mxu0 %v8817
        %10665 = vmatpush.bf16.msra.mxu0 %v8813
        %10666 = vmatpush.bf16.msra.mxu0 %v8809
        %10667 = vmatpush.bf16.msra.mxu0 %v8805
        %10668 = vmatpush.bf16.msra.mxu0 %v8801
        %10669 = vmatmul.bf16.gmra.mxu0 %v6475
        %v10670 = vpop.f32.mrf.mxu0
        %v10671 = vadd.f32 %v9954, %v10670
        %v10672 = vpop.f32.mrf.mxu0
        %10673 = vdwg.mxu0
        %10674 = vmatpush.bf16.msra.mxu0 %v8861
        %10675 = vmatpush.bf16.msra.mxu0 %v8857
        %10676 = vmatpush.bf16.msra.mxu0 %v8853
        %10677 = vmatpush.bf16.msra.mxu0 %v8849
        %10678 = vmatpush.bf16.msra.mxu0 %v8845
        %10679 = vmatpush.bf16.msra.mxu0 %v8841
        %10680 = vmatpush.bf16.msra.mxu0 %v8837
        %10681 = vmatpush.bf16.msra.mxu0 %v8833
        %10682 = vmatmul.bf16.gmra.mxu0 %v6476
        %v10683 = vpop.f32.mrf.mxu0
        %v10684 = vadd.f32 %v10671, %v10683
        %v10685 = vpop.f32.mrf.mxu0
        %10686 = vdwg.mxu0
        %10687 = vmatpush.bf16.msra.mxu0 %v8893
        %10688 = vmatpush.bf16.msra.mxu0 %v8889
        %10689 = vmatpush.bf16.msra.mxu0 %v8885
        %10690 = vmatpush.bf16.msra.mxu0 %v8881
        %10691 = vmatpush.bf16.msra.mxu0 %v8877
        %10692 = vmatpush.bf16.msra.mxu0 %v8873
        %10693 = vmatpush.bf16.msra.mxu0 %v8869
        %10694 = vmatpush.bf16.msra.mxu0 %v8865
        %10695 = vmatmul.bf16.gmra.mxu0 %v6477
        %v10696 = vpop.f32.mrf.mxu0
        %v10697 = vadd.f32 %v10684, %v10696
        %v10698 = vpop.f32.mrf.mxu0
        %10699 = vdwg.mxu0
        %10700 = vmatpush.bf16.msra.mxu0 %v8925
        %10701 = vmatpush.bf16.msra.mxu0 %v8921
        %10702 = vmatpush.bf16.msra.mxu0 %v8917
        %10703 = vmatpush.bf16.msra.mxu0 %v8913
        %10704 = vmatpush.bf16.msra.mxu0 %v8909
        %10705 = vmatpush.bf16.msra.mxu0 %v8905
        %10706 = vmatpush.bf16.msra.mxu0 %v8901
        %10707 = vmatpush.bf16.msra.mxu0 %v8897
        %10708 = vmatmul.bf16.gmra.mxu0 %v6478
        %v10709 = vpop.f32.mrf.mxu0
        %v10710 = vadd.f32 %v10697, %v10709
        %v10711 = vpop.f32.mrf.mxu0
        %10712 = vdwg.mxu0
        %10713 = vmatpush.bf16.msra.mxu0 %v8957
        %10714 = vmatpush.bf16.msra.mxu0 %v8953
        %10715 = vmatpush.bf16.msra.mxu0 %v8949
        %10716 = vmatpush.bf16.msra.mxu0 %v8945
        %10717 = vmatpush.bf16.msra.mxu0 %v8941
        %10718 = vmatpush.bf16.msra.mxu0 %v8937
        %10719 = vmatpush.bf16.msra.mxu0 %v8933
        %10720 = vmatpush.bf16.msra.mxu0 %v8929
        %10721 = vmatmul.bf16.gmra.mxu0 %v6479
        %v10722 = vpop.f32.mrf.mxu0
        %v10723 = vadd.f32 %v10710, %v10722
        %v10724 = vpop.f32.mrf.mxu0
        %10725 = vdwg.mxu0
        %10726 = vmatpush.bf16.msra.mxu0 %v8989
        %10727 = vmatpush.bf16.msra.mxu0 %v8985
        %10728 = vmatpush.bf16.msra.mxu0 %v8981
        %10729 = vmatpush.bf16.msra.mxu0 %v8977
        %10730 = vmatpush.bf16.msra.mxu0 %v8973
        %10731 = vmatpush.bf16.msra.mxu0 %v8969
        %10732 = vmatpush.bf16.msra.mxu0 %v8965
        %10733 = vmatpush.bf16.msra.mxu0 %v8961
        %10734 = vmatmul.bf16.gmra.mxu0 %v6480
        %v10735 = vpop.f32.mrf.mxu0
        %v10736 = vadd.f32 %v10723, %v10735
        %v10737 = vpop.f32.mrf.mxu0
        %10738 = vdwg.mxu0
        %10739 = vmatpush.bf16.msra.mxu0 %v9021
        %10740 = vmatpush.bf16.msra.mxu0 %v9017
        %10741 = vmatpush.bf16.msra.mxu0 %v9013
        %10742 = vmatpush.bf16.msra.mxu0 %v9009
        %10743 = vmatpush.bf16.msra.mxu0 %v9005
        %10744 = vmatpush.bf16.msra.mxu0 %v9001
        %10745 = vmatpush.bf16.msra.mxu0 %v8997
        %10746 = vmatpush.bf16.msra.mxu0 %v8993
        %10747 = vmatmul.bf16.gmra.mxu0 %v6481
        %v10748 = vpop.f32.mrf.mxu0
        %v10749 = vadd.f32 %v10736, %v10748
        %v10750 = vpop.f32.mrf.mxu0
        %10751 = vdwg.mxu0
        %10752 = vmatpush.bf16.msra.mxu0 %v9053
        %10753 = vmatpush.bf16.msra.mxu0 %v9049
        %10754 = vmatpush.bf16.msra.mxu0 %v9045
        %10755 = vmatpush.bf16.msra.mxu0 %v9041
        %10756 = vmatpush.bf16.msra.mxu0 %v9037
        %10757 = vmatpush.bf16.msra.mxu0 %v9033
        %10758 = vmatpush.bf16.msra.mxu0 %v9029
        %10759 = vmatpush.bf16.msra.mxu0 %v9025
        %10760 = vmatmul.bf16.gmra.mxu0 %v6482
        %v10761 = vpop.f32.mrf.mxu0
        %v10762 = vadd.f32 %v10749, %v10761
        %v10763 = vpop.f32.mrf.mxu0
        %10764 = vdwg.mxu0
        %10765 = vmatpush.bf16.msra.mxu0 %v9085
        %10766 = vmatpush.bf16.msra.mxu0 %v9081
        %10767 = vmatpush.bf16.msra.mxu0 %v9077
        %10768 = vmatpush.bf16.msra.mxu0 %v9073
        %10769 = vmatpush.bf16.msra.mxu0 %v9069
        %10770 = vmatpush.bf16.msra.mxu0 %v9065
        %10771 = vmatpush.bf16.msra.mxu0 %v9061
        %10772 = vmatpush.bf16.msra.mxu0 %v9057
        %10773 = vmatmul.bf16.gmra.mxu0 %v6483
        %v10774 = vpop.f32.mrf.mxu0
        %v10775 = vadd.f32 %v10762, %v10774
        %v10776 = vpop.f32.mrf.mxu0
        %10777 = vdwg.mxu0
        %10778 = vmatpush.bf16.msra.mxu0 %v9117
        %10779 = vmatpush.bf16.msra.mxu0 %v9113
        %10780 = vmatpush.bf16.msra.mxu0 %v9109
        %10781 = vmatpush.bf16.msra.mxu0 %v9105
        %10782 = vmatpush.bf16.msra.mxu0 %v9101
        %10783 = vmatpush.bf16.msra.mxu0 %v9097
        %10784 = vmatpush.bf16.msra.mxu0 %v9093
        %10785 = vmatpush.bf16.msra.mxu0 %v9089
        %10786 = vmatmul.bf16.gmra.mxu0 %v6484
        %v10787 = vpop.f32.mrf.mxu0
        %v10788 = vadd.f32 %v10775, %v10787
        %v10789 = vpop.f32.mrf.mxu0
        %10790 = vdwg.mxu0
        %10791 = vmatpush.bf16.msra.mxu0 %v9149
        %10792 = vmatpush.bf16.msra.mxu0 %v9145
        %10793 = vmatpush.bf16.msra.mxu0 %v9141
        %10794 = vmatpush.bf16.msra.mxu0 %v9137
        %10795 = vmatpush.bf16.msra.mxu0 %v9133
        %10796 = vmatpush.bf16.msra.mxu0 %v9129
        %10797 = vmatpush.bf16.msra.mxu0 %v9125
        %10798 = vmatpush.bf16.msra.mxu0 %v9121
        %10799 = vmatmul.bf16.gmra.mxu0 %v6485
        %v10800 = vpop.f32.mrf.mxu0
        %v10801 = vadd.f32 %v10788, %v10800
        %v10802 = vpop.f32.mrf.mxu0
        %10803 = vdwg.mxu0
        %10804 = vmatpush.bf16.msra.mxu0 %v9181
        %10805 = vmatpush.bf16.msra.mxu0 %v9177
        %10806 = vmatpush.bf16.msra.mxu0 %v9173
        %10807 = vmatpush.bf16.msra.mxu0 %v9169
        %10808 = vmatpush.bf16.msra.mxu0 %v9165
        %10809 = vmatpush.bf16.msra.mxu0 %v9161
        %10810 = vmatpush.bf16.msra.mxu0 %v9157
        %10811 = vmatpush.bf16.msra.mxu0 %v9153
        %10812 = vmatmul.bf16.gmra.mxu0 %v6486
        %v10813 = vpop.f32.mrf.mxu0
        %v10814 = vadd.f32 %v10801, %v10813
        %v10815 = vpop.f32.mrf.mxu0
        %10816 = vdwg.mxu0
        %10817 = vmatpush.bf16.msra.mxu0 %v9213
        %10818 = vmatpush.bf16.msra.mxu0 %v9209
        %10819 = vmatpush.bf16.msra.mxu0 %v9205
        %10820 = vmatpush.bf16.msra.mxu0 %v9201
        %10821 = vmatpush.bf16.msra.mxu0 %v9197
        %10822 = vmatpush.bf16.msra.mxu0 %v9193
        %10823 = vmatpush.bf16.msra.mxu0 %v9189
        %10824 = vmatpush.bf16.msra.mxu0 %v9185
        %10825 = vmatmul.bf16.gmra.mxu0 %v6487
        %v10826 = vpop.f32.mrf.mxu0
        %v10827 = vadd.f32 %v10814, %v10826
        %v10828 = vpop.f32.mrf.mxu0
        %10829 = vdwg.mxu0
        %10830 = vmatpush.bf16.msra.mxu0 %v9245
        %10831 = vmatpush.bf16.msra.mxu0 %v9241
        %10832 = vmatpush.bf16.msra.mxu0 %v9237
        %10833 = vmatpush.bf16.msra.mxu0 %v9233
        %10834 = vmatpush.bf16.msra.mxu0 %v9229
        %10835 = vmatpush.bf16.msra.mxu0 %v9225
        %10836 = vmatpush.bf16.msra.mxu0 %v9221
        %10837 = vmatpush.bf16.msra.mxu0 %v9217
        %10838 = vmatmul.bf16.gmra.mxu0 %v6488
        %v10839 = vpop.f32.mrf.mxu0
        %v10840 = vadd.f32 %v10827, %v10839
        %v10841 = vpop.f32.mrf.mxu0
        %10842 = vdwg.mxu0
        %10843 = vmatpush.bf16.msra.mxu0 %v9277
        %10844 = vmatpush.bf16.msra.mxu0 %v9273
        %10845 = vmatpush.bf16.msra.mxu0 %v9269
        %10846 = vmatpush.bf16.msra.mxu0 %v9265
        %10847 = vmatpush.bf16.msra.mxu0 %v9261
        %10848 = vmatpush.bf16.msra.mxu0 %v9257
        %10849 = vmatpush.bf16.msra.mxu0 %v9253
        %10850 = vmatpush.bf16.msra.mxu0 %v9249
        %10851 = vmatmul.bf16.gmra.mxu0 %v6489
        %v10852 = vpop.f32.mrf.mxu0
        %v10853 = vadd.f32 %v10840, %v10852
        %v10854 = vpop.f32.mrf.mxu0
        %10855 = vdwg.mxu0
        %10856 = vmatpush.bf16.msra.mxu0 %v9309
        %10857 = vmatpush.bf16.msra.mxu0 %v9305
        %10858 = vmatpush.bf16.msra.mxu0 %v9301
        %10859 = vmatpush.bf16.msra.mxu0 %v9297
        %10860 = vmatpush.bf16.msra.mxu0 %v9293
        %10861 = vmatpush.bf16.msra.mxu0 %v9289
        %10862 = vmatpush.bf16.msra.mxu0 %v9285
        %10863 = vmatpush.bf16.msra.mxu0 %v9281
        %10864 = vmatmul.bf16.gmra.mxu0 %v6490
        %v10865 = vpop.f32.mrf.mxu0
        %v10866 = vadd.f32 %v10853, %v10865
        %v10867 = vpop.f32.mrf.mxu0
        %10868 = vdwg.mxu0
        %10869 = vmatpush.bf16.msra.mxu0 %v9341
        %10870 = vmatpush.bf16.msra.mxu0 %v9337
        %10871 = vmatpush.bf16.msra.mxu0 %v9333
        %10872 = vmatpush.bf16.msra.mxu0 %v9329
        %10873 = vmatpush.bf16.msra.mxu0 %v9325
        %10874 = vmatpush.bf16.msra.mxu0 %v9321
        %10875 = vmatpush.bf16.msra.mxu0 %v9317
        %10876 = vmatpush.bf16.msra.mxu0 %v9313
        %10877 = vmatmul.bf16.gmra.mxu0 %v6491
        %v10878 = vpop.f32.mrf.mxu0
        %v10879 = vadd.f32 %v10866, %v10878
        %v10880 = vpop.f32.mrf.mxu0
        %10881 = vdwg.mxu0
        %10882 = vmatpush.bf16.msra.mxu0 %v9373
        %10883 = vmatpush.bf16.msra.mxu0 %v9369
        %10884 = vmatpush.bf16.msra.mxu0 %v9365
        %10885 = vmatpush.bf16.msra.mxu0 %v9361
        %10886 = vmatpush.bf16.msra.mxu0 %v9357
        %10887 = vmatpush.bf16.msra.mxu0 %v9353
        %10888 = vmatpush.bf16.msra.mxu0 %v9349
        %10889 = vmatpush.bf16.msra.mxu0 %v9345
        %10890 = vmatmul.bf16.gmra.mxu0 %v6492
        %v10891 = vpop.f32.mrf.mxu0
        %v10892 = vadd.f32 %v10879, %v10891
        %v10893 = vpop.f32.mrf.mxu0
        %10894 = vdwg.mxu0
        %v10895 = vmax.f32 %v10190, 0.0
        %v10896 = vmax.f32 %v10424, 0.0
        %v10897 = vmax.f32 %v10658, 0.0
        %v10898 = vmax.f32 %v10892, 0.0
        %v10899 = vpack.c.bf16 %v10895, %v10895
        %v10900 = vpack.c.bf16 %v10896, %v10896
        %v10901 = vpack.c.bf16 %v10897, %v10897
        %v10902 = vpack.c.bf16 %v10898, %v10898
        %v10903 = vld [vmem:[%s11] sm:$0xf]
        %v10904 = vld [vmem:[%s11 + $0x4] sm:$0xf]
        %v10905 = vld [vmem:[%s11 + $0x8] sm:$0xf]
        %v10906 = vld [vmem:[%s11 + $0xc] sm:$0xf]
        %v10907 = vld [vmem:[%s11 + $0x10] sm:$0xf]
        %v10908 = vld [vmem:[%s11 + $0x14] sm:$0xf]
        %v10909 = vld [vmem:[%s11 + $0x18] sm:$0xf]
        %v10910 = vld [vmem:[%s11 + $0x1c] sm:$0xf]
        %v10911 = vld [vmem:[%s11 + $0x20] sm:$0xf]
        %v10912 = vld [vmem:[%s11 + $0x24] sm:$0xf]
        %v10913 = vld [vmem:[%s11 + $0x28] sm:$0xf]
        %v10914 = vld [vmem:[%s11 + $0x2c] sm:$0xf]
        %v10915 = vld [vmem:[%s11 + $0x30] sm:$0xf]
        %v10916 = vld [vmem:[%s11 + $0x34] sm:$0xf]
        %v10917 = vld [vmem:[%s11 + $0x38] sm:$0xf]
        %v10918 = vld [vmem:[%s11 + $0x3c] sm:$0xf]
        %v10919 = vld [vmem:[%s11 + $0x40] sm:$0xf]
        %v10920 = vld [vmem:[%s11 + $0x44] sm:$0xf]
        %v10921 = vld [vmem:[%s11 + $0x48] sm:$0xf]
        %v10922 = vld [vmem:[%s11 + $0x4c] sm:$0xf]
        %v10923 = vld [vmem:[%s11 + $0x50] sm:$0xf]
        %v10924 = vld [vmem:[%s11 + $0x54] sm:$0xf]
        %v10925 = vld [vmem:[%s11 + $0x58] sm:$0xf]
        %v10926 = vld [vmem:[%s11 + $0x5c] sm:$0xf]
        %v10927 = vld [vmem:[%s11 + $0x60] sm:$0xf]
        %v10928 = vld [vmem:[%s11 + $0x64] sm:$0xf]
        %v10929 = vld [vmem:[%s11 + $0x68] sm:$0xf]
        %v10930 = vld [vmem:[%s11 + $0x6c] sm:$0xf]
        %v10931 = vld [vmem:[%s11 + $0x70] sm:$0xf]
        %v10932 = vld [vmem:[%s11 + $0x74] sm:$0xf]
        %v10933 = vld [vmem:[%s11 + $0x78] sm:$0xf]
        %v10934 = vld [vmem:[%s11 + $0x7c] sm:$0xf]
        %v10935 = vld [vmem:[%s11 + $0x80] sm:$0xf]
        %v10936 = vld [vmem:[%s11 + $0x84] sm:$0xf]
        %v10937 = vld [vmem:[%s11 + $0x88] sm:$0xf]
        %v10938 = vld [vmem:[%s11 + $0x8c] sm:$0xf]
        %v10939 = vld [vmem:[%s11 + $0x90] sm:$0xf]
        %v10940 = vld [vmem:[%s11 + $0x94] sm:$0xf]
        %v10941 = vld [vmem:[%s11 + $0x98] sm:$0xf]
        %v10942 = vld [vmem:[%s11 + $0x9c] sm:$0xf]
        %v10943 = vld [vmem:[%s11 + $0xa0] sm:$0xf]
        %v10944 = vld [vmem:[%s11 + $0xa4] sm:$0xf]
        %v10945 = vld [vmem:[%s11 + $0xa8] sm:$0xf]
        %v10946 = vld [vmem:[%s11 + $0xac] sm:$0xf]
        %v10947 = vld [vmem:[%s11 + $0xb0] sm:$0xf]
        %v10948 = vld [vmem:[%s11 + $0xb4] sm:$0xf]
        %v10949 = vld [vmem:[%s11 + $0xb8] sm:$0xf]
        %v10950 = vld [vmem:[%s11 + $0xbc] sm:$0xf]
        %v10951 = vld [vmem:[%s11 + $0xc0] sm:$0xf]
        %v10952 = vld [vmem:[%s11 + $0xc4] sm:$0xf]
        %v10953 = vld [vmem:[%s11 + $0xc8] sm:$0xf]
        %v10954 = vld [vmem:[%s11 + $0xcc] sm:$0xf]
        %v10955 = vld [vmem:[%s11 + $0xd0] sm:$0xf]
        %v10956 = vld [vmem:[%s11 + $0xd4] sm:$0xf]
        %v10957 = vld [vmem:[%s11 + $0xd8] sm:$0xf]
        %v10958 = vld [vmem:[%s11 + $0xdc] sm:$0xf]
        %v10959 = vld [vmem:[%s11 + $0xe0] sm:$0xf]
        %v10960 = vld [vmem:[%s11 + $0xe4] sm:$0xf]
        %v10961 = vld [vmem:[%s11 + $0xe8] sm:$0xf]
        %v10962 = vld [vmem:[%s11 + $0xec] sm:$0xf]
        %v10963 = vld [vmem:[%s11 + $0xf0] sm:$0xf]
        %v10964 = vld [vmem:[%s11 + $0xf4] sm:$0xf]
        %v10965 = vld [vmem:[%s11 + $0xf8] sm:$0xf]
        %v10966 = vld [vmem:[%s11 + $0xfc] sm:$0xf]
        %v10967 = vld [vmem:[%s12] sm:$0x1]
        %v11032 = vunpack.c.l.b16 %v10903
        %v11033 = vunpack.c.l.b16 %v10904
        %v11034 = vunpack.c.l.b16 %v10905
        %v11035 = vunpack.c.l.b16 %v10906
        %v11036 = vunpack.c.l.b16 %v10907
        %v11037 = vunpack.c.l.b16 %v10908
        %v11038 = vunpack.c.l.b16 %v10909
        %v11039 = vunpack.c.l.b16 %v10910
        %v11040 = vunpack.c.l.b16 %v10911
        %v11041 = vunpack.c.l.b16 %v10912
        %v11042 = vunpack.c.l.b16 %v10913
        %v11043 = vunpack.c.l.b16 %v10914
        %v11044 = vunpack.c.l.b16 %v10915
        %v11045 = vunpack.c.l.b16 %v10916
        %v11046 = vunpack.c.l.b16 %v10917
        %v11047 = vunpack.c.l.b16 %v10918
        %v11048 = vunpack.c.l.b16 %v10919
        %v11049 = vunpack.c.l.b16 %v10920
        %v11050 = vunpack.c.l.b16 %v10921
        %v11051 = vunpack.c.l.b16 %v10922
        %v11052 = vunpack.c.l.b16 %v10923
        %v11053 = vunpack.c.l.b16 %v10924
        %v11054 = vunpack.c.l.b16 %v10925
        %v11055 = vunpack.c.l.b16 %v10926
        %v11056 = vunpack.c.l.b16 %v10927
        %v11057 = vunpack.c.l.b16 %v10928
        %v11058 = vunpack.c.l.b16 %v10929
        %v11059 = vunpack.c.l.b16 %v10930
        %v11060 = vunpack.c.l.b16 %v10931
        %v11061 = vunpack.c.l.b16 %v10932
        %v11062 = vunpack.c.l.b16 %v10933
        %v11063 = vunpack.c.l.b16 %v10934
        %v11064 = vunpack.c.l.b16 %v10935
        %v11065 = vunpack.c.l.b16 %v10936
        %v11066 = vunpack.c.l.b16 %v10937
        %v11067 = vunpack.c.l.b16 %v10938
        %v11068 = vunpack.c.l.b16 %v10939
        %v11069 = vunpack.c.l.b16 %v10940
        %v11070 = vunpack.c.l.b16 %v10941
        %v11071 = vunpack.c.l.b16 %v10942
        %v11072 = vunpack.c.l.b16 %v10943
        %v11073 = vunpack.c.l.b16 %v10944
        %v11074 = vunpack.c.l.b16 %v10945
        %v11075 = vunpack.c.l.b16 %v10946
        %v11076 = vunpack.c.l.b16 %v10947
        %v11077 = vunpack.c.l.b16 %v10948
        %v11078 = vunpack.c.l.b16 %v10949
        %v11079 = vunpack.c.l.b16 %v10950
        %v11080 = vunpack.c.l.b16 %v10951
        %v11081 = vunpack.c.l.b16 %v10952
        %v11082 = vunpack.c.l.b16 %v10953
        %v11083 = vunpack.c.l.b16 %v10954
        %v11084 = vunpack.c.l.b16 %v10955
        %v11085 = vunpack.c.l.b16 %v10956
        %v11086 = vunpack.c.l.b16 %v10957
        %v11087 = vunpack.c.l.b16 %v10958
        %v11088 = vunpack.c.l.b16 %v10959
        %v11089 = vunpack.c.l.b16 %v10960
        %v11090 = vunpack.c.l.b16 %v10961
        %v11091 = vunpack.c.l.b16 %v10962
        %v11092 = vunpack.c.l.b16 %v10963
        %v11093 = vunpack.c.l.b16 %v10964
        %v11094 = vunpack.c.l.b16 %v10965
        %v11095 = vunpack.c.l.b16 %v10966
        %v11096 = vpack.c.b16 %v11033, %v11032
        %v11097 = vpack.c.b16 %v11035, %v11034
        %v11098 = vpack.c.b16 %v11037, %v11036
        %v11099 = vpack.c.b16 %v11039, %v11038
        %v11100 = vpack.c.b16 %v11041, %v11040
        %v11101 = vpack.c.b16 %v11043, %v11042
        %v11102 = vpack.c.b16 %v11045, %v11044
        %v11103 = vpack.c.b16 %v11047, %v11046
        %v11104 = vpack.c.b16 %v11049, %v11048
        %v11105 = vpack.c.b16 %v11051, %v11050
        %v11106 = vpack.c.b16 %v11053, %v11052
        %v11107 = vpack.c.b16 %v11055, %v11054
        %v11108 = vpack.c.b16 %v11057, %v11056
        %v11109 = vpack.c.b16 %v11059, %v11058
        %v11110 = vpack.c.b16 %v11061, %v11060
        %v11111 = vpack.c.b16 %v11063, %v11062
        %v11112 = vpack.c.b16 %v11065, %v11064
        %v11113 = vpack.c.b16 %v11067, %v11066
        %v11114 = vpack.c.b16 %v11069, %v11068
        %v11115 = vpack.c.b16 %v11071, %v11070
        %v11116 = vpack.c.b16 %v11073, %v11072
        %v11117 = vpack.c.b16 %v11075, %v11074
        %v11118 = vpack.c.b16 %v11077, %v11076
        %v11119 = vpack.c.b16 %v11079, %v11078
        %v11120 = vpack.c.b16 %v11081, %v11080
        %v11121 = vpack.c.b16 %v11083, %v11082
        %v11122 = vpack.c.b16 %v11085, %v11084
        %v11123 = vpack.c.b16 %v11087, %v11086
        %v11124 = vpack.c.b16 %v11089, %v11088
        %v11125 = vpack.c.b16 %v11091, %v11090
        %v11126 = vpack.c.b16 %v11093, %v11092
        %v11127 = vpack.c.b16 %v11095, %v11094
        %11160 = vmatpush.bf16.msra.mxu0 %v11103
        %11161 = vmatpush.bf16.msra.mxu0 %v11102
        %11162 = vmatpush.bf16.msra.mxu0 %v11101
        %11163 = vmatpush.bf16.msra.mxu0 %v11100
        %11164 = vmatpush.bf16.msra.mxu0 %v11099
        %11165 = vmatpush.bf16.msra.mxu0 %v11098
        %11166 = vmatpush.bf16.msra.mxu0 %v11097
        %11167 = vmatpush.bf16.msra.mxu0 %v11096
        %11168 = vmatmul.bf16.gmra.mxu0 %v10899
        %v11169 = vpop.f32.mrf.mxu0
        %v11170 = vadd.f32 %v10967, %v11169
        %v11171 = vpop.f32.mrf.mxu0
        %11172 = vdwg.mxu0
        %11173 = vmatpush.bf16.msra.mxu0 %v11111
        %11174 = vmatpush.bf16.msra.mxu0 %v11110
        %11175 = vmatpush.bf16.msra.mxu0 %v11109
        %11176 = vmatpush.bf16.msra.mxu0 %v11108
        %11177 = vmatpush.bf16.msra.mxu0 %v11107
        %11178 = vmatpush.bf16.msra.mxu0 %v11106
        %11179 = vmatpush.bf16.msra.mxu0 %v11105
        %11180 = vmatpush.bf16.msra.mxu0 %v11104
        %11181 = vmatmul.bf16.gmra.mxu0 %v10900
        %v11182 = vpop.f32.mrf.mxu0
        %v11183 = vadd.f32 %v11170, %v11182
        %v11184 = vpop.f32.mrf.mxu0
        %11185 = vdwg.mxu0
        %11186 = vmatpush.bf16.msra.mxu0 %v11119
        %11187 = vmatpush.bf16.msra.mxu0 %v11118
        %11188 = vmatpush.bf16.msra.mxu0 %v11117
        %11189 = vmatpush.bf16.msra.mxu0 %v11116
        %11190 = vmatpush.bf16.msra.mxu0 %v11115
        %11191 = vmatpush.bf16.msra.mxu0 %v11114
        %11192 = vmatpush.bf16.msra.mxu0 %v11113
        %11193 = vmatpush.bf16.msra.mxu0 %v11112
        %11194 = vmatmul.bf16.gmra.mxu0 %v10901
        %v11195 = vpop.f32.mrf.mxu0
        %v11196 = vadd.f32 %v11183, %v11195
        %v11197 = vpop.f32.mrf.mxu0
        %11198 = vdwg.mxu0
        %11199 = vmatpush.bf16.msra.mxu0 %v11127
        %11200 = vmatpush.bf16.msra.mxu0 %v11126
        %11201 = vmatpush.bf16.msra.mxu0 %v11125
        %11202 = vmatpush.bf16.msra.mxu0 %v11124
        %11203 = vmatpush.bf16.msra.mxu0 %v11123
        %11204 = vmatpush.bf16.msra.mxu0 %v11122
        %11205 = vmatpush.bf16.msra.mxu0 %v11121
        %11206 = vmatpush.bf16.msra.mxu0 %v11120
        %11207 = vmatmul.bf16.gmra.mxu0 %v10902
        %v11208 = vpop.f32.mrf.mxu0
        %v11209 = vadd.f32 %v11196, %v11208
        %v11210 = vpop.f32.mrf.mxu0
        %11211 = vdwg.mxu0
        %11212 = vst [vmem:[%s432] sm:$0x1] %v11209
        %s11213 = sand.u32 %s313, 1
        %s11214 = scalar_lea.sflag [#allocation4], %s11213
        %s11215 = sand.u32 %s313, 1
        %s11216 = scalar_lea.vmem [#allocation3], %s11215
        // Predicated region
        $region73: #{dqn_forward.1} parent=71 // pred_check
          %p11217 = pneg %p323
        $region74: #{dqn_forward.1} parent=71 // pred_check_branch
          %11219 = sbr.rel (%p11217) target = $region76
        $region75: #{dqn_forward.1} parent=71 // pred_region
          %11221 = vsyncadd %s11214, 0
          %s11222 = scalar_lea.hbm %s13, %s27
          %s11224 = sshll.u32 %s11216, 4
          %s11225 = int_to_ptr.vmem [resolvable:$true] %s11224
          %s11226 = sshll.u32 %s11222, 4
          %s11227 = int_to_ptr.hbm [resolvable:$true] %s11226
          %11229 = dma.vmem_to_hbm [thread:$0]  %s11225, 16, %s11227, %s11214
        $region76: #{dqn_forward.1} parent=71 // pred_fallthru
          _
      $region72: #{dqn_forward.1} parent=5 // pred_fallthru
        _
      %p11230 = scmp.le.s32.totalorder 2, %s22
      // Predicated region
      $region77: #{dqn_forward.1} parent=5 // pred_check
        %p11231 = pneg %p11230
      $region78: #{dqn_forward.1} parent=5 // pred_check_branch
        %11233 = sbr.rel (%p11231) target = $region80
      $region79: #{dqn_forward.1} parent=5 // pred_region
        %s11234 = ssub.s32 %s22, 2
        // Predicated region
        $region81: #{dqn_forward.1} parent=79 // pred_check
          %p11235 = pneg %p329
        $region82: #{dqn_forward.1} parent=79 // pred_check_branch
          %11237 = sbr.rel (%p11235) target = $region84
        $region83: #{dqn_forward.1} parent=79 // pred_region
          %s11238 = sand.u32 %s314, 1
          %s11239 = scalar_lea.sflag [#allocation4], %s11238
          %s11240 = sand.u32 %s314, 1
          %s11241 = scalar_lea.vmem [#allocation3], %s11240
          %11243 = dma.done %s11239, 16
        $region84: #{dqn_forward.1} parent=79 // pred_fallthru
          _
      $region80: #{dqn_forward.1} parent=5 // pred_fallthru
        _
    $region6: #{dqn_forward.1} parent=1 // loop_footer
      %s26 = sadd.s32 1, %s22
    $region7: #{dqn_forward.1} parent=1 // loop_footer_branch
      %21 = sbr.rel target = $region3
    $region8: #{dqn_forward.1} parent=1 // loop_exit
      _
    %11244 = vsyncpa [#allocation4], 1
    %s11245 = scalar_lea.sflag [#allocation4], 1
    %11246 = vsyncpa %s11245, 1

</llo_original>
